<compile_context>
chip_gen: v6e
topology: v6e:2x2x1
jax: 0.10.0
libtpu: 0.0.40
codegen_flags: <defaults>
</compile_context>

<pallas_src>
import functools
import math

import jax
import jax.numpy as jnp
from jax.experimental import pallas as pl
from jax.experimental.pallas import tpu as pltpu


_ACTS = {
    "ReLU": lambda v: jnp.maximum(v, 0.0),
    # PyTorch nn.GELU defaults to the exact (erf) formulation.
    "GELU": functools.partial(jax.nn.gelu, approximate=False),
}


# ----------------------------------------------------------------------------
# Fused kernel (trace-time Python, static shapes)
# ----------------------------------------------------------------------------
def _make_kernel(plan, ksize, sample, bt, L, l_out, act_name, matmul_dtype):
    act = _ACTS[act_name]

    # Distinct causal shifts used by any conv, and widest conv-input channel count:
    # one hoisted mask per shift (JAX does not CSE broadcasts, so do them once).
    shifts = sorted({(ksize - 1 - k) * blk["dilation"]
                     for blk in plan for k in range(ksize - 1)})
    shifts = [s for s in shifts if 0 < s < L]
    mask_w = max([blk["cin"] for blk in plan] + [blk["cout"] for blk in plan] + [1])

    def kernel(*refs):
        x_ref = refs[0]
        out_ref = refs[-1]
        w_refs = list(refs[1:-1])
        idx = [0]

        def nxt():
            r = w_refs[idx[0]]
            idx[0] += 1
            return r

        M = bt * L
        d_input = x_ref.shape[-1]

        def mm(a, w):
            # bf16 operands (weights pre-cast on host), f32 accumulation on the MXU.
            return jnp.dot(a.astype(matmul_dtype), w,
                           preferred_element_type=jnp.float32)

        # ---- hoisted causal masks: one per distinct shift, computed once --------
        masks = {}
        if shifts:
            t_in_seq = jax.lax.broadcasted_iota(jnp.int32, (M, mask_w), 0) % L
            for s in shifts:
                masks[s] = (t_in_seq >= s).astype(jnp.float32)

        def masked_tap(v, shift, cin):
            # out[t] = v[t - shift] within each length-L sequence, zeros otherwise.
            rolled = pltpu.roll(v, shift=shift, axis=0)        # XLU sublane rotate
            m = masks[shift]
            if cin != mask_w:
                m = m[:, :cin]
            return rolled * m

        def causal_conv(v, w_ref, b_ref, dil, cin):
            # K per-tap matmuls accumulated in f32; tap ksize-1 is the zero-shift tap.
            z = mm(v, w_ref[ksize - 1]) + b_ref[...]
            for k in range(ksize - 1):
                shift = (ksize - 1 - k) * dil
                if shift >= L:
                    continue                      # tap falls outside every sequence
                z = z + mm(masked_tap(v, shift, cin), w_ref[k])
            return z

        # Flatten (bt, L, Cin) -> (bt*L, Cin): time on sublanes, channels on lanes.
        y = x_ref[...].astype(jnp.float32).reshape(M, d_input)

        # ---- TemporalConvNet -----------------------------------------------------
        for blk in plan:
            dil, cin, cout = blk["dilation"], blk["cin"], blk["cout"]
            ds = blk["downsample"]
            w1, b1 = nxt(), nxt()
            w2, b2 = nxt(), nxt()
            z = causal_conv(y, w1, b1, dil, cin)   # (M, 2*cout) if ds else (M, cout)
            if ds:
                # 1x1 downsample was fused into conv1's zero-shift tap: split halves.
                res = z[:, cout:]
                h = act(z[:, :cout])               # dropout: identity (eval)
            else:
                res = y
                h = act(z)
            h = act(causal_conv(h, w2, b2, dil, cout))   # dropout: identity (eval)
            y = act(h + res)

        # ---- subsample BEFORE the fused per-position linear (equivalent, cheaper)
        if sample > 1:
            C = y.shape[-1]
            # TODO(synk): strided-slice subsample path only exercised when sample > 1.
            y = y.reshape(bt, L, C)[:, ::sample, :].reshape(bt * l_out, C)

        # ---- fused tail: Linear(d_model)*sqrt(d_model) -> PE(identity) -> Linear(d_output)
        wt, btail = nxt(), nxt()
        y = mm(y, wt[...]) + btail[...]

        out_ref[...] = y.reshape(bt, l_out, out_ref.shape[-1]).astype(out_ref.dtype)

    return kernel


# ----------------------------------------------------------------------------
# Parameters (deterministic synthetic init, shapes follow the nn.Module)
# ----------------------------------------------------------------------------
def init_params(key, d_input, d_model, num_channels, kernel_size, d_output):
    params = []
    block_cfg = []
    keys = iter(jax.random.split(key, 4 * len(num_channels) * 3 + 8))

    def w(shape, s=0.1):
        return jax.random.normal(next(keys), shape, jnp.float32) * s

    in_ch = d_input
    for i, out_ch in enumerate(num_channels):
        dil = 2 ** i
        params += [w((kernel_size, in_ch, out_ch)), w((1, out_ch), 0.01)]   # conv1
        params += [w((kernel_size, out_ch, out_ch)), w((1, out_ch), 0.01)]  # conv2
        has_ds = in_ch != out_ch
        if has_ds:
            params += [w((in_ch, out_ch)), w((1, out_ch), 0.01)]            # 1x1 downsample
        block_cfg.append(dict(dilation=dil, downsample=has_ds))
        in_ch = out_ch

    params += [w((in_ch, d_model)), w((1, d_model), 0.01)]                  # InputTCN linear
    params += [w((d_model, d_output)), w((1, d_output), 0.01)]              # enc_out_embedding
    return params, block_cfg


def _prepare_params(params, block_cfg, d_input, d_model, d_output, d_out_pad,
                    matmul_dtype):
    """Host-side prep:
       * per-block conv weights kept per-tap as (K, Cin, Cw), bf16;
       * 1x1 downsample fused into conv1's zero-shift tap (Cw = 2*Cout);
       * the two tail linears composed into one (sqrt(d_model) folded in),
         padded to a lane-dense output width."""
    it = iter(params)
    nxt = lambda: next(it)
    prepped, plan = [], []
    cin = d_input
    for cfg in block_cfg:
        w1, b1 = nxt(), nxt()
        w2, b2 = nxt(), nxt()
        K, _, cout = w1.shape
        ds = cfg["downsample"]
        if ds:
            wd, bd = nxt(), nxt()
            cw = 2 * cout
            w1f = jnp.zeros((K, cin, cw), jnp.float32)
            w1f = w1f.at[:, :, :cout].set(w1)
            w1f = w1f.at[K - 1, :, cout:].set(wd)       # residual rides the 0-shift tap
            b1f = jnp.concatenate([b1, bd], axis=1)
        else:
            w1f, b1f = w1, b1
        prepped += [w1f.astype(matmul_dtype), b1f.astype(jnp.float32),
                    w2.astype(matmul_dtype), b2.astype(jnp.float32)]
        plan.append(dict(dilation=cfg["dilation"], cin=cin, cout=cout, downsample=ds))
        cin = cout

    # Compose Linear(C_last, d_model)*sqrt(d_model) with Linear(d_model, d_output)
    # into a single matmul (f32 composition on host, then bf16 cast).
    emb_w, emb_b = nxt(), nxt()
    ow, ob = nxt(), nxt()
    s = math.sqrt(d_model)
    w_tail = (emb_w * s) @ ow                              # (C_last, d_output)
    b_tail = (emb_b * s) @ ow + ob                         # (1, d_output)
    w_tail_p = jnp.zeros((w_tail.shape[0], d_out_pad), jnp.float32)
    w_tail_p = w_tail_p.at[:, :d_output].set(w_tail)
    b_tail_p = jnp.zeros((1, d_out_pad), jnp.float32).at[:, :d_output].set(b_tail[0])
    prepped += [w_tail_p.astype(matmul_dtype), b_tail_p]
    return prepped, plan


# ----------------------------------------------------------------------------
# Generation-aware grid selection
# ----------------------------------------------------------------------------
def _tensorcores_per_chip():
    """2 TensorCores on v7x (and v4/v5p megacore); 1 on v5e ('v5 lite') / v6e."""
    try:
        kind = jax.devices()[0].device_kind.lower()
    except Exception:
        return 1
    if "v7" in kind:
        return 2
    if "v4" in kind or "v5p" in kind:
        return 2
    return 1


def _pick_grid(B, L, d_input, channels, d_out_pad, num_tc,
               vmem_budget_bytes=24 * 1024 * 1024):
    """Grid length = #TensorCores (1 on v5e/v6e, 2 on v7x), grown only if the
    per-block live f32 intermediates would blow the VMEM budget."""
    max_c = max([d_input] + list(channels) + [1])
    # rough per-batch-row footprint: input + ~8 live (L, C) f32 activations + output.
    per_row = 4 * L * (d_input + 8 * max_c + d_out_pad)
    g = max(num_tc, -(-(B * per_row) // vmem_budget_bytes))
    return max(1, min(g, B))


# ----------------------------------------------------------------------------
# Wrapper: pallas_call plumbing
# ----------------------------------------------------------------------------
def my_tcn_encoder_forward(feat, params, block_cfg, *, kernel_size, sample,
                           d_model, d_output, activation="ReLU",
                           grid_steps=None, matmul_dtype=jnp.bfloat16):
    """feat: (seq_len, batch, d_input) -> (ceil(seq_len/sample), batch, d_output)."""
    L, B, d_input = feat.shape
    l_out = -(-L // sample)
    d_out_pad = -(-d_output // 128) * 128                  # lane-dense output width

    prepped, plan = _prepare_params(params, block_cfg, d_input, d_model, d_output,
                                    d_out_pad, matmul_dtype)
    channels = [blk["cout"] for blk in plan]

    num_tc = _tensorcores_per_chip()
    g = grid_steps if grid_steps is not None else _pick_grid(
        B, L, d_input, channels, d_out_pad, num_tc)
    B_pad = -(-B // g) * g                                 # pad batch so grid divides it
    bt = B_pad // g

    x = jnp.transpose(feat, (1, 0, 2))                     # (B, L, d_input)
    if B_pad != B:
        x = jnp.concatenate([x, jnp.zeros((B_pad - B, L, d_input), x.dtype)], axis=0)

    kernel = _make_kernel(plan, kernel_size, sample, bt, L, l_out, activation,
                          matmul_dtype)

    def full_spec(a):
        nd = a.ndim
        return pl.BlockSpec(a.shape, lambda gi, nd=nd: (0,) * nd)

    out = pl.pallas_call(
        kernel,
        out_shape=jax.ShapeDtypeStruct((B_pad, l_out, d_out_pad), jnp.float32),
        grid=(g,),
        in_specs=[pl.BlockSpec((bt, L, d_input), lambda gi: (gi, 0, 0))]
                 + [full_spec(p) for p in prepped],
        out_specs=pl.BlockSpec((bt, l_out, d_out_pad), lambda gi: (gi, 0, 0)),
        compiler_params=pltpu.CompilerParams(
            # TODO(synk): on v7x confirm this 'parallel' axis actually shards across
            # both TensorCores; if not, switch to pltpu.CORE_PARALLEL / pl.core_map.
            dimension_semantics=("parallel",),
            vmem_limit_bytes=32 * 1024 * 1024),
    )(x, *prepped)

    out = out[:B, :, :d_output]                            # drop batch/lane padding
    return jnp.transpose(out, (1, 0, 2))                   # (l_out, B, d_output)


# ----------------------------------------------------------------------------
# Pure-JAX reference (f32, HIGHEST precision) for validation
# ----------------------------------------------------------------------------
def reference_forward(feat, params, block_cfg, *, kernel_size, sample,
                      d_model, activation="ReLU"):
    act = _ACTS[activation]
    hp = jax.lax.Precision.HIGHEST
    x = jnp.transpose(feat, (1, 0, 2)).astype(jnp.float32)   # (B, L, C)
    it = iter(params)
    nxt = lambda: next(it)

    def conv(x, w, b, dil):
        K, _, cout = w.shape
        L = x.shape[1]
        acc = jnp.zeros((x.shape[0], L, cout), jnp.float32)
        for k in range(K):
            shift = (K - 1 - k) * dil
            xs = jnp.pad(x, ((0, 0), (shift, 0), (0, 0)))[:, :L, :]
            acc = acc + jnp.einsum("blc,cd->bld", xs, w[k], precision=hp)
        return acc + b

    y = x
    for cfg in block_cfg:
        w1, b1, w2, b2 = nxt(), nxt(), nxt(), nxt()
        res_in = y
        h = act(conv(y, w1, b1, cfg["dilation"]))
        h = act(conv(h, w2, b2, cfg["dilation"]))
        if cfg["downsample"]:
            wd, bd = nxt(), nxt()
            res = jnp.einsum("blc,cd->bld", res_in, wd, precision=hp) + bd
        else:
            res = res_in
        y = act(h + res)

    emb_w, emb_b = nxt(), nxt()
    y = jnp.einsum("blc,cd->bld", y, emb_w, precision=hp) + emb_b
    y = y * math.sqrt(d_model)
    y = y[:, ::sample, :]
    ow, ob = nxt(), nxt()
    y = jnp.einsum("blc,cd->bld", y, ow, precision=hp) + ob
    return jnp.transpose(y, (1, 0, 2))


# ----------------------------------------------------------------------------
if __name__ == "__main__":
    # Small shapes consistent with the module's forward contract.
    L, B = 64, 8
    d_input, d_model, d_output = 6, 32, 16
    num_channels = [32, 32]
    kernel_size = 3
    sample = 1
    activation = "ReLU"

    key = jax.random.PRNGKey(0)
    k_feat, k_par = jax.random.split(key)
    feat = jax.random.normal(k_feat, (L, B, d_input), jnp.float32)

    params, block_cfg = init_params(k_par, d_input, d_model, num_channels,
                                    kernel_size, d_output)

    out = my_tcn_encoder_forward(
        feat, params, block_cfg, kernel_size=kernel_size, sample=sample,
        d_model=d_model, d_output=d_output, activation=activation)
    out = jax.block_until_ready(out)

    ref = reference_forward(
        feat, params, block_cfg, kernel_size=kernel_size, sample=sample,
        d_model=d_model, activation=activation)
    ref = jax.block_until_ready(ref)

    l_out = -(-L // sample)
    assert out.shape == (l_out, B, d_output), out.shape
    # bf16 matmul operands vs f32/HIGHEST reference: check scaled max error.
    rel_err = float(jnp.max(jnp.abs(out - ref)) / (jnp.max(jnp.abs(ref)) + 1e-8))
    assert rel_err < 3e-2, rel_err

    print("KERNEL_OK")
</pallas_src>

<mosaic_0001>
module attributes {stable_mosaic.version = 11 : i64} {
  func.func @kernel(%arg0: i32, %arg1: memref<8x64x6xf32, #tpu.memory_space<vmem>>, %arg2: memref<3x6x64xbf16, #tpu.memory_space<vmem>>, %arg3: memref<1x64xf32, #tpu.memory_space<vmem>>, %arg4: memref<3x32x32xbf16, #tpu.memory_space<vmem>>, %arg5: memref<1x32xf32, #tpu.memory_space<vmem>>, %arg6: memref<3x32x32xbf16, #tpu.memory_space<vmem>>, %arg7: memref<1x32xf32, #tpu.memory_space<vmem>>, %arg8: memref<3x32x32xbf16, #tpu.memory_space<vmem>>, %arg9: memref<1x32xf32, #tpu.memory_space<vmem>>, %arg10: memref<32x128xbf16, #tpu.memory_space<vmem>>, %arg11: memref<1x128xf32, #tpu.memory_space<vmem>>, %arg12: memref<8x64x128xf32, #tpu.memory_space<vmem>>) attributes {dimension_semantics = [#tpu.dimension_semantics<parallel>], iteration_bounds = array<i64: 1>, scalar_prefetch = 0 : i64, scratch_operands = 0 : i64, tpu.core_type = #tpu.core_type<tc>, window_params = [{transform_indices = @transform_0, window_bounds = array<i64: 8, 64, 6>}, {pipeline_mode = #tpu.pipeline_mode<synchronous>, transform_indices = @transform_1, window_bounds = array<i64: 3, 6, 64>}, {pipeline_mode = #tpu.pipeline_mode<synchronous>, transform_indices = @transform_2, window_bounds = array<i64: 1, 64>}, {pipeline_mode = #tpu.pipeline_mode<synchronous>, transform_indices = @transform_3, window_bounds = array<i64: 3, 32, 32>}, {pipeline_mode = #tpu.pipeline_mode<synchronous>, transform_indices = @transform_4, window_bounds = array<i64: 1, 32>}, {pipeline_mode = #tpu.pipeline_mode<synchronous>, transform_indices = @transform_5, window_bounds = array<i64: 3, 32, 32>}, {pipeline_mode = #tpu.pipeline_mode<synchronous>, transform_indices = @transform_6, window_bounds = array<i64: 1, 32>}, {pipeline_mode = #tpu.pipeline_mode<synchronous>, transform_indices = @transform_7, window_bounds = array<i64: 3, 32, 32>}, {pipeline_mode = #tpu.pipeline_mode<synchronous>, transform_indices = @transform_8, window_bounds = array<i64: 1, 32>}, {pipeline_mode = #tpu.pipeline_mode<synchronous>, transform_indices = @transform_9, window_bounds = array<i64: 32, 128>}, {pipeline_mode = #tpu.pipeline_mode<synchronous>, transform_indices = @transform_10, window_bounds = array<i64: 1, 128>}, {transform_indices = @transform_11, window_bounds = array<i64: 8, 64, 128>}]} {
    %0 = tpu.iota {dimensions = array<i32: 0>} : vector<512x32xi32>
    %c64_i32 = arith.constant 64 : i32
    %c0_i32 = arith.constant 0 : i32
    %1 = arith.cmpi eq, %c64_i32, %c0_i32 : i32
    %c1_i32 = arith.constant 1 : i32
    %2 = arith.select %1, %c1_i32, %c64_i32 : i32
    %3 = vector.broadcast %2 : i32 to vector<512x32xi32>
    %4 = arith.remsi %0, %3 : vector<512x32xi32>
    %c0_i32_0 = arith.constant 0 : i32
    %5 = vector.broadcast %c0_i32_0 : i32 to vector<512x32xi32>
    %6 = arith.cmpi ne, %4, %5 : vector<512x32xi32>
    %c0_i32_1 = arith.constant 0 : i32
    %7 = vector.broadcast %c0_i32_1 : i32 to vector<512x32xi32>
    %8 = arith.cmpi slt, %4, %7 : vector<512x32xi32>
    %c0_i32_2 = arith.constant 0 : i32
    %9 = arith.cmpi slt, %2, %c0_i32_2 : i32
    %10 = vector.broadcast %9 : i1 to vector<512x32xi1>
    %11 = vector.broadcast %10 : vector<512x32xi1> to vector<512x32xi1>
    %12 = arith.xori %8, %11 : vector<512x32xi1>
    %13 = arith.andi %12, %6 : vector<512x32xi1>
    %14 = vector.broadcast %2 : i32 to vector<512x32xi32>
    %15 = arith.addi %4, %14 : vector<512x32xi32>
    %16 = arith.select %13, %15, %4 : vector<512x32xi1>, vector<512x32xi32>
    %c1_i32_3 = arith.constant 1 : i32
    %17 = vector.broadcast %c1_i32_3 : i32 to vector<512x32xi32>
    %18 = arith.cmpi sge, %16, %17 : vector<512x32xi32>
    %19 = arith.extui %18 : vector<512x32xi1> to vector<512x32xi32>
    %20 = arith.sitofp %19 : vector<512x32xi32> to vector<512x32xf32>
    %c2_i32 = arith.constant 2 : i32
    %21 = vector.broadcast %c2_i32 : i32 to vector<512x32xi32>
    %22 = arith.cmpi sge, %16, %21 : vector<512x32xi32>
    %23 = arith.extui %22 : vector<512x32xi1> to vector<512x32xi32>
    %24 = arith.sitofp %23 : vector<512x32xi32> to vector<512x32xf32>
    %c4_i32 = arith.constant 4 : i32
    %25 = vector.broadcast %c4_i32 : i32 to vector<512x32xi32>
    %26 = arith.cmpi sge, %16, %25 : vector<512x32xi32>
    %27 = arith.extui %26 : vector<512x32xi1> to vector<512x32xi32>
    %28 = arith.sitofp %27 : vector<512x32xi32> to vector<512x32xf32>
    %c0 = arith.constant 0 : index
    %c0_4 = arith.constant 0 : index
    %c0_5 = arith.constant 0 : index
    %29 = vector.load %arg1[%c0, %c0_4, %c0_5] : memref<8x64x6xf32, #tpu.memory_space<vmem>>, vector<8x64x6xf32>
    %30 = vector.shape_cast %29 : vector<8x64x6xf32> to vector<512x6xf32>
    %c2 = arith.constant 2 : index
    %c0_6 = arith.constant 0 : index
    %c0_7 = arith.constant 0 : index
    %31 = vector.load %arg2[%c2, %c0_6, %c0_7] : memref<3x6x64xbf16, #tpu.memory_space<vmem>>, vector<1x6x64xbf16>
    %32 = vector.shape_cast %31 : vector<1x6x64xbf16> to vector<6x64xbf16>
    %33 = arith.truncf %30 : vector<512x6xf32> to vector<512x6xbf16>
    %cst = arith.constant dense<0.000000e+00> : vector<512x64xf32>
    %34 = tpu.matmul %33, %32, %cst {dimension_numbers = #tpu.dot_dimension_numbers<[1], [0], [0], [1], [0, 0, 1, 1], [], []>} : vector<512x6xbf16>, vector<6x64xbf16>, vector<512x64xf32> -> vector<512x64xf32>
    %c0_8 = arith.constant 0 : index
    %c0_9 = arith.constant 0 : index
    %35 = vector.load %arg3[%c0_8, %c0_9] : memref<1x64xf32, #tpu.memory_space<vmem>>, vector<1x64xf32>
    %36 = vector.broadcast %35 : vector<1x64xf32> to vector<512x64xf32>
    %37 = arith.addf %34, %36 : vector<512x64xf32>
    %c2_i32_10 = arith.constant 2 : i32
    %38 = tpu.dynamic_rotate %30 by %c2_i32_10 dim 0 : vector<512x6xf32>, i32 -> vector<512x6xf32>
    %39 = vector.extract_strided_slice %24 {offsets = [0, 0], sizes = [512, 6], strides = [1, 1]} : vector<512x32xf32> to vector<512x6xf32>
    %40 = arith.mulf %38, %39 : vector<512x6xf32>
    %c0_11 = arith.constant 0 : index
    %c0_12 = arith.constant 0 : index
    %c0_13 = arith.constant 0 : index
    %41 = vector.load %arg2[%c0_11, %c0_12, %c0_13] : memref<3x6x64xbf16, #tpu.memory_space<vmem>>, vector<1x6x64xbf16>
    %42 = vector.shape_cast %41 : vector<1x6x64xbf16> to vector<6x64xbf16>
    %43 = arith.truncf %40 : vector<512x6xf32> to vector<512x6xbf16>
    %cst_14 = arith.constant dense<0.000000e+00> : vector<512x64xf32>
    %44 = tpu.matmul %43, %42, %cst_14 {dimension_numbers = #tpu.dot_dimension_numbers<[1], [0], [0], [1], [0, 0, 1, 1], [], []>} : vector<512x6xbf16>, vector<6x64xbf16>, vector<512x64xf32> -> vector<512x64xf32>
    %45 = arith.addf %37, %44 : vector<512x64xf32>
    %c1_i32_15 = arith.constant 1 : i32
    %46 = tpu.dynamic_rotate %30 by %c1_i32_15 dim 0 : vector<512x6xf32>, i32 -> vector<512x6xf32>
    %47 = vector.extract_strided_slice %20 {offsets = [0, 0], sizes = [512, 6], strides = [1, 1]} : vector<512x32xf32> to vector<512x6xf32>
    %48 = arith.mulf %46, %47 : vector<512x6xf32>
    %c1 = arith.constant 1 : index
    %c0_16 = arith.constant 0 : index
    %c0_17 = arith.constant 0 : index
    %49 = vector.load %arg2[%c1, %c0_16, %c0_17] : memref<3x6x64xbf16, #tpu.memory_space<vmem>>, vector<1x6x64xbf16>
    %50 = vector.shape_cast %49 : vector<1x6x64xbf16> to vector<6x64xbf16>
    %51 = arith.truncf %48 : vector<512x6xf32> to vector<512x6xbf16>
    %cst_18 = arith.constant dense<0.000000e+00> : vector<512x64xf32>
    %52 = tpu.matmul %51, %50, %cst_18 {dimension_numbers = #tpu.dot_dimension_numbers<[1], [0], [0], [1], [0, 0, 1, 1], [], []>} : vector<512x6xbf16>, vector<6x64xbf16>, vector<512x64xf32> -> vector<512x64xf32>
    %53 = arith.addf %45, %52 : vector<512x64xf32>
    %54 = vector.extract_strided_slice %53 {offsets = [0, 32], sizes = [512, 32], strides = [1, 1]} : vector<512x64xf32> to vector<512x32xf32>
    %55 = vector.extract_strided_slice %53 {offsets = [0, 0], sizes = [512, 32], strides = [1, 1]} : vector<512x64xf32> to vector<512x32xf32>
    %cst_19 = arith.constant 0.000000e+00 : f32
    %56 = vector.broadcast %cst_19 : f32 to vector<512x32xf32>
    %57 = arith.maximumf %55, %56 : vector<512x32xf32>
    %c2_20 = arith.constant 2 : index
    %c0_21 = arith.constant 0 : index
    %c0_22 = arith.constant 0 : index
    %58 = vector.load %arg4[%c2_20, %c0_21, %c0_22] : memref<3x32x32xbf16, #tpu.memory_space<vmem>>, vector<1x32x32xbf16>
    %59 = vector.shape_cast %58 : vector<1x32x32xbf16> to vector<32x32xbf16>
    %60 = arith.truncf %57 : vector<512x32xf32> to vector<512x32xbf16>
    %cst_23 = arith.constant dense<0.000000e+00> : vector<512x32xf32>
    %61 = tpu.matmul %60, %59, %cst_23 {dimension_numbers = #tpu.dot_dimension_numbers<[1], [0], [0], [1], [0, 0, 1, 1], [], []>} : vector<512x32xbf16>, vector<32x32xbf16>, vector<512x32xf32> -> vector<512x32xf32>
    %c0_24 = arith.constant 0 : index
    %c0_25 = arith.constant 0 : index
    %62 = vector.load %arg5[%c0_24, %c0_25] : memref<1x32xf32, #tpu.memory_space<vmem>>, vector<1x32xf32>
    %63 = vector.broadcast %62 : vector<1x32xf32> to vector<512x32xf32>
    %64 = arith.addf %61, %63 : vector<512x32xf32>
    %c2_i32_26 = arith.constant 2 : i32
    %65 = tpu.dynamic_rotate %57 by %c2_i32_26 dim 0 : vector<512x32xf32>, i32 -> vector<512x32xf32>
    %66 = arith.mulf %65, %24 : vector<512x32xf32>
    %c0_27 = arith.constant 0 : index
    %c0_28 = arith.constant 0 : index
    %c0_29 = arith.constant 0 : index
    %67 = vector.load %arg4[%c0_27, %c0_28, %c0_29] : memref<3x32x32xbf16, #tpu.memory_space<vmem>>, vector<1x32x32xbf16>
    %68 = vector.shape_cast %67 : vector<1x32x32xbf16> to vector<32x32xbf16>
    %69 = arith.truncf %66 : vector<512x32xf32> to vector<512x32xbf16>
    %cst_30 = arith.constant dense<0.000000e+00> : vector<512x32xf32>
    %70 = tpu.matmul %69, %68, %cst_30 {dimension_numbers = #tpu.dot_dimension_numbers<[1], [0], [0], [1], [0, 0, 1, 1], [], []>} : vector<512x32xbf16>, vector<32x32xbf16>, vector<512x32xf32> -> vector<512x32xf32>
    %71 = arith.addf %64, %70 : vector<512x32xf32>
    %c1_i32_31 = arith.constant 1 : i32
    %72 = tpu.dynamic_rotate %57 by %c1_i32_31 dim 0 : vector<512x32xf32>, i32 -> vector<512x32xf32>
    %73 = arith.mulf %72, %20 : vector<512x32xf32>
    %c1_32 = arith.constant 1 : index
    %c0_33 = arith.constant 0 : index
    %c0_34 = arith.constant 0 : index
    %74 = vector.load %arg4[%c1_32, %c0_33, %c0_34] : memref<3x32x32xbf16, #tpu.memory_space<vmem>>, vector<1x32x32xbf16>
    %75 = vector.shape_cast %74 : vector<1x32x32xbf16> to vector<32x32xbf16>
    %76 = arith.truncf %73 : vector<512x32xf32> to vector<512x32xbf16>
    %cst_35 = arith.constant dense<0.000000e+00> : vector<512x32xf32>
    %77 = tpu.matmul %76, %75, %cst_35 {dimension_numbers = #tpu.dot_dimension_numbers<[1], [0], [0], [1], [0, 0, 1, 1], [], []>} : vector<512x32xbf16>, vector<32x32xbf16>, vector<512x32xf32> -> vector<512x32xf32>
    %78 = arith.addf %71, %77 : vector<512x32xf32>
    %cst_36 = arith.constant 0.000000e+00 : f32
    %79 = vector.broadcast %cst_36 : f32 to vector<512x32xf32>
    %80 = arith.maximumf %78, %79 : vector<512x32xf32>
    %81 = arith.addf %80, %54 : vector<512x32xf32>
    %cst_37 = arith.constant 0.000000e+00 : f32
    %82 = vector.broadcast %cst_37 : f32 to vector<512x32xf32>
    %83 = arith.maximumf %81, %82 : vector<512x32xf32>
    %c2_38 = arith.constant 2 : index
    %c0_39 = arith.constant 0 : index
    %c0_40 = arith.constant 0 : index
    %84 = vector.load %arg6[%c2_38, %c0_39, %c0_40] : memref<3x32x32xbf16, #tpu.memory_space<vmem>>, vector<1x32x32xbf16>
    %85 = vector.shape_cast %84 : vector<1x32x32xbf16> to vector<32x32xbf16>
    %86 = arith.truncf %83 : vector<512x32xf32> to vector<512x32xbf16>
    %cst_41 = arith.constant dense<0.000000e+00> : vector<512x32xf32>
    %87 = tpu.matmul %86, %85, %cst_41 {dimension_numbers = #tpu.dot_dimension_numbers<[1], [0], [0], [1], [0, 0, 1, 1], [], []>} : vector<512x32xbf16>, vector<32x32xbf16>, vector<512x32xf32> -> vector<512x32xf32>
    %c0_42 = arith.constant 0 : index
    %c0_43 = arith.constant 0 : index
    %88 = vector.load %arg7[%c0_42, %c0_43] : memref<1x32xf32, #tpu.memory_space<vmem>>, vector<1x32xf32>
    %89 = vector.broadcast %88 : vector<1x32xf32> to vector<512x32xf32>
    %90 = arith.addf %87, %89 : vector<512x32xf32>
    %c4_i32_44 = arith.constant 4 : i32
    %91 = tpu.dynamic_rotate %83 by %c4_i32_44 dim 0 : vector<512x32xf32>, i32 -> vector<512x32xf32>
    %92 = arith.mulf %91, %28 : vector<512x32xf32>
    %c0_45 = arith.constant 0 : index
    %c0_46 = arith.constant 0 : index
    %c0_47 = arith.constant 0 : index
    %93 = vector.load %arg6[%c0_45, %c0_46, %c0_47] : memref<3x32x32xbf16, #tpu.memory_space<vmem>>, vector<1x32x32xbf16>
    %94 = vector.shape_cast %93 : vector<1x32x32xbf16> to vector<32x32xbf16>
    %95 = arith.truncf %92 : vector<512x32xf32> to vector<512x32xbf16>
    %cst_48 = arith.constant dense<0.000000e+00> : vector<512x32xf32>
    %96 = tpu.matmul %95, %94, %cst_48 {dimension_numbers = #tpu.dot_dimension_numbers<[1], [0], [0], [1], [0, 0, 1, 1], [], []>} : vector<512x32xbf16>, vector<32x32xbf16>, vector<512x32xf32> -> vector<512x32xf32>
    %97 = arith.addf %90, %96 : vector<512x32xf32>
    %c2_i32_49 = arith.constant 2 : i32
    %98 = tpu.dynamic_rotate %83 by %c2_i32_49 dim 0 : vector<512x32xf32>, i32 -> vector<512x32xf32>
    %99 = arith.mulf %98, %24 : vector<512x32xf32>
    %c1_50 = arith.constant 1 : index
    %c0_51 = arith.constant 0 : index
    %c0_52 = arith.constant 0 : index
    %100 = vector.load %arg6[%c1_50, %c0_51, %c0_52] : memref<3x32x32xbf16, #tpu.memory_space<vmem>>, vector<1x32x32xbf16>
    %101 = vector.shape_cast %100 : vector<1x32x32xbf16> to vector<32x32xbf16>
    %102 = arith.truncf %99 : vector<512x32xf32> to vector<512x32xbf16>
    %cst_53 = arith.constant dense<0.000000e+00> : vector<512x32xf32>
    %103 = tpu.matmul %102, %101, %cst_53 {dimension_numbers = #tpu.dot_dimension_numbers<[1], [0], [0], [1], [0, 0, 1, 1], [], []>} : vector<512x32xbf16>, vector<32x32xbf16>, vector<512x32xf32> -> vector<512x32xf32>
    %104 = arith.addf %97, %103 : vector<512x32xf32>
    %cst_54 = arith.constant 0.000000e+00 : f32
    %105 = vector.broadcast %cst_54 : f32 to vector<512x32xf32>
    %106 = arith.maximumf %104, %105 : vector<512x32xf32>
    %c2_55 = arith.constant 2 : index
    %c0_56 = arith.constant 0 : index
    %c0_57 = arith.constant 0 : index
    %107 = vector.load %arg8[%c2_55, %c0_56, %c0_57] : memref<3x32x32xbf16, #tpu.memory_space<vmem>>, vector<1x32x32xbf16>
    %108 = vector.shape_cast %107 : vector<1x32x32xbf16> to vector<32x32xbf16>
    %109 = arith.truncf %106 : vector<512x32xf32> to vector<512x32xbf16>
    %cst_58 = arith.constant dense<0.000000e+00> : vector<512x32xf32>
    %110 = tpu.matmul %109, %108, %cst_58 {dimension_numbers = #tpu.dot_dimension_numbers<[1], [0], [0], [1], [0, 0, 1, 1], [], []>} : vector<512x32xbf16>, vector<32x32xbf16>, vector<512x32xf32> -> vector<512x32xf32>
    %c0_59 = arith.constant 0 : index
    %c0_60 = arith.constant 0 : index
    %111 = vector.load %arg9[%c0_59, %c0_60] : memref<1x32xf32, #tpu.memory_space<vmem>>, vector<1x32xf32>
    %112 = vector.broadcast %111 : vector<1x32xf32> to vector<512x32xf32>
    %113 = arith.addf %110, %112 : vector<512x32xf32>
    %c4_i32_61 = arith.constant 4 : i32
    %114 = tpu.dynamic_rotate %106 by %c4_i32_61 dim 0 : vector<512x32xf32>, i32 -> vector<512x32xf32>
    %115 = arith.mulf %114, %28 : vector<512x32xf32>
    %c0_62 = arith.constant 0 : index
    %c0_63 = arith.constant 0 : index
    %c0_64 = arith.constant 0 : index
    %116 = vector.load %arg8[%c0_62, %c0_63, %c0_64] : memref<3x32x32xbf16, #tpu.memory_space<vmem>>, vector<1x32x32xbf16>
    %117 = vector.shape_cast %116 : vector<1x32x32xbf16> to vector<32x32xbf16>
    %118 = arith.truncf %115 : vector<512x32xf32> to vector<512x32xbf16>
    %cst_65 = arith.constant dense<0.000000e+00> : vector<512x32xf32>
    %119 = tpu.matmul %118, %117, %cst_65 {dimension_numbers = #tpu.dot_dimension_numbers<[1], [0], [0], [1], [0, 0, 1, 1], [], []>} : vector<512x32xbf16>, vector<32x32xbf16>, vector<512x32xf32> -> vector<512x32xf32>
    %120 = arith.addf %113, %119 : vector<512x32xf32>
    %c2_i32_66 = arith.constant 2 : i32
    %121 = tpu.dynamic_rotate %106 by %c2_i32_66 dim 0 : vector<512x32xf32>, i32 -> vector<512x32xf32>
    %122 = arith.mulf %121, %24 : vector<512x32xf32>
    %c1_67 = arith.constant 1 : index
    %c0_68 = arith.constant 0 : index
    %c0_69 = arith.constant 0 : index
    %123 = vector.load %arg8[%c1_67, %c0_68, %c0_69] : memref<3x32x32xbf16, #tpu.memory_space<vmem>>, vector<1x32x32xbf16>
    %124 = vector.shape_cast %123 : vector<1x32x32xbf16> to vector<32x32xbf16>
    %125 = arith.truncf %122 : vector<512x32xf32> to vector<512x32xbf16>
    %cst_70 = arith.constant dense<0.000000e+00> : vector<512x32xf32>
    %126 = tpu.matmul %125, %124, %cst_70 {dimension_numbers = #tpu.dot_dimension_numbers<[1], [0], [0], [1], [0, 0, 1, 1], [], []>} : vector<512x32xbf16>, vector<32x32xbf16>, vector<512x32xf32> -> vector<512x32xf32>
    %127 = arith.addf %120, %126 : vector<512x32xf32>
    %cst_71 = arith.constant 0.000000e+00 : f32
    %128 = vector.broadcast %cst_71 : f32 to vector<512x32xf32>
    %129 = arith.maximumf %127, %128 : vector<512x32xf32>
    %130 = arith.addf %129, %83 : vector<512x32xf32>
    %cst_72 = arith.constant 0.000000e+00 : f32
    %131 = vector.broadcast %cst_72 : f32 to vector<512x32xf32>
    %132 = arith.maximumf %130, %131 : vector<512x32xf32>
    %c0_73 = arith.constant 0 : index
    %c0_74 = arith.constant 0 : index
    %133 = vector.load %arg10[%c0_73, %c0_74] : memref<32x128xbf16, #tpu.memory_space<vmem>>, vector<32x128xbf16>
    %134 = arith.truncf %132 : vector<512x32xf32> to vector<512x32xbf16>
    %cst_75 = arith.constant dense<0.000000e+00> : vector<512x128xf32>
    %135 = tpu.matmul %134, %133, %cst_75 {dimension_numbers = #tpu.dot_dimension_numbers<[1], [0], [0], [1], [0, 0, 1, 1], [], []>} : vector<512x32xbf16>, vector<32x128xbf16>, vector<512x128xf32> -> vector<512x128xf32>
    %c0_76 = arith.constant 0 : index
    %c0_77 = arith.constant 0 : index
    %136 = vector.load %arg11[%c0_76, %c0_77] : memref<1x128xf32, #tpu.memory_space<vmem>>, vector<1x128xf32>
    %137 = vector.broadcast %136 : vector<1x128xf32> to vector<512x128xf32>
    %138 = arith.addf %135, %137 : vector<512x128xf32>
    %139 = vector.shape_cast %138 : vector<512x128xf32> to vector<8x64x128xf32>
    %c0_78 = arith.constant 0 : index
    %c0_79 = arith.constant 0 : index
    %c0_80 = arith.constant 0 : index
    %140 = vector.load %arg12[%c0_78, %c0_79, %c0_80] : memref<8x64x128xf32, #tpu.memory_space<vmem>>, vector<8x64x128xf32>
    tpu.vector_store %arg12[%c0_78, %c0_79, %c0_80], %139 {strides = array<i32>} : memref<8x64x128xf32, #tpu.memory_space<vmem>>, vector<8x64x128xf32>,
    return
  }
  func.func @transform_0(%arg0: i32) -> (i32, i32, i32) {
    %c0_i32 = arith.constant 0 : i32
    %c0_i32_0 = arith.constant 0 : i32
    %c0_i32_1 = arith.constant 0 : i32
    return %arg0, %c0_i32, %c0_i32_0 : i32, i32, i32
  }
  func.func @transform_1(%arg0: i32) -> (i32, i32, i32) {
    %c0_i32 = arith.constant 0 : i32
    %c0_i32_0 = arith.constant 0 : i32
    %c0_i32_1 = arith.constant 0 : i32
    %c0_i32_2 = arith.constant 0 : i32
    return %c0_i32, %c0_i32_0, %c0_i32_1 : i32, i32, i32
  }
  func.func @transform_2(%arg0: i32) -> (i32, i32) {
    %c0_i32 = arith.constant 0 : i32
    %c0_i32_0 = arith.constant 0 : i32
    %c0_i32_1 = arith.constant 0 : i32
    return %c0_i32, %c0_i32_0 : i32, i32
  }
  func.func @transform_3(%arg0: i32) -> (i32, i32, i32) {
    %c0_i32 = arith.constant 0 : i32
    %c0_i32_0 = arith.constant 0 : i32
    %c0_i32_1 = arith.constant 0 : i32
    %c0_i32_2 = arith.constant 0 : i32
    return %c0_i32, %c0_i32_0, %c0_i32_1 : i32, i32, i32
  }
  func.func @transform_4(%arg0: i32) -> (i32, i32) {
    %c0_i32 = arith.constant 0 : i32
    %c0_i32_0 = arith.constant 0 : i32
    %c0_i32_1 = arith.constant 0 : i32
    return %c0_i32, %c0_i32_0 : i32, i32
  }
  func.func @transform_5(%arg0: i32) -> (i32, i32, i32) {
    %c0_i32 = arith.constant 0 : i32
    %c0_i32_0 = arith.constant 0 : i32
    %c0_i32_1 = arith.constant 0 : i32
    %c0_i32_2 = arith.constant 0 : i32
    return %c0_i32, %c0_i32_0, %c0_i32_1 : i32, i32, i32
  }
  func.func @transform_6(%arg0: i32) -> (i32, i32) {
    %c0_i32 = arith.constant 0 : i32
    %c0_i32_0 = arith.constant 0 : i32
    %c0_i32_1 = arith.constant 0 : i32
    return %c0_i32, %c0_i32_0 : i32, i32
  }
  func.func @transform_7(%arg0: i32) -> (i32, i32, i32) {
    %c0_i32 = arith.constant 0 : i32
    %c0_i32_0 = arith.constant 0 : i32
    %c0_i32_1 = arith.constant 0 : i32
    %c0_i32_2 = arith.constant 0 : i32
    return %c0_i32, %c0_i32_0, %c0_i32_1 : i32, i32, i32
  }
  func.func @transform_8(%arg0: i32) -> (i32, i32) {
    %c0_i32 = arith.constant 0 : i32
    %c0_i32_0 = arith.constant 0 : i32
    %c0_i32_1 = arith.constant 0 : i32
    return %c0_i32, %c0_i32_0 : i32, i32
  }
  func.func @transform_9(%arg0: i32) -> (i32, i32) {
    %c0_i32 = arith.constant 0 : i32
    %c0_i32_0 = arith.constant 0 : i32
    %c0_i32_1 = arith.constant 0 : i32
    return %c0_i32, %c0_i32_0 : i32, i32
  }
  func.func @transform_10(%arg0: i32) -> (i32, i32) {
    %c0_i32 = arith.constant 0 : i32
    %c0_i32_0 = arith.constant 0 : i32
    %c0_i32_1 = arith.constant 0 : i32
    return %c0_i32, %c0_i32_0 : i32, i32
  }
  func.func @transform_11(%arg0: i32) -> (i32, i32, i32) {
    %c0_i32 = arith.constant 0 : i32
    %c0_i32_0 = arith.constant 0 : i32
    %c0_i32_1 = arith.constant 0 : i32
    return %arg0, %c0_i32, %c0_i32_0 : i32, i32, i32
  }
}

</mosaic_0001>

<llo_original>
// kernel: tpu_custom_call.1
$region0: #{tpu_custom_call.1}
  #allocation0 [shape = 'u32[]', space=smem, size = 0x4, offset = 0x4, fixed_abs, tag = 'smem constant byte address 0x4 - core index']
  #allocation1 [shape = 'u32[144,128]{1,0:T(1,128)}', space=vmem, size = 0x12000, scoped, tag = 'internal scratch']
  %s0 = inlined_call_operand.vmem [shape: f32[8,64,6], index: 0, kind: input, shape index: {}]
  %s1 = inlined_call_operand.vmem [shape: bf16[3,6,64], index: 1, kind: input, shape index: {}]
  %s2 = inlined_call_operand.vmem [shape: f32[1,64], index: 2, kind: input, shape index: {}]
  %s3 = inlined_call_operand.vmem [shape: bf16[3,32,32], index: 3, kind: input, shape index: {}]
  %s4 = inlined_call_operand.vmem [shape: f32[1,32], index: 4, kind: input, shape index: {}]
  %s5 = inlined_call_operand.vmem [shape: bf16[3,32,32], index: 5, kind: input, shape index: {}]
  %s6 = inlined_call_operand.vmem [shape: f32[1,32], index: 6, kind: input, shape index: {}]
  %s7 = inlined_call_operand.vmem [shape: bf16[3,32,32], index: 7, kind: input, shape index: {}]
  %s8 = inlined_call_operand.vmem [shape: f32[1,32], index: 8, kind: input, shape index: {}]
  %s9 = inlined_call_operand.vmem [shape: bf16[32,128], index: 9, kind: input, shape index: {}]
  %s10 = inlined_call_operand.vmem [shape: f32[1,128], index: 10, kind: input, shape index: {}]
  %s11 = inlined_call_operand.hbm [shape: f32[8,64,128], index: 11, kind: output, shape index: {}]
  %s12 = sld [smem:[#allocation0]]
  $region54: #{tpu_custom_call.1} parent=0
    _
  %s14 = ssub.s32 1, %s12
  %s15 = scalar_select 0, %s14, %s12
  $region1: #{tpu_custom_call.1} parent=0
    #allocation2 [shape = 'u8[262144]{0}', space=vmem, size = 0x40000, scoped, tag = 'output window, operand 0, single buffered']
    #allocation3 [shape = 's32[1]{0}', space=sflag, size = 0x4, scoped, tag = 'scoped memory for tpu_custom_call.1']
    %16 = vsyncpa [#allocation3], 0
    // Predicated region
    $region2: #{tpu_custom_call.1} parent=1 // pred_check
      _
    $region3: #{tpu_custom_call.1} parent=1 // pred_check_branch
      %18 = sbr.rel (0) target = $region5
    $region4: #{tpu_custom_call.1} parent=1 // pred_region
      _
    $region5: #{tpu_custom_call.1} parent=1 // pred_fallthru
      _
    // Predicated region
    $region6: #{tpu_custom_call.1} parent=1 // pred_check
      _
    $region7: #{tpu_custom_call.1} parent=1 // pred_check_branch
      %20 = sbr.rel (0) target = $region9
    $region8: #{tpu_custom_call.1} parent=1 // pred_region
      _
    $region9: #{tpu_custom_call.1} parent=1 // pred_fallthru
      _
    // Predicated region
    $region10: #{tpu_custom_call.1} parent=1 // pred_check
      _
    $region11: #{tpu_custom_call.1} parent=1 // pred_check_branch
      %22 = sbr.rel (0) target = $region13
    $region12: #{tpu_custom_call.1} parent=1 // pred_region
      _
    $region13: #{tpu_custom_call.1} parent=1 // pred_fallthru
      _
    // Predicated region
    $region14: #{tpu_custom_call.1} parent=1 // pred_check
      _
    $region15: #{tpu_custom_call.1} parent=1 // pred_check_branch
      %24 = sbr.rel (0) target = $region17
    $region16: #{tpu_custom_call.1} parent=1 // pred_region
      _
    $region17: #{tpu_custom_call.1} parent=1 // pred_fallthru
      _
    // Predicated region
    $region18: #{tpu_custom_call.1} parent=1 // pred_check
      _
    $region19: #{tpu_custom_call.1} parent=1 // pred_check_branch
      %26 = sbr.rel (0) target = $region21
    $region20: #{tpu_custom_call.1} parent=1 // pred_region
      _
    $region21: #{tpu_custom_call.1} parent=1 // pred_fallthru
      _
    // Predicated region
    $region22: #{tpu_custom_call.1} parent=1 // pred_check
      _
    $region23: #{tpu_custom_call.1} parent=1 // pred_check_branch
      %28 = sbr.rel (0) target = $region25
    $region24: #{tpu_custom_call.1} parent=1 // pred_region
      _
    $region25: #{tpu_custom_call.1} parent=1 // pred_fallthru
      _
    // Predicated region
    $region26: #{tpu_custom_call.1} parent=1 // pred_check
      _
    $region27: #{tpu_custom_call.1} parent=1 // pred_check_branch
      %30 = sbr.rel (0) target = $region29
    $region28: #{tpu_custom_call.1} parent=1 // pred_region
      _
    $region29: #{tpu_custom_call.1} parent=1 // pred_fallthru
      _
    // Predicated region
    $region30: #{tpu_custom_call.1} parent=1 // pred_check
      _
    $region31: #{tpu_custom_call.1} parent=1 // pred_check_branch
      %32 = sbr.rel (0) target = $region33
    $region32: #{tpu_custom_call.1} parent=1 // pred_region
      _
    $region33: #{tpu_custom_call.1} parent=1 // pred_fallthru
      _
    // Predicated region
    $region34: #{tpu_custom_call.1} parent=1 // pred_check
      _
    $region35: #{tpu_custom_call.1} parent=1 // pred_check_branch
      %34 = sbr.rel (0) target = $region37
    $region36: #{tpu_custom_call.1} parent=1 // pred_region
      _
    $region37: #{tpu_custom_call.1} parent=1 // pred_fallthru
      _
    // Predicated region
    $region38: #{tpu_custom_call.1} parent=1 // pred_check
      _
    $region39: #{tpu_custom_call.1} parent=1 // pred_check_branch
      %36 = sbr.rel (0) target = $region41
    $region40: #{tpu_custom_call.1} parent=1 // pred_region
      _
    $region41: #{tpu_custom_call.1} parent=1 // pred_fallthru
      _
    // Predicated region
    $region42: #{tpu_custom_call.1} parent=1 // pred_check
      _
    $region43: #{tpu_custom_call.1} parent=1 // pred_check_branch
      %38 = sbr.rel (0) target = $region45
    $region44: #{tpu_custom_call.1} parent=1 // pred_region
      _
    $region45: #{tpu_custom_call.1} parent=1 // pred_fallthru
      _
    %v40 = vlaneseq
    %v41 = vshrl.u32 %v40, 7
    %v42 = vadd.s32 %v41, 8
    %v43 = vadd.s32 %v41, 16
    %v44 = vadd.s32 %v41, 24
    %v45 = vadd.s32 %v41, 32
    %v46 = vadd.s32 %v41, 40
    %v47 = vadd.s32 %v41, 48
    %v48 = vadd.s32 %v41, 56
    %v49 = vadd.s32 %v41, 64
    %v50 = vadd.s32 %v41, 72
    %v51 = vadd.s32 %v41, 80
    %v52 = vadd.s32 %v41, 88
    %v53 = vadd.s32 %v41, 96
    %v54 = vadd.s32 %v41, 104
    %v55 = vadd.s32 %v41, 112
    %v56 = vadd.s32 %v41, 120
    %v57 = vadd.s32 %v41, 128
    %v58 = vadd.s32 %v41, 136
    %v59 = vadd.s32 %v41, 144
    %v60 = vadd.s32 %v41, 152
    %v61 = vadd.s32 %v41, 160
    %v62 = vadd.s32 %v41, 168
    %v63 = vadd.s32 %v41, 176
    %v64 = vadd.s32 %v41, 184
    %v65 = vadd.s32 %v41, 192
    %v66 = vadd.s32 %v41, 200
    %v67 = vadd.s32 %v41, 208
    %v68 = vadd.s32 %v41, 216
    %v69 = vadd.s32 %v41, 224
    %v70 = vadd.s32 %v41, 232
    %v71 = vadd.s32 %v41, 240
    %v72 = vadd.s32 %v41, 248
    %v73 = vadd.s32 %v41, 256
    %v74 = vadd.s32 %v41, 264
    %v75 = vadd.s32 %v41, 272
    %v76 = vadd.s32 %v41, 280
    %v77 = vadd.s32 %v41, 288
    %v78 = vadd.s32 %v41, 296
    %v79 = vadd.s32 %v41, 304
    %v80 = vadd.s32 %v41, 312
    %v81 = vadd.s32 %v41, 320
    %v82 = vadd.s32 %v41, 328
    %v83 = vadd.s32 %v41, 336
    %v84 = vadd.s32 %v41, 344
    %v85 = vadd.s32 %v41, 352
    %v86 = vadd.s32 %v41, 360
    %v87 = vadd.s32 %v41, 368
    %v88 = vadd.s32 %v41, 376
    %v89 = vadd.s32 %v41, 384
    %v90 = vadd.s32 %v41, 392
    %v91 = vadd.s32 %v41, 400
    %v92 = vadd.s32 %v41, 408
    %v93 = vadd.s32 %v41, 416
    %v94 = vadd.s32 %v41, 424
    %v95 = vadd.s32 %v41, 432
    %v96 = vadd.s32 %v41, 440
    %v97 = vadd.s32 %v41, 448
    %v98 = vadd.s32 %v41, 456
    %v99 = vadd.s32 %v41, 464
    %v100 = vadd.s32 %v41, 472
    %v101 = vadd.s32 %v41, 480
    %v102 = vadd.s32 %v41, 488
    %v103 = vadd.s32 %v41, 496
    %v104 = vadd.s32 %v41, 504
    %vm105 = vcmp.lt.s32.totalorder %v41, 0
    %v106 = vsub.s32 0, %v41
    %v107 = vsel %vm105, %v106, %v41
    %v108 = vshrl.u32 %v107, 6
    %v109 = vand.u32 %v107, 63
    %v110 = vsub.s32 0, %v109
    %v111 = vsel %vm105, %v110, %v109
    %vm112 = vcmp.lt.s32.totalorder %v42, 0
    %v113 = vsub.s32 0, %v42
    %v114 = vsel %vm112, %v113, %v42
    %v115 = vshrl.u32 %v114, 6
    %v116 = vand.u32 %v114, 63
    %v117 = vsub.s32 0, %v116
    %v118 = vsel %vm112, %v117, %v116
    %vm119 = vcmp.lt.s32.totalorder %v43, 0
    %v120 = vsub.s32 0, %v43
    %v121 = vsel %vm119, %v120, %v43
    %v122 = vshrl.u32 %v121, 6
    %v123 = vand.u32 %v121, 63
    %v124 = vsub.s32 0, %v123
    %v125 = vsel %vm119, %v124, %v123
    %vm126 = vcmp.lt.s32.totalorder %v44, 0
    %v127 = vsub.s32 0, %v44
    %v128 = vsel %vm126, %v127, %v44
    %v129 = vshrl.u32 %v128, 6
    %v130 = vand.u32 %v128, 63
    %v131 = vsub.s32 0, %v130
    %v132 = vsel %vm126, %v131, %v130
    %vm133 = vcmp.lt.s32.totalorder %v45, 0
    %v134 = vsub.s32 0, %v45
    %v135 = vsel %vm133, %v134, %v45
    %v136 = vshrl.u32 %v135, 6
    %v137 = vand.u32 %v135, 63
    %v138 = vsub.s32 0, %v137
    %v139 = vsel %vm133, %v138, %v137
    %vm140 = vcmp.lt.s32.totalorder %v46, 0
    %v141 = vsub.s32 0, %v46
    %v142 = vsel %vm140, %v141, %v46
    %v143 = vshrl.u32 %v142, 6
    %v144 = vand.u32 %v142, 63
    %v145 = vsub.s32 0, %v144
    %v146 = vsel %vm140, %v145, %v144
    %vm147 = vcmp.lt.s32.totalorder %v47, 0
    %v148 = vsub.s32 0, %v47
    %v149 = vsel %vm147, %v148, %v47
    %v150 = vshrl.u32 %v149, 6
    %v151 = vand.u32 %v149, 63
    %v152 = vsub.s32 0, %v151
    %v153 = vsel %vm147, %v152, %v151
    %vm154 = vcmp.lt.s32.totalorder %v48, 0
    %v155 = vsub.s32 0, %v48
    %v156 = vsel %vm154, %v155, %v48
    %v157 = vshrl.u32 %v156, 6
    %v158 = vand.u32 %v156, 63
    %v159 = vsub.s32 0, %v158
    %v160 = vsel %vm154, %v159, %v158
    %vm161 = vcmp.lt.s32.totalorder %v49, 0
    %v162 = vsub.s32 0, %v49
    %v163 = vsel %vm161, %v162, %v49
    %v164 = vshrl.u32 %v163, 6
    %v165 = vand.u32 %v163, 63
    %v166 = vsub.s32 0, %v165
    %v167 = vsel %vm161, %v166, %v165
    %vm168 = vcmp.lt.s32.totalorder %v50, 0
    %v169 = vsub.s32 0, %v50
    %v170 = vsel %vm168, %v169, %v50
    %v171 = vshrl.u32 %v170, 6
    %v172 = vand.u32 %v170, 63
    %v173 = vsub.s32 0, %v172
    %v174 = vsel %vm168, %v173, %v172
    %vm175 = vcmp.lt.s32.totalorder %v51, 0
    %v176 = vsub.s32 0, %v51
    %v177 = vsel %vm175, %v176, %v51
    %v178 = vshrl.u32 %v177, 6
    %v179 = vand.u32 %v177, 63
    %v180 = vsub.s32 0, %v179
    %v181 = vsel %vm175, %v180, %v179
    %vm182 = vcmp.lt.s32.totalorder %v52, 0
    %v183 = vsub.s32 0, %v52
    %v184 = vsel %vm182, %v183, %v52
    %v185 = vshrl.u32 %v184, 6
    %v186 = vand.u32 %v184, 63
    %v187 = vsub.s32 0, %v186
    %v188 = vsel %vm182, %v187, %v186
    %vm189 = vcmp.lt.s32.totalorder %v53, 0
    %v190 = vsub.s32 0, %v53
    %v191 = vsel %vm189, %v190, %v53
    %v192 = vshrl.u32 %v191, 6
    %v193 = vand.u32 %v191, 63
    %v194 = vsub.s32 0, %v193
    %v195 = vsel %vm189, %v194, %v193
    %vm196 = vcmp.lt.s32.totalorder %v54, 0
    %v197 = vsub.s32 0, %v54
    %v198 = vsel %vm196, %v197, %v54
    %v199 = vshrl.u32 %v198, 6
    %v200 = vand.u32 %v198, 63
    %v201 = vsub.s32 0, %v200
    %v202 = vsel %vm196, %v201, %v200
    %vm203 = vcmp.lt.s32.totalorder %v55, 0
    %v204 = vsub.s32 0, %v55
    %v205 = vsel %vm203, %v204, %v55
    %v206 = vshrl.u32 %v205, 6
    %v207 = vand.u32 %v205, 63
    %v208 = vsub.s32 0, %v207
    %v209 = vsel %vm203, %v208, %v207
    %vm210 = vcmp.lt.s32.totalorder %v56, 0
    %v211 = vsub.s32 0, %v56
    %v212 = vsel %vm210, %v211, %v56
    %v213 = vshrl.u32 %v212, 6
    %v214 = vand.u32 %v212, 63
    %v215 = vsub.s32 0, %v214
    %v216 = vsel %vm210, %v215, %v214
    %vm217 = vcmp.lt.s32.totalorder %v57, 0
    %v218 = vsub.s32 0, %v57
    %v219 = vsel %vm217, %v218, %v57
    %v220 = vshrl.u32 %v219, 6
    %v221 = vand.u32 %v219, 63
    %v222 = vsub.s32 0, %v221
    %v223 = vsel %vm217, %v222, %v221
    %vm224 = vcmp.lt.s32.totalorder %v58, 0
    %v225 = vsub.s32 0, %v58
    %v226 = vsel %vm224, %v225, %v58
    %v227 = vshrl.u32 %v226, 6
    %v228 = vand.u32 %v226, 63
    %v229 = vsub.s32 0, %v228
    %v230 = vsel %vm224, %v229, %v228
    %vm231 = vcmp.lt.s32.totalorder %v59, 0
    %v232 = vsub.s32 0, %v59
    %v233 = vsel %vm231, %v232, %v59
    %v234 = vshrl.u32 %v233, 6
    %v235 = vand.u32 %v233, 63
    %v236 = vsub.s32 0, %v235
    %v237 = vsel %vm231, %v236, %v235
    %vm238 = vcmp.lt.s32.totalorder %v60, 0
    %v239 = vsub.s32 0, %v60
    %v240 = vsel %vm238, %v239, %v60
    %v241 = vshrl.u32 %v240, 6
    %v242 = vand.u32 %v240, 63
    %v243 = vsub.s32 0, %v242
    %v244 = vsel %vm238, %v243, %v242
    %vm245 = vcmp.lt.s32.totalorder %v61, 0
    %v246 = vsub.s32 0, %v61
    %v247 = vsel %vm245, %v246, %v61
    %v248 = vshrl.u32 %v247, 6
    %v249 = vand.u32 %v247, 63
    %v250 = vsub.s32 0, %v249
    %v251 = vsel %vm245, %v250, %v249
    %vm252 = vcmp.lt.s32.totalorder %v62, 0
    %v253 = vsub.s32 0, %v62
    %v254 = vsel %vm252, %v253, %v62
    %v255 = vshrl.u32 %v254, 6
    %v256 = vand.u32 %v254, 63
    %v257 = vsub.s32 0, %v256
    %v258 = vsel %vm252, %v257, %v256
    %vm259 = vcmp.lt.s32.totalorder %v63, 0
    %v260 = vsub.s32 0, %v63
    %v261 = vsel %vm259, %v260, %v63
    %v262 = vshrl.u32 %v261, 6
    %v263 = vand.u32 %v261, 63
    %v264 = vsub.s32 0, %v263
    %v265 = vsel %vm259, %v264, %v263
    %vm266 = vcmp.lt.s32.totalorder %v64, 0
    %v267 = vsub.s32 0, %v64
    %v268 = vsel %vm266, %v267, %v64
    %v269 = vshrl.u32 %v268, 6
    %v270 = vand.u32 %v268, 63
    %v271 = vsub.s32 0, %v270
    %v272 = vsel %vm266, %v271, %v270
    %vm273 = vcmp.lt.s32.totalorder %v65, 0
    %v274 = vsub.s32 0, %v65
    %v275 = vsel %vm273, %v274, %v65
    %v276 = vshrl.u32 %v275, 6
    %v277 = vand.u32 %v275, 63
    %v278 = vsub.s32 0, %v277
    %v279 = vsel %vm273, %v278, %v277
    %vm280 = vcmp.lt.s32.totalorder %v66, 0
    %v281 = vsub.s32 0, %v66
    %v282 = vsel %vm280, %v281, %v66
    %v283 = vshrl.u32 %v282, 6
    %v284 = vand.u32 %v282, 63
    %v285 = vsub.s32 0, %v284
    %v286 = vsel %vm280, %v285, %v284
    %vm287 = vcmp.lt.s32.totalorder %v67, 0
    %v288 = vsub.s32 0, %v67
    %v289 = vsel %vm287, %v288, %v67
    %v290 = vshrl.u32 %v289, 6
    %v291 = vand.u32 %v289, 63
    %v292 = vsub.s32 0, %v291
    %v293 = vsel %vm287, %v292, %v291
    %vm294 = vcmp.lt.s32.totalorder %v68, 0
    %v295 = vsub.s32 0, %v68
    %v296 = vsel %vm294, %v295, %v68
    %v297 = vshrl.u32 %v296, 6
    %v298 = vand.u32 %v296, 63
    %v299 = vsub.s32 0, %v298
    %v300 = vsel %vm294, %v299, %v298
    %vm301 = vcmp.lt.s32.totalorder %v69, 0
    %v302 = vsub.s32 0, %v69
    %v303 = vsel %vm301, %v302, %v69
    %v304 = vshrl.u32 %v303, 6
    %v305 = vand.u32 %v303, 63
    %v306 = vsub.s32 0, %v305
    %v307 = vsel %vm301, %v306, %v305
    %vm308 = vcmp.lt.s32.totalorder %v70, 0
    %v309 = vsub.s32 0, %v70
    %v310 = vsel %vm308, %v309, %v70
    %v311 = vshrl.u32 %v310, 6
    %v312 = vand.u32 %v310, 63
    %v313 = vsub.s32 0, %v312
    %v314 = vsel %vm308, %v313, %v312
    %vm315 = vcmp.lt.s32.totalorder %v71, 0
    %v316 = vsub.s32 0, %v71
    %v317 = vsel %vm315, %v316, %v71
    %v318 = vshrl.u32 %v317, 6
    %v319 = vand.u32 %v317, 63
    %v320 = vsub.s32 0, %v319
    %v321 = vsel %vm315, %v320, %v319
    %vm322 = vcmp.lt.s32.totalorder %v72, 0
    %v323 = vsub.s32 0, %v72
    %v324 = vsel %vm322, %v323, %v72
    %v325 = vshrl.u32 %v324, 6
    %v326 = vand.u32 %v324, 63
    %v327 = vsub.s32 0, %v326
    %v328 = vsel %vm322, %v327, %v326
    %vm329 = vcmp.lt.s32.totalorder %v73, 0
    %v330 = vsub.s32 0, %v73
    %v331 = vsel %vm329, %v330, %v73
    %v332 = vshrl.u32 %v331, 6
    %v333 = vand.u32 %v331, 63
    %v334 = vsub.s32 0, %v333
    %v335 = vsel %vm329, %v334, %v333
    %vm336 = vcmp.lt.s32.totalorder %v74, 0
    %v337 = vsub.s32 0, %v74
    %v338 = vsel %vm336, %v337, %v74
    %v339 = vshrl.u32 %v338, 6
    %v340 = vand.u32 %v338, 63
    %v341 = vsub.s32 0, %v340
    %v342 = vsel %vm336, %v341, %v340
    %vm343 = vcmp.lt.s32.totalorder %v75, 0
    %v344 = vsub.s32 0, %v75
    %v345 = vsel %vm343, %v344, %v75
    %v346 = vshrl.u32 %v345, 6
    %v347 = vand.u32 %v345, 63
    %v348 = vsub.s32 0, %v347
    %v349 = vsel %vm343, %v348, %v347
    %vm350 = vcmp.lt.s32.totalorder %v76, 0
    %v351 = vsub.s32 0, %v76
    %v352 = vsel %vm350, %v351, %v76
    %v353 = vshrl.u32 %v352, 6
    %v354 = vand.u32 %v352, 63
    %v355 = vsub.s32 0, %v354
    %v356 = vsel %vm350, %v355, %v354
    %vm357 = vcmp.lt.s32.totalorder %v77, 0
    %v358 = vsub.s32 0, %v77
    %v359 = vsel %vm357, %v358, %v77
    %v360 = vshrl.u32 %v359, 6
    %v361 = vand.u32 %v359, 63
    %v362 = vsub.s32 0, %v361
    %v363 = vsel %vm357, %v362, %v361
    %vm364 = vcmp.lt.s32.totalorder %v78, 0
    %v365 = vsub.s32 0, %v78
    %v366 = vsel %vm364, %v365, %v78
    %v367 = vshrl.u32 %v366, 6
    %v368 = vand.u32 %v366, 63
    %v369 = vsub.s32 0, %v368
    %v370 = vsel %vm364, %v369, %v368
    %vm371 = vcmp.lt.s32.totalorder %v79, 0
    %v372 = vsub.s32 0, %v79
    %v373 = vsel %vm371, %v372, %v79
    %v374 = vshrl.u32 %v373, 6
    %v375 = vand.u32 %v373, 63
    %v376 = vsub.s32 0, %v375
    %v377 = vsel %vm371, %v376, %v375
    %vm378 = vcmp.lt.s32.totalorder %v80, 0
    %v379 = vsub.s32 0, %v80
    %v380 = vsel %vm378, %v379, %v80
    %v381 = vshrl.u32 %v380, 6
    %v382 = vand.u32 %v380, 63
    %v383 = vsub.s32 0, %v382
    %v384 = vsel %vm378, %v383, %v382
    %vm385 = vcmp.lt.s32.totalorder %v81, 0
    %v386 = vsub.s32 0, %v81
    %v387 = vsel %vm385, %v386, %v81
    %v388 = vshrl.u32 %v387, 6
    %v389 = vand.u32 %v387, 63
    %v390 = vsub.s32 0, %v389
    %v391 = vsel %vm385, %v390, %v389
    %vm392 = vcmp.lt.s32.totalorder %v82, 0
    %v393 = vsub.s32 0, %v82
    %v394 = vsel %vm392, %v393, %v82
    %v395 = vshrl.u32 %v394, 6
    %v396 = vand.u32 %v394, 63
    %v397 = vsub.s32 0, %v396
    %v398 = vsel %vm392, %v397, %v396
    %vm399 = vcmp.lt.s32.totalorder %v83, 0
    %v400 = vsub.s32 0, %v83
    %v401 = vsel %vm399, %v400, %v83
    %v402 = vshrl.u32 %v401, 6
    %v403 = vand.u32 %v401, 63
    %v404 = vsub.s32 0, %v403
    %v405 = vsel %vm399, %v404, %v403
    %vm406 = vcmp.lt.s32.totalorder %v84, 0
    %v407 = vsub.s32 0, %v84
    %v408 = vsel %vm406, %v407, %v84
    %v409 = vshrl.u32 %v408, 6
    %v410 = vand.u32 %v408, 63
    %v411 = vsub.s32 0, %v410
    %v412 = vsel %vm406, %v411, %v410
    %vm413 = vcmp.lt.s32.totalorder %v85, 0
    %v414 = vsub.s32 0, %v85
    %v415 = vsel %vm413, %v414, %v85
    %v416 = vshrl.u32 %v415, 6
    %v417 = vand.u32 %v415, 63
    %v418 = vsub.s32 0, %v417
    %v419 = vsel %vm413, %v418, %v417
    %vm420 = vcmp.lt.s32.totalorder %v86, 0
    %v421 = vsub.s32 0, %v86
    %v422 = vsel %vm420, %v421, %v86
    %v423 = vshrl.u32 %v422, 6
    %v424 = vand.u32 %v422, 63
    %v425 = vsub.s32 0, %v424
    %v426 = vsel %vm420, %v425, %v424
    %vm427 = vcmp.lt.s32.totalorder %v87, 0
    %v428 = vsub.s32 0, %v87
    %v429 = vsel %vm427, %v428, %v87
    %v430 = vshrl.u32 %v429, 6
    %v431 = vand.u32 %v429, 63
    %v432 = vsub.s32 0, %v431
    %v433 = vsel %vm427, %v432, %v431
    %vm434 = vcmp.lt.s32.totalorder %v88, 0
    %v435 = vsub.s32 0, %v88
    %v436 = vsel %vm434, %v435, %v88
    %v437 = vshrl.u32 %v436, 6
    %v438 = vand.u32 %v436, 63
    %v439 = vsub.s32 0, %v438
    %v440 = vsel %vm434, %v439, %v438
    %vm441 = vcmp.lt.s32.totalorder %v89, 0
    %v442 = vsub.s32 0, %v89
    %v443 = vsel %vm441, %v442, %v89
    %v444 = vshrl.u32 %v443, 6
    %v445 = vand.u32 %v443, 63
    %v446 = vsub.s32 0, %v445
    %v447 = vsel %vm441, %v446, %v445
    %vm448 = vcmp.lt.s32.totalorder %v90, 0
    %v449 = vsub.s32 0, %v90
    %v450 = vsel %vm448, %v449, %v90
    %v451 = vshrl.u32 %v450, 6
    %v452 = vand.u32 %v450, 63
    %v453 = vsub.s32 0, %v452
    %v454 = vsel %vm448, %v453, %v452
    %vm455 = vcmp.lt.s32.totalorder %v91, 0
    %v456 = vsub.s32 0, %v91
    %v457 = vsel %vm455, %v456, %v91
    %v458 = vshrl.u32 %v457, 6
    %v459 = vand.u32 %v457, 63
    %v460 = vsub.s32 0, %v459
    %v461 = vsel %vm455, %v460, %v459
    %vm462 = vcmp.lt.s32.totalorder %v92, 0
    %v463 = vsub.s32 0, %v92
    %v464 = vsel %vm462, %v463, %v92
    %v465 = vshrl.u32 %v464, 6
    %v466 = vand.u32 %v464, 63
    %v467 = vsub.s32 0, %v466
    %v468 = vsel %vm462, %v467, %v466
    %vm469 = vcmp.lt.s32.totalorder %v93, 0
    %v470 = vsub.s32 0, %v93
    %v471 = vsel %vm469, %v470, %v93
    %v472 = vshrl.u32 %v471, 6
    %v473 = vand.u32 %v471, 63
    %v474 = vsub.s32 0, %v473
    %v475 = vsel %vm469, %v474, %v473
    %vm476 = vcmp.lt.s32.totalorder %v94, 0
    %v477 = vsub.s32 0, %v94
    %v478 = vsel %vm476, %v477, %v94
    %v479 = vshrl.u32 %v478, 6
    %v480 = vand.u32 %v478, 63
    %v481 = vsub.s32 0, %v480
    %v482 = vsel %vm476, %v481, %v480
    %vm483 = vcmp.lt.s32.totalorder %v95, 0
    %v484 = vsub.s32 0, %v95
    %v485 = vsel %vm483, %v484, %v95
    %v486 = vshrl.u32 %v485, 6
    %v487 = vand.u32 %v485, 63
    %v488 = vsub.s32 0, %v487
    %v489 = vsel %vm483, %v488, %v487
    %vm490 = vcmp.lt.s32.totalorder %v96, 0
    %v491 = vsub.s32 0, %v96
    %v492 = vsel %vm490, %v491, %v96
    %v493 = vshrl.u32 %v492, 6
    %v494 = vand.u32 %v492, 63
    %v495 = vsub.s32 0, %v494
    %v496 = vsel %vm490, %v495, %v494
    %vm497 = vcmp.lt.s32.totalorder %v97, 0
    %v498 = vsub.s32 0, %v97
    %v499 = vsel %vm497, %v498, %v97
    %v500 = vshrl.u32 %v499, 6
    %v501 = vand.u32 %v499, 63
    %v502 = vsub.s32 0, %v501
    %v503 = vsel %vm497, %v502, %v501
    %vm504 = vcmp.lt.s32.totalorder %v98, 0
    %v505 = vsub.s32 0, %v98
    %v506 = vsel %vm504, %v505, %v98
    %v507 = vshrl.u32 %v506, 6
    %v508 = vand.u32 %v506, 63
    %v509 = vsub.s32 0, %v508
    %v510 = vsel %vm504, %v509, %v508
    %vm511 = vcmp.lt.s32.totalorder %v99, 0
    %v512 = vsub.s32 0, %v99
    %v513 = vsel %vm511, %v512, %v99
    %v514 = vshrl.u32 %v513, 6
    %v515 = vand.u32 %v513, 63
    %v516 = vsub.s32 0, %v515
    %v517 = vsel %vm511, %v516, %v515
    %vm518 = vcmp.lt.s32.totalorder %v100, 0
    %v519 = vsub.s32 0, %v100
    %v520 = vsel %vm518, %v519, %v100
    %v521 = vshrl.u32 %v520, 6
    %v522 = vand.u32 %v520, 63
    %v523 = vsub.s32 0, %v522
    %v524 = vsel %vm518, %v523, %v522
    %vm525 = vcmp.lt.s32.totalorder %v101, 0
    %v526 = vsub.s32 0, %v101
    %v527 = vsel %vm525, %v526, %v101
    %v528 = vshrl.u32 %v527, 6
    %v529 = vand.u32 %v527, 63
    %v530 = vsub.s32 0, %v529
    %v531 = vsel %vm525, %v530, %v529
    %vm532 = vcmp.lt.s32.totalorder %v102, 0
    %v533 = vsub.s32 0, %v102
    %v534 = vsel %vm532, %v533, %v102
    %v535 = vshrl.u32 %v534, 6
    %v536 = vand.u32 %v534, 63
    %v537 = vsub.s32 0, %v536
    %v538 = vsel %vm532, %v537, %v536
    %vm539 = vcmp.lt.s32.totalorder %v103, 0
    %v540 = vsub.s32 0, %v103
    %v541 = vsel %vm539, %v540, %v103
    %v542 = vshrl.u32 %v541, 6
    %v543 = vand.u32 %v541, 63
    %v544 = vsub.s32 0, %v543
    %v545 = vsel %vm539, %v544, %v543
    %vm546 = vcmp.lt.s32.totalorder %v104, 0
    %v547 = vsub.s32 0, %v104
    %v548 = vsel %vm546, %v547, %v104
    %v549 = vshrl.u32 %v548, 6
    %v550 = vand.u32 %v548, 63
    %v551 = vsub.s32 0, %v550
    %v552 = vsel %vm546, %v551, %v550
    %vm553 = vcmp.ne.s32.totalorder %v111, 0
    %vm554 = vcmp.ne.s32.totalorder %v118, 0
    %vm555 = vcmp.ne.s32.totalorder %v125, 0
    %vm556 = vcmp.ne.s32.totalorder %v132, 0
    %vm557 = vcmp.ne.s32.totalorder %v139, 0
    %vm558 = vcmp.ne.s32.totalorder %v146, 0
    %vm559 = vcmp.ne.s32.totalorder %v153, 0
    %vm560 = vcmp.ne.s32.totalorder %v160, 0
    %vm561 = vcmp.ne.s32.totalorder %v167, 0
    %vm562 = vcmp.ne.s32.totalorder %v174, 0
    %vm563 = vcmp.ne.s32.totalorder %v181, 0
    %vm564 = vcmp.ne.s32.totalorder %v188, 0
    %vm565 = vcmp.ne.s32.totalorder %v195, 0
    %vm566 = vcmp.ne.s32.totalorder %v202, 0
    %vm567 = vcmp.ne.s32.totalorder %v209, 0
    %vm568 = vcmp.ne.s32.totalorder %v216, 0
    %vm569 = vcmp.ne.s32.totalorder %v223, 0
    %vm570 = vcmp.ne.s32.totalorder %v230, 0
    %vm571 = vcmp.ne.s32.totalorder %v237, 0
    %vm572 = vcmp.ne.s32.totalorder %v244, 0
    %vm573 = vcmp.ne.s32.totalorder %v251, 0
    %vm574 = vcmp.ne.s32.totalorder %v258, 0
    %vm575 = vcmp.ne.s32.totalorder %v265, 0
    %vm576 = vcmp.ne.s32.totalorder %v272, 0
    %vm577 = vcmp.ne.s32.totalorder %v279, 0
    %vm578 = vcmp.ne.s32.totalorder %v286, 0
    %vm579 = vcmp.ne.s32.totalorder %v293, 0
    %vm580 = vcmp.ne.s32.totalorder %v300, 0
    %vm581 = vcmp.ne.s32.totalorder %v307, 0
    %vm582 = vcmp.ne.s32.totalorder %v314, 0
    %vm583 = vcmp.ne.s32.totalorder %v321, 0
    %vm584 = vcmp.ne.s32.totalorder %v328, 0
    %vm585 = vcmp.ne.s32.totalorder %v335, 0
    %vm586 = vcmp.ne.s32.totalorder %v342, 0
    %vm587 = vcmp.ne.s32.totalorder %v349, 0
    %vm588 = vcmp.ne.s32.totalorder %v356, 0
    %vm589 = vcmp.ne.s32.totalorder %v363, 0
    %vm590 = vcmp.ne.s32.totalorder %v370, 0
    %vm591 = vcmp.ne.s32.totalorder %v377, 0
    %vm592 = vcmp.ne.s32.totalorder %v384, 0
    %vm593 = vcmp.ne.s32.totalorder %v391, 0
    %vm594 = vcmp.ne.s32.totalorder %v398, 0
    %vm595 = vcmp.ne.s32.totalorder %v405, 0
    %vm596 = vcmp.ne.s32.totalorder %v412, 0
    %vm597 = vcmp.ne.s32.totalorder %v419, 0
    %vm598 = vcmp.ne.s32.totalorder %v426, 0
    %vm599 = vcmp.ne.s32.totalorder %v433, 0
    %vm600 = vcmp.ne.s32.totalorder %v440, 0
    %vm601 = vcmp.ne.s32.totalorder %v447, 0
    %vm602 = vcmp.ne.s32.totalorder %v454, 0
    %vm603 = vcmp.ne.s32.totalorder %v461, 0
    %vm604 = vcmp.ne.s32.totalorder %v468, 0
    %vm605 = vcmp.ne.s32.totalorder %v475, 0
    %vm606 = vcmp.ne.s32.totalorder %v482, 0
    %vm607 = vcmp.ne.s32.totalorder %v489, 0
    %vm608 = vcmp.ne.s32.totalorder %v496, 0
    %vm609 = vcmp.ne.s32.totalorder %v503, 0
    %vm610 = vcmp.ne.s32.totalorder %v510, 0
    %vm611 = vcmp.ne.s32.totalorder %v517, 0
    %vm612 = vcmp.ne.s32.totalorder %v524, 0
    %vm613 = vcmp.ne.s32.totalorder %v531, 0
    %vm614 = vcmp.ne.s32.totalorder %v538, 0
    %vm615 = vcmp.ne.s32.totalorder %v545, 0
    %vm616 = vcmp.ne.s32.totalorder %v552, 0
    %vm617 = vcmp.lt.s32.totalorder %v111, 0
    %vm618 = vcmp.lt.s32.totalorder %v118, 0
    %vm619 = vcmp.lt.s32.totalorder %v125, 0
    %vm620 = vcmp.lt.s32.totalorder %v132, 0
    %vm621 = vcmp.lt.s32.totalorder %v139, 0
    %vm622 = vcmp.lt.s32.totalorder %v146, 0
    %vm623 = vcmp.lt.s32.totalorder %v153, 0
    %vm624 = vcmp.lt.s32.totalorder %v160, 0
    %vm625 = vcmp.lt.s32.totalorder %v167, 0
    %vm626 = vcmp.lt.s32.totalorder %v174, 0
    %vm627 = vcmp.lt.s32.totalorder %v181, 0
    %vm628 = vcmp.lt.s32.totalorder %v188, 0
    %vm629 = vcmp.lt.s32.totalorder %v195, 0
    %vm630 = vcmp.lt.s32.totalorder %v202, 0
    %vm631 = vcmp.lt.s32.totalorder %v209, 0
    %vm632 = vcmp.lt.s32.totalorder %v216, 0
    %vm633 = vcmp.lt.s32.totalorder %v223, 0
    %vm634 = vcmp.lt.s32.totalorder %v230, 0
    %vm635 = vcmp.lt.s32.totalorder %v237, 0
    %vm636 = vcmp.lt.s32.totalorder %v244, 0
    %vm637 = vcmp.lt.s32.totalorder %v251, 0
    %vm638 = vcmp.lt.s32.totalorder %v258, 0
    %vm639 = vcmp.lt.s32.totalorder %v265, 0
    %vm640 = vcmp.lt.s32.totalorder %v272, 0
    %vm641 = vcmp.lt.s32.totalorder %v279, 0
    %vm642 = vcmp.lt.s32.totalorder %v286, 0
    %vm643 = vcmp.lt.s32.totalorder %v293, 0
    %vm644 = vcmp.lt.s32.totalorder %v300, 0
    %vm645 = vcmp.lt.s32.totalorder %v307, 0
    %vm646 = vcmp.lt.s32.totalorder %v314, 0
    %vm647 = vcmp.lt.s32.totalorder %v321, 0
    %vm648 = vcmp.lt.s32.totalorder %v328, 0
    %vm649 = vcmp.lt.s32.totalorder %v335, 0
    %vm650 = vcmp.lt.s32.totalorder %v342, 0
    %vm651 = vcmp.lt.s32.totalorder %v349, 0
    %vm652 = vcmp.lt.s32.totalorder %v356, 0
    %vm653 = vcmp.lt.s32.totalorder %v363, 0
    %vm654 = vcmp.lt.s32.totalorder %v370, 0
    %vm655 = vcmp.lt.s32.totalorder %v377, 0
    %vm656 = vcmp.lt.s32.totalorder %v384, 0
    %vm657 = vcmp.lt.s32.totalorder %v391, 0
    %vm658 = vcmp.lt.s32.totalorder %v398, 0
    %vm659 = vcmp.lt.s32.totalorder %v405, 0
    %vm660 = vcmp.lt.s32.totalorder %v412, 0
    %vm661 = vcmp.lt.s32.totalorder %v419, 0
    %vm662 = vcmp.lt.s32.totalorder %v426, 0
    %vm663 = vcmp.lt.s32.totalorder %v433, 0
    %vm664 = vcmp.lt.s32.totalorder %v440, 0
    %vm665 = vcmp.lt.s32.totalorder %v447, 0
    %vm666 = vcmp.lt.s32.totalorder %v454, 0
    %vm667 = vcmp.lt.s32.totalorder %v461, 0
    %vm668 = vcmp.lt.s32.totalorder %v468, 0
    %vm669 = vcmp.lt.s32.totalorder %v475, 0
    %vm670 = vcmp.lt.s32.totalorder %v482, 0
    %vm671 = vcmp.lt.s32.totalorder %v489, 0
    %vm672 = vcmp.lt.s32.totalorder %v496, 0
    %vm673 = vcmp.lt.s32.totalorder %v503, 0
    %vm674 = vcmp.lt.s32.totalorder %v510, 0
    %vm675 = vcmp.lt.s32.totalorder %v517, 0
    %vm676 = vcmp.lt.s32.totalorder %v524, 0
    %vm677 = vcmp.lt.s32.totalorder %v531, 0
    %vm678 = vcmp.lt.s32.totalorder %v538, 0
    %vm679 = vcmp.lt.s32.totalorder %v545, 0
    %vm680 = vcmp.lt.s32.totalorder %v552, 0
    %vm681 = vmand %vm617, %vm553
    %vm682 = vmand %vm618, %vm554
    %vm683 = vmand %vm619, %vm555
    %vm684 = vmand %vm620, %vm556
    %vm685 = vmand %vm621, %vm557
    %vm686 = vmand %vm622, %vm558
    %vm687 = vmand %vm623, %vm559
    %vm688 = vmand %vm624, %vm560
    %vm689 = vmand %vm625, %vm561
    %vm690 = vmand %vm626, %vm562
    %vm691 = vmand %vm627, %vm563
    %vm692 = vmand %vm628, %vm564
    %vm693 = vmand %vm629, %vm565
    %vm694 = vmand %vm630, %vm566
    %vm695 = vmand %vm631, %vm567
    %vm696 = vmand %vm632, %vm568
    %vm697 = vmand %vm633, %vm569
    %vm698 = vmand %vm634, %vm570
    %vm699 = vmand %vm635, %vm571
    %vm700 = vmand %vm636, %vm572
    %vm701 = vmand %vm637, %vm573
    %vm702 = vmand %vm638, %vm574
    %vm703 = vmand %vm639, %vm575
    %vm704 = vmand %vm640, %vm576
    %vm705 = vmand %vm641, %vm577
    %vm706 = vmand %vm642, %vm578
    %vm707 = vmand %vm643, %vm579
    %vm708 = vmand %vm644, %vm580
    %vm709 = vmand %vm645, %vm581
    %vm710 = vmand %vm646, %vm582
    %vm711 = vmand %vm647, %vm583
    %vm712 = vmand %vm648, %vm584
    %vm713 = vmand %vm649, %vm585
    %vm714 = vmand %vm650, %vm586
    %vm715 = vmand %vm651, %vm587
    %vm716 = vmand %vm652, %vm588
    %vm717 = vmand %vm653, %vm589
    %vm718 = vmand %vm654, %vm590
    %vm719 = vmand %vm655, %vm591
    %vm720 = vmand %vm656, %vm592
    %vm721 = vmand %vm657, %vm593
    %vm722 = vmand %vm658, %vm594
    %vm723 = vmand %vm659, %vm595
    %vm724 = vmand %vm660, %vm596
    %vm725 = vmand %vm661, %vm597
    %vm726 = vmand %vm662, %vm598
    %vm727 = vmand %vm663, %vm599
    %vm728 = vmand %vm664, %vm600
    %vm729 = vmand %vm665, %vm601
    %vm730 = vmand %vm666, %vm602
    %vm731 = vmand %vm667, %vm603
    %vm732 = vmand %vm668, %vm604
    %vm733 = vmand %vm669, %vm605
    %vm734 = vmand %vm670, %vm606
    %vm735 = vmand %vm671, %vm607
    %vm736 = vmand %vm672, %vm608
    %vm737 = vmand %vm673, %vm609
    %vm738 = vmand %vm674, %vm610
    %vm739 = vmand %vm675, %vm611
    %vm740 = vmand %vm676, %vm612
    %vm741 = vmand %vm677, %vm613
    %vm742 = vmand %vm678, %vm614
    %vm743 = vmand %vm679, %vm615
    %vm744 = vmand %vm680, %vm616
    %v745 = vadd.s32 %v111, 64
    %v746 = vadd.s32 %v118, 64
    %v747 = vadd.s32 %v125, 64
    %v748 = vadd.s32 %v132, 64
    %v749 = vadd.s32 %v139, 64
    %v750 = vadd.s32 %v146, 64
    %v751 = vadd.s32 %v153, 64
    %v752 = vadd.s32 %v160, 64
    %v753 = vadd.s32 %v167, 64
    %v754 = vadd.s32 %v174, 64
    %v755 = vadd.s32 %v181, 64
    %v756 = vadd.s32 %v188, 64
    %v757 = vadd.s32 %v195, 64
    %v758 = vadd.s32 %v202, 64
    %v759 = vadd.s32 %v209, 64
    %v760 = vadd.s32 %v216, 64
    %v761 = vadd.s32 %v223, 64
    %v762 = vadd.s32 %v230, 64
    %v763 = vadd.s32 %v237, 64
    %v764 = vadd.s32 %v244, 64
    %v765 = vadd.s32 %v251, 64
    %v766 = vadd.s32 %v258, 64
    %v767 = vadd.s32 %v265, 64
    %v768 = vadd.s32 %v272, 64
    %v769 = vadd.s32 %v279, 64
    %v770 = vadd.s32 %v286, 64
    %v771 = vadd.s32 %v293, 64
    %v772 = vadd.s32 %v300, 64
    %v773 = vadd.s32 %v307, 64
    %v774 = vadd.s32 %v314, 64
    %v775 = vadd.s32 %v321, 64
    %v776 = vadd.s32 %v328, 64
    %v777 = vadd.s32 %v335, 64
    %v778 = vadd.s32 %v342, 64
    %v779 = vadd.s32 %v349, 64
    %v780 = vadd.s32 %v356, 64
    %v781 = vadd.s32 %v363, 64
    %v782 = vadd.s32 %v370, 64
    %v783 = vadd.s32 %v377, 64
    %v784 = vadd.s32 %v384, 64
    %v785 = vadd.s32 %v391, 64
    %v786 = vadd.s32 %v398, 64
    %v787 = vadd.s32 %v405, 64
    %v788 = vadd.s32 %v412, 64
    %v789 = vadd.s32 %v419, 64
    %v790 = vadd.s32 %v426, 64
    %v791 = vadd.s32 %v433, 64
    %v792 = vadd.s32 %v440, 64
    %v793 = vadd.s32 %v447, 64
    %v794 = vadd.s32 %v454, 64
    %v795 = vadd.s32 %v461, 64
    %v796 = vadd.s32 %v468, 64
    %v797 = vadd.s32 %v475, 64
    %v798 = vadd.s32 %v482, 64
    %v799 = vadd.s32 %v489, 64
    %v800 = vadd.s32 %v496, 64
    %v801 = vadd.s32 %v503, 64
    %v802 = vadd.s32 %v510, 64
    %v803 = vadd.s32 %v517, 64
    %v804 = vadd.s32 %v524, 64
    %v805 = vadd.s32 %v531, 64
    %v806 = vadd.s32 %v538, 64
    %v807 = vadd.s32 %v545, 64
    %v808 = vadd.s32 %v552, 64
    %v809 = vsel %vm681, %v745, %v111
    %v810 = vsel %vm682, %v746, %v118
    %v811 = vsel %vm683, %v747, %v125
    %v812 = vsel %vm684, %v748, %v132
    %v813 = vsel %vm685, %v749, %v139
    %v814 = vsel %vm686, %v750, %v146
    %v815 = vsel %vm687, %v751, %v153
    %v816 = vsel %vm688, %v752, %v160
    %v817 = vsel %vm689, %v753, %v167
    %v818 = vsel %vm690, %v754, %v174
    %v819 = vsel %vm691, %v755, %v181
    %v820 = vsel %vm692, %v756, %v188
    %v821 = vsel %vm693, %v757, %v195
    %v822 = vsel %vm694, %v758, %v202
    %v823 = vsel %vm695, %v759, %v209
    %v824 = vsel %vm696, %v760, %v216
    %v825 = vsel %vm697, %v761, %v223
    %v826 = vsel %vm698, %v762, %v230
    %v827 = vsel %vm699, %v763, %v237
    %v828 = vsel %vm700, %v764, %v244
    %v829 = vsel %vm701, %v765, %v251
    %v830 = vsel %vm702, %v766, %v258
    %v831 = vsel %vm703, %v767, %v265
    %v832 = vsel %vm704, %v768, %v272
    %v833 = vsel %vm705, %v769, %v279
    %v834 = vsel %vm706, %v770, %v286
    %v835 = vsel %vm707, %v771, %v293
    %v836 = vsel %vm708, %v772, %v300
    %v837 = vsel %vm709, %v773, %v307
    %v838 = vsel %vm710, %v774, %v314
    %v839 = vsel %vm711, %v775, %v321
    %v840 = vsel %vm712, %v776, %v328
    %v841 = vsel %vm713, %v777, %v335
    %v842 = vsel %vm714, %v778, %v342
    %v843 = vsel %vm715, %v779, %v349
    %v844 = vsel %vm716, %v780, %v356
    %v845 = vsel %vm717, %v781, %v363
    %v846 = vsel %vm718, %v782, %v370
    %v847 = vsel %vm719, %v783, %v377
    %v848 = vsel %vm720, %v784, %v384
    %v849 = vsel %vm721, %v785, %v391
    %v850 = vsel %vm722, %v786, %v398
    %v851 = vsel %vm723, %v787, %v405
    %v852 = vsel %vm724, %v788, %v412
    %v853 = vsel %vm725, %v789, %v419
    %v854 = vsel %vm726, %v790, %v426
    %v855 = vsel %vm727, %v791, %v433
    %v856 = vsel %vm728, %v792, %v440
    %v857 = vsel %vm729, %v793, %v447
    %v858 = vsel %vm730, %v794, %v454
    %v859 = vsel %vm731, %v795, %v461
    %v860 = vsel %vm732, %v796, %v468
    %v861 = vsel %vm733, %v797, %v475
    %v862 = vsel %vm734, %v798, %v482
    %v863 = vsel %vm735, %v799, %v489
    %v864 = vsel %vm736, %v800, %v496
    %v865 = vsel %vm737, %v801, %v503
    %v866 = vsel %vm738, %v802, %v510
    %v867 = vsel %vm739, %v803, %v517
    %v868 = vsel %vm740, %v804, %v524
    %v869 = vsel %vm741, %v805, %v531
    %v870 = vsel %vm742, %v806, %v538
    %v871 = vsel %vm743, %v807, %v545
    %v872 = vsel %vm744, %v808, %v552
    %vm873 = vcmp.ge.s32.totalorder %v809, 1
    %vm874 = vcmp.ge.s32.totalorder %v810, 1
    %vm875 = vcmp.ge.s32.totalorder %v811, 1
    %vm876 = vcmp.ge.s32.totalorder %v812, 1
    %vm877 = vcmp.ge.s32.totalorder %v813, 1
    %vm878 = vcmp.ge.s32.totalorder %v814, 1
    %vm879 = vcmp.ge.s32.totalorder %v815, 1
    %vm880 = vcmp.ge.s32.totalorder %v816, 1
    %vm881 = vcmp.ge.s32.totalorder %v817, 1
    %vm882 = vcmp.ge.s32.totalorder %v818, 1
    %vm883 = vcmp.ge.s32.totalorder %v819, 1
    %vm884 = vcmp.ge.s32.totalorder %v820, 1
    %vm885 = vcmp.ge.s32.totalorder %v821, 1
    %vm886 = vcmp.ge.s32.totalorder %v822, 1
    %vm887 = vcmp.ge.s32.totalorder %v823, 1
    %vm888 = vcmp.ge.s32.totalorder %v824, 1
    %vm889 = vcmp.ge.s32.totalorder %v825, 1
    %vm890 = vcmp.ge.s32.totalorder %v826, 1
    %vm891 = vcmp.ge.s32.totalorder %v827, 1
    %vm892 = vcmp.ge.s32.totalorder %v828, 1
    %vm893 = vcmp.ge.s32.totalorder %v829, 1
    %vm894 = vcmp.ge.s32.totalorder %v830, 1
    %vm895 = vcmp.ge.s32.totalorder %v831, 1
    %vm896 = vcmp.ge.s32.totalorder %v832, 1
    %vm897 = vcmp.ge.s32.totalorder %v833, 1
    %vm898 = vcmp.ge.s32.totalorder %v834, 1
    %vm899 = vcmp.ge.s32.totalorder %v835, 1
    %vm900 = vcmp.ge.s32.totalorder %v836, 1
    %vm901 = vcmp.ge.s32.totalorder %v837, 1
    %vm902 = vcmp.ge.s32.totalorder %v838, 1
    %vm903 = vcmp.ge.s32.totalorder %v839, 1
    %vm904 = vcmp.ge.s32.totalorder %v840, 1
    %vm905 = vcmp.ge.s32.totalorder %v841, 1
    %vm906 = vcmp.ge.s32.totalorder %v842, 1
    %vm907 = vcmp.ge.s32.totalorder %v843, 1
    %vm908 = vcmp.ge.s32.totalorder %v844, 1
    %vm909 = vcmp.ge.s32.totalorder %v845, 1
    %vm910 = vcmp.ge.s32.totalorder %v846, 1
    %vm911 = vcmp.ge.s32.totalorder %v847, 1
    %vm912 = vcmp.ge.s32.totalorder %v848, 1
    %vm913 = vcmp.ge.s32.totalorder %v849, 1
    %vm914 = vcmp.ge.s32.totalorder %v850, 1
    %vm915 = vcmp.ge.s32.totalorder %v851, 1
    %vm916 = vcmp.ge.s32.totalorder %v852, 1
    %vm917 = vcmp.ge.s32.totalorder %v853, 1
    %vm918 = vcmp.ge.s32.totalorder %v854, 1
    %vm919 = vcmp.ge.s32.totalorder %v855, 1
    %vm920 = vcmp.ge.s32.totalorder %v856, 1
    %vm921 = vcmp.ge.s32.totalorder %v857, 1
    %vm922 = vcmp.ge.s32.totalorder %v858, 1
    %vm923 = vcmp.ge.s32.totalorder %v859, 1
    %vm924 = vcmp.ge.s32.totalorder %v860, 1
    %vm925 = vcmp.ge.s32.totalorder %v861, 1
    %vm926 = vcmp.ge.s32.totalorder %v862, 1
    %vm927 = vcmp.ge.s32.totalorder %v863, 1
    %vm928 = vcmp.ge.s32.totalorder %v864, 1
    %vm929 = vcmp.ge.s32.totalorder %v865, 1
    %vm930 = vcmp.ge.s32.totalorder %v866, 1
    %vm931 = vcmp.ge.s32.totalorder %v867, 1
    %vm932 = vcmp.ge.s32.totalorder %v868, 1
    %vm933 = vcmp.ge.s32.totalorder %v869, 1
    %vm934 = vcmp.ge.s32.totalorder %v870, 1
    %vm935 = vcmp.ge.s32.totalorder %v871, 1
    %vm936 = vcmp.ge.s32.totalorder %v872, 1
    %v937 = vsel %vm873, 1, 0
    %v938 = vsel %vm874, 1, 0
    %v939 = vsel %vm875, 1, 0
    %v940 = vsel %vm876, 1, 0
    %v941 = vsel %vm877, 1, 0
    %v942 = vsel %vm878, 1, 0
    %v943 = vsel %vm879, 1, 0
    %v944 = vsel %vm880, 1, 0
    %v945 = vsel %vm881, 1, 0
    %v946 = vsel %vm882, 1, 0
    %v947 = vsel %vm883, 1, 0
    %v948 = vsel %vm884, 1, 0
    %v949 = vsel %vm885, 1, 0
    %v950 = vsel %vm886, 1, 0
    %v951 = vsel %vm887, 1, 0
    %v952 = vsel %vm888, 1, 0
    %v953 = vsel %vm889, 1, 0
    %v954 = vsel %vm890, 1, 0
    %v955 = vsel %vm891, 1, 0
    %v956 = vsel %vm892, 1, 0
    %v957 = vsel %vm893, 1, 0
    %v958 = vsel %vm894, 1, 0
    %v959 = vsel %vm895, 1, 0
    %v960 = vsel %vm896, 1, 0
    %v961 = vsel %vm897, 1, 0
    %v962 = vsel %vm898, 1, 0
    %v963 = vsel %vm899, 1, 0
    %v964 = vsel %vm900, 1, 0
    %v965 = vsel %vm901, 1, 0
    %v966 = vsel %vm902, 1, 0
    %v967 = vsel %vm903, 1, 0
    %v968 = vsel %vm904, 1, 0
    %v969 = vsel %vm905, 1, 0
    %v970 = vsel %vm906, 1, 0
    %v971 = vsel %vm907, 1, 0
    %v972 = vsel %vm908, 1, 0
    %v973 = vsel %vm909, 1, 0
    %v974 = vsel %vm910, 1, 0
    %v975 = vsel %vm911, 1, 0
    %v976 = vsel %vm912, 1, 0
    %v977 = vsel %vm913, 1, 0
    %v978 = vsel %vm914, 1, 0
    %v979 = vsel %vm915, 1, 0
    %v980 = vsel %vm916, 1, 0
    %v981 = vsel %vm917, 1, 0
    %v982 = vsel %vm918, 1, 0
    %v983 = vsel %vm919, 1, 0
    %v984 = vsel %vm920, 1, 0
    %v985 = vsel %vm921, 1, 0
    %v986 = vsel %vm922, 1, 0
    %v987 = vsel %vm923, 1, 0
    %v988 = vsel %vm924, 1, 0
    %v989 = vsel %vm925, 1, 0
    %v990 = vsel %vm926, 1, 0
    %v991 = vsel %vm927, 1, 0
    %v992 = vsel %vm928, 1, 0
    %v993 = vsel %vm929, 1, 0
    %v994 = vsel %vm930, 1, 0
    %v995 = vsel %vm931, 1, 0
    %v996 = vsel %vm932, 1, 0
    %v997 = vsel %vm933, 1, 0
    %v998 = vsel %vm934, 1, 0
    %v999 = vsel %vm935, 1, 0
    %v1000 = vsel %vm936, 1, 0
    %v1001 = vcvt.s32.f32 %v937
    %v1002 = vcvt.s32.f32 %v938
    %v1003 = vcvt.s32.f32 %v939
    %v1004 = vcvt.s32.f32 %v940
    %v1005 = vcvt.s32.f32 %v941
    %v1006 = vcvt.s32.f32 %v942
    %v1007 = vcvt.s32.f32 %v943
    %v1008 = vcvt.s32.f32 %v944
    %v1009 = vcvt.s32.f32 %v945
    %v1010 = vcvt.s32.f32 %v946
    %v1011 = vcvt.s32.f32 %v947
    %v1012 = vcvt.s32.f32 %v948
    %v1013 = vcvt.s32.f32 %v949
    %v1014 = vcvt.s32.f32 %v950
    %v1015 = vcvt.s32.f32 %v951
    %v1016 = vcvt.s32.f32 %v952
    %v1017 = vcvt.s32.f32 %v953
    %v1018 = vcvt.s32.f32 %v954
    %v1019 = vcvt.s32.f32 %v955
    %v1020 = vcvt.s32.f32 %v956
    %v1021 = vcvt.s32.f32 %v957
    %v1022 = vcvt.s32.f32 %v958
    %v1023 = vcvt.s32.f32 %v959
    %v1024 = vcvt.s32.f32 %v960
    %v1025 = vcvt.s32.f32 %v961
    %v1026 = vcvt.s32.f32 %v962
    %v1027 = vcvt.s32.f32 %v963
    %v1028 = vcvt.s32.f32 %v964
    %v1029 = vcvt.s32.f32 %v965
    %v1030 = vcvt.s32.f32 %v966
    %v1031 = vcvt.s32.f32 %v967
    %v1032 = vcvt.s32.f32 %v968
    %v1033 = vcvt.s32.f32 %v969
    %v1034 = vcvt.s32.f32 %v970
    %v1035 = vcvt.s32.f32 %v971
    %v1036 = vcvt.s32.f32 %v972
    %v1037 = vcvt.s32.f32 %v973
    %v1038 = vcvt.s32.f32 %v974
    %v1039 = vcvt.s32.f32 %v975
    %v1040 = vcvt.s32.f32 %v976
    %v1041 = vcvt.s32.f32 %v977
    %v1042 = vcvt.s32.f32 %v978
    %v1043 = vcvt.s32.f32 %v979
    %v1044 = vcvt.s32.f32 %v980
    %v1045 = vcvt.s32.f32 %v981
    %v1046 = vcvt.s32.f32 %v982
    %v1047 = vcvt.s32.f32 %v983
    %v1048 = vcvt.s32.f32 %v984
    %v1049 = vcvt.s32.f32 %v985
    %v1050 = vcvt.s32.f32 %v986
    %v1051 = vcvt.s32.f32 %v987
    %v1052 = vcvt.s32.f32 %v988
    %v1053 = vcvt.s32.f32 %v989
    %v1054 = vcvt.s32.f32 %v990
    %v1055 = vcvt.s32.f32 %v991
    %v1056 = vcvt.s32.f32 %v992
    %v1057 = vcvt.s32.f32 %v993
    %v1058 = vcvt.s32.f32 %v994
    %v1059 = vcvt.s32.f32 %v995
    %v1060 = vcvt.s32.f32 %v996
    %v1061 = vcvt.s32.f32 %v997
    %v1062 = vcvt.s32.f32 %v998
    %v1063 = vcvt.s32.f32 %v999
    %v1064 = vcvt.s32.f32 %v1000
    %vm1065 = vcmp.ge.s32.totalorder %v809, 2
    %vm1066 = vcmp.ge.s32.totalorder %v810, 2
    %vm1067 = vcmp.ge.s32.totalorder %v811, 2
    %vm1068 = vcmp.ge.s32.totalorder %v812, 2
    %vm1069 = vcmp.ge.s32.totalorder %v813, 2
    %vm1070 = vcmp.ge.s32.totalorder %v814, 2
    %vm1071 = vcmp.ge.s32.totalorder %v815, 2
    %vm1072 = vcmp.ge.s32.totalorder %v816, 2
    %vm1073 = vcmp.ge.s32.totalorder %v817, 2
    %vm1074 = vcmp.ge.s32.totalorder %v818, 2
    %vm1075 = vcmp.ge.s32.totalorder %v819, 2
    %vm1076 = vcmp.ge.s32.totalorder %v820, 2
    %vm1077 = vcmp.ge.s32.totalorder %v821, 2
    %vm1078 = vcmp.ge.s32.totalorder %v822, 2
    %vm1079 = vcmp.ge.s32.totalorder %v823, 2
    %vm1080 = vcmp.ge.s32.totalorder %v824, 2
    %vm1081 = vcmp.ge.s32.totalorder %v825, 2
    %vm1082 = vcmp.ge.s32.totalorder %v826, 2
    %vm1083 = vcmp.ge.s32.totalorder %v827, 2
    %vm1084 = vcmp.ge.s32.totalorder %v828, 2
    %vm1085 = vcmp.ge.s32.totalorder %v829, 2
    %vm1086 = vcmp.ge.s32.totalorder %v830, 2
    %vm1087 = vcmp.ge.s32.totalorder %v831, 2
    %vm1088 = vcmp.ge.s32.totalorder %v832, 2
    %vm1089 = vcmp.ge.s32.totalorder %v833, 2
    %vm1090 = vcmp.ge.s32.totalorder %v834, 2
    %vm1091 = vcmp.ge.s32.totalorder %v835, 2
    %vm1092 = vcmp.ge.s32.totalorder %v836, 2
    %vm1093 = vcmp.ge.s32.totalorder %v837, 2
    %vm1094 = vcmp.ge.s32.totalorder %v838, 2
    %vm1095 = vcmp.ge.s32.totalorder %v839, 2
    %vm1096 = vcmp.ge.s32.totalorder %v840, 2
    %vm1097 = vcmp.ge.s32.totalorder %v841, 2
    %vm1098 = vcmp.ge.s32.totalorder %v842, 2
    %vm1099 = vcmp.ge.s32.totalorder %v843, 2
    %vm1100 = vcmp.ge.s32.totalorder %v844, 2
    %vm1101 = vcmp.ge.s32.totalorder %v845, 2
    %vm1102 = vcmp.ge.s32.totalorder %v846, 2
    %vm1103 = vcmp.ge.s32.totalorder %v847, 2
    %vm1104 = vcmp.ge.s32.totalorder %v848, 2
    %vm1105 = vcmp.ge.s32.totalorder %v849, 2
    %vm1106 = vcmp.ge.s32.totalorder %v850, 2
    %vm1107 = vcmp.ge.s32.totalorder %v851, 2
    %vm1108 = vcmp.ge.s32.totalorder %v852, 2
    %vm1109 = vcmp.ge.s32.totalorder %v853, 2
    %vm1110 = vcmp.ge.s32.totalorder %v854, 2
    %vm1111 = vcmp.ge.s32.totalorder %v855, 2
    %vm1112 = vcmp.ge.s32.totalorder %v856, 2
    %vm1113 = vcmp.ge.s32.totalorder %v857, 2
    %vm1114 = vcmp.ge.s32.totalorder %v858, 2
    %vm1115 = vcmp.ge.s32.totalorder %v859, 2
    %vm1116 = vcmp.ge.s32.totalorder %v860, 2
    %vm1117 = vcmp.ge.s32.totalorder %v861, 2
    %vm1118 = vcmp.ge.s32.totalorder %v862, 2
    %vm1119 = vcmp.ge.s32.totalorder %v863, 2
    %vm1120 = vcmp.ge.s32.totalorder %v864, 2
    %vm1121 = vcmp.ge.s32.totalorder %v865, 2
    %vm1122 = vcmp.ge.s32.totalorder %v866, 2
    %vm1123 = vcmp.ge.s32.totalorder %v867, 2
    %vm1124 = vcmp.ge.s32.totalorder %v868, 2
    %vm1125 = vcmp.ge.s32.totalorder %v869, 2
    %vm1126 = vcmp.ge.s32.totalorder %v870, 2
    %vm1127 = vcmp.ge.s32.totalorder %v871, 2
    %vm1128 = vcmp.ge.s32.totalorder %v872, 2
    %v1129 = vsel %vm1065, 1, 0
    %v1130 = vsel %vm1066, 1, 0
    %v1131 = vsel %vm1067, 1, 0
    %v1132 = vsel %vm1068, 1, 0
    %v1133 = vsel %vm1069, 1, 0
    %v1134 = vsel %vm1070, 1, 0
    %v1135 = vsel %vm1071, 1, 0
    %v1136 = vsel %vm1072, 1, 0
    %v1137 = vsel %vm1073, 1, 0
    %v1138 = vsel %vm1074, 1, 0
    %v1139 = vsel %vm1075, 1, 0
    %v1140 = vsel %vm1076, 1, 0
    %v1141 = vsel %vm1077, 1, 0
    %v1142 = vsel %vm1078, 1, 0
    %v1143 = vsel %vm1079, 1, 0
    %v1144 = vsel %vm1080, 1, 0
    %v1145 = vsel %vm1081, 1, 0
    %v1146 = vsel %vm1082, 1, 0
    %v1147 = vsel %vm1083, 1, 0
    %v1148 = vsel %vm1084, 1, 0
    %v1149 = vsel %vm1085, 1, 0
    %v1150 = vsel %vm1086, 1, 0
    %v1151 = vsel %vm1087, 1, 0
    %v1152 = vsel %vm1088, 1, 0
    %v1153 = vsel %vm1089, 1, 0
    %v1154 = vsel %vm1090, 1, 0
    %v1155 = vsel %vm1091, 1, 0
    %v1156 = vsel %vm1092, 1, 0
    %v1157 = vsel %vm1093, 1, 0
    %v1158 = vsel %vm1094, 1, 0
    %v1159 = vsel %vm1095, 1, 0
    %v1160 = vsel %vm1096, 1, 0
    %v1161 = vsel %vm1097, 1, 0
    %v1162 = vsel %vm1098, 1, 0
    %v1163 = vsel %vm1099, 1, 0
    %v1164 = vsel %vm1100, 1, 0
    %v1165 = vsel %vm1101, 1, 0
    %v1166 = vsel %vm1102, 1, 0
    %v1167 = vsel %vm1103, 1, 0
    %v1168 = vsel %vm1104, 1, 0
    %v1169 = vsel %vm1105, 1, 0
    %v1170 = vsel %vm1106, 1, 0
    %v1171 = vsel %vm1107, 1, 0
    %v1172 = vsel %vm1108, 1, 0
    %v1173 = vsel %vm1109, 1, 0
    %v1174 = vsel %vm1110, 1, 0
    %v1175 = vsel %vm1111, 1, 0
    %v1176 = vsel %vm1112, 1, 0
    %v1177 = vsel %vm1113, 1, 0
    %v1178 = vsel %vm1114, 1, 0
    %v1179 = vsel %vm1115, 1, 0
    %v1180 = vsel %vm1116, 1, 0
    %v1181 = vsel %vm1117, 1, 0
    %v1182 = vsel %vm1118, 1, 0
    %v1183 = vsel %vm1119, 1, 0
    %v1184 = vsel %vm1120, 1, 0
    %v1185 = vsel %vm1121, 1, 0
    %v1186 = vsel %vm1122, 1, 0
    %v1187 = vsel %vm1123, 1, 0
    %v1188 = vsel %vm1124, 1, 0
    %v1189 = vsel %vm1125, 1, 0
    %v1190 = vsel %vm1126, 1, 0
    %v1191 = vsel %vm1127, 1, 0
    %v1192 = vsel %vm1128, 1, 0
    %v1193 = vcvt.s32.f32 %v1129
    %v1194 = vcvt.s32.f32 %v1130
    %v1195 = vcvt.s32.f32 %v1131
    %v1196 = vcvt.s32.f32 %v1132
    %v1197 = vcvt.s32.f32 %v1133
    %v1198 = vcvt.s32.f32 %v1134
    %v1199 = vcvt.s32.f32 %v1135
    %v1200 = vcvt.s32.f32 %v1136
    %v1201 = vcvt.s32.f32 %v1137
    %v1202 = vcvt.s32.f32 %v1138
    %v1203 = vcvt.s32.f32 %v1139
    %v1204 = vcvt.s32.f32 %v1140
    %v1205 = vcvt.s32.f32 %v1141
    %v1206 = vcvt.s32.f32 %v1142
    %v1207 = vcvt.s32.f32 %v1143
    %v1208 = vcvt.s32.f32 %v1144
    %v1209 = vcvt.s32.f32 %v1145
    %v1210 = vcvt.s32.f32 %v1146
    %v1211 = vcvt.s32.f32 %v1147
    %v1212 = vcvt.s32.f32 %v1148
    %v1213 = vcvt.s32.f32 %v1149
    %v1214 = vcvt.s32.f32 %v1150
    %v1215 = vcvt.s32.f32 %v1151
    %v1216 = vcvt.s32.f32 %v1152
    %v1217 = vcvt.s32.f32 %v1153
    %v1218 = vcvt.s32.f32 %v1154
    %v1219 = vcvt.s32.f32 %v1155
    %v1220 = vcvt.s32.f32 %v1156
    %v1221 = vcvt.s32.f32 %v1157
    %v1222 = vcvt.s32.f32 %v1158
    %v1223 = vcvt.s32.f32 %v1159
    %v1224 = vcvt.s32.f32 %v1160
    %v1225 = vcvt.s32.f32 %v1161
    %v1226 = vcvt.s32.f32 %v1162
    %v1227 = vcvt.s32.f32 %v1163
    %v1228 = vcvt.s32.f32 %v1164
    %v1229 = vcvt.s32.f32 %v1165
    %v1230 = vcvt.s32.f32 %v1166
    %v1231 = vcvt.s32.f32 %v1167
    %v1232 = vcvt.s32.f32 %v1168
    %v1233 = vcvt.s32.f32 %v1169
    %v1234 = vcvt.s32.f32 %v1170
    %v1235 = vcvt.s32.f32 %v1171
    %v1236 = vcvt.s32.f32 %v1172
    %v1237 = vcvt.s32.f32 %v1173
    %v1238 = vcvt.s32.f32 %v1174
    %v1239 = vcvt.s32.f32 %v1175
    %v1240 = vcvt.s32.f32 %v1176
    %v1241 = vcvt.s32.f32 %v1177
    %v1242 = vcvt.s32.f32 %v1178
    %v1243 = vcvt.s32.f32 %v1179
    %v1244 = vcvt.s32.f32 %v1180
    %v1245 = vcvt.s32.f32 %v1181
    %v1246 = vcvt.s32.f32 %v1182
    %v1247 = vcvt.s32.f32 %v1183
    %v1248 = vcvt.s32.f32 %v1184
    %v1249 = vcvt.s32.f32 %v1185
    %v1250 = vcvt.s32.f32 %v1186
    %v1251 = vcvt.s32.f32 %v1187
    %v1252 = vcvt.s32.f32 %v1188
    %v1253 = vcvt.s32.f32 %v1189
    %v1254 = vcvt.s32.f32 %v1190
    %v1255 = vcvt.s32.f32 %v1191
    %v1256 = vcvt.s32.f32 %v1192
    %vm1257 = vcmp.ge.s32.totalorder %v809, 4
    %vm1258 = vcmp.ge.s32.totalorder %v810, 4
    %vm1259 = vcmp.ge.s32.totalorder %v811, 4
    %vm1260 = vcmp.ge.s32.totalorder %v812, 4
    %vm1261 = vcmp.ge.s32.totalorder %v813, 4
    %vm1262 = vcmp.ge.s32.totalorder %v814, 4
    %vm1263 = vcmp.ge.s32.totalorder %v815, 4
    %vm1264 = vcmp.ge.s32.totalorder %v816, 4
    %vm1265 = vcmp.ge.s32.totalorder %v817, 4
    %vm1266 = vcmp.ge.s32.totalorder %v818, 4
    %vm1267 = vcmp.ge.s32.totalorder %v819, 4
    %vm1268 = vcmp.ge.s32.totalorder %v820, 4
    %vm1269 = vcmp.ge.s32.totalorder %v821, 4
    %vm1270 = vcmp.ge.s32.totalorder %v822, 4
    %vm1271 = vcmp.ge.s32.totalorder %v823, 4
    %vm1272 = vcmp.ge.s32.totalorder %v824, 4
    %vm1273 = vcmp.ge.s32.totalorder %v825, 4
    %vm1274 = vcmp.ge.s32.totalorder %v826, 4
    %vm1275 = vcmp.ge.s32.totalorder %v827, 4
    %vm1276 = vcmp.ge.s32.totalorder %v828, 4
    %vm1277 = vcmp.ge.s32.totalorder %v829, 4
    %vm1278 = vcmp.ge.s32.totalorder %v830, 4
    %vm1279 = vcmp.ge.s32.totalorder %v831, 4
    %vm1280 = vcmp.ge.s32.totalorder %v832, 4
    %vm1281 = vcmp.ge.s32.totalorder %v833, 4
    %vm1282 = vcmp.ge.s32.totalorder %v834, 4
    %vm1283 = vcmp.ge.s32.totalorder %v835, 4
    %vm1284 = vcmp.ge.s32.totalorder %v836, 4
    %vm1285 = vcmp.ge.s32.totalorder %v837, 4
    %vm1286 = vcmp.ge.s32.totalorder %v838, 4
    %vm1287 = vcmp.ge.s32.totalorder %v839, 4
    %vm1288 = vcmp.ge.s32.totalorder %v840, 4
    %vm1289 = vcmp.ge.s32.totalorder %v841, 4
    %vm1290 = vcmp.ge.s32.totalorder %v842, 4
    %vm1291 = vcmp.ge.s32.totalorder %v843, 4
    %vm1292 = vcmp.ge.s32.totalorder %v844, 4
    %vm1293 = vcmp.ge.s32.totalorder %v845, 4
    %vm1294 = vcmp.ge.s32.totalorder %v846, 4
    %vm1295 = vcmp.ge.s32.totalorder %v847, 4
    %vm1296 = vcmp.ge.s32.totalorder %v848, 4
    %vm1297 = vcmp.ge.s32.totalorder %v849, 4
    %vm1298 = vcmp.ge.s32.totalorder %v850, 4
    %vm1299 = vcmp.ge.s32.totalorder %v851, 4
    %vm1300 = vcmp.ge.s32.totalorder %v852, 4
    %vm1301 = vcmp.ge.s32.totalorder %v853, 4
    %vm1302 = vcmp.ge.s32.totalorder %v854, 4
    %vm1303 = vcmp.ge.s32.totalorder %v855, 4
    %vm1304 = vcmp.ge.s32.totalorder %v856, 4
    %vm1305 = vcmp.ge.s32.totalorder %v857, 4
    %vm1306 = vcmp.ge.s32.totalorder %v858, 4
    %vm1307 = vcmp.ge.s32.totalorder %v859, 4
    %vm1308 = vcmp.ge.s32.totalorder %v860, 4
    %vm1309 = vcmp.ge.s32.totalorder %v861, 4
    %vm1310 = vcmp.ge.s32.totalorder %v862, 4
    %vm1311 = vcmp.ge.s32.totalorder %v863, 4
    %vm1312 = vcmp.ge.s32.totalorder %v864, 4
    %vm1313 = vcmp.ge.s32.totalorder %v865, 4
    %vm1314 = vcmp.ge.s32.totalorder %v866, 4
    %vm1315 = vcmp.ge.s32.totalorder %v867, 4
    %vm1316 = vcmp.ge.s32.totalorder %v868, 4
    %vm1317 = vcmp.ge.s32.totalorder %v869, 4
    %vm1318 = vcmp.ge.s32.totalorder %v870, 4
    %vm1319 = vcmp.ge.s32.totalorder %v871, 4
    %vm1320 = vcmp.ge.s32.totalorder %v872, 4
    %v1321 = vsel %vm1257, 1, 0
    %v1322 = vsel %vm1258, 1, 0
    %v1323 = vsel %vm1259, 1, 0
    %v1324 = vsel %vm1260, 1, 0
    %v1325 = vsel %vm1261, 1, 0
    %v1326 = vsel %vm1262, 1, 0
    %v1327 = vsel %vm1263, 1, 0
    %v1328 = vsel %vm1264, 1, 0
    %v1329 = vsel %vm1265, 1, 0
    %v1330 = vsel %vm1266, 1, 0
    %v1331 = vsel %vm1267, 1, 0
    %v1332 = vsel %vm1268, 1, 0
    %v1333 = vsel %vm1269, 1, 0
    %v1334 = vsel %vm1270, 1, 0
    %v1335 = vsel %vm1271, 1, 0
    %v1336 = vsel %vm1272, 1, 0
    %v1337 = vsel %vm1273, 1, 0
    %v1338 = vsel %vm1274, 1, 0
    %v1339 = vsel %vm1275, 1, 0
    %v1340 = vsel %vm1276, 1, 0
    %v1341 = vsel %vm1277, 1, 0
    %v1342 = vsel %vm1278, 1, 0
    %v1343 = vsel %vm1279, 1, 0
    %v1344 = vsel %vm1280, 1, 0
    %v1345 = vsel %vm1281, 1, 0
    %v1346 = vsel %vm1282, 1, 0
    %v1347 = vsel %vm1283, 1, 0
    %v1348 = vsel %vm1284, 1, 0
    %v1349 = vsel %vm1285, 1, 0
    %v1350 = vsel %vm1286, 1, 0
    %v1351 = vsel %vm1287, 1, 0
    %v1352 = vsel %vm1288, 1, 0
    %v1353 = vsel %vm1289, 1, 0
    %v1354 = vsel %vm1290, 1, 0
    %v1355 = vsel %vm1291, 1, 0
    %v1356 = vsel %vm1292, 1, 0
    %v1357 = vsel %vm1293, 1, 0
    %v1358 = vsel %vm1294, 1, 0
    %v1359 = vsel %vm1295, 1, 0
    %v1360 = vsel %vm1296, 1, 0
    %v1361 = vsel %vm1297, 1, 0
    %v1362 = vsel %vm1298, 1, 0
    %v1363 = vsel %vm1299, 1, 0
    %v1364 = vsel %vm1300, 1, 0
    %v1365 = vsel %vm1301, 1, 0
    %v1366 = vsel %vm1302, 1, 0
    %v1367 = vsel %vm1303, 1, 0
    %v1368 = vsel %vm1304, 1, 0
    %v1369 = vsel %vm1305, 1, 0
    %v1370 = vsel %vm1306, 1, 0
    %v1371 = vsel %vm1307, 1, 0
    %v1372 = vsel %vm1308, 1, 0
    %v1373 = vsel %vm1309, 1, 0
    %v1374 = vsel %vm1310, 1, 0
    %v1375 = vsel %vm1311, 1, 0
    %v1376 = vsel %vm1312, 1, 0
    %v1377 = vsel %vm1313, 1, 0
    %v1378 = vsel %vm1314, 1, 0
    %v1379 = vsel %vm1315, 1, 0
    %v1380 = vsel %vm1316, 1, 0
    %v1381 = vsel %vm1317, 1, 0
    %v1382 = vsel %vm1318, 1, 0
    %v1383 = vsel %vm1319, 1, 0
    %v1384 = vsel %vm1320, 1, 0
    %v1385 = vcvt.s32.f32 %v1321
    %v1386 = vcvt.s32.f32 %v1322
    %v1387 = vcvt.s32.f32 %v1323
    %v1388 = vcvt.s32.f32 %v1324
    %v1389 = vcvt.s32.f32 %v1325
    %v1390 = vcvt.s32.f32 %v1326
    %v1391 = vcvt.s32.f32 %v1327
    %v1392 = vcvt.s32.f32 %v1328
    %v1393 = vcvt.s32.f32 %v1329
    %v1394 = vcvt.s32.f32 %v1330
    %v1395 = vcvt.s32.f32 %v1331
    %v1396 = vcvt.s32.f32 %v1332
    %v1397 = vcvt.s32.f32 %v1333
    %v1398 = vcvt.s32.f32 %v1334
    %v1399 = vcvt.s32.f32 %v1335
    %v1400 = vcvt.s32.f32 %v1336
    %v1401 = vcvt.s32.f32 %v1337
    %v1402 = vcvt.s32.f32 %v1338
    %v1403 = vcvt.s32.f32 %v1339
    %v1404 = vcvt.s32.f32 %v1340
    %v1405 = vcvt.s32.f32 %v1341
    %v1406 = vcvt.s32.f32 %v1342
    %v1407 = vcvt.s32.f32 %v1343
    %v1408 = vcvt.s32.f32 %v1344
    %v1409 = vcvt.s32.f32 %v1345
    %v1410 = vcvt.s32.f32 %v1346
    %v1411 = vcvt.s32.f32 %v1347
    %v1412 = vcvt.s32.f32 %v1348
    %v1413 = vcvt.s32.f32 %v1349
    %v1414 = vcvt.s32.f32 %v1350
    %v1415 = vcvt.s32.f32 %v1351
    %v1416 = vcvt.s32.f32 %v1352
    %v1417 = vcvt.s32.f32 %v1353
    %v1418 = vcvt.s32.f32 %v1354
    %v1419 = vcvt.s32.f32 %v1355
    %v1420 = vcvt.s32.f32 %v1356
    %v1421 = vcvt.s32.f32 %v1357
    %v1422 = vcvt.s32.f32 %v1358
    %v1423 = vcvt.s32.f32 %v1359
    %v1424 = vcvt.s32.f32 %v1360
    %v1425 = vcvt.s32.f32 %v1361
    %v1426 = vcvt.s32.f32 %v1362
    %v1427 = vcvt.s32.f32 %v1363
    %v1428 = vcvt.s32.f32 %v1364
    %v1429 = vcvt.s32.f32 %v1365
    %v1430 = vcvt.s32.f32 %v1366
    %v1431 = vcvt.s32.f32 %v1367
    %v1432 = vcvt.s32.f32 %v1368
    %v1433 = vcvt.s32.f32 %v1369
    %v1434 = vcvt.s32.f32 %v1370
    %v1435 = vcvt.s32.f32 %v1371
    %v1436 = vcvt.s32.f32 %v1372
    %v1437 = vcvt.s32.f32 %v1373
    %v1438 = vcvt.s32.f32 %v1374
    %v1439 = vcvt.s32.f32 %v1375
    %v1440 = vcvt.s32.f32 %v1376
    %v1441 = vcvt.s32.f32 %v1377
    %v1442 = vcvt.s32.f32 %v1378
    %v1443 = vcvt.s32.f32 %v1379
    %v1444 = vcvt.s32.f32 %v1380
    %v1445 = vcvt.s32.f32 %v1381
    %v1446 = vcvt.s32.f32 %v1382
    %v1447 = vcvt.s32.f32 %v1383
    %v1448 = vcvt.s32.f32 %v1384
    %v1449 = vld [vmem:[%s0] sm:$0xff]
    %v1450 = vld [vmem:[%s0 + $0x8] sm:$0xff]
    %v1451 = vld [vmem:[%s0 + $0x10] sm:$0xff]
    %v1452 = vld [vmem:[%s0 + $0x18] sm:$0xff]
    %v1453 = vld [vmem:[%s0 + $0x20] sm:$0xff]
    %v1454 = vld [vmem:[%s0 + $0x28] sm:$0xff]
    %v1455 = vld [vmem:[%s0 + $0x30] sm:$0xff]
    %v1456 = vld [vmem:[%s0 + $0x38] sm:$0xff]
    %v1457 = vld [vmem:[%s0 + $0x40] sm:$0xff]
    %v1458 = vld [vmem:[%s0 + $0x48] sm:$0xff]
    %v1459 = vld [vmem:[%s0 + $0x50] sm:$0xff]
    %v1460 = vld [vmem:[%s0 + $0x58] sm:$0xff]
    %v1461 = vld [vmem:[%s0 + $0x60] sm:$0xff]
    %v1462 = vld [vmem:[%s0 + $0x68] sm:$0xff]
    %v1463 = vld [vmem:[%s0 + $0x70] sm:$0xff]
    %v1464 = vld [vmem:[%s0 + $0x78] sm:$0xff]
    %v1465 = vld [vmem:[%s0 + $0x80] sm:$0xff]
    %v1466 = vld [vmem:[%s0 + $0x88] sm:$0xff]
    %v1467 = vld [vmem:[%s0 + $0x90] sm:$0xff]
    %v1468 = vld [vmem:[%s0 + $0x98] sm:$0xff]
    %v1469 = vld [vmem:[%s0 + $0xa0] sm:$0xff]
    %v1470 = vld [vmem:[%s0 + $0xa8] sm:$0xff]
    %v1471 = vld [vmem:[%s0 + $0xb0] sm:$0xff]
    %v1472 = vld [vmem:[%s0 + $0xb8] sm:$0xff]
    %v1473 = vld [vmem:[%s0 + $0xc0] sm:$0xff]
    %v1474 = vld [vmem:[%s0 + $0xc8] sm:$0xff]
    %v1475 = vld [vmem:[%s0 + $0xd0] sm:$0xff]
    %v1476 = vld [vmem:[%s0 + $0xd8] sm:$0xff]
    %v1477 = vld [vmem:[%s0 + $0xe0] sm:$0xff]
    %v1478 = vld [vmem:[%s0 + $0xe8] sm:$0xff]
    %v1479 = vld [vmem:[%s0 + $0xf0] sm:$0xff]
    %v1480 = vld [vmem:[%s0 + $0xf8] sm:$0xff]
    %v1481 = vld [vmem:[%s0 + $0x100] sm:$0xff]
    %v1482 = vld [vmem:[%s0 + $0x108] sm:$0xff]
    %v1483 = vld [vmem:[%s0 + $0x110] sm:$0xff]
    %v1484 = vld [vmem:[%s0 + $0x118] sm:$0xff]
    %v1485 = vld [vmem:[%s0 + $0x120] sm:$0xff]
    %v1486 = vld [vmem:[%s0 + $0x128] sm:$0xff]
    %v1487 = vld [vmem:[%s0 + $0x130] sm:$0xff]
    %v1488 = vld [vmem:[%s0 + $0x138] sm:$0xff]
    %v1489 = vld [vmem:[%s0 + $0x140] sm:$0xff]
    %v1490 = vld [vmem:[%s0 + $0x148] sm:$0xff]
    %v1491 = vld [vmem:[%s0 + $0x150] sm:$0xff]
    %v1492 = vld [vmem:[%s0 + $0x158] sm:$0xff]
    %v1493 = vld [vmem:[%s0 + $0x160] sm:$0xff]
    %v1494 = vld [vmem:[%s0 + $0x168] sm:$0xff]
    %v1495 = vld [vmem:[%s0 + $0x170] sm:$0xff]
    %v1496 = vld [vmem:[%s0 + $0x178] sm:$0xff]
    %v1497 = vld [vmem:[%s0 + $0x180] sm:$0xff]
    %v1498 = vld [vmem:[%s0 + $0x188] sm:$0xff]
    %v1499 = vld [vmem:[%s0 + $0x190] sm:$0xff]
    %v1500 = vld [vmem:[%s0 + $0x198] sm:$0xff]
    %v1501 = vld [vmem:[%s0 + $0x1a0] sm:$0xff]
    %v1502 = vld [vmem:[%s0 + $0x1a8] sm:$0xff]
    %v1503 = vld [vmem:[%s0 + $0x1b0] sm:$0xff]
    %v1504 = vld [vmem:[%s0 + $0x1b8] sm:$0xff]
    %v1505 = vld [vmem:[%s0 + $0x1c0] sm:$0xff]
    %v1506 = vld [vmem:[%s0 + $0x1c8] sm:$0xff]
    %v1507 = vld [vmem:[%s0 + $0x1d0] sm:$0xff]
    %v1508 = vld [vmem:[%s0 + $0x1d8] sm:$0xff]
    %v1509 = vld [vmem:[%s0 + $0x1e0] sm:$0xff]
    %v1510 = vld [vmem:[%s0 + $0x1e8] sm:$0xff]
    %v1511 = vld [vmem:[%s0 + $0x1f0] sm:$0xff]
    %v1512 = vld [vmem:[%s0 + $0x1f8] sm:$0xff]
    %s1513 = scalar_lea.vmem %s1, 8
    %v1514 = vld [vmem:[%s1513] sm:$0x7]
    %v1515 = vpack.c.bf16 %v1450, %v1449
    %v1516 = vpack.c.bf16 %v1452, %v1451
    %v1517 = vpack.c.bf16 %v1454, %v1453
    %v1518 = vpack.c.bf16 %v1456, %v1455
    %v1519 = vpack.c.bf16 %v1458, %v1457
    %v1520 = vpack.c.bf16 %v1460, %v1459
    %v1521 = vpack.c.bf16 %v1462, %v1461
    %v1522 = vpack.c.bf16 %v1464, %v1463
    %v1523 = vpack.c.bf16 %v1466, %v1465
    %v1524 = vpack.c.bf16 %v1468, %v1467
    %v1525 = vpack.c.bf16 %v1470, %v1469
    %v1526 = vpack.c.bf16 %v1472, %v1471
    %v1527 = vpack.c.bf16 %v1474, %v1473
    %v1528 = vpack.c.bf16 %v1476, %v1475
    %v1529 = vpack.c.bf16 %v1478, %v1477
    %v1530 = vpack.c.bf16 %v1480, %v1479
    %v1531 = vpack.c.bf16 %v1482, %v1481
    %v1532 = vpack.c.bf16 %v1484, %v1483
    %v1533 = vpack.c.bf16 %v1486, %v1485
    %v1534 = vpack.c.bf16 %v1488, %v1487
    %v1535 = vpack.c.bf16 %v1490, %v1489
    %v1536 = vpack.c.bf16 %v1492, %v1491
    %v1537 = vpack.c.bf16 %v1494, %v1493
    %v1538 = vpack.c.bf16 %v1496, %v1495
    %v1539 = vpack.c.bf16 %v1498, %v1497
    %v1540 = vpack.c.bf16 %v1500, %v1499
    %v1541 = vpack.c.bf16 %v1502, %v1501
    %v1542 = vpack.c.bf16 %v1504, %v1503
    %v1543 = vpack.c.bf16 %v1506, %v1505
    %v1544 = vpack.c.bf16 %v1508, %v1507
    %v1545 = vpack.c.bf16 %v1510, %v1509
    %v1546 = vpack.c.bf16 %v1512, %v1511
    %v1547 = vld [vmem:[%s2] sm:$0x1]
    %v1549 = vlaneseq
    %v1550 = vshrl.u32 %v1549, 7
    %v1551 = vsub.s32 0, %v1550
    %v1552 = vrot.slane %v1547, %v1551
    %vm1554 = vcmask 48128
    %v1556 = vsel %vm1554, %v1515, 0
    %v1559 = vsel %vm1554, %v1516, 0
    %v1562 = vsel %vm1554, %v1517, 0
    %v1565 = vsel %vm1554, %v1518, 0
    %v1568 = vsel %vm1554, %v1519, 0
    %v1571 = vsel %vm1554, %v1520, 0
    %v1574 = vsel %vm1554, %v1521, 0
    %v1577 = vsel %vm1554, %v1522, 0
    %v1580 = vsel %vm1554, %v1523, 0
    %v1583 = vsel %vm1554, %v1524, 0
    %v1586 = vsel %vm1554, %v1525, 0
    %v1589 = vsel %vm1554, %v1526, 0
    %v1592 = vsel %vm1554, %v1527, 0
    %v1595 = vsel %vm1554, %v1528, 0
    %v1598 = vsel %vm1554, %v1529, 0
    %v1601 = vsel %vm1554, %v1530, 0
    %v1604 = vsel %vm1554, %v1531, 0
    %v1607 = vsel %vm1554, %v1532, 0
    %v1610 = vsel %vm1554, %v1533, 0
    %v1613 = vsel %vm1554, %v1534, 0
    %v1616 = vsel %vm1554, %v1535, 0
    %v1619 = vsel %vm1554, %v1536, 0
    %v1622 = vsel %vm1554, %v1537, 0
    %v1625 = vsel %vm1554, %v1538, 0
    %v1628 = vsel %vm1554, %v1539, 0
    %v1631 = vsel %vm1554, %v1540, 0
    %v1634 = vsel %vm1554, %v1541, 0
    %v1637 = vsel %vm1554, %v1542, 0
    %v1640 = vsel %vm1554, %v1543, 0
    %v1643 = vsel %vm1554, %v1544, 0
    %v1646 = vsel %vm1554, %v1545, 0
    %v1649 = vsel %vm1554, %v1546, 0
    %vm1651 = vcmask 1042432
    %v1653 = vsel %vm1651, %v1514, 0
    %1655 = vmatprep.subr.bf16.mxu0 0
    %1656 = vmatpush1.bf16.msra.mxu0 0
    %1657 = vmatprep.subr.bf16.mxu0 0
    %1658 = vmatpush1.bf16.msra.mxu0 0
    %1659 = vmatprep.subr.bf16.mxu0 0
    %1660 = vmatpush1.bf16.msra.mxu0 0
    %1661 = vmatprep.subr.bf16.mxu0 0
    %1662 = vmatpush1.bf16.msra.mxu0 0
    %1663 = vmatprep.subr.bf16.mxu0 0
    %1664 = vmatpush1.bf16.msra.mxu0 0
    %1665 = vmatprep.subr.bf16.mxu0 0
    %1666 = vmatpush1.bf16.msra.mxu0 0
    %1667 = vmatprep.subr.bf16.mxu0 0
    %1668 = vmatpush1.bf16.msra.mxu0 0
    %1669 = vmatprep.subr.bf16.mxu0 0
    %1670 = vmatpush1.bf16.msra.mxu0 %v1653
    %1671 = vmatprep.subr.bf16.mxu0 0
    %1672 = vmatpush2.bf16.msra.mxu0 0
    %1673 = vmatprep.subr.bf16.mxu0 0
    %1674 = vmatpush2.bf16.msra.mxu0 0
    %1675 = vmatprep.subr.bf16.mxu0 0
    %1676 = vmatpush2.bf16.msra.mxu0 0
    %1677 = vmatprep.subr.bf16.mxu0 0
    %1678 = vmatpush2.bf16.msra.mxu0 0
    %1679 = vmatprep.subr.bf16.mxu0 0
    %1680 = vmatpush2.bf16.msra.mxu0 0
    %1681 = vmatprep.subr.bf16.mxu0 0
    %1682 = vmatpush2.bf16.msra.mxu0 0
    %1683 = vmatprep.subr.bf16.mxu0 0
    %1684 = vmatpush2.bf16.msra.mxu0 0
    %1685 = vmatprep.subr.bf16.mxu0 0
    %1686 = vmatpush2.bf16.msra.mxu0 0
    %1687 = vmatprep.mubr.bf16.mxu0 0
    %1688 = vmatmul.mubr.bf16.gmra.mxu0 %v1556
    %v1689 = vpop.f32.mrf.mxu0
    %v1690 = vadd.f32 %v1552, %v1689
    %v1691 = vpop.f32.mrf.mxu0
    %v1692 = vpop.f32.mrf.mxu0
    %v1693 = vadd.f32 %v1552, %v1692
    %v1694 = vpop.f32.mrf.mxu0
    %1695 = vmatprep.mubr.bf16.mxu0 0
    %1696 = vmatmul.mubr.bf16.gmra.mxu0 %v1559
    %v1697 = vpop.f32.mrf.mxu0
    %v1698 = vadd.f32 %v1552, %v1697
    %v1699 = vpop.f32.mrf.mxu0
    %v1700 = vpop.f32.mrf.mxu0
    %v1701 = vadd.f32 %v1552, %v1700
    %v1702 = vpop.f32.mrf.mxu0
    %1703 = vmatprep.mubr.bf16.mxu0 0
    %1704 = vmatmul.mubr.bf16.gmra.mxu0 %v1562
    %v1705 = vpop.f32.mrf.mxu0
    %v1706 = vadd.f32 %v1552, %v1705
    %v1707 = vpop.f32.mrf.mxu0
    %v1708 = vpop.f32.mrf.mxu0
    %v1709 = vadd.f32 %v1552, %v1708
    %v1710 = vpop.f32.mrf.mxu0
    %1711 = vmatprep.mubr.bf16.mxu0 0
    %1712 = vmatmul.mubr.bf16.gmra.mxu0 %v1565
    %v1713 = vpop.f32.mrf.mxu0
    %v1714 = vadd.f32 %v1552, %v1713
    %v1715 = vpop.f32.mrf.mxu0
    %v1716 = vpop.f32.mrf.mxu0
    %v1717 = vadd.f32 %v1552, %v1716
    %v1718 = vpop.f32.mrf.mxu0
    %1719 = vmatprep.mubr.bf16.mxu0 0
    %1720 = vmatmul.mubr.bf16.gmra.mxu0 %v1568
    %v1721 = vpop.f32.mrf.mxu0
    %v1722 = vadd.f32 %v1552, %v1721
    %v1723 = vpop.f32.mrf.mxu0
    %v1724 = vpop.f32.mrf.mxu0
    %v1725 = vadd.f32 %v1552, %v1724
    %v1726 = vpop.f32.mrf.mxu0
    %1727 = vmatprep.mubr.bf16.mxu0 0
    %1728 = vmatmul.mubr.bf16.gmra.mxu0 %v1571
    %v1729 = vpop.f32.mrf.mxu0
    %v1730 = vadd.f32 %v1552, %v1729
    %v1731 = vpop.f32.mrf.mxu0
    %v1732 = vpop.f32.mrf.mxu0
    %v1733 = vadd.f32 %v1552, %v1732
    %v1734 = vpop.f32.mrf.mxu0
    %1735 = vmatprep.mubr.bf16.mxu0 0
    %1736 = vmatmul.mubr.bf16.gmra.mxu0 %v1574
    %v1737 = vpop.f32.mrf.mxu0
    %v1738 = vadd.f32 %v1552, %v1737
    %v1739 = vpop.f32.mrf.mxu0
    %v1740 = vpop.f32.mrf.mxu0
    %v1741 = vadd.f32 %v1552, %v1740
    %v1742 = vpop.f32.mrf.mxu0
    %1743 = vmatprep.mubr.bf16.mxu0 0
    %1744 = vmatmul.mubr.bf16.gmra.mxu0 %v1577
    %v1745 = vpop.f32.mrf.mxu0
    %v1746 = vadd.f32 %v1552, %v1745
    %v1747 = vpop.f32.mrf.mxu0
    %v1748 = vpop.f32.mrf.mxu0
    %v1749 = vadd.f32 %v1552, %v1748
    %v1750 = vpop.f32.mrf.mxu0
    %1751 = vmatprep.mubr.bf16.mxu0 0
    %1752 = vmatmul.mubr.bf16.gmra.mxu0 %v1580
    %v1753 = vpop.f32.mrf.mxu0
    %v1754 = vadd.f32 %v1552, %v1753
    %v1755 = vpop.f32.mrf.mxu0
    %v1756 = vpop.f32.mrf.mxu0
    %v1757 = vadd.f32 %v1552, %v1756
    %v1758 = vpop.f32.mrf.mxu0
    %1759 = vmatprep.mubr.bf16.mxu0 0
    %1760 = vmatmul.mubr.bf16.gmra.mxu0 %v1583
    %v1761 = vpop.f32.mrf.mxu0
    %v1762 = vadd.f32 %v1552, %v1761
    %v1763 = vpop.f32.mrf.mxu0
    %v1764 = vpop.f32.mrf.mxu0
    %v1765 = vadd.f32 %v1552, %v1764
    %v1766 = vpop.f32.mrf.mxu0
    %1767 = vmatprep.mubr.bf16.mxu0 0
    %1768 = vmatmul.mubr.bf16.gmra.mxu0 %v1586
    %v1769 = vpop.f32.mrf.mxu0
    %v1770 = vadd.f32 %v1552, %v1769
    %v1771 = vpop.f32.mrf.mxu0
    %v1772 = vpop.f32.mrf.mxu0
    %v1773 = vadd.f32 %v1552, %v1772
    %v1774 = vpop.f32.mrf.mxu0
    %1775 = vmatprep.mubr.bf16.mxu0 0
    %1776 = vmatmul.mubr.bf16.gmra.mxu0 %v1589
    %v1777 = vpop.f32.mrf.mxu0
    %v1778 = vadd.f32 %v1552, %v1777
    %v1779 = vpop.f32.mrf.mxu0
    %v1780 = vpop.f32.mrf.mxu0
    %v1781 = vadd.f32 %v1552, %v1780
    %v1782 = vpop.f32.mrf.mxu0
    %1783 = vmatprep.mubr.bf16.mxu0 0
    %1784 = vmatmul.mubr.bf16.gmra.mxu0 %v1592
    %v1785 = vpop.f32.mrf.mxu0
    %v1786 = vadd.f32 %v1552, %v1785
    %v1787 = vpop.f32.mrf.mxu0
    %v1788 = vpop.f32.mrf.mxu0
    %v1789 = vadd.f32 %v1552, %v1788
    %v1790 = vpop.f32.mrf.mxu0
    %1791 = vmatprep.mubr.bf16.mxu0 0
    %1792 = vmatmul.mubr.bf16.gmra.mxu0 %v1595
    %v1793 = vpop.f32.mrf.mxu0
    %v1794 = vadd.f32 %v1552, %v1793
    %v1795 = vpop.f32.mrf.mxu0
    %v1796 = vpop.f32.mrf.mxu0
    %v1797 = vadd.f32 %v1552, %v1796
    %v1798 = vpop.f32.mrf.mxu0
    %1799 = vmatprep.mubr.bf16.mxu0 0
    %1800 = vmatmul.mubr.bf16.gmra.mxu0 %v1598
    %v1801 = vpop.f32.mrf.mxu0
    %v1802 = vadd.f32 %v1552, %v1801
    %v1803 = vpop.f32.mrf.mxu0
    %v1804 = vpop.f32.mrf.mxu0
    %v1805 = vadd.f32 %v1552, %v1804
    %v1806 = vpop.f32.mrf.mxu0
    %1807 = vmatprep.mubr.bf16.mxu0 0
    %1808 = vmatmul.mubr.bf16.gmra.mxu0 %v1601
    %v1809 = vpop.f32.mrf.mxu0
    %v1810 = vadd.f32 %v1552, %v1809
    %v1811 = vpop.f32.mrf.mxu0
    %v1812 = vpop.f32.mrf.mxu0
    %v1813 = vadd.f32 %v1552, %v1812
    %v1814 = vpop.f32.mrf.mxu0
    %1815 = vmatprep.mubr.bf16.mxu0 0
    %1816 = vmatmul.mubr.bf16.gmra.mxu0 %v1604
    %v1817 = vpop.f32.mrf.mxu0
    %v1818 = vadd.f32 %v1552, %v1817
    %v1819 = vpop.f32.mrf.mxu0
    %v1820 = vpop.f32.mrf.mxu0
    %v1821 = vadd.f32 %v1552, %v1820
    %v1822 = vpop.f32.mrf.mxu0
    %1823 = vmatprep.mubr.bf16.mxu0 0
    %1824 = vmatmul.mubr.bf16.gmra.mxu0 %v1607
    %v1825 = vpop.f32.mrf.mxu0
    %v1826 = vadd.f32 %v1552, %v1825
    %v1827 = vpop.f32.mrf.mxu0
    %v1828 = vpop.f32.mrf.mxu0
    %v1829 = vadd.f32 %v1552, %v1828
    %v1830 = vpop.f32.mrf.mxu0
    %1831 = vmatprep.mubr.bf16.mxu0 0
    %1832 = vmatmul.mubr.bf16.gmra.mxu0 %v1610
    %v1833 = vpop.f32.mrf.mxu0
    %v1834 = vadd.f32 %v1552, %v1833
    %v1835 = vpop.f32.mrf.mxu0
    %v1836 = vpop.f32.mrf.mxu0
    %v1837 = vadd.f32 %v1552, %v1836
    %v1838 = vpop.f32.mrf.mxu0
    %1839 = vmatprep.mubr.bf16.mxu0 0
    %1840 = vmatmul.mubr.bf16.gmra.mxu0 %v1613
    %v1841 = vpop.f32.mrf.mxu0
    %v1842 = vadd.f32 %v1552, %v1841
    %v1843 = vpop.f32.mrf.mxu0
    %v1844 = vpop.f32.mrf.mxu0
    %v1845 = vadd.f32 %v1552, %v1844
    %v1846 = vpop.f32.mrf.mxu0
    %1847 = vmatprep.mubr.bf16.mxu0 0
    %1848 = vmatmul.mubr.bf16.gmra.mxu0 %v1616
    %v1849 = vpop.f32.mrf.mxu0
    %v1850 = vadd.f32 %v1552, %v1849
    %v1851 = vpop.f32.mrf.mxu0
    %v1852 = vpop.f32.mrf.mxu0
    %v1853 = vadd.f32 %v1552, %v1852
    %v1854 = vpop.f32.mrf.mxu0
    %1855 = vmatprep.mubr.bf16.mxu0 0
    %1856 = vmatmul.mubr.bf16.gmra.mxu0 %v1619
    %v1857 = vpop.f32.mrf.mxu0
    %v1858 = vadd.f32 %v1552, %v1857
    %v1859 = vpop.f32.mrf.mxu0
    %v1860 = vpop.f32.mrf.mxu0
    %v1861 = vadd.f32 %v1552, %v1860
    %v1862 = vpop.f32.mrf.mxu0
    %1863 = vmatprep.mubr.bf16.mxu0 0
    %1864 = vmatmul.mubr.bf16.gmra.mxu0 %v1622
    %v1865 = vpop.f32.mrf.mxu0
    %v1866 = vadd.f32 %v1552, %v1865
    %v1867 = vpop.f32.mrf.mxu0
    %v1868 = vpop.f32.mrf.mxu0
    %v1869 = vadd.f32 %v1552, %v1868
    %v1870 = vpop.f32.mrf.mxu0
    %1871 = vmatprep.mubr.bf16.mxu0 0
    %1872 = vmatmul.mubr.bf16.gmra.mxu0 %v1625
    %v1873 = vpop.f32.mrf.mxu0
    %v1874 = vadd.f32 %v1552, %v1873
    %v1875 = vpop.f32.mrf.mxu0
    %v1876 = vpop.f32.mrf.mxu0
    %v1877 = vadd.f32 %v1552, %v1876
    %v1878 = vpop.f32.mrf.mxu0
    %1879 = vmatprep.mubr.bf16.mxu0 0
    %1880 = vmatmul.mubr.bf16.gmra.mxu0 %v1628
    %v1881 = vpop.f32.mrf.mxu0
    %v1882 = vadd.f32 %v1552, %v1881
    %v1883 = vpop.f32.mrf.mxu0
    %v1884 = vpop.f32.mrf.mxu0
    %v1885 = vadd.f32 %v1552, %v1884
    %v1886 = vpop.f32.mrf.mxu0
    %1887 = vmatprep.mubr.bf16.mxu0 0
    %1888 = vmatmul.mubr.bf16.gmra.mxu0 %v1631
    %v1889 = vpop.f32.mrf.mxu0
    %v1890 = vadd.f32 %v1552, %v1889
    %v1891 = vpop.f32.mrf.mxu0
    %v1892 = vpop.f32.mrf.mxu0
    %v1893 = vadd.f32 %v1552, %v1892
    %v1894 = vpop.f32.mrf.mxu0
    %1895 = vmatprep.mubr.bf16.mxu0 0
    %1896 = vmatmul.mubr.bf16.gmra.mxu0 %v1634
    %v1897 = vpop.f32.mrf.mxu0
    %v1898 = vadd.f32 %v1552, %v1897
    %v1899 = vpop.f32.mrf.mxu0
    %v1900 = vpop.f32.mrf.mxu0
    %v1901 = vadd.f32 %v1552, %v1900
    %v1902 = vpop.f32.mrf.mxu0
    %1903 = vmatprep.mubr.bf16.mxu0 0
    %1904 = vmatmul.mubr.bf16.gmra.mxu0 %v1637
    %v1905 = vpop.f32.mrf.mxu0
    %v1906 = vadd.f32 %v1552, %v1905
    %v1907 = vpop.f32.mrf.mxu0
    %v1908 = vpop.f32.mrf.mxu0
    %v1909 = vadd.f32 %v1552, %v1908
    %v1910 = vpop.f32.mrf.mxu0
    %1911 = vmatprep.mubr.bf16.mxu0 0
    %1912 = vmatmul.mubr.bf16.gmra.mxu0 %v1640
    %v1913 = vpop.f32.mrf.mxu0
    %v1914 = vadd.f32 %v1552, %v1913
    %v1915 = vpop.f32.mrf.mxu0
    %v1916 = vpop.f32.mrf.mxu0
    %v1917 = vadd.f32 %v1552, %v1916
    %v1918 = vpop.f32.mrf.mxu0
    %1919 = vmatprep.mubr.bf16.mxu0 0
    %1920 = vmatmul.mubr.bf16.gmra.mxu0 %v1643
    %v1921 = vpop.f32.mrf.mxu0
    %v1922 = vadd.f32 %v1552, %v1921
    %v1923 = vpop.f32.mrf.mxu0
    %v1924 = vpop.f32.mrf.mxu0
    %v1925 = vadd.f32 %v1552, %v1924
    %v1926 = vpop.f32.mrf.mxu0
    %1927 = vmatprep.mubr.bf16.mxu0 0
    %1928 = vmatmul.mubr.bf16.gmra.mxu0 %v1646
    %v1929 = vpop.f32.mrf.mxu0
    %v1930 = vadd.f32 %v1552, %v1929
    %v1931 = vpop.f32.mrf.mxu0
    %v1932 = vpop.f32.mrf.mxu0
    %v1933 = vadd.f32 %v1552, %v1932
    %v1934 = vpop.f32.mrf.mxu0
    %1935 = vmatprep.mubr.bf16.mxu0 0
    %1936 = vmatmul.mubr.bf16.gmra.mxu0 %v1649
    %v1937 = vpop.f32.mrf.mxu0
    %v1938 = vadd.f32 %v1552, %v1937
    %v1939 = vpop.f32.mrf.mxu0
    %v1940 = vpop.f32.mrf.mxu0
    %v1941 = vadd.f32 %v1552, %v1940
    %v1942 = vpop.f32.mrf.mxu0
    %1943 = vdwg.mxu0
    %v1944 = vrot.slane %v1449, 6
    %v1945 = vrot.slane %v1450, 6
    %v1946 = vrot.slane %v1451, 6
    %v1947 = vrot.slane %v1452, 6
    %v1948 = vrot.slane %v1453, 6
    %v1949 = vrot.slane %v1454, 6
    %v1950 = vrot.slane %v1455, 6
    %v1951 = vrot.slane %v1456, 6
    %v1952 = vrot.slane %v1457, 6
    %v1953 = vrot.slane %v1458, 6
    %v1954 = vrot.slane %v1459, 6
    %v1955 = vrot.slane %v1460, 6
    %v1956 = vrot.slane %v1461, 6
    %v1957 = vrot.slane %v1462, 6
    %v1958 = vrot.slane %v1463, 6
    %v1959 = vrot.slane %v1464, 6
    %v1960 = vrot.slane %v1465, 6
    %v1961 = vrot.slane %v1466, 6
    %v1962 = vrot.slane %v1467, 6
    %v1963 = vrot.slane %v1468, 6
    %v1964 = vrot.slane %v1469, 6
    %v1965 = vrot.slane %v1470, 6
    %v1966 = vrot.slane %v1471, 6
    %v1967 = vrot.slane %v1472, 6
    %v1968 = vrot.slane %v1473, 6
    %v1969 = vrot.slane %v1474, 6
    %v1970 = vrot.slane %v1475, 6
    %v1971 = vrot.slane %v1476, 6
    %v1972 = vrot.slane %v1477, 6
    %v1973 = vrot.slane %v1478, 6
    %v1974 = vrot.slane %v1479, 6
    %v1975 = vrot.slane %v1480, 6
    %v1976 = vrot.slane %v1481, 6
    %v1977 = vrot.slane %v1482, 6
    %v1978 = vrot.slane %v1483, 6
    %v1979 = vrot.slane %v1484, 6
    %v1980 = vrot.slane %v1485, 6
    %v1981 = vrot.slane %v1486, 6
    %v1982 = vrot.slane %v1487, 6
    %v1983 = vrot.slane %v1488, 6
    %v1984 = vrot.slane %v1489, 6
    %v1985 = vrot.slane %v1490, 6
    %v1986 = vrot.slane %v1491, 6
    %v1987 = vrot.slane %v1492, 6
    %v1988 = vrot.slane %v1493, 6
    %v1989 = vrot.slane %v1494, 6
    %v1990 = vrot.slane %v1495, 6
    %v1991 = vrot.slane %v1496, 6
    %v1992 = vrot.slane %v1497, 6
    %v1993 = vrot.slane %v1498, 6
    %v1994 = vrot.slane %v1499, 6
    %v1995 = vrot.slane %v1500, 6
    %v1996 = vrot.slane %v1501, 6
    %v1997 = vrot.slane %v1502, 6
    %v1998 = vrot.slane %v1503, 6
    %v1999 = vrot.slane %v1504, 6
    %v2000 = vrot.slane %v1505, 6
    %v2001 = vrot.slane %v1506, 6
    %v2002 = vrot.slane %v1507, 6
    %v2003 = vrot.slane %v1508, 6
    %v2004 = vrot.slane %v1509, 6
    %v2005 = vrot.slane %v1510, 6
    %v2006 = vrot.slane %v1511, 6
    %v2007 = vrot.slane %v1512, 6
    %vm2008 = vcmp.lt.s32.totalorder %v41, 2
    %v2009 = vsel %vm2008, %v2006, %v2007
    %v2010 = vsel %vm2008, %v2005, %v2006
    %v2011 = vsel %vm2008, %v2004, %v2005
    %v2012 = vsel %vm2008, %v2003, %v2004
    %v2013 = vsel %vm2008, %v2002, %v2003
    %v2014 = vsel %vm2008, %v2001, %v2002
    %v2015 = vsel %vm2008, %v2000, %v2001
    %v2016 = vsel %vm2008, %v1999, %v2000
    %v2017 = vsel %vm2008, %v1998, %v1999
    %v2018 = vsel %vm2008, %v1997, %v1998
    %v2019 = vsel %vm2008, %v1996, %v1997
    %v2020 = vsel %vm2008, %v1995, %v1996
    %v2021 = vsel %vm2008, %v1994, %v1995
    %v2022 = vsel %vm2008, %v1993, %v1994
    %v2023 = vsel %vm2008, %v1992, %v1993
    %v2024 = vsel %vm2008, %v1991, %v1992
    %v2025 = vsel %vm2008, %v1990, %v1991
    %v2026 = vsel %vm2008, %v1989, %v1990
    %v2027 = vsel %vm2008, %v1988, %v1989
    %v2028 = vsel %vm2008, %v1987, %v1988
    %v2029 = vsel %vm2008, %v1986, %v1987
    %v2030 = vsel %vm2008, %v1985, %v1986
    %v2031 = vsel %vm2008, %v1984, %v1985
    %v2032 = vsel %vm2008, %v1983, %v1984
    %v2033 = vsel %vm2008, %v1982, %v1983
    %v2034 = vsel %vm2008, %v1981, %v1982
    %v2035 = vsel %vm2008, %v1980, %v1981
    %v2036 = vsel %vm2008, %v1979, %v1980
    %v2037 = vsel %vm2008, %v1978, %v1979
    %v2038 = vsel %vm2008, %v1977, %v1978
    %v2039 = vsel %vm2008, %v1976, %v1977
    %v2040 = vsel %vm2008, %v1975, %v1976
    %v2041 = vsel %vm2008, %v1974, %v1975
    %v2042 = vsel %vm2008, %v1973, %v1974
    %v2043 = vsel %vm2008, %v1972, %v1973
    %v2044 = vsel %vm2008, %v1971, %v1972
    %v2045 = vsel %vm2008, %v1970, %v1971
    %v2046 = vsel %vm2008, %v1969, %v1970
    %v2047 = vsel %vm2008, %v1968, %v1969
    %v2048 = vsel %vm2008, %v1967, %v1968
    %v2049 = vsel %vm2008, %v1966, %v1967
    %v2050 = vsel %vm2008, %v1965, %v1966
    %v2051 = vsel %vm2008, %v1964, %v1965
    %v2052 = vsel %vm2008, %v1963, %v1964
    %v2053 = vsel %vm2008, %v1962, %v1963
    %v2054 = vsel %vm2008, %v1961, %v1962
    %v2055 = vsel %vm2008, %v1960, %v1961
    %v2056 = vsel %vm2008, %v1959, %v1960
    %v2057 = vsel %vm2008, %v1958, %v1959
    %v2058 = vsel %vm2008, %v1957, %v1958
    %v2059 = vsel %vm2008, %v1956, %v1957
    %v2060 = vsel %vm2008, %v1955, %v1956
    %v2061 = vsel %vm2008, %v1954, %v1955
    %v2062 = vsel %vm2008, %v1953, %v1954
    %v2063 = vsel %vm2008, %v1952, %v1953
    %v2064 = vsel %vm2008, %v1951, %v1952
    %v2065 = vsel %vm2008, %v1950, %v1951
    %v2066 = vsel %vm2008, %v1949, %v1950
    %v2067 = vsel %vm2008, %v1948, %v1949
    %v2068 = vsel %vm2008, %v1947, %v1948
    %v2069 = vsel %vm2008, %v1946, %v1947
    %v2070 = vsel %vm2008, %v1945, %v1946
    %v2071 = vsel %vm2008, %v1944, %v1945
    %v2072 = vsel %vm2008, %v2007, %v1944
    %v2073 = vmul.f32 %v2072, %v1193
    %v2074 = vmul.f32 %v2071, %v1194
    %v2075 = vmul.f32 %v2070, %v1195
    %v2076 = vmul.f32 %v2069, %v1196
    %v2077 = vmul.f32 %v2068, %v1197
    %v2078 = vmul.f32 %v2067, %v1198
    %v2079 = vmul.f32 %v2066, %v1199
    %v2080 = vmul.f32 %v2065, %v1200
    %v2081 = vmul.f32 %v2064, %v1201
    %v2082 = vmul.f32 %v2063, %v1202
    %v2083 = vmul.f32 %v2062, %v1203
    %v2084 = vmul.f32 %v2061, %v1204
    %v2085 = vmul.f32 %v2060, %v1205
    %v2086 = vmul.f32 %v2059, %v1206
    %v2087 = vmul.f32 %v2058, %v1207
    %v2088 = vmul.f32 %v2057, %v1208
    %v2089 = vmul.f32 %v2056, %v1209
    %v2090 = vmul.f32 %v2055, %v1210
    %v2091 = vmul.f32 %v2054, %v1211
    %v2092 = vmul.f32 %v2053, %v1212
    %v2093 = vmul.f32 %v2052, %v1213
    %v2094 = vmul.f32 %v2051, %v1214
    %v2095 = vmul.f32 %v2050, %v1215
    %v2096 = vmul.f32 %v2049, %v1216
    %v2097 = vmul.f32 %v2048, %v1217
    %v2098 = vmul.f32 %v2047, %v1218
    %v2099 = vmul.f32 %v2046, %v1219
    %v2100 = vmul.f32 %v2045, %v1220
    %v2101 = vmul.f32 %v2044, %v1221
    %v2102 = vmul.f32 %v2043, %v1222
    %v2103 = vmul.f32 %v2042, %v1223
    %v2104 = vmul.f32 %v2041, %v1224
    %v2105 = vmul.f32 %v2040, %v1225
    %v2106 = vmul.f32 %v2039, %v1226
    %v2107 = vmul.f32 %v2038, %v1227
    %v2108 = vmul.f32 %v2037, %v1228
    %v2109 = vmul.f32 %v2036, %v1229
    %v2110 = vmul.f32 %v2035, %v1230
    %v2111 = vmul.f32 %v2034, %v1231
    %v2112 = vmul.f32 %v2033, %v1232
    %v2113 = vmul.f32 %v2032, %v1233
    %v2114 = vmul.f32 %v2031, %v1234
    %v2115 = vmul.f32 %v2030, %v1235
    %v2116 = vmul.f32 %v2029, %v1236
    %v2117 = vmul.f32 %v2028, %v1237
    %v2118 = vmul.f32 %v2027, %v1238
    %v2119 = vmul.f32 %v2026, %v1239
    %v2120 = vmul.f32 %v2025, %v1240
    %v2121 = vmul.f32 %v2024, %v1241
    %v2122 = vmul.f32 %v2023, %v1242
    %v2123 = vmul.f32 %v2022, %v1243
    %v2124 = vmul.f32 %v2021, %v1244
    %v2125 = vmul.f32 %v2020, %v1245
    %v2126 = vmul.f32 %v2019, %v1246
    %v2127 = vmul.f32 %v2018, %v1247
    %v2128 = vmul.f32 %v2017, %v1248
    %v2129 = vmul.f32 %v2016, %v1249
    %v2130 = vmul.f32 %v2015, %v1250
    %v2131 = vmul.f32 %v2014, %v1251
    %v2132 = vmul.f32 %v2013, %v1252
    %v2133 = vmul.f32 %v2012, %v1253
    %v2134 = vmul.f32 %v2011, %v1254
    %v2135 = vmul.f32 %v2010, %v1255
    %v2136 = vmul.f32 %v2009, %v1256
    %v2137 = vld [vmem:[%s1] sm:$0x7]
    %v2138 = vpack.c.bf16 %v2074, %v2073
    %v2139 = vpack.c.bf16 %v2076, %v2075
    %v2140 = vpack.c.bf16 %v2078, %v2077
    %v2141 = vpack.c.bf16 %v2080, %v2079
    %v2142 = vpack.c.bf16 %v2082, %v2081
    %v2143 = vpack.c.bf16 %v2084, %v2083
    %v2144 = vpack.c.bf16 %v2086, %v2085
    %v2145 = vpack.c.bf16 %v2088, %v2087
    %v2146 = vpack.c.bf16 %v2090, %v2089
    %v2147 = vpack.c.bf16 %v2092, %v2091
    %v2148 = vpack.c.bf16 %v2094, %v2093
    %v2149 = vpack.c.bf16 %v2096, %v2095
    %v2150 = vpack.c.bf16 %v2098, %v2097
    %v2151 = vpack.c.bf16 %v2100, %v2099
    %v2152 = vpack.c.bf16 %v2102, %v2101
    %v2153 = vpack.c.bf16 %v2104, %v2103
    %v2154 = vpack.c.bf16 %v2106, %v2105
    %v2155 = vpack.c.bf16 %v2108, %v2107
    %v2156 = vpack.c.bf16 %v2110, %v2109
    %v2157 = vpack.c.bf16 %v2112, %v2111
    %v2158 = vpack.c.bf16 %v2114, %v2113
    %v2159 = vpack.c.bf16 %v2116, %v2115
    %v2160 = vpack.c.bf16 %v2118, %v2117
    %v2161 = vpack.c.bf16 %v2120, %v2119
    %v2162 = vpack.c.bf16 %v2122, %v2121
    %v2163 = vpack.c.bf16 %v2124, %v2123
    %v2164 = vpack.c.bf16 %v2126, %v2125
    %v2165 = vpack.c.bf16 %v2128, %v2127
    %v2166 = vpack.c.bf16 %v2130, %v2129
    %v2167 = vpack.c.bf16 %v2132, %v2131
    %v2168 = vpack.c.bf16 %v2134, %v2133
    %v2169 = vpack.c.bf16 %v2136, %v2135
    %v2171 = vsel %vm1554, %v2138, 0
    %v2174 = vsel %vm1554, %v2139, 0
    %v2177 = vsel %vm1554, %v2140, 0
    %v2180 = vsel %vm1554, %v2141, 0
    %v2183 = vsel %vm1554, %v2142, 0
    %v2186 = vsel %vm1554, %v2143, 0
    %v2189 = vsel %vm1554, %v2144, 0
    %v2192 = vsel %vm1554, %v2145, 0
    %v2195 = vsel %vm1554, %v2146, 0
    %v2198 = vsel %vm1554, %v2147, 0
    %v2201 = vsel %vm1554, %v2148, 0
    %v2204 = vsel %vm1554, %v2149, 0
    %v2207 = vsel %vm1554, %v2150, 0
    %v2210 = vsel %vm1554, %v2151, 0
    %v2213 = vsel %vm1554, %v2152, 0
    %v2216 = vsel %vm1554, %v2153, 0
    %v2219 = vsel %vm1554, %v2154, 0
    %v2222 = vsel %vm1554, %v2155, 0
    %v2225 = vsel %vm1554, %v2156, 0
    %v2228 = vsel %vm1554, %v2157, 0
    %v2231 = vsel %vm1554, %v2158, 0
    %v2234 = vsel %vm1554, %v2159, 0
    %v2237 = vsel %vm1554, %v2160, 0
    %v2240 = vsel %vm1554, %v2161, 0
    %v2243 = vsel %vm1554, %v2162, 0
    %v2246 = vsel %vm1554, %v2163, 0
    %v2249 = vsel %vm1554, %v2164, 0
    %v2252 = vsel %vm1554, %v2165, 0
    %v2255 = vsel %vm1554, %v2166, 0
    %v2258 = vsel %vm1554, %v2167, 0
    %v2261 = vsel %vm1554, %v2168, 0
    %v2264 = vsel %vm1554, %v2169, 0
    %v2267 = vsel %vm1651, %v2137, 0
    %2269 = vmatprep.subr.bf16.mxu0 0
    %2270 = vmatpush1.bf16.msra.mxu0 0
    %2271 = vmatprep.subr.bf16.mxu0 0
    %2272 = vmatpush1.bf16.msra.mxu0 0
    %2273 = vmatprep.subr.bf16.mxu0 0
    %2274 = vmatpush1.bf16.msra.mxu0 0
    %2275 = vmatprep.subr.bf16.mxu0 0
    %2276 = vmatpush1.bf16.msra.mxu0 0
    %2277 = vmatprep.subr.bf16.mxu0 0
    %2278 = vmatpush1.bf16.msra.mxu0 0
    %2279 = vmatprep.subr.bf16.mxu0 0
    %2280 = vmatpush1.bf16.msra.mxu0 0
    %2281 = vmatprep.subr.bf16.mxu0 0
    %2282 = vmatpush1.bf16.msra.mxu0 0
    %2283 = vmatprep.subr.bf16.mxu0 0
    %2284 = vmatpush1.bf16.msra.mxu0 %v2267
    %2285 = vmatprep.subr.bf16.mxu0 0
    %2286 = vmatpush2.bf16.msra.mxu0 0
    %2287 = vmatprep.subr.bf16.mxu0 0
    %2288 = vmatpush2.bf16.msra.mxu0 0
    %2289 = vmatprep.subr.bf16.mxu0 0
    %2290 = vmatpush2.bf16.msra.mxu0 0
    %2291 = vmatprep.subr.bf16.mxu0 0
    %2292 = vmatpush2.bf16.msra.mxu0 0
    %2293 = vmatprep.subr.bf16.mxu0 0
    %2294 = vmatpush2.bf16.msra.mxu0 0
    %2295 = vmatprep.subr.bf16.mxu0 0
    %2296 = vmatpush2.bf16.msra.mxu0 0
    %2297 = vmatprep.subr.bf16.mxu0 0
    %2298 = vmatpush2.bf16.msra.mxu0 0
    %2299 = vmatprep.subr.bf16.mxu0 0
    %2300 = vmatpush2.bf16.msra.mxu0 0
    %2301 = vmatprep.mubr.bf16.mxu0 0
    %2302 = vmatmul.mubr.bf16.gmra.mxu0 %v2171
    %v2303 = vpop.f32.mrf.mxu0
    %v2304 = vadd.f32 0.0, %v2303
    %v2305 = vpop.f32.mrf.mxu0
    %v2306 = vpop.f32.mrf.mxu0
    %v2307 = vadd.f32 0.0, %v2306
    %v2308 = vpop.f32.mrf.mxu0
    %2309 = vmatprep.mubr.bf16.mxu0 0
    %2310 = vmatmul.mubr.bf16.gmra.mxu0 %v2174
    %v2311 = vpop.f32.mrf.mxu0
    %v2312 = vadd.f32 0.0, %v2311
    %v2313 = vpop.f32.mrf.mxu0
    %v2314 = vpop.f32.mrf.mxu0
    %v2315 = vadd.f32 0.0, %v2314
    %v2316 = vpop.f32.mrf.mxu0
    %2317 = vmatprep.mubr.bf16.mxu0 0
    %2318 = vmatmul.mubr.bf16.gmra.mxu0 %v2177
    %v2319 = vpop.f32.mrf.mxu0
    %v2320 = vadd.f32 0.0, %v2319
    %v2321 = vpop.f32.mrf.mxu0
    %v2322 = vpop.f32.mrf.mxu0
    %v2323 = vadd.f32 0.0, %v2322
    %v2324 = vpop.f32.mrf.mxu0
    %2325 = vmatprep.mubr.bf16.mxu0 0
    %2326 = vmatmul.mubr.bf16.gmra.mxu0 %v2180
    %v2327 = vpop.f32.mrf.mxu0
    %v2328 = vadd.f32 0.0, %v2327
    %v2329 = vpop.f32.mrf.mxu0
    %v2330 = vpop.f32.mrf.mxu0
    %v2331 = vadd.f32 0.0, %v2330
    %v2332 = vpop.f32.mrf.mxu0
    %2333 = vmatprep.mubr.bf16.mxu0 0
    %2334 = vmatmul.mubr.bf16.gmra.mxu0 %v2183
    %v2335 = vpop.f32.mrf.mxu0
    %v2336 = vadd.f32 0.0, %v2335
    %v2337 = vpop.f32.mrf.mxu0
    %v2338 = vpop.f32.mrf.mxu0
    %v2339 = vadd.f32 0.0, %v2338
    %v2340 = vpop.f32.mrf.mxu0
    %2341 = vmatprep.mubr.bf16.mxu0 0
    %2342 = vmatmul.mubr.bf16.gmra.mxu0 %v2186
    %v2343 = vpop.f32.mrf.mxu0
    %v2344 = vadd.f32 0.0, %v2343
    %v2345 = vpop.f32.mrf.mxu0
    %v2346 = vpop.f32.mrf.mxu0
    %v2347 = vadd.f32 0.0, %v2346
    %v2348 = vpop.f32.mrf.mxu0
    %2349 = vmatprep.mubr.bf16.mxu0 0
    %2350 = vmatmul.mubr.bf16.gmra.mxu0 %v2189
    %v2351 = vpop.f32.mrf.mxu0
    %v2352 = vadd.f32 0.0, %v2351
    %v2353 = vpop.f32.mrf.mxu0
    %v2354 = vpop.f32.mrf.mxu0
    %v2355 = vadd.f32 0.0, %v2354
    %v2356 = vpop.f32.mrf.mxu0
    %2357 = vmatprep.mubr.bf16.mxu0 0
    %2358 = vmatmul.mubr.bf16.gmra.mxu0 %v2192
    %v2359 = vpop.f32.mrf.mxu0
    %v2360 = vadd.f32 0.0, %v2359
    %v2361 = vpop.f32.mrf.mxu0
    %v2362 = vpop.f32.mrf.mxu0
    %v2363 = vadd.f32 0.0, %v2362
    %v2364 = vpop.f32.mrf.mxu0
    %2365 = vmatprep.mubr.bf16.mxu0 0
    %2366 = vmatmul.mubr.bf16.gmra.mxu0 %v2195
    %v2367 = vpop.f32.mrf.mxu0
    %v2368 = vadd.f32 0.0, %v2367
    %v2369 = vpop.f32.mrf.mxu0
    %v2370 = vpop.f32.mrf.mxu0
    %v2371 = vadd.f32 0.0, %v2370
    %v2372 = vpop.f32.mrf.mxu0
    %2373 = vmatprep.mubr.bf16.mxu0 0
    %2374 = vmatmul.mubr.bf16.gmra.mxu0 %v2198
    %v2375 = vpop.f32.mrf.mxu0
    %v2376 = vadd.f32 0.0, %v2375
    %v2377 = vpop.f32.mrf.mxu0
    %v2378 = vpop.f32.mrf.mxu0
    %v2379 = vadd.f32 0.0, %v2378
    %v2380 = vpop.f32.mrf.mxu0
    %2381 = vmatprep.mubr.bf16.mxu0 0
    %2382 = vmatmul.mubr.bf16.gmra.mxu0 %v2201
    %v2383 = vpop.f32.mrf.mxu0
    %v2384 = vadd.f32 0.0, %v2383
    %v2385 = vpop.f32.mrf.mxu0
    %v2386 = vpop.f32.mrf.mxu0
    %v2387 = vadd.f32 0.0, %v2386
    %v2388 = vpop.f32.mrf.mxu0
    %2389 = vmatprep.mubr.bf16.mxu0 0
    %2390 = vmatmul.mubr.bf16.gmra.mxu0 %v2204
    %v2391 = vpop.f32.mrf.mxu0
    %v2392 = vadd.f32 0.0, %v2391
    %v2393 = vpop.f32.mrf.mxu0
    %v2394 = vpop.f32.mrf.mxu0
    %v2395 = vadd.f32 0.0, %v2394
    %v2396 = vpop.f32.mrf.mxu0
    %2397 = vmatprep.mubr.bf16.mxu0 0
    %2398 = vmatmul.mubr.bf16.gmra.mxu0 %v2207
    %v2399 = vpop.f32.mrf.mxu0
    %v2400 = vadd.f32 0.0, %v2399
    %v2401 = vpop.f32.mrf.mxu0
    %v2402 = vpop.f32.mrf.mxu0
    %v2403 = vadd.f32 0.0, %v2402
    %v2404 = vpop.f32.mrf.mxu0
    %2405 = vmatprep.mubr.bf16.mxu0 0
    %2406 = vmatmul.mubr.bf16.gmra.mxu0 %v2210
    %v2407 = vpop.f32.mrf.mxu0
    %v2408 = vadd.f32 0.0, %v2407
    %v2409 = vpop.f32.mrf.mxu0
    %v2410 = vpop.f32.mrf.mxu0
    %v2411 = vadd.f32 0.0, %v2410
    %v2412 = vpop.f32.mrf.mxu0
    %2413 = vmatprep.mubr.bf16.mxu0 0
    %2414 = vmatmul.mubr.bf16.gmra.mxu0 %v2213
    %v2415 = vpop.f32.mrf.mxu0
    %v2416 = vadd.f32 0.0, %v2415
    %v2417 = vpop.f32.mrf.mxu0
    %v2418 = vpop.f32.mrf.mxu0
    %v2419 = vadd.f32 0.0, %v2418
    %v2420 = vpop.f32.mrf.mxu0
    %2421 = vmatprep.mubr.bf16.mxu0 0
    %2422 = vmatmul.mubr.bf16.gmra.mxu0 %v2216
    %v2423 = vpop.f32.mrf.mxu0
    %v2424 = vadd.f32 0.0, %v2423
    %v2425 = vpop.f32.mrf.mxu0
    %v2426 = vpop.f32.mrf.mxu0
    %v2427 = vadd.f32 0.0, %v2426
    %v2428 = vpop.f32.mrf.mxu0
    %2429 = vmatprep.mubr.bf16.mxu0 0
    %2430 = vmatmul.mubr.bf16.gmra.mxu0 %v2219
    %v2431 = vpop.f32.mrf.mxu0
    %v2432 = vadd.f32 0.0, %v2431
    %v2433 = vpop.f32.mrf.mxu0
    %v2434 = vpop.f32.mrf.mxu0
    %v2435 = vadd.f32 0.0, %v2434
    %v2436 = vpop.f32.mrf.mxu0
    %2437 = vmatprep.mubr.bf16.mxu0 0
    %2438 = vmatmul.mubr.bf16.gmra.mxu0 %v2222
    %v2439 = vpop.f32.mrf.mxu0
    %v2440 = vadd.f32 0.0, %v2439
    %v2441 = vpop.f32.mrf.mxu0
    %v2442 = vpop.f32.mrf.mxu0
    %v2443 = vadd.f32 0.0, %v2442
    %v2444 = vpop.f32.mrf.mxu0
    %2445 = vmatprep.mubr.bf16.mxu0 0
    %2446 = vmatmul.mubr.bf16.gmra.mxu0 %v2225
    %v2447 = vpop.f32.mrf.mxu0
    %v2448 = vadd.f32 0.0, %v2447
    %v2449 = vpop.f32.mrf.mxu0
    %v2450 = vpop.f32.mrf.mxu0
    %v2451 = vadd.f32 0.0, %v2450
    %v2452 = vpop.f32.mrf.mxu0
    %2453 = vmatprep.mubr.bf16.mxu0 0
    %2454 = vmatmul.mubr.bf16.gmra.mxu0 %v2228
    %v2455 = vpop.f32.mrf.mxu0
    %v2456 = vadd.f32 0.0, %v2455
    %v2457 = vpop.f32.mrf.mxu0
    %v2458 = vpop.f32.mrf.mxu0
    %v2459 = vadd.f32 0.0, %v2458
    %v2460 = vpop.f32.mrf.mxu0
    %2461 = vmatprep.mubr.bf16.mxu0 0
    %2462 = vmatmul.mubr.bf16.gmra.mxu0 %v2231
    %v2463 = vpop.f32.mrf.mxu0
    %v2464 = vadd.f32 0.0, %v2463
    %v2465 = vpop.f32.mrf.mxu0
    %v2466 = vpop.f32.mrf.mxu0
    %v2467 = vadd.f32 0.0, %v2466
    %v2468 = vpop.f32.mrf.mxu0
    %2469 = vmatprep.mubr.bf16.mxu0 0
    %2470 = vmatmul.mubr.bf16.gmra.mxu0 %v2234
    %v2471 = vpop.f32.mrf.mxu0
    %v2472 = vadd.f32 0.0, %v2471
    %v2473 = vpop.f32.mrf.mxu0
    %v2474 = vpop.f32.mrf.mxu0
    %v2475 = vadd.f32 0.0, %v2474
    %v2476 = vpop.f32.mrf.mxu0
    %2477 = vmatprep.mubr.bf16.mxu0 0
    %2478 = vmatmul.mubr.bf16.gmra.mxu0 %v2237
    %v2479 = vpop.f32.mrf.mxu0
    %v2480 = vadd.f32 0.0, %v2479
    %v2481 = vpop.f32.mrf.mxu0
    %v2482 = vpop.f32.mrf.mxu0
    %v2483 = vadd.f32 0.0, %v2482
    %v2484 = vpop.f32.mrf.mxu0
    %2485 = vmatprep.mubr.bf16.mxu0 0
    %2486 = vmatmul.mubr.bf16.gmra.mxu0 %v2240
    %v2487 = vpop.f32.mrf.mxu0
    %v2488 = vadd.f32 0.0, %v2487
    %v2489 = vpop.f32.mrf.mxu0
    %v2490 = vpop.f32.mrf.mxu0
    %v2491 = vadd.f32 0.0, %v2490
    %v2492 = vpop.f32.mrf.mxu0
    %2493 = vmatprep.mubr.bf16.mxu0 0
    %2494 = vmatmul.mubr.bf16.gmra.mxu0 %v2243
    %v2495 = vpop.f32.mrf.mxu0
    %v2496 = vadd.f32 0.0, %v2495
    %v2497 = vpop.f32.mrf.mxu0
    %v2498 = vpop.f32.mrf.mxu0
    %v2499 = vadd.f32 0.0, %v2498
    %v2500 = vpop.f32.mrf.mxu0
    %2501 = vmatprep.mubr.bf16.mxu0 0
    %2502 = vmatmul.mubr.bf16.gmra.mxu0 %v2246
    %v2503 = vpop.f32.mrf.mxu0
    %v2504 = vadd.f32 0.0, %v2503
    %v2505 = vpop.f32.mrf.mxu0
    %v2506 = vpop.f32.mrf.mxu0
    %v2507 = vadd.f32 0.0, %v2506
    %v2508 = vpop.f32.mrf.mxu0
    %2509 = vmatprep.mubr.bf16.mxu0 0
    %2510 = vmatmul.mubr.bf16.gmra.mxu0 %v2249
    %v2511 = vpop.f32.mrf.mxu0
    %v2512 = vadd.f32 0.0, %v2511
    %v2513 = vpop.f32.mrf.mxu0
    %v2514 = vpop.f32.mrf.mxu0
    %v2515 = vadd.f32 0.0, %v2514
    %v2516 = vpop.f32.mrf.mxu0
    %2517 = vmatprep.mubr.bf16.mxu0 0
    %2518 = vmatmul.mubr.bf16.gmra.mxu0 %v2252
    %v2519 = vpop.f32.mrf.mxu0
    %v2520 = vadd.f32 0.0, %v2519
    %v2521 = vpop.f32.mrf.mxu0
    %v2522 = vpop.f32.mrf.mxu0
    %v2523 = vadd.f32 0.0, %v2522
    %v2524 = vpop.f32.mrf.mxu0
    %2525 = vmatprep.mubr.bf16.mxu0 0
    %2526 = vmatmul.mubr.bf16.gmra.mxu0 %v2255
    %v2527 = vpop.f32.mrf.mxu0
    %v2528 = vadd.f32 0.0, %v2527
    %v2529 = vpop.f32.mrf.mxu0
    %v2530 = vpop.f32.mrf.mxu0
    %v2531 = vadd.f32 0.0, %v2530
    %v2532 = vpop.f32.mrf.mxu0
    %2533 = vmatprep.mubr.bf16.mxu0 0
    %2534 = vmatmul.mubr.bf16.gmra.mxu0 %v2258
    %v2535 = vpop.f32.mrf.mxu0
    %v2536 = vadd.f32 0.0, %v2535
    %v2537 = vpop.f32.mrf.mxu0
    %v2538 = vpop.f32.mrf.mxu0
    %v2539 = vadd.f32 0.0, %v2538
    %v2540 = vpop.f32.mrf.mxu0
    %2541 = vmatprep.mubr.bf16.mxu0 0
    %2542 = vmatmul.mubr.bf16.gmra.mxu0 %v2261
    %v2543 = vpop.f32.mrf.mxu0
    %v2544 = vadd.f32 0.0, %v2543
    %v2545 = vpop.f32.mrf.mxu0
    %v2546 = vpop.f32.mrf.mxu0
    %v2547 = vadd.f32 0.0, %v2546
    %v2548 = vpop.f32.mrf.mxu0
    %2549 = vmatprep.mubr.bf16.mxu0 0
    %2550 = vmatmul.mubr.bf16.gmra.mxu0 %v2264
    %v2551 = vpop.f32.mrf.mxu0
    %v2552 = vadd.f32 0.0, %v2551
    %v2553 = vpop.f32.mrf.mxu0
    %v2554 = vpop.f32.mrf.mxu0
    %v2555 = vadd.f32 0.0, %v2554
    %v2556 = vpop.f32.mrf.mxu0
    %2557 = vdwg.mxu0
    %v2558 = vadd.f32 %v1690, %v2304
    %v2559 = vadd.f32 %v1693, %v2307
    %v2560 = vadd.f32 %v1698, %v2312
    %v2561 = vadd.f32 %v1701, %v2315
    %v2562 = vadd.f32 %v1706, %v2320
    %v2563 = vadd.f32 %v1709, %v2323
    %v2564 = vadd.f32 %v1714, %v2328
    %v2565 = vadd.f32 %v1717, %v2331
    %v2566 = vadd.f32 %v1722, %v2336
    %v2567 = vadd.f32 %v1725, %v2339
    %v2568 = vadd.f32 %v1730, %v2344
    %v2569 = vadd.f32 %v1733, %v2347
    %v2570 = vadd.f32 %v1738, %v2352
    %v2571 = vadd.f32 %v1741, %v2355
    %v2572 = vadd.f32 %v1746, %v2360
    %v2573 = vadd.f32 %v1749, %v2363
    %v2574 = vadd.f32 %v1754, %v2368
    %v2575 = vadd.f32 %v1757, %v2371
    %v2576 = vadd.f32 %v1762, %v2376
    %v2577 = vadd.f32 %v1765, %v2379
    %v2578 = vadd.f32 %v1770, %v2384
    %v2579 = vadd.f32 %v1773, %v2387
    %v2580 = vadd.f32 %v1778, %v2392
    %v2581 = vadd.f32 %v1781, %v2395
    %v2582 = vadd.f32 %v1786, %v2400
    %v2583 = vadd.f32 %v1789, %v2403
    %v2584 = vadd.f32 %v1794, %v2408
    %v2585 = vadd.f32 %v1797, %v2411
    %v2586 = vadd.f32 %v1802, %v2416
    %v2587 = vadd.f32 %v1805, %v2419
    %v2588 = vadd.f32 %v1810, %v2424
    %v2589 = vadd.f32 %v1813, %v2427
    %v2590 = vadd.f32 %v1818, %v2432
    %v2591 = vadd.f32 %v1821, %v2435
    %v2592 = vadd.f32 %v1826, %v2440
    %v2593 = vadd.f32 %v1829, %v2443
    %v2594 = vadd.f32 %v1834, %v2448
    %v2595 = vadd.f32 %v1837, %v2451
    %v2596 = vadd.f32 %v1842, %v2456
    %v2597 = vadd.f32 %v1845, %v2459
    %v2598 = vadd.f32 %v1850, %v2464
    %v2599 = vadd.f32 %v1853, %v2467
    %v2600 = vadd.f32 %v1858, %v2472
    %v2601 = vadd.f32 %v1861, %v2475
    %v2602 = vadd.f32 %v1866, %v2480
    %v2603 = vadd.f32 %v1869, %v2483
    %v2604 = vadd.f32 %v1874, %v2488
    %v2605 = vadd.f32 %v1877, %v2491
    %v2606 = vadd.f32 %v1882, %v2496
    %v2607 = vadd.f32 %v1885, %v2499
    %v2608 = vadd.f32 %v1890, %v2504
    %v2609 = vadd.f32 %v1893, %v2507
    %v2610 = vadd.f32 %v1898, %v2512
    %v2611 = vadd.f32 %v1901, %v2515
    %v2612 = vadd.f32 %v1906, %v2520
    %v2613 = vadd.f32 %v1909, %v2523
    %v2614 = vadd.f32 %v1914, %v2528
    %v2615 = vadd.f32 %v1917, %v2531
    %v2616 = vadd.f32 %v1922, %v2536
    %v2617 = vadd.f32 %v1925, %v2539
    %v2618 = vadd.f32 %v1930, %v2544
    %v2619 = vadd.f32 %v1933, %v2547
    %v2620 = vadd.f32 %v1938, %v2552
    %v2621 = vadd.f32 %v1941, %v2555
    %v2622 = vrot.slane %v1449, 7
    %v2623 = vrot.slane %v1450, 7
    %v2624 = vrot.slane %v1451, 7
    %v2625 = vrot.slane %v1452, 7
    %v2626 = vrot.slane %v1453, 7
    %v2627 = vrot.slane %v1454, 7
    %v2628 = vrot.slane %v1455, 7
    %v2629 = vrot.slane %v1456, 7
    %v2630 = vrot.slane %v1457, 7
    %v2631 = vrot.slane %v1458, 7
    %v2632 = vrot.slane %v1459, 7
    %v2633 = vrot.slane %v1460, 7
    %v2634 = vrot.slane %v1461, 7
    %v2635 = vrot.slane %v1462, 7
    %v2636 = vrot.slane %v1463, 7
    %v2637 = vrot.slane %v1464, 7
    %v2638 = vrot.slane %v1465, 7
    %v2639 = vrot.slane %v1466, 7
    %v2640 = vrot.slane %v1467, 7
    %v2641 = vrot.slane %v1468, 7
    %v2642 = vrot.slane %v1469, 7
    %v2643 = vrot.slane %v1470, 7
    %v2644 = vrot.slane %v1471, 7
    %v2645 = vrot.slane %v1472, 7
    %v2646 = vrot.slane %v1473, 7
    %v2647 = vrot.slane %v1474, 7
    %v2648 = vrot.slane %v1475, 7
    %v2649 = vrot.slane %v1476, 7
    %v2650 = vrot.slane %v1477, 7
    %v2651 = vrot.slane %v1478, 7
    %v2652 = vrot.slane %v1479, 7
    %v2653 = vrot.slane %v1480, 7
    %v2654 = vrot.slane %v1481, 7
    %v2655 = vrot.slane %v1482, 7
    %v2656 = vrot.slane %v1483, 7
    %v2657 = vrot.slane %v1484, 7
    %v2658 = vrot.slane %v1485, 7
    %v2659 = vrot.slane %v1486, 7
    %v2660 = vrot.slane %v1487, 7
    %v2661 = vrot.slane %v1488, 7
    %v2662 = vrot.slane %v1489, 7
    %v2663 = vrot.slane %v1490, 7
    %v2664 = vrot.slane %v1491, 7
    %v2665 = vrot.slane %v1492, 7
    %v2666 = vrot.slane %v1493, 7
    %v2667 = vrot.slane %v1494, 7
    %v2668 = vrot.slane %v1495, 7
    %v2669 = vrot.slane %v1496, 7
    %v2670 = vrot.slane %v1497, 7
    %v2671 = vrot.slane %v1498, 7
    %v2672 = vrot.slane %v1499, 7
    %v2673 = vrot.slane %v1500, 7
    %v2674 = vrot.slane %v1501, 7
    %v2675 = vrot.slane %v1502, 7
    %v2676 = vrot.slane %v1503, 7
    %v2677 = vrot.slane %v1504, 7
    %v2678 = vrot.slane %v1505, 7
    %v2679 = vrot.slane %v1506, 7
    %v2680 = vrot.slane %v1507, 7
    %v2681 = vrot.slane %v1508, 7
    %v2682 = vrot.slane %v1509, 7
    %v2683 = vrot.slane %v1510, 7
    %v2684 = vrot.slane %v1511, 7
    %v2685 = vrot.slane %v1512, 7
    %vm2686 = vcmp.lt.s32.totalorder %v41, 1
    %v2687 = vsel %vm2686, %v2684, %v2685
    %v2688 = vsel %vm2686, %v2683, %v2684
    %v2689 = vsel %vm2686, %v2682, %v2683
    %v2690 = vsel %vm2686, %v2681, %v2682
    %v2691 = vsel %vm2686, %v2680, %v2681
    %v2692 = vsel %vm2686, %v2679, %v2680
    %v2693 = vsel %vm2686, %v2678, %v2679
    %v2694 = vsel %vm2686, %v2677, %v2678
    %v2695 = vsel %vm2686, %v2676, %v2677
    %v2696 = vsel %vm2686, %v2675, %v2676
    %v2697 = vsel %vm2686, %v2674, %v2675
    %v2698 = vsel %vm2686, %v2673, %v2674
    %v2699 = vsel %vm2686, %v2672, %v2673
    %v2700 = vsel %vm2686, %v2671, %v2672
    %v2701 = vsel %vm2686, %v2670, %v2671
    %v2702 = vsel %vm2686, %v2669, %v2670
    %v2703 = vsel %vm2686, %v2668, %v2669
    %v2704 = vsel %vm2686, %v2667, %v2668
    %v2705 = vsel %vm2686, %v2666, %v2667
    %v2706 = vsel %vm2686, %v2665, %v2666
    %v2707 = vsel %vm2686, %v2664, %v2665
    %v2708 = vsel %vm2686, %v2663, %v2664
    %v2709 = vsel %vm2686, %v2662, %v2663
    %v2710 = vsel %vm2686, %v2661, %v2662
    %v2711 = vsel %vm2686, %v2660, %v2661
    %v2712 = vsel %vm2686, %v2659, %v2660
    %v2713 = vsel %vm2686, %v2658, %v2659
    %v2714 = vsel %vm2686, %v2657, %v2658
    %v2715 = vsel %vm2686, %v2656, %v2657
    %v2716 = vsel %vm2686, %v2655, %v2656
    %v2717 = vsel %vm2686, %v2654, %v2655
    %v2718 = vsel %vm2686, %v2653, %v2654
    %v2719 = vsel %vm2686, %v2652, %v2653
    %v2720 = vsel %vm2686, %v2651, %v2652
    %v2721 = vsel %vm2686, %v2650, %v2651
    %v2722 = vsel %vm2686, %v2649, %v2650
    %v2723 = vsel %vm2686, %v2648, %v2649
    %v2724 = vsel %vm2686, %v2647, %v2648
    %v2725 = vsel %vm2686, %v2646, %v2647
    %v2726 = vsel %vm2686, %v2645, %v2646
    %v2727 = vsel %vm2686, %v2644, %v2645
    %v2728 = vsel %vm2686, %v2643, %v2644
    %v2729 = vsel %vm2686, %v2642, %v2643
    %v2730 = vsel %vm2686, %v2641, %v2642
    %v2731 = vsel %vm2686, %v2640, %v2641
    %v2732 = vsel %vm2686, %v2639, %v2640
    %v2733 = vsel %vm2686, %v2638, %v2639
    %v2734 = vsel %vm2686, %v2637, %v2638
    %v2735 = vsel %vm2686, %v2636, %v2637
    %v2736 = vsel %vm2686, %v2635, %v2636
    %v2737 = vsel %vm2686, %v2634, %v2635
    %v2738 = vsel %vm2686, %v2633, %v2634
    %v2739 = vsel %vm2686, %v2632, %v2633
    %v2740 = vsel %vm2686, %v2631, %v2632
    %v2741 = vsel %vm2686, %v2630, %v2631
    %v2742 = vsel %vm2686, %v2629, %v2630
    %v2743 = vsel %vm2686, %v2628, %v2629
    %v2744 = vsel %vm2686, %v2627, %v2628
    %v2745 = vsel %vm2686, %v2626, %v2627
    %v2746 = vsel %vm2686, %v2625, %v2626
    %v2747 = vsel %vm2686, %v2624, %v2625
    %v2748 = vsel %vm2686, %v2623, %v2624
    %v2749 = vsel %vm2686, %v2622, %v2623
    %v2750 = vsel %vm2686, %v2685, %v2622
    %v2751 = vmul.f32 %v2750, %v1001
    %v2752 = vmul.f32 %v2749, %v1002
    %v2753 = vmul.f32 %v2748, %v1003
    %v2754 = vmul.f32 %v2747, %v1004
    %v2755 = vmul.f32 %v2746, %v1005
    %v2756 = vmul.f32 %v2745, %v1006
    %v2757 = vmul.f32 %v2744, %v1007
    %v2758 = vmul.f32 %v2743, %v1008
    %v2759 = vmul.f32 %v2742, %v1009
    %v2760 = vmul.f32 %v2741, %v1010
    %v2761 = vmul.f32 %v2740, %v1011
    %v2762 = vmul.f32 %v2739, %v1012
    %v2763 = vmul.f32 %v2738, %v1013
    %v2764 = vmul.f32 %v2737, %v1014
    %v2765 = vmul.f32 %v2736, %v1015
    %v2766 = vmul.f32 %v2735, %v1016
    %v2767 = vmul.f32 %v2734, %v1017
    %v2768 = vmul.f32 %v2733, %v1018
    %v2769 = vmul.f32 %v2732, %v1019
    %v2770 = vmul.f32 %v2731, %v1020
    %v2771 = vmul.f32 %v2730, %v1021
    %v2772 = vmul.f32 %v2729, %v1022
    %v2773 = vmul.f32 %v2728, %v1023
    %v2774 = vmul.f32 %v2727, %v1024
    %v2775 = vmul.f32 %v2726, %v1025
    %v2776 = vmul.f32 %v2725, %v1026
    %v2777 = vmul.f32 %v2724, %v1027
    %v2778 = vmul.f32 %v2723, %v1028
    %v2779 = vmul.f32 %v2722, %v1029
    %v2780 = vmul.f32 %v2721, %v1030
    %v2781 = vmul.f32 %v2720, %v1031
    %v2782 = vmul.f32 %v2719, %v1032
    %v2783 = vmul.f32 %v2718, %v1033
    %v2784 = vmul.f32 %v2717, %v1034
    %v2785 = vmul.f32 %v2716, %v1035
    %v2786 = vmul.f32 %v2715, %v1036
    %v2787 = vmul.f32 %v2714, %v1037
    %v2788 = vmul.f32 %v2713, %v1038
    %v2789 = vmul.f32 %v2712, %v1039
    %v2790 = vmul.f32 %v2711, %v1040
    %v2791 = vmul.f32 %v2710, %v1041
    %v2792 = vmul.f32 %v2709, %v1042
    %v2793 = vmul.f32 %v2708, %v1043
    %v2794 = vmul.f32 %v2707, %v1044
    %v2795 = vmul.f32 %v2706, %v1045
    %v2796 = vmul.f32 %v2705, %v1046
    %v2797 = vmul.f32 %v2704, %v1047
    %v2798 = vmul.f32 %v2703, %v1048
    %v2799 = vmul.f32 %v2702, %v1049
    %v2800 = vmul.f32 %v2701, %v1050
    %v2801 = vmul.f32 %v2700, %v1051
    %v2802 = vmul.f32 %v2699, %v1052
    %v2803 = vmul.f32 %v2698, %v1053
    %v2804 = vmul.f32 %v2697, %v1054
    %v2805 = vmul.f32 %v2696, %v1055
    %v2806 = vmul.f32 %v2695, %v1056
    %v2807 = vmul.f32 %v2694, %v1057
    %v2808 = vmul.f32 %v2693, %v1058
    %v2809 = vmul.f32 %v2692, %v1059
    %v2810 = vmul.f32 %v2691, %v1060
    %v2811 = vmul.f32 %v2690, %v1061
    %v2812 = vmul.f32 %v2689, %v1062
    %v2813 = vmul.f32 %v2688, %v1063
    %v2814 = vmul.f32 %v2687, %v1064
    %s2815 = scalar_lea.vmem %s1, 4
    %v2816 = vld [vmem:[%s2815] sm:$0x7]
    %v2817 = vpack.c.bf16 %v2752, %v2751
    %v2818 = vpack.c.bf16 %v2754, %v2753
    %v2819 = vpack.c.bf16 %v2756, %v2755
    %v2820 = vpack.c.bf16 %v2758, %v2757
    %v2821 = vpack.c.bf16 %v2760, %v2759
    %v2822 = vpack.c.bf16 %v2762, %v2761
    %v2823 = vpack.c.bf16 %v2764, %v2763
    %v2824 = vpack.c.bf16 %v2766, %v2765
    %v2825 = vpack.c.bf16 %v2768, %v2767
    %v2826 = vpack.c.bf16 %v2770, %v2769
    %v2827 = vpack.c.bf16 %v2772, %v2771
    %v2828 = vpack.c.bf16 %v2774, %v2773
    %v2829 = vpack.c.bf16 %v2776, %v2775
    %v2830 = vpack.c.bf16 %v2778, %v2777
    %v2831 = vpack.c.bf16 %v2780, %v2779
    %v2832 = vpack.c.bf16 %v2782, %v2781
    %v2833 = vpack.c.bf16 %v2784, %v2783
    %v2834 = vpack.c.bf16 %v2786, %v2785
    %v2835 = vpack.c.bf16 %v2788, %v2787
    %v2836 = vpack.c.bf16 %v2790, %v2789
    %v2837 = vpack.c.bf16 %v2792, %v2791
    %v2838 = vpack.c.bf16 %v2794, %v2793
    %v2839 = vpack.c.bf16 %v2796, %v2795
    %v2840 = vpack.c.bf16 %v2798, %v2797
    %v2841 = vpack.c.bf16 %v2800, %v2799
    %v2842 = vpack.c.bf16 %v2802, %v2801
    %v2843 = vpack.c.bf16 %v2804, %v2803
    %v2844 = vpack.c.bf16 %v2806, %v2805
    %v2845 = vpack.c.bf16 %v2808, %v2807
    %v2846 = vpack.c.bf16 %v2810, %v2809
    %v2847 = vpack.c.bf16 %v2812, %v2811
    %v2848 = vpack.c.bf16 %v2814, %v2813
    %v2850 = vsel %vm1554, %v2817, 0
    %v2853 = vsel %vm1554, %v2818, 0
    %v2856 = vsel %vm1554, %v2819, 0
    %v2859 = vsel %vm1554, %v2820, 0
    %v2862 = vsel %vm1554, %v2821, 0
    %v2865 = vsel %vm1554, %v2822, 0
    %v2868 = vsel %vm1554, %v2823, 0
    %v2871 = vsel %vm1554, %v2824, 0
    %v2874 = vsel %vm1554, %v2825, 0
    %v2877 = vsel %vm1554, %v2826, 0
    %v2880 = vsel %vm1554, %v2827, 0
    %v2883 = vsel %vm1554, %v2828, 0
    %v2886 = vsel %vm1554, %v2829, 0
    %v2889 = vsel %vm1554, %v2830, 0
    %v2892 = vsel %vm1554, %v2831, 0
    %v2895 = vsel %vm1554, %v2832, 0
    %v2898 = vsel %vm1554, %v2833, 0
    %v2901 = vsel %vm1554, %v2834, 0
    %v2904 = vsel %vm1554, %v2835, 0
    %v2907 = vsel %vm1554, %v2836, 0
    %v2910 = vsel %vm1554, %v2837, 0
    %v2913 = vsel %vm1554, %v2838, 0
    %v2916 = vsel %vm1554, %v2839, 0
    %v2919 = vsel %vm1554, %v2840, 0
    %v2922 = vsel %vm1554, %v2841, 0
    %v2925 = vsel %vm1554, %v2842, 0
    %v2928 = vsel %vm1554, %v2843, 0
    %v2931 = vsel %vm1554, %v2844, 0
    %v2934 = vsel %vm1554, %v2845, 0
    %v2937 = vsel %vm1554, %v2846, 0
    %v2940 = vsel %vm1554, %v2847, 0
    %v2943 = vsel %vm1554, %v2848, 0
    %v2946 = vsel %vm1651, %v2816, 0
    %2948 = vmatprep.subr.bf16.mxu0 0
    %2949 = vmatpush1.bf16.msra.mxu0 0
    %2950 = vmatprep.subr.bf16.mxu0 0
    %2951 = vmatpush1.bf16.msra.mxu0 0
    %2952 = vmatprep.subr.bf16.mxu0 0
    %2953 = vmatpush1.bf16.msra.mxu0 0
    %2954 = vmatprep.subr.bf16.mxu0 0
    %2955 = vmatpush1.bf16.msra.mxu0 0
    %2956 = vmatprep.subr.bf16.mxu0 0
    %2957 = vmatpush1.bf16.msra.mxu0 0
    %2958 = vmatprep.subr.bf16.mxu0 0
    %2959 = vmatpush1.bf16.msra.mxu0 0
    %2960 = vmatprep.subr.bf16.mxu0 0
    %2961 = vmatpush1.bf16.msra.mxu0 0
    %2962 = vmatprep.subr.bf16.mxu0 0
    %2963 = vmatpush1.bf16.msra.mxu0 %v2946
    %2964 = vmatprep.subr.bf16.mxu0 0
    %2965 = vmatpush2.bf16.msra.mxu0 0
    %2966 = vmatprep.subr.bf16.mxu0 0
    %2967 = vmatpush2.bf16.msra.mxu0 0
    %2968 = vmatprep.subr.bf16.mxu0 0
    %2969 = vmatpush2.bf16.msra.mxu0 0
    %2970 = vmatprep.subr.bf16.mxu0 0
    %2971 = vmatpush2.bf16.msra.mxu0 0
    %2972 = vmatprep.subr.bf16.mxu0 0
    %2973 = vmatpush2.bf16.msra.mxu0 0
    %2974 = vmatprep.subr.bf16.mxu0 0
    %2975 = vmatpush2.bf16.msra.mxu0 0
    %2976 = vmatprep.subr.bf16.mxu0 0
    %2977 = vmatpush2.bf16.msra.mxu0 0
    %2978 = vmatprep.subr.bf16.mxu0 0
    %2979 = vmatpush2.bf16.msra.mxu0 0
    %2980 = vmatprep.mubr.bf16.mxu0 0
    %2981 = vmatmul.mubr.bf16.gmra.mxu0 %v2850
    %v2982 = vpop.f32.mrf.mxu0
    %v2983 = vadd.f32 0.0, %v2982
    %v2984 = vpop.f32.mrf.mxu0
    %v2985 = vpop.f32.mrf.mxu0
    %v2986 = vadd.f32 0.0, %v2985
    %v2987 = vpop.f32.mrf.mxu0
    %2988 = vmatprep.mubr.bf16.mxu0 0
    %2989 = vmatmul.mubr.bf16.gmra.mxu0 %v2853
    %v2990 = vpop.f32.mrf.mxu0
    %v2991 = vadd.f32 0.0, %v2990
    %v2992 = vpop.f32.mrf.mxu0
    %v2993 = vpop.f32.mrf.mxu0
    %v2994 = vadd.f32 0.0, %v2993
    %v2995 = vpop.f32.mrf.mxu0
    %2996 = vmatprep.mubr.bf16.mxu0 0
    %2997 = vmatmul.mubr.bf16.gmra.mxu0 %v2856
    %v2998 = vpop.f32.mrf.mxu0
    %v2999 = vadd.f32 0.0, %v2998
    %v3000 = vpop.f32.mrf.mxu0
    %v3001 = vpop.f32.mrf.mxu0
    %v3002 = vadd.f32 0.0, %v3001
    %v3003 = vpop.f32.mrf.mxu0
    %3004 = vmatprep.mubr.bf16.mxu0 0
    %3005 = vmatmul.mubr.bf16.gmra.mxu0 %v2859
    %v3006 = vpop.f32.mrf.mxu0
    %v3007 = vadd.f32 0.0, %v3006
    %v3008 = vpop.f32.mrf.mxu0
    %v3009 = vpop.f32.mrf.mxu0
    %v3010 = vadd.f32 0.0, %v3009
    %v3011 = vpop.f32.mrf.mxu0
    %3012 = vmatprep.mubr.bf16.mxu0 0
    %3013 = vmatmul.mubr.bf16.gmra.mxu0 %v2862
    %v3014 = vpop.f32.mrf.mxu0
    %v3015 = vadd.f32 0.0, %v3014
    %v3016 = vpop.f32.mrf.mxu0
    %v3017 = vpop.f32.mrf.mxu0
    %v3018 = vadd.f32 0.0, %v3017
    %v3019 = vpop.f32.mrf.mxu0
    %3020 = vmatprep.mubr.bf16.mxu0 0
    %3021 = vmatmul.mubr.bf16.gmra.mxu0 %v2865
    %v3022 = vpop.f32.mrf.mxu0
    %v3023 = vadd.f32 0.0, %v3022
    %v3024 = vpop.f32.mrf.mxu0
    %v3025 = vpop.f32.mrf.mxu0
    %v3026 = vadd.f32 0.0, %v3025
    %v3027 = vpop.f32.mrf.mxu0
    %3028 = vmatprep.mubr.bf16.mxu0 0
    %3029 = vmatmul.mubr.bf16.gmra.mxu0 %v2868
    %v3030 = vpop.f32.mrf.mxu0
    %v3031 = vadd.f32 0.0, %v3030
    %v3032 = vpop.f32.mrf.mxu0
    %v3033 = vpop.f32.mrf.mxu0
    %v3034 = vadd.f32 0.0, %v3033
    %v3035 = vpop.f32.mrf.mxu0
    %3036 = vmatprep.mubr.bf16.mxu0 0
    %3037 = vmatmul.mubr.bf16.gmra.mxu0 %v2871
    %v3038 = vpop.f32.mrf.mxu0
    %v3039 = vadd.f32 0.0, %v3038
    %v3040 = vpop.f32.mrf.mxu0
    %v3041 = vpop.f32.mrf.mxu0
    %v3042 = vadd.f32 0.0, %v3041
    %v3043 = vpop.f32.mrf.mxu0
    %3044 = vmatprep.mubr.bf16.mxu0 0
    %3045 = vmatmul.mubr.bf16.gmra.mxu0 %v2874
    %v3046 = vpop.f32.mrf.mxu0
    %v3047 = vadd.f32 0.0, %v3046
    %v3048 = vpop.f32.mrf.mxu0
    %v3049 = vpop.f32.mrf.mxu0
    %v3050 = vadd.f32 0.0, %v3049
    %v3051 = vpop.f32.mrf.mxu0
    %3052 = vmatprep.mubr.bf16.mxu0 0
    %3053 = vmatmul.mubr.bf16.gmra.mxu0 %v2877
    %v3054 = vpop.f32.mrf.mxu0
    %v3055 = vadd.f32 0.0, %v3054
    %v3056 = vpop.f32.mrf.mxu0
    %v3057 = vpop.f32.mrf.mxu0
    %v3058 = vadd.f32 0.0, %v3057
    %v3059 = vpop.f32.mrf.mxu0
    %3060 = vmatprep.mubr.bf16.mxu0 0
    %3061 = vmatmul.mubr.bf16.gmra.mxu0 %v2880
    %v3062 = vpop.f32.mrf.mxu0
    %v3063 = vadd.f32 0.0, %v3062
    %v3064 = vpop.f32.mrf.mxu0
    %v3065 = vpop.f32.mrf.mxu0
    %v3066 = vadd.f32 0.0, %v3065
    %v3067 = vpop.f32.mrf.mxu0
    %3068 = vmatprep.mubr.bf16.mxu0 0
    %3069 = vmatmul.mubr.bf16.gmra.mxu0 %v2883
    %v3070 = vpop.f32.mrf.mxu0
    %v3071 = vadd.f32 0.0, %v3070
    %v3072 = vpop.f32.mrf.mxu0
    %v3073 = vpop.f32.mrf.mxu0
    %v3074 = vadd.f32 0.0, %v3073
    %v3075 = vpop.f32.mrf.mxu0
    %3076 = vmatprep.mubr.bf16.mxu0 0
    %3077 = vmatmul.mubr.bf16.gmra.mxu0 %v2886
    %v3078 = vpop.f32.mrf.mxu0
    %v3079 = vadd.f32 0.0, %v3078
    %v3080 = vpop.f32.mrf.mxu0
    %v3081 = vpop.f32.mrf.mxu0
    %v3082 = vadd.f32 0.0, %v3081
    %v3083 = vpop.f32.mrf.mxu0
    %3084 = vmatprep.mubr.bf16.mxu0 0
    %3085 = vmatmul.mubr.bf16.gmra.mxu0 %v2889
    %v3086 = vpop.f32.mrf.mxu0
    %v3087 = vadd.f32 0.0, %v3086
    %v3088 = vpop.f32.mrf.mxu0
    %v3089 = vpop.f32.mrf.mxu0
    %v3090 = vadd.f32 0.0, %v3089
    %v3091 = vpop.f32.mrf.mxu0
    %3092 = vmatprep.mubr.bf16.mxu0 0
    %3093 = vmatmul.mubr.bf16.gmra.mxu0 %v2892
    %v3094 = vpop.f32.mrf.mxu0
    %v3095 = vadd.f32 0.0, %v3094
    %v3096 = vpop.f32.mrf.mxu0
    %v3097 = vpop.f32.mrf.mxu0
    %v3098 = vadd.f32 0.0, %v3097
    %v3099 = vpop.f32.mrf.mxu0
    %3100 = vmatprep.mubr.bf16.mxu0 0
    %3101 = vmatmul.mubr.bf16.gmra.mxu0 %v2895
    %v3102 = vpop.f32.mrf.mxu0
    %v3103 = vadd.f32 0.0, %v3102
    %v3104 = vpop.f32.mrf.mxu0
    %v3105 = vpop.f32.mrf.mxu0
    %v3106 = vadd.f32 0.0, %v3105
    %v3107 = vpop.f32.mrf.mxu0
    %3108 = vmatprep.mubr.bf16.mxu0 0
    %3109 = vmatmul.mubr.bf16.gmra.mxu0 %v2898
    %v3110 = vpop.f32.mrf.mxu0
    %v3111 = vadd.f32 0.0, %v3110
    %v3112 = vpop.f32.mrf.mxu0
    %v3113 = vpop.f32.mrf.mxu0
    %v3114 = vadd.f32 0.0, %v3113
    %v3115 = vpop.f32.mrf.mxu0
    %3116 = vmatprep.mubr.bf16.mxu0 0
    %3117 = vmatmul.mubr.bf16.gmra.mxu0 %v2901
    %v3118 = vpop.f32.mrf.mxu0
    %v3119 = vadd.f32 0.0, %v3118
    %v3120 = vpop.f32.mrf.mxu0
    %v3121 = vpop.f32.mrf.mxu0
    %v3122 = vadd.f32 0.0, %v3121
    %v3123 = vpop.f32.mrf.mxu0
    %3124 = vmatprep.mubr.bf16.mxu0 0
    %3125 = vmatmul.mubr.bf16.gmra.mxu0 %v2904
    %v3126 = vpop.f32.mrf.mxu0
    %v3127 = vadd.f32 0.0, %v3126
    %v3128 = vpop.f32.mrf.mxu0
    %v3129 = vpop.f32.mrf.mxu0
    %v3130 = vadd.f32 0.0, %v3129
    %v3131 = vpop.f32.mrf.mxu0
    %3132 = vmatprep.mubr.bf16.mxu0 0
    %3133 = vmatmul.mubr.bf16.gmra.mxu0 %v2907
    %v3134 = vpop.f32.mrf.mxu0
    %v3135 = vadd.f32 0.0, %v3134
    %v3136 = vpop.f32.mrf.mxu0
    %v3137 = vpop.f32.mrf.mxu0
    %v3138 = vadd.f32 0.0, %v3137
    %v3139 = vpop.f32.mrf.mxu0
    %3140 = vmatprep.mubr.bf16.mxu0 0
    %3141 = vmatmul.mubr.bf16.gmra.mxu0 %v2910
    %v3142 = vpop.f32.mrf.mxu0
    %v3143 = vadd.f32 0.0, %v3142
    %v3144 = vpop.f32.mrf.mxu0
    %v3145 = vpop.f32.mrf.mxu0
    %v3146 = vadd.f32 0.0, %v3145
    %v3147 = vpop.f32.mrf.mxu0
    %3148 = vmatprep.mubr.bf16.mxu0 0
    %3149 = vmatmul.mubr.bf16.gmra.mxu0 %v2913
    %v3150 = vpop.f32.mrf.mxu0
    %v3151 = vadd.f32 0.0, %v3150
    %v3152 = vpop.f32.mrf.mxu0
    %v3153 = vpop.f32.mrf.mxu0
    %v3154 = vadd.f32 0.0, %v3153
    %v3155 = vpop.f32.mrf.mxu0
    %3156 = vmatprep.mubr.bf16.mxu0 0
    %3157 = vmatmul.mubr.bf16.gmra.mxu0 %v2916
    %v3158 = vpop.f32.mrf.mxu0
    %v3159 = vadd.f32 0.0, %v3158
    %v3160 = vpop.f32.mrf.mxu0
    %v3161 = vpop.f32.mrf.mxu0
    %v3162 = vadd.f32 0.0, %v3161
    %v3163 = vpop.f32.mrf.mxu0
    %3164 = vmatprep.mubr.bf16.mxu0 0
    %3165 = vmatmul.mubr.bf16.gmra.mxu0 %v2919
    %v3166 = vpop.f32.mrf.mxu0
    %v3167 = vadd.f32 0.0, %v3166
    %v3168 = vpop.f32.mrf.mxu0
    %v3169 = vpop.f32.mrf.mxu0
    %v3170 = vadd.f32 0.0, %v3169
    %v3171 = vpop.f32.mrf.mxu0
    %3172 = vmatprep.mubr.bf16.mxu0 0
    %3173 = vmatmul.mubr.bf16.gmra.mxu0 %v2922
    %v3174 = vpop.f32.mrf.mxu0
    %v3175 = vadd.f32 0.0, %v3174
    %v3176 = vpop.f32.mrf.mxu0
    %v3177 = vpop.f32.mrf.mxu0
    %v3178 = vadd.f32 0.0, %v3177
    %v3179 = vpop.f32.mrf.mxu0
    %3180 = vmatprep.mubr.bf16.mxu0 0
    %3181 = vmatmul.mubr.bf16.gmra.mxu0 %v2925
    %v3182 = vpop.f32.mrf.mxu0
    %v3183 = vadd.f32 0.0, %v3182
    %v3184 = vpop.f32.mrf.mxu0
    %v3185 = vpop.f32.mrf.mxu0
    %v3186 = vadd.f32 0.0, %v3185
    %v3187 = vpop.f32.mrf.mxu0
    %3188 = vmatprep.mubr.bf16.mxu0 0
    %3189 = vmatmul.mubr.bf16.gmra.mxu0 %v2928
    %v3190 = vpop.f32.mrf.mxu0
    %v3191 = vadd.f32 0.0, %v3190
    %v3192 = vpop.f32.mrf.mxu0
    %v3193 = vpop.f32.mrf.mxu0
    %v3194 = vadd.f32 0.0, %v3193
    %v3195 = vpop.f32.mrf.mxu0
    %3196 = vmatprep.mubr.bf16.mxu0 0
    %3197 = vmatmul.mubr.bf16.gmra.mxu0 %v2931
    %v3198 = vpop.f32.mrf.mxu0
    %v3199 = vadd.f32 0.0, %v3198
    %v3200 = vpop.f32.mrf.mxu0
    %v3201 = vpop.f32.mrf.mxu0
    %v3202 = vadd.f32 0.0, %v3201
    %v3203 = vpop.f32.mrf.mxu0
    %3204 = vmatprep.mubr.bf16.mxu0 0
    %3205 = vmatmul.mubr.bf16.gmra.mxu0 %v2934
    %v3206 = vpop.f32.mrf.mxu0
    %v3207 = vadd.f32 0.0, %v3206
    %v3208 = vpop.f32.mrf.mxu0
    %v3209 = vpop.f32.mrf.mxu0
    %v3210 = vadd.f32 0.0, %v3209
    %v3211 = vpop.f32.mrf.mxu0
    %3212 = vmatprep.mubr.bf16.mxu0 0
    %3213 = vmatmul.mubr.bf16.gmra.mxu0 %v2937
    %v3214 = vpop.f32.mrf.mxu0
    %v3215 = vadd.f32 0.0, %v3214
    %v3216 = vpop.f32.mrf.mxu0
    %v3217 = vpop.f32.mrf.mxu0
    %v3218 = vadd.f32 0.0, %v3217
    %v3219 = vpop.f32.mrf.mxu0
    %3220 = vmatprep.mubr.bf16.mxu0 0
    %3221 = vmatmul.mubr.bf16.gmra.mxu0 %v2940
    %v3222 = vpop.f32.mrf.mxu0
    %v3223 = vadd.f32 0.0, %v3222
    %v3224 = vpop.f32.mrf.mxu0
    %v3225 = vpop.f32.mrf.mxu0
    %v3226 = vadd.f32 0.0, %v3225
    %v3227 = vpop.f32.mrf.mxu0
    %3228 = vmatprep.mubr.bf16.mxu0 0
    %3229 = vmatmul.mubr.bf16.gmra.mxu0 %v2943
    %v3230 = vpop.f32.mrf.mxu0
    %v3231 = vadd.f32 0.0, %v3230
    %v3232 = vpop.f32.mrf.mxu0
    %v3233 = vpop.f32.mrf.mxu0
    %v3234 = vadd.f32 0.0, %v3233
    %v3235 = vpop.f32.mrf.mxu0
    %3236 = vdwg.mxu0
    %v3237 = vadd.f32 %v2558, %v2983
    %v3238 = vadd.f32 %v2559, %v2986
    %v3239 = vadd.f32 %v2560, %v2991
    %v3240 = vadd.f32 %v2561, %v2994
    %v3241 = vadd.f32 %v2562, %v2999
    %v3242 = vadd.f32 %v2563, %v3002
    %v3243 = vadd.f32 %v2564, %v3007
    %v3244 = vadd.f32 %v2565, %v3010
    %v3245 = vadd.f32 %v2566, %v3015
    %v3246 = vadd.f32 %v2567, %v3018
    %v3247 = vadd.f32 %v2568, %v3023
    %v3248 = vadd.f32 %v2569, %v3026
    %v3249 = vadd.f32 %v2570, %v3031
    %v3250 = vadd.f32 %v2571, %v3034
    %v3251 = vadd.f32 %v2572, %v3039
    %v3252 = vadd.f32 %v2573, %v3042
    %v3253 = vadd.f32 %v2574, %v3047
    %v3254 = vadd.f32 %v2575, %v3050
    %v3255 = vadd.f32 %v2576, %v3055
    %v3256 = vadd.f32 %v2577, %v3058
    %v3257 = vadd.f32 %v2578, %v3063
    %v3258 = vadd.f32 %v2579, %v3066
    %v3259 = vadd.f32 %v2580, %v3071
    %v3260 = vadd.f32 %v2581, %v3074
    %v3261 = vadd.f32 %v2582, %v3079
    %v3262 = vadd.f32 %v2583, %v3082
    %v3263 = vadd.f32 %v2584, %v3087
    %v3264 = vadd.f32 %v2585, %v3090
    %v3265 = vadd.f32 %v2586, %v3095
    %v3266 = vadd.f32 %v2587, %v3098
    %v3267 = vadd.f32 %v2588, %v3103
    %v3268 = vadd.f32 %v2589, %v3106
    %v3269 = vadd.f32 %v2590, %v3111
    %v3270 = vadd.f32 %v2591, %v3114
    %v3271 = vadd.f32 %v2592, %v3119
    %v3272 = vadd.f32 %v2593, %v3122
    %v3273 = vadd.f32 %v2594, %v3127
    %v3274 = vadd.f32 %v2595, %v3130
    %v3275 = vadd.f32 %v2596, %v3135
    %v3276 = vadd.f32 %v2597, %v3138
    %v3277 = vadd.f32 %v2598, %v3143
    %v3278 = vadd.f32 %v2599, %v3146
    %v3279 = vadd.f32 %v2600, %v3151
    %v3280 = vadd.f32 %v2601, %v3154
    %v3281 = vadd.f32 %v2602, %v3159
    %v3282 = vadd.f32 %v2603, %v3162
    %v3283 = vadd.f32 %v2604, %v3167
    %v3284 = vadd.f32 %v2605, %v3170
    %v3285 = vadd.f32 %v2606, %v3175
    %v3286 = vadd.f32 %v2607, %v3178
    %v3287 = vadd.f32 %v2608, %v3183
    %v3288 = vadd.f32 %v2609, %v3186
    %v3289 = vadd.f32 %v2610, %v3191
    %v3290 = vadd.f32 %v2611, %v3194
    %v3291 = vadd.f32 %v2612, %v3199
    %v3292 = vadd.f32 %v2613, %v3202
    %v3293 = vadd.f32 %v2614, %v3207
    %v3294 = vadd.f32 %v2615, %v3210
    %v3295 = vadd.f32 %v2616, %v3215
    %v3296 = vadd.f32 %v2617, %v3218
    %v3297 = vadd.f32 %v2618, %v3223
    %v3298 = vadd.f32 %v2619, %v3226
    %v3299 = vadd.f32 %v2620, %v3231
    %v3300 = vadd.f32 %v2621, %v3234
    %v3301 = vmax.f32 %v3237, 0.0
    %v3302 = vmax.f32 %v3238, 0.0
    %v3303 = vmax.f32 %v3239, 0.0
    %v3304 = vmax.f32 %v3240, 0.0
    %v3305 = vmax.f32 %v3241, 0.0
    %v3306 = vmax.f32 %v3242, 0.0
    %v3307 = vmax.f32 %v3243, 0.0
    %v3308 = vmax.f32 %v3244, 0.0
    %v3309 = vmax.f32 %v3245, 0.0
    %v3310 = vmax.f32 %v3246, 0.0
    %v3311 = vmax.f32 %v3247, 0.0
    %v3312 = vmax.f32 %v3248, 0.0
    %v3313 = vmax.f32 %v3249, 0.0
    %v3314 = vmax.f32 %v3250, 0.0
    %v3315 = vmax.f32 %v3251, 0.0
    %v3316 = vmax.f32 %v3252, 0.0
    %v3317 = vmax.f32 %v3253, 0.0
    %v3318 = vmax.f32 %v3254, 0.0
    %v3319 = vmax.f32 %v3255, 0.0
    %v3320 = vmax.f32 %v3256, 0.0
    %v3321 = vmax.f32 %v3257, 0.0
    %v3322 = vmax.f32 %v3258, 0.0
    %v3323 = vmax.f32 %v3259, 0.0
    %v3324 = vmax.f32 %v3260, 0.0
    %v3325 = vmax.f32 %v3261, 0.0
    %v3326 = vmax.f32 %v3262, 0.0
    %v3327 = vmax.f32 %v3263, 0.0
    %v3328 = vmax.f32 %v3264, 0.0
    %v3329 = vmax.f32 %v3265, 0.0
    %v3330 = vmax.f32 %v3266, 0.0
    %v3331 = vmax.f32 %v3267, 0.0
    %v3332 = vmax.f32 %v3268, 0.0
    %v3333 = vmax.f32 %v3269, 0.0
    %v3334 = vmax.f32 %v3270, 0.0
    %v3335 = vmax.f32 %v3271, 0.0
    %v3336 = vmax.f32 %v3272, 0.0
    %v3337 = vmax.f32 %v3273, 0.0
    %v3338 = vmax.f32 %v3274, 0.0
    %v3339 = vmax.f32 %v3275, 0.0
    %v3340 = vmax.f32 %v3276, 0.0
    %v3341 = vmax.f32 %v3277, 0.0
    %v3342 = vmax.f32 %v3278, 0.0
    %v3343 = vmax.f32 %v3279, 0.0
    %v3344 = vmax.f32 %v3280, 0.0
    %v3345 = vmax.f32 %v3281, 0.0
    %v3346 = vmax.f32 %v3282, 0.0
    %v3347 = vmax.f32 %v3283, 0.0
    %v3348 = vmax.f32 %v3284, 0.0
    %v3349 = vmax.f32 %v3285, 0.0
    %v3350 = vmax.f32 %v3286, 0.0
    %v3351 = vmax.f32 %v3287, 0.0
    %v3352 = vmax.f32 %v3288, 0.0
    %v3353 = vmax.f32 %v3289, 0.0
    %v3354 = vmax.f32 %v3290, 0.0
    %v3355 = vmax.f32 %v3291, 0.0
    %v3356 = vmax.f32 %v3292, 0.0
    %v3357 = vmax.f32 %v3293, 0.0
    %v3358 = vmax.f32 %v3294, 0.0
    %v3359 = vmax.f32 %v3295, 0.0
    %v3360 = vmax.f32 %v3296, 0.0
    %v3361 = vmax.f32 %v3297, 0.0
    %v3362 = vmax.f32 %v3298, 0.0
    %v3363 = vmax.f32 %v3299, 0.0
    %v3364 = vmax.f32 %v3300, 0.0
    %s3365 = scalar_lea.vmem %s3, 32
    %v3366 = vld [vmem:[%s3365] sm:$0xf]
    %v3367 = vld [vmem:[%s3365 + $0x4] sm:$0xf]
    %v3368 = vld [vmem:[%s3365 + $0x8] sm:$0xf]
    %v3369 = vld [vmem:[%s3365 + $0xc] sm:$0xf]
    %v3370 = vpack.c.bf16 %v3302, %v3301
    %v3371 = vpack.c.bf16 %v3304, %v3303
    %v3372 = vpack.c.bf16 %v3306, %v3305
    %v3373 = vpack.c.bf16 %v3308, %v3307
    %v3374 = vpack.c.bf16 %v3310, %v3309
    %v3375 = vpack.c.bf16 %v3312, %v3311
    %v3376 = vpack.c.bf16 %v3314, %v3313
    %v3377 = vpack.c.bf16 %v3316, %v3315
    %v3378 = vpack.c.bf16 %v3318, %v3317
    %v3379 = vpack.c.bf16 %v3320, %v3319
    %v3380 = vpack.c.bf16 %v3322, %v3321
    %v3381 = vpack.c.bf16 %v3324, %v3323
    %v3382 = vpack.c.bf16 %v3326, %v3325
    %v3383 = vpack.c.bf16 %v3328, %v3327
    %v3384 = vpack.c.bf16 %v3330, %v3329
    %v3385 = vpack.c.bf16 %v3332, %v3331
    %v3386 = vpack.c.bf16 %v3334, %v3333
    %v3387 = vpack.c.bf16 %v3336, %v3335
    %v3388 = vpack.c.bf16 %v3338, %v3337
    %v3389 = vpack.c.bf16 %v3340, %v3339
    %v3390 = vpack.c.bf16 %v3342, %v3341
    %v3391 = vpack.c.bf16 %v3344, %v3343
    %v3392 = vpack.c.bf16 %v3346, %v3345
    %v3393 = vpack.c.bf16 %v3348, %v3347
    %v3394 = vpack.c.bf16 %v3350, %v3349
    %v3395 = vpack.c.bf16 %v3352, %v3351
    %v3396 = vpack.c.bf16 %v3354, %v3353
    %v3397 = vpack.c.bf16 %v3356, %v3355
    %v3398 = vpack.c.bf16 %v3358, %v3357
    %v3399 = vpack.c.bf16 %v3360, %v3359
    %v3400 = vpack.c.bf16 %v3362, %v3361
    %v3401 = vpack.c.bf16 %v3364, %v3363
    %v3402 = vld [vmem:[%s4] sm:$0x1]
    %v3404 = vlaneseq
    %v3405 = vshrl.u32 %v3404, 7
    %v3406 = vsub.s32 0, %v3405
    %v3407 = vrot.slane %v3402, %v3406
    %v3413 = vunpack.c.l.b16 %v3366
    %v3414 = vunpack.c.l.b16 %v3367
    %v3415 = vunpack.c.l.b16 %v3368
    %v3416 = vunpack.c.l.b16 %v3369
    %v3417 = vpack.c.b16 %v3414, %v3413
    %v3418 = vpack.c.b16 %v3416, %v3415
    %vm3421 = vcmask 261120
    %v3423 = vsel %vm3421, %v3370, 0
    %v3426 = vsel %vm3421, %v3371, 0
    %v3429 = vsel %vm3421, %v3372, 0
    %v3432 = vsel %vm3421, %v3373, 0
    %v3435 = vsel %vm3421, %v3374, 0
    %v3438 = vsel %vm3421, %v3375, 0
    %v3441 = vsel %vm3421, %v3376, 0
    %v3444 = vsel %vm3421, %v3377, 0
    %v3447 = vsel %vm3421, %v3378, 0
    %v3450 = vsel %vm3421, %v3379, 0
    %v3453 = vsel %vm3421, %v3380, 0
    %v3456 = vsel %vm3421, %v3381, 0
    %v3459 = vsel %vm3421, %v3382, 0
    %v3462 = vsel %vm3421, %v3383, 0
    %v3465 = vsel %vm3421, %v3384, 0
    %v3468 = vsel %vm3421, %v3385, 0
    %v3471 = vsel %vm3421, %v3386, 0
    %v3474 = vsel %vm3421, %v3387, 0
    %v3477 = vsel %vm3421, %v3388, 0
    %v3480 = vsel %vm3421, %v3389, 0
    %v3483 = vsel %vm3421, %v3390, 0
    %v3486 = vsel %vm3421, %v3391, 0
    %v3489 = vsel %vm3421, %v3392, 0
    %v3492 = vsel %vm3421, %v3393, 0
    %v3495 = vsel %vm3421, %v3394, 0
    %v3498 = vsel %vm3421, %v3395, 0
    %v3501 = vsel %vm3421, %v3396, 0
    %v3504 = vsel %vm3421, %v3397, 0
    %v3507 = vsel %vm3421, %v3398, 0
    %v3510 = vsel %vm3421, %v3399, 0
    %v3513 = vsel %vm3421, %v3400, 0
    %v3516 = vsel %vm3421, %v3401, 0
    %3518 = vmatprep.subr.bf16.mxu0 0
    %3519 = vmatpush1.bf16.msra.mxu0 0
    %3520 = vmatprep.subr.bf16.mxu0 0
    %3521 = vmatpush1.bf16.msra.mxu0 0
    %3522 = vmatprep.subr.bf16.mxu0 0
    %3523 = vmatpush1.bf16.msra.mxu0 0
    %3524 = vmatprep.subr.bf16.mxu0 0
    %3525 = vmatpush1.bf16.msra.mxu0 0
    %3526 = vmatprep.subr.bf16.mxu0 0
    %3527 = vmatpush1.bf16.msra.mxu0 0
    %3528 = vmatprep.subr.bf16.mxu0 0
    %3529 = vmatpush1.bf16.msra.mxu0 0
    %3530 = vmatprep.subr.bf16.mxu0 0
    %3531 = vmatpush1.bf16.msra.mxu0 %v3418
    %3532 = vmatprep.subr.bf16.mxu0 0
    %3533 = vmatpush1.bf16.msra.mxu0 %v3417
    %3534 = vmatprep.subr.bf16.mxu0 0
    %3535 = vmatpush2.bf16.msra.mxu0 0
    %3536 = vmatprep.subr.bf16.mxu0 0
    %3537 = vmatpush2.bf16.msra.mxu0 0
    %3538 = vmatprep.subr.bf16.mxu0 0
    %3539 = vmatpush2.bf16.msra.mxu0 0
    %3540 = vmatprep.subr.bf16.mxu0 0
    %3541 = vmatpush2.bf16.msra.mxu0 0
    %3542 = vmatprep.subr.bf16.mxu0 0
    %3543 = vmatpush2.bf16.msra.mxu0 0
    %3544 = vmatprep.subr.bf16.mxu0 0
    %3545 = vmatpush2.bf16.msra.mxu0 0
    %3546 = vmatprep.subr.bf16.mxu0 0
    %3547 = vmatpush2.bf16.msra.mxu0 0
    %3548 = vmatprep.subr.bf16.mxu0 0
    %3549 = vmatpush2.bf16.msra.mxu0 0
    %3550 = vmatprep.mubr.bf16.mxu0 0
    %3551 = vmatmul.mubr.bf16.gmra.mxu0 %v3423
    %v3552 = vpop.f32.mrf.mxu0
    %v3553 = vadd.f32 %v3407, %v3552
    %v3554 = vpop.f32.mrf.mxu0
    %v3555 = vpop.f32.mrf.mxu0
    %v3556 = vadd.f32 %v3407, %v3555
    %v3557 = vpop.f32.mrf.mxu0
    %3558 = vmatprep.mubr.bf16.mxu0 0
    %3559 = vmatmul.mubr.bf16.gmra.mxu0 %v3426
    %v3560 = vpop.f32.mrf.mxu0
    %v3561 = vadd.f32 %v3407, %v3560
    %v3562 = vpop.f32.mrf.mxu0
    %v3563 = vpop.f32.mrf.mxu0
    %v3564 = vadd.f32 %v3407, %v3563
    %v3565 = vpop.f32.mrf.mxu0
    %3566 = vmatprep.mubr.bf16.mxu0 0
    %3567 = vmatmul.mubr.bf16.gmra.mxu0 %v3429
    %v3568 = vpop.f32.mrf.mxu0
    %v3569 = vadd.f32 %v3407, %v3568
    %v3570 = vpop.f32.mrf.mxu0
    %v3571 = vpop.f32.mrf.mxu0
    %v3572 = vadd.f32 %v3407, %v3571
    %v3573 = vpop.f32.mrf.mxu0
    %3574 = vmatprep.mubr.bf16.mxu0 0
    %3575 = vmatmul.mubr.bf16.gmra.mxu0 %v3432
    %v3576 = vpop.f32.mrf.mxu0
    %v3577 = vadd.f32 %v3407, %v3576
    %v3578 = vpop.f32.mrf.mxu0
    %v3579 = vpop.f32.mrf.mxu0
    %v3580 = vadd.f32 %v3407, %v3579
    %v3581 = vpop.f32.mrf.mxu0
    %3582 = vmatprep.mubr.bf16.mxu0 0
    %3583 = vmatmul.mubr.bf16.gmra.mxu0 %v3435
    %v3584 = vpop.f32.mrf.mxu0
    %v3585 = vadd.f32 %v3407, %v3584
    %v3586 = vpop.f32.mrf.mxu0
    %v3587 = vpop.f32.mrf.mxu0
    %v3588 = vadd.f32 %v3407, %v3587
    %v3589 = vpop.f32.mrf.mxu0
    %3590 = vmatprep.mubr.bf16.mxu0 0
    %3591 = vmatmul.mubr.bf16.gmra.mxu0 %v3438
    %v3592 = vpop.f32.mrf.mxu0
    %v3593 = vadd.f32 %v3407, %v3592
    %v3594 = vpop.f32.mrf.mxu0
    %v3595 = vpop.f32.mrf.mxu0
    %v3596 = vadd.f32 %v3407, %v3595
    %v3597 = vpop.f32.mrf.mxu0
    %3598 = vmatprep.mubr.bf16.mxu0 0
    %3599 = vmatmul.mubr.bf16.gmra.mxu0 %v3441
    %v3600 = vpop.f32.mrf.mxu0
    %v3601 = vadd.f32 %v3407, %v3600
    %v3602 = vpop.f32.mrf.mxu0
    %v3603 = vpop.f32.mrf.mxu0
    %v3604 = vadd.f32 %v3407, %v3603
    %v3605 = vpop.f32.mrf.mxu0
    %3606 = vmatprep.mubr.bf16.mxu0 0
    %3607 = vmatmul.mubr.bf16.gmra.mxu0 %v3444
    %v3608 = vpop.f32.mrf.mxu0
    %v3609 = vadd.f32 %v3407, %v3608
    %v3610 = vpop.f32.mrf.mxu0
    %v3611 = vpop.f32.mrf.mxu0
    %v3612 = vadd.f32 %v3407, %v3611
    %v3613 = vpop.f32.mrf.mxu0
    %3614 = vmatprep.mubr.bf16.mxu0 0
    %3615 = vmatmul.mubr.bf16.gmra.mxu0 %v3447
    %v3616 = vpop.f32.mrf.mxu0
    %v3617 = vadd.f32 %v3407, %v3616
    %v3618 = vpop.f32.mrf.mxu0
    %v3619 = vpop.f32.mrf.mxu0
    %v3620 = vadd.f32 %v3407, %v3619
    %v3621 = vpop.f32.mrf.mxu0
    %3622 = vmatprep.mubr.bf16.mxu0 0
    %3623 = vmatmul.mubr.bf16.gmra.mxu0 %v3450
    %v3624 = vpop.f32.mrf.mxu0
    %v3625 = vadd.f32 %v3407, %v3624
    %v3626 = vpop.f32.mrf.mxu0
    %v3627 = vpop.f32.mrf.mxu0
    %v3628 = vadd.f32 %v3407, %v3627
    %v3629 = vpop.f32.mrf.mxu0
    %3630 = vmatprep.mubr.bf16.mxu0 0
    %3631 = vmatmul.mubr.bf16.gmra.mxu0 %v3453
    %v3632 = vpop.f32.mrf.mxu0
    %v3633 = vadd.f32 %v3407, %v3632
    %v3634 = vpop.f32.mrf.mxu0
    %v3635 = vpop.f32.mrf.mxu0
    %v3636 = vadd.f32 %v3407, %v3635
    %v3637 = vpop.f32.mrf.mxu0
    %3638 = vmatprep.mubr.bf16.mxu0 0
    %3639 = vmatmul.mubr.bf16.gmra.mxu0 %v3456
    %v3640 = vpop.f32.mrf.mxu0
    %v3641 = vadd.f32 %v3407, %v3640
    %v3642 = vpop.f32.mrf.mxu0
    %v3643 = vpop.f32.mrf.mxu0
    %v3644 = vadd.f32 %v3407, %v3643
    %v3645 = vpop.f32.mrf.mxu0
    %3646 = vmatprep.mubr.bf16.mxu0 0
    %3647 = vmatmul.mubr.bf16.gmra.mxu0 %v3459
    %v3648 = vpop.f32.mrf.mxu0
    %v3649 = vadd.f32 %v3407, %v3648
    %v3650 = vpop.f32.mrf.mxu0
    %v3651 = vpop.f32.mrf.mxu0
    %v3652 = vadd.f32 %v3407, %v3651
    %v3653 = vpop.f32.mrf.mxu0
    %3654 = vmatprep.mubr.bf16.mxu0 0
    %3655 = vmatmul.mubr.bf16.gmra.mxu0 %v3462
    %v3656 = vpop.f32.mrf.mxu0
    %v3657 = vadd.f32 %v3407, %v3656
    %v3658 = vpop.f32.mrf.mxu0
    %v3659 = vpop.f32.mrf.mxu0
    %v3660 = vadd.f32 %v3407, %v3659
    %v3661 = vpop.f32.mrf.mxu0
    %3662 = vmatprep.mubr.bf16.mxu0 0
    %3663 = vmatmul.mubr.bf16.gmra.mxu0 %v3465
    %v3664 = vpop.f32.mrf.mxu0
    %v3665 = vadd.f32 %v3407, %v3664
    %v3666 = vpop.f32.mrf.mxu0
    %v3667 = vpop.f32.mrf.mxu0
    %v3668 = vadd.f32 %v3407, %v3667
    %v3669 = vpop.f32.mrf.mxu0
    %3670 = vmatprep.mubr.bf16.mxu0 0
    %3671 = vmatmul.mubr.bf16.gmra.mxu0 %v3468
    %v3672 = vpop.f32.mrf.mxu0
    %v3673 = vadd.f32 %v3407, %v3672
    %v3674 = vpop.f32.mrf.mxu0
    %v3675 = vpop.f32.mrf.mxu0
    %v3676 = vadd.f32 %v3407, %v3675
    %v3677 = vpop.f32.mrf.mxu0
    %3678 = vmatprep.mubr.bf16.mxu0 0
    %3679 = vmatmul.mubr.bf16.gmra.mxu0 %v3471
    %v3680 = vpop.f32.mrf.mxu0
    %v3681 = vadd.f32 %v3407, %v3680
    %v3682 = vpop.f32.mrf.mxu0
    %v3683 = vpop.f32.mrf.mxu0
    %v3684 = vadd.f32 %v3407, %v3683
    %v3685 = vpop.f32.mrf.mxu0
    %3686 = vmatprep.mubr.bf16.mxu0 0
    %3687 = vmatmul.mubr.bf16.gmra.mxu0 %v3474
    %v3688 = vpop.f32.mrf.mxu0
    %v3689 = vadd.f32 %v3407, %v3688
    %v3690 = vpop.f32.mrf.mxu0
    %v3691 = vpop.f32.mrf.mxu0
    %v3692 = vadd.f32 %v3407, %v3691
    %v3693 = vpop.f32.mrf.mxu0
    %3694 = vmatprep.mubr.bf16.mxu0 0
    %3695 = vmatmul.mubr.bf16.gmra.mxu0 %v3477
    %v3696 = vpop.f32.mrf.mxu0
    %v3697 = vadd.f32 %v3407, %v3696
    %v3698 = vpop.f32.mrf.mxu0
    %v3699 = vpop.f32.mrf.mxu0
    %v3700 = vadd.f32 %v3407, %v3699
    %v3701 = vpop.f32.mrf.mxu0
    %3702 = vmatprep.mubr.bf16.mxu0 0
    %3703 = vmatmul.mubr.bf16.gmra.mxu0 %v3480
    %v3704 = vpop.f32.mrf.mxu0
    %v3705 = vadd.f32 %v3407, %v3704
    %v3706 = vpop.f32.mrf.mxu0
    %v3707 = vpop.f32.mrf.mxu0
    %v3708 = vadd.f32 %v3407, %v3707
    %v3709 = vpop.f32.mrf.mxu0
    %3710 = vmatprep.mubr.bf16.mxu0 0
    %3711 = vmatmul.mubr.bf16.gmra.mxu0 %v3483
    %v3712 = vpop.f32.mrf.mxu0
    %v3713 = vadd.f32 %v3407, %v3712
    %v3714 = vpop.f32.mrf.mxu0
    %v3715 = vpop.f32.mrf.mxu0
    %v3716 = vadd.f32 %v3407, %v3715
    %v3717 = vpop.f32.mrf.mxu0
    %3718 = vmatprep.mubr.bf16.mxu0 0
    %3719 = vmatmul.mubr.bf16.gmra.mxu0 %v3486
    %v3720 = vpop.f32.mrf.mxu0
    %v3721 = vadd.f32 %v3407, %v3720
    %v3722 = vpop.f32.mrf.mxu0
    %v3723 = vpop.f32.mrf.mxu0
    %v3724 = vadd.f32 %v3407, %v3723
    %v3725 = vpop.f32.mrf.mxu0
    %3726 = vmatprep.mubr.bf16.mxu0 0
    %3727 = vmatmul.mubr.bf16.gmra.mxu0 %v3489
    %v3728 = vpop.f32.mrf.mxu0
    %v3729 = vadd.f32 %v3407, %v3728
    %v3730 = vpop.f32.mrf.mxu0
    %v3731 = vpop.f32.mrf.mxu0
    %v3732 = vadd.f32 %v3407, %v3731
    %v3733 = vpop.f32.mrf.mxu0
    %3734 = vmatprep.mubr.bf16.mxu0 0
    %3735 = vmatmul.mubr.bf16.gmra.mxu0 %v3492
    %v3736 = vpop.f32.mrf.mxu0
    %v3737 = vadd.f32 %v3407, %v3736
    %v3738 = vpop.f32.mrf.mxu0
    %v3739 = vpop.f32.mrf.mxu0
    %v3740 = vadd.f32 %v3407, %v3739
    %v3741 = vpop.f32.mrf.mxu0
    %3742 = vmatprep.mubr.bf16.mxu0 0
    %3743 = vmatmul.mubr.bf16.gmra.mxu0 %v3495
    %v3744 = vpop.f32.mrf.mxu0
    %v3745 = vadd.f32 %v3407, %v3744
    %v3746 = vpop.f32.mrf.mxu0
    %v3747 = vpop.f32.mrf.mxu0
    %v3748 = vadd.f32 %v3407, %v3747
    %v3749 = vpop.f32.mrf.mxu0
    %3750 = vmatprep.mubr.bf16.mxu0 0
    %3751 = vmatmul.mubr.bf16.gmra.mxu0 %v3498
    %v3752 = vpop.f32.mrf.mxu0
    %v3753 = vadd.f32 %v3407, %v3752
    %v3754 = vpop.f32.mrf.mxu0
    %v3755 = vpop.f32.mrf.mxu0
    %v3756 = vadd.f32 %v3407, %v3755
    %v3757 = vpop.f32.mrf.mxu0
    %3758 = vmatprep.mubr.bf16.mxu0 0
    %3759 = vmatmul.mubr.bf16.gmra.mxu0 %v3501
    %v3760 = vpop.f32.mrf.mxu0
    %v3761 = vadd.f32 %v3407, %v3760
    %v3762 = vpop.f32.mrf.mxu0
    %v3763 = vpop.f32.mrf.mxu0
    %v3764 = vadd.f32 %v3407, %v3763
    %v3765 = vpop.f32.mrf.mxu0
    %3766 = vmatprep.mubr.bf16.mxu0 0
    %3767 = vmatmul.mubr.bf16.gmra.mxu0 %v3504
    %v3768 = vpop.f32.mrf.mxu0
    %v3769 = vadd.f32 %v3407, %v3768
    %v3770 = vpop.f32.mrf.mxu0
    %v3771 = vpop.f32.mrf.mxu0
    %v3772 = vadd.f32 %v3407, %v3771
    %v3773 = vpop.f32.mrf.mxu0
    %3774 = vmatprep.mubr.bf16.mxu0 0
    %3775 = vmatmul.mubr.bf16.gmra.mxu0 %v3507
    %v3776 = vpop.f32.mrf.mxu0
    %v3777 = vadd.f32 %v3407, %v3776
    %v3778 = vpop.f32.mrf.mxu0
    %v3779 = vpop.f32.mrf.mxu0
    %v3780 = vadd.f32 %v3407, %v3779
    %v3781 = vpop.f32.mrf.mxu0
    %3782 = vmatprep.mubr.bf16.mxu0 0
    %3783 = vmatmul.mubr.bf16.gmra.mxu0 %v3510
    %v3784 = vpop.f32.mrf.mxu0
    %v3785 = vadd.f32 %v3407, %v3784
    %v3786 = vpop.f32.mrf.mxu0
    %v3787 = vpop.f32.mrf.mxu0
    %v3788 = vadd.f32 %v3407, %v3787
    %v3789 = vpop.f32.mrf.mxu0
    %3790 = vmatprep.mubr.bf16.mxu0 0
    %3791 = vmatmul.mubr.bf16.gmra.mxu0 %v3513
    %v3792 = vpop.f32.mrf.mxu0
    %v3793 = vadd.f32 %v3407, %v3792
    %v3794 = vpop.f32.mrf.mxu0
    %v3795 = vpop.f32.mrf.mxu0
    %v3796 = vadd.f32 %v3407, %v3795
    %v3797 = vpop.f32.mrf.mxu0
    %3798 = vmatprep.mubr.bf16.mxu0 0
    %3799 = vmatmul.mubr.bf16.gmra.mxu0 %v3516
    %v3800 = vpop.f32.mrf.mxu0
    %v3801 = vadd.f32 %v3407, %v3800
    %v3802 = vpop.f32.mrf.mxu0
    %v3803 = vpop.f32.mrf.mxu0
    %v3804 = vadd.f32 %v3407, %v3803
    %v3805 = vpop.f32.mrf.mxu0
    %3806 = vdwg.mxu0
    %v3807 = vrot.slane %v3301, 6
    %v3808 = vrot.slane %v3302, 6
    %v3809 = vrot.slane %v3303, 6
    %v3810 = vrot.slane %v3304, 6
    %v3811 = vrot.slane %v3305, 6
    %v3812 = vrot.slane %v3306, 6
    %v3813 = vrot.slane %v3307, 6
    %v3814 = vrot.slane %v3308, 6
    %v3815 = vrot.slane %v3309, 6
    %v3816 = vrot.slane %v3310, 6
    %v3817 = vrot.slane %v3311, 6
    %v3818 = vrot.slane %v3312, 6
    %v3819 = vrot.slane %v3313, 6
    %v3820 = vrot.slane %v3314, 6
    %v3821 = vrot.slane %v3315, 6
    %v3822 = vrot.slane %v3316, 6
    %v3823 = vrot.slane %v3317, 6
    %v3824 = vrot.slane %v3318, 6
    %v3825 = vrot.slane %v3319, 6
    %v3826 = vrot.slane %v3320, 6
    %v3827 = vrot.slane %v3321, 6
    %v3828 = vrot.slane %v3322, 6
    %v3829 = vrot.slane %v3323, 6
    %v3830 = vrot.slane %v3324, 6
    %v3831 = vrot.slane %v3325, 6
    %v3832 = vrot.slane %v3326, 6
    %v3833 = vrot.slane %v3327, 6
    %v3834 = vrot.slane %v3328, 6
    %v3835 = vrot.slane %v3329, 6
    %v3836 = vrot.slane %v3330, 6
    %v3837 = vrot.slane %v3331, 6
    %v3838 = vrot.slane %v3332, 6
    %v3839 = vrot.slane %v3333, 6
    %v3840 = vrot.slane %v3334, 6
    %v3841 = vrot.slane %v3335, 6
    %v3842 = vrot.slane %v3336, 6
    %v3843 = vrot.slane %v3337, 6
    %v3844 = vrot.slane %v3338, 6
    %v3845 = vrot.slane %v3339, 6
    %v3846 = vrot.slane %v3340, 6
    %v3847 = vrot.slane %v3341, 6
    %v3848 = vrot.slane %v3342, 6
    %v3849 = vrot.slane %v3343, 6
    %v3850 = vrot.slane %v3344, 6
    %v3851 = vrot.slane %v3345, 6
    %v3852 = vrot.slane %v3346, 6
    %v3853 = vrot.slane %v3347, 6
    %v3854 = vrot.slane %v3348, 6
    %v3855 = vrot.slane %v3349, 6
    %v3856 = vrot.slane %v3350, 6
    %v3857 = vrot.slane %v3351, 6
    %v3858 = vrot.slane %v3352, 6
    %v3859 = vrot.slane %v3353, 6
    %v3860 = vrot.slane %v3354, 6
    %v3861 = vrot.slane %v3355, 6
    %v3862 = vrot.slane %v3356, 6
    %v3863 = vrot.slane %v3357, 6
    %v3864 = vrot.slane %v3358, 6
    %v3865 = vrot.slane %v3359, 6
    %v3866 = vrot.slane %v3360, 6
    %v3867 = vrot.slane %v3361, 6
    %v3868 = vrot.slane %v3362, 6
    %v3869 = vrot.slane %v3363, 6
    %v3870 = vrot.slane %v3364, 6
    %v3871 = vsel %vm2008, %v3869, %v3870
    %v3872 = vsel %vm2008, %v3868, %v3869
    %v3873 = vsel %vm2008, %v3867, %v3868
    %v3874 = vsel %vm2008, %v3866, %v3867
    %v3875 = vsel %vm2008, %v3865, %v3866
    %v3876 = vsel %vm2008, %v3864, %v3865
    %v3877 = vsel %vm2008, %v3863, %v3864
    %v3878 = vsel %vm2008, %v3862, %v3863
    %v3879 = vsel %vm2008, %v3861, %v3862
    %v3880 = vsel %vm2008, %v3860, %v3861
    %v3881 = vsel %vm2008, %v3859, %v3860
    %v3882 = vsel %vm2008, %v3858, %v3859
    %v3883 = vsel %vm2008, %v3857, %v3858
    %v3884 = vsel %vm2008, %v3856, %v3857
    %v3885 = vsel %vm2008, %v3855, %v3856
    %v3886 = vsel %vm2008, %v3854, %v3855
    %v3887 = vsel %vm2008, %v3853, %v3854
    %v3888 = vsel %vm2008, %v3852, %v3853
    %v3889 = vsel %vm2008, %v3851, %v3852
    %v3890 = vsel %vm2008, %v3850, %v3851
    %v3891 = vsel %vm2008, %v3849, %v3850
    %v3892 = vsel %vm2008, %v3848, %v3849
    %v3893 = vsel %vm2008, %v3847, %v3848
    %v3894 = vsel %vm2008, %v3846, %v3847
    %v3895 = vsel %vm2008, %v3845, %v3846
    %v3896 = vsel %vm2008, %v3844, %v3845
    %v3897 = vsel %vm2008, %v3843, %v3844
    %v3898 = vsel %vm2008, %v3842, %v3843
    %v3899 = vsel %vm2008, %v3841, %v3842
    %v3900 = vsel %vm2008, %v3840, %v3841
    %v3901 = vsel %vm2008, %v3839, %v3840
    %v3902 = vsel %vm2008, %v3838, %v3839
    %v3903 = vsel %vm2008, %v3837, %v3838
    %v3904 = vsel %vm2008, %v3836, %v3837
    %v3905 = vsel %vm2008, %v3835, %v3836
    %v3906 = vsel %vm2008, %v3834, %v3835
    %v3907 = vsel %vm2008, %v3833, %v3834
    %v3908 = vsel %vm2008, %v3832, %v3833
    %v3909 = vsel %vm2008, %v3831, %v3832
    %v3910 = vsel %vm2008, %v3830, %v3831
    %v3911 = vsel %vm2008, %v3829, %v3830
    %v3912 = vsel %vm2008, %v3828, %v3829
    %v3913 = vsel %vm2008, %v3827, %v3828
    %v3914 = vsel %vm2008, %v3826, %v3827
    %v3915 = vsel %vm2008, %v3825, %v3826
    %v3916 = vsel %vm2008, %v3824, %v3825
    %v3917 = vsel %vm2008, %v3823, %v3824
    %v3918 = vsel %vm2008, %v3822, %v3823
    %v3919 = vsel %vm2008, %v3821, %v3822
    %v3920 = vsel %vm2008, %v3820, %v3821
    %v3921 = vsel %vm2008, %v3819, %v3820
    %v3922 = vsel %vm2008, %v3818, %v3819
    %v3923 = vsel %vm2008, %v3817, %v3818
    %v3924 = vsel %vm2008, %v3816, %v3817
    %v3925 = vsel %vm2008, %v3815, %v3816
    %v3926 = vsel %vm2008, %v3814, %v3815
    %v3927 = vsel %vm2008, %v3813, %v3814
    %v3928 = vsel %vm2008, %v3812, %v3813
    %v3929 = vsel %vm2008, %v3811, %v3812
    %v3930 = vsel %vm2008, %v3810, %v3811
    %v3931 = vsel %vm2008, %v3809, %v3810
    %v3932 = vsel %vm2008, %v3808, %v3809
    %v3933 = vsel %vm2008, %v3807, %v3808
    %v3934 = vsel %vm2008, %v3870, %v3807
    %v3935 = vmul.f32 %v3934, %v1193
    %v3936 = vmul.f32 %v3933, %v1194
    %v3937 = vmul.f32 %v3932, %v1195
    %v3938 = vmul.f32 %v3931, %v1196
    %v3939 = vmul.f32 %v3930, %v1197
    %v3940 = vmul.f32 %v3929, %v1198
    %v3941 = vmul.f32 %v3928, %v1199
    %v3942 = vmul.f32 %v3927, %v1200
    %v3943 = vmul.f32 %v3926, %v1201
    %v3944 = vmul.f32 %v3925, %v1202
    %v3945 = vmul.f32 %v3924, %v1203
    %v3946 = vmul.f32 %v3923, %v1204
    %v3947 = vmul.f32 %v3922, %v1205
    %v3948 = vmul.f32 %v3921, %v1206
    %v3949 = vmul.f32 %v3920, %v1207
    %v3950 = vmul.f32 %v3919, %v1208
    %v3951 = vmul.f32 %v3918, %v1209
    %v3952 = vmul.f32 %v3917, %v1210
    %v3953 = vmul.f32 %v3916, %v1211
    %v3954 = vmul.f32 %v3915, %v1212
    %v3955 = vmul.f32 %v3914, %v1213
    %v3956 = vmul.f32 %v3913, %v1214
    %v3957 = vmul.f32 %v3912, %v1215
    %v3958 = vmul.f32 %v3911, %v1216
    %v3959 = vmul.f32 %v3910, %v1217
    %v3960 = vmul.f32 %v3909, %v1218
    %v3961 = vmul.f32 %v3908, %v1219
    %v3962 = vmul.f32 %v3907, %v1220
    %v3963 = vmul.f32 %v3906, %v1221
    %v3964 = vmul.f32 %v3905, %v1222
    %v3965 = vmul.f32 %v3904, %v1223
    %v3966 = vmul.f32 %v3903, %v1224
    %v3967 = vmul.f32 %v3902, %v1225
    %v3968 = vmul.f32 %v3901, %v1226
    %v3969 = vmul.f32 %v3900, %v1227
    %v3970 = vmul.f32 %v3899, %v1228
    %v3971 = vmul.f32 %v3898, %v1229
    %v3972 = vmul.f32 %v3897, %v1230
    %v3973 = vmul.f32 %v3896, %v1231
    %v3974 = vmul.f32 %v3895, %v1232
    %v3975 = vmul.f32 %v3894, %v1233
    %v3976 = vmul.f32 %v3893, %v1234
    %v3977 = vmul.f32 %v3892, %v1235
    %v3978 = vmul.f32 %v3891, %v1236
    %v3979 = vmul.f32 %v3890, %v1237
    %v3980 = vmul.f32 %v3889, %v1238
    %v3981 = vmul.f32 %v3888, %v1239
    %v3982 = vmul.f32 %v3887, %v1240
    %v3983 = vmul.f32 %v3886, %v1241
    %v3984 = vmul.f32 %v3885, %v1242
    %v3985 = vmul.f32 %v3884, %v1243
    %v3986 = vmul.f32 %v3883, %v1244
    %v3987 = vmul.f32 %v3882, %v1245
    %v3988 = vmul.f32 %v3881, %v1246
    %v3989 = vmul.f32 %v3880, %v1247
    %v3990 = vmul.f32 %v3879, %v1248
    %v3991 = vmul.f32 %v3878, %v1249
    %v3992 = vmul.f32 %v3877, %v1250
    %v3993 = vmul.f32 %v3876, %v1251
    %v3994 = vmul.f32 %v3875, %v1252
    %v3995 = vmul.f32 %v3874, %v1253
    %v3996 = vmul.f32 %v3873, %v1254
    %v3997 = vmul.f32 %v3872, %v1255
    %v3998 = vmul.f32 %v3871, %v1256
    %v3999 = vld [vmem:[%s3] sm:$0xf]
    %v4000 = vld [vmem:[%s3 + $0x4] sm:$0xf]
    %v4001 = vld [vmem:[%s3 + $0x8] sm:$0xf]
    %v4002 = vld [vmem:[%s3 + $0xc] sm:$0xf]
    %v4003 = vpack.c.bf16 %v3936, %v3935
    %v4004 = vpack.c.bf16 %v3938, %v3937
    %v4005 = vpack.c.bf16 %v3940, %v3939
    %v4006 = vpack.c.bf16 %v3942, %v3941
    %v4007 = vpack.c.bf16 %v3944, %v3943
    %v4008 = vpack.c.bf16 %v3946, %v3945
    %v4009 = vpack.c.bf16 %v3948, %v3947
    %v4010 = vpack.c.bf16 %v3950, %v3949
    %v4011 = vpack.c.bf16 %v3952, %v3951
    %v4012 = vpack.c.bf16 %v3954, %v3953
    %v4013 = vpack.c.bf16 %v3956, %v3955
    %v4014 = vpack.c.bf16 %v3958, %v3957
    %v4015 = vpack.c.bf16 %v3960, %v3959
    %v4016 = vpack.c.bf16 %v3962, %v3961
    %v4017 = vpack.c.bf16 %v3964, %v3963
    %v4018 = vpack.c.bf16 %v3966, %v3965
    %v4019 = vpack.c.bf16 %v3968, %v3967
    %v4020 = vpack.c.bf16 %v3970, %v3969
    %v4021 = vpack.c.bf16 %v3972, %v3971
    %v4022 = vpack.c.bf16 %v3974, %v3973
    %v4023 = vpack.c.bf16 %v3976, %v3975
    %v4024 = vpack.c.bf16 %v3978, %v3977
    %v4025 = vpack.c.bf16 %v3980, %v3979
    %v4026 = vpack.c.bf16 %v3982, %v3981
    %v4027 = vpack.c.bf16 %v3984, %v3983
    %v4028 = vpack.c.bf16 %v3986, %v3985
    %v4029 = vpack.c.bf16 %v3988, %v3987
    %v4030 = vpack.c.bf16 %v3990, %v3989
    %v4031 = vpack.c.bf16 %v3992, %v3991
    %v4032 = vpack.c.bf16 %v3994, %v3993
    %v4033 = vpack.c.bf16 %v3996, %v3995
    %v4034 = vpack.c.bf16 %v3998, %v3997
    %v4039 = vunpack.c.l.b16 %v3999
    %v4040 = vunpack.c.l.b16 %v4000
    %v4041 = vunpack.c.l.b16 %v4001
    %v4042 = vunpack.c.l.b16 %v4002
    %v4043 = vpack.c.b16 %v4040, %v4039
    %v4044 = vpack.c.b16 %v4042, %v4041
    %v4048 = vsel %vm3421, %v4003, 0
    %v4051 = vsel %vm3421, %v4004, 0
    %v4054 = vsel %vm3421, %v4005, 0
    %v4057 = vsel %vm3421, %v4006, 0
    %v4060 = vsel %vm3421, %v4007, 0
    %v4063 = vsel %vm3421, %v4008, 0
    %v4066 = vsel %vm3421, %v4009, 0
    %v4069 = vsel %vm3421, %v4010, 0
    %v4072 = vsel %vm3421, %v4011, 0
    %v4075 = vsel %vm3421, %v4012, 0
    %v4078 = vsel %vm3421, %v4013, 0
    %v4081 = vsel %vm3421, %v4014, 0
    %v4084 = vsel %vm3421, %v4015, 0
    %v4087 = vsel %vm3421, %v4016, 0
    %v4090 = vsel %vm3421, %v4017, 0
    %v4093 = vsel %vm3421, %v4018, 0
    %v4096 = vsel %vm3421, %v4019, 0
    %v4099 = vsel %vm3421, %v4020, 0
    %v4102 = vsel %vm3421, %v4021, 0
    %v4105 = vsel %vm3421, %v4022, 0
    %v4108 = vsel %vm3421, %v4023, 0
    %v4111 = vsel %vm3421, %v4024, 0
    %v4114 = vsel %vm3421, %v4025, 0
    %v4117 = vsel %vm3421, %v4026, 0
    %v4120 = vsel %vm3421, %v4027, 0
    %v4123 = vsel %vm3421, %v4028, 0
    %v4126 = vsel %vm3421, %v4029, 0
    %v4129 = vsel %vm3421, %v4030, 0
    %v4132 = vsel %vm3421, %v4031, 0
    %v4135 = vsel %vm3421, %v4032, 0
    %v4138 = vsel %vm3421, %v4033, 0
    %v4141 = vsel %vm3421, %v4034, 0
    %4143 = vmatprep.subr.bf16.mxu0 0
    %4144 = vmatpush1.bf16.msra.mxu0 0
    %4145 = vmatprep.subr.bf16.mxu0 0
    %4146 = vmatpush1.bf16.msra.mxu0 0
    %4147 = vmatprep.subr.bf16.mxu0 0
    %4148 = vmatpush1.bf16.msra.mxu0 0
    %4149 = vmatprep.subr.bf16.mxu0 0
    %4150 = vmatpush1.bf16.msra.mxu0 0
    %4151 = vmatprep.subr.bf16.mxu0 0
    %4152 = vmatpush1.bf16.msra.mxu0 0
    %4153 = vmatprep.subr.bf16.mxu0 0
    %4154 = vmatpush1.bf16.msra.mxu0 0
    %4155 = vmatprep.subr.bf16.mxu0 0
    %4156 = vmatpush1.bf16.msra.mxu0 %v4044
    %4157 = vmatprep.subr.bf16.mxu0 0
    %4158 = vmatpush1.bf16.msra.mxu0 %v4043
    %4159 = vmatprep.subr.bf16.mxu0 0
    %4160 = vmatpush2.bf16.msra.mxu0 0
    %4161 = vmatprep.subr.bf16.mxu0 0
    %4162 = vmatpush2.bf16.msra.mxu0 0
    %4163 = vmatprep.subr.bf16.mxu0 0
    %4164 = vmatpush2.bf16.msra.mxu0 0
    %4165 = vmatprep.subr.bf16.mxu0 0
    %4166 = vmatpush2.bf16.msra.mxu0 0
    %4167 = vmatprep.subr.bf16.mxu0 0
    %4168 = vmatpush2.bf16.msra.mxu0 0
    %4169 = vmatprep.subr.bf16.mxu0 0
    %4170 = vmatpush2.bf16.msra.mxu0 0
    %4171 = vmatprep.subr.bf16.mxu0 0
    %4172 = vmatpush2.bf16.msra.mxu0 0
    %4173 = vmatprep.subr.bf16.mxu0 0
    %4174 = vmatpush2.bf16.msra.mxu0 0
    %4175 = vmatprep.mubr.bf16.mxu0 0
    %4176 = vmatmul.mubr.bf16.gmra.mxu0 %v4048
    %v4177 = vpop.f32.mrf.mxu0
    %v4178 = vadd.f32 0.0, %v4177
    %v4179 = vpop.f32.mrf.mxu0
    %v4180 = vpop.f32.mrf.mxu0
    %v4181 = vadd.f32 0.0, %v4180
    %v4182 = vpop.f32.mrf.mxu0
    %4183 = vmatprep.mubr.bf16.mxu0 0
    %4184 = vmatmul.mubr.bf16.gmra.mxu0 %v4051
    %v4185 = vpop.f32.mrf.mxu0
    %v4186 = vadd.f32 0.0, %v4185
    %v4187 = vpop.f32.mrf.mxu0
    %v4188 = vpop.f32.mrf.mxu0
    %v4189 = vadd.f32 0.0, %v4188
    %v4190 = vpop.f32.mrf.mxu0
    %4191 = vmatprep.mubr.bf16.mxu0 0
    %4192 = vmatmul.mubr.bf16.gmra.mxu0 %v4054
    %v4193 = vpop.f32.mrf.mxu0
    %v4194 = vadd.f32 0.0, %v4193
    %v4195 = vpop.f32.mrf.mxu0
    %v4196 = vpop.f32.mrf.mxu0
    %v4197 = vadd.f32 0.0, %v4196
    %v4198 = vpop.f32.mrf.mxu0
    %4199 = vmatprep.mubr.bf16.mxu0 0
    %4200 = vmatmul.mubr.bf16.gmra.mxu0 %v4057
    %v4201 = vpop.f32.mrf.mxu0
    %v4202 = vadd.f32 0.0, %v4201
    %v4203 = vpop.f32.mrf.mxu0
    %v4204 = vpop.f32.mrf.mxu0
    %v4205 = vadd.f32 0.0, %v4204
    %v4206 = vpop.f32.mrf.mxu0
    %4207 = vmatprep.mubr.bf16.mxu0 0
    %4208 = vmatmul.mubr.bf16.gmra.mxu0 %v4060
    %v4209 = vpop.f32.mrf.mxu0
    %v4210 = vadd.f32 0.0, %v4209
    %v4211 = vpop.f32.mrf.mxu0
    %v4212 = vpop.f32.mrf.mxu0
    %v4213 = vadd.f32 0.0, %v4212
    %v4214 = vpop.f32.mrf.mxu0
    %4215 = vmatprep.mubr.bf16.mxu0 0
    %4216 = vmatmul.mubr.bf16.gmra.mxu0 %v4063
    %v4217 = vpop.f32.mrf.mxu0
    %v4218 = vadd.f32 0.0, %v4217
    %v4219 = vpop.f32.mrf.mxu0
    %v4220 = vpop.f32.mrf.mxu0
    %v4221 = vadd.f32 0.0, %v4220
    %v4222 = vpop.f32.mrf.mxu0
    %4223 = vmatprep.mubr.bf16.mxu0 0
    %4224 = vmatmul.mubr.bf16.gmra.mxu0 %v4066
    %v4225 = vpop.f32.mrf.mxu0
    %v4226 = vadd.f32 0.0, %v4225
    %v4227 = vpop.f32.mrf.mxu0
    %v4228 = vpop.f32.mrf.mxu0
    %v4229 = vadd.f32 0.0, %v4228
    %v4230 = vpop.f32.mrf.mxu0
    %4231 = vmatprep.mubr.bf16.mxu0 0
    %4232 = vmatmul.mubr.bf16.gmra.mxu0 %v4069
    %v4233 = vpop.f32.mrf.mxu0
    %v4234 = vadd.f32 0.0, %v4233
    %v4235 = vpop.f32.mrf.mxu0
    %v4236 = vpop.f32.mrf.mxu0
    %v4237 = vadd.f32 0.0, %v4236
    %v4238 = vpop.f32.mrf.mxu0
    %4239 = vmatprep.mubr.bf16.mxu0 0
    %4240 = vmatmul.mubr.bf16.gmra.mxu0 %v4072
    %v4241 = vpop.f32.mrf.mxu0
    %v4242 = vadd.f32 0.0, %v4241
    %v4243 = vpop.f32.mrf.mxu0
    %v4244 = vpop.f32.mrf.mxu0
    %v4245 = vadd.f32 0.0, %v4244
    %v4246 = vpop.f32.mrf.mxu0
    %4247 = vmatprep.mubr.bf16.mxu0 0
    %4248 = vmatmul.mubr.bf16.gmra.mxu0 %v4075
    %v4249 = vpop.f32.mrf.mxu0
    %v4250 = vadd.f32 0.0, %v4249
    %v4251 = vpop.f32.mrf.mxu0
    %v4252 = vpop.f32.mrf.mxu0
    %v4253 = vadd.f32 0.0, %v4252
    %v4254 = vpop.f32.mrf.mxu0
    %4255 = vmatprep.mubr.bf16.mxu0 0
    %4256 = vmatmul.mubr.bf16.gmra.mxu0 %v4078
    %v4257 = vpop.f32.mrf.mxu0
    %v4258 = vadd.f32 0.0, %v4257
    %v4259 = vpop.f32.mrf.mxu0
    %v4260 = vpop.f32.mrf.mxu0
    %v4261 = vadd.f32 0.0, %v4260
    %v4262 = vpop.f32.mrf.mxu0
    %4263 = vmatprep.mubr.bf16.mxu0 0
    %4264 = vmatmul.mubr.bf16.gmra.mxu0 %v4081
    %v4265 = vpop.f32.mrf.mxu0
    %v4266 = vadd.f32 0.0, %v4265
    %v4267 = vpop.f32.mrf.mxu0
    %v4268 = vpop.f32.mrf.mxu0
    %v4269 = vadd.f32 0.0, %v4268
    %v4270 = vpop.f32.mrf.mxu0
    %4271 = vmatprep.mubr.bf16.mxu0 0
    %4272 = vmatmul.mubr.bf16.gmra.mxu0 %v4084
    %v4273 = vpop.f32.mrf.mxu0
    %v4274 = vadd.f32 0.0, %v4273
    %v4275 = vpop.f32.mrf.mxu0
    %v4276 = vpop.f32.mrf.mxu0
    %v4277 = vadd.f32 0.0, %v4276
    %v4278 = vpop.f32.mrf.mxu0
    %4279 = vmatprep.mubr.bf16.mxu0 0
    %4280 = vmatmul.mubr.bf16.gmra.mxu0 %v4087
    %v4281 = vpop.f32.mrf.mxu0
    %v4282 = vadd.f32 0.0, %v4281
    %v4283 = vpop.f32.mrf.mxu0
    %v4284 = vpop.f32.mrf.mxu0
    %v4285 = vadd.f32 0.0, %v4284
    %v4286 = vpop.f32.mrf.mxu0
    %4287 = vmatprep.mubr.bf16.mxu0 0
    %4288 = vmatmul.mubr.bf16.gmra.mxu0 %v4090
    %v4289 = vpop.f32.mrf.mxu0
    %v4290 = vadd.f32 0.0, %v4289
    %v4291 = vpop.f32.mrf.mxu0
    %v4292 = vpop.f32.mrf.mxu0
    %v4293 = vadd.f32 0.0, %v4292
    %v4294 = vpop.f32.mrf.mxu0
    %4295 = vmatprep.mubr.bf16.mxu0 0
    %4296 = vmatmul.mubr.bf16.gmra.mxu0 %v4093
    %v4297 = vpop.f32.mrf.mxu0
    %v4298 = vadd.f32 0.0, %v4297
    %v4299 = vpop.f32.mrf.mxu0
    %v4300 = vpop.f32.mrf.mxu0
    %v4301 = vadd.f32 0.0, %v4300
    %v4302 = vpop.f32.mrf.mxu0
    %4303 = vmatprep.mubr.bf16.mxu0 0
    %4304 = vmatmul.mubr.bf16.gmra.mxu0 %v4096
    %v4305 = vpop.f32.mrf.mxu0
    %v4306 = vadd.f32 0.0, %v4305
    %v4307 = vpop.f32.mrf.mxu0
    %v4308 = vpop.f32.mrf.mxu0
    %v4309 = vadd.f32 0.0, %v4308
    %v4310 = vpop.f32.mrf.mxu0
    %4311 = vmatprep.mubr.bf16.mxu0 0
    %4312 = vmatmul.mubr.bf16.gmra.mxu0 %v4099
    %v4313 = vpop.f32.mrf.mxu0
    %v4314 = vadd.f32 0.0, %v4313
    %v4315 = vpop.f32.mrf.mxu0
    %v4316 = vpop.f32.mrf.mxu0
    %v4317 = vadd.f32 0.0, %v4316
    %v4318 = vpop.f32.mrf.mxu0
    %4319 = vmatprep.mubr.bf16.mxu0 0
    %4320 = vmatmul.mubr.bf16.gmra.mxu0 %v4102
    %v4321 = vpop.f32.mrf.mxu0
    %v4322 = vadd.f32 0.0, %v4321
    %v4323 = vpop.f32.mrf.mxu0
    %v4324 = vpop.f32.mrf.mxu0
    %v4325 = vadd.f32 0.0, %v4324
    %v4326 = vpop.f32.mrf.mxu0
    %4327 = vmatprep.mubr.bf16.mxu0 0
    %4328 = vmatmul.mubr.bf16.gmra.mxu0 %v4105
    %v4329 = vpop.f32.mrf.mxu0
    %v4330 = vadd.f32 0.0, %v4329
    %v4331 = vpop.f32.mrf.mxu0
    %v4332 = vpop.f32.mrf.mxu0
    %v4333 = vadd.f32 0.0, %v4332
    %v4334 = vpop.f32.mrf.mxu0
    %4335 = vmatprep.mubr.bf16.mxu0 0
    %4336 = vmatmul.mubr.bf16.gmra.mxu0 %v4108
    %v4337 = vpop.f32.mrf.mxu0
    %v4338 = vadd.f32 0.0, %v4337
    %v4339 = vpop.f32.mrf.mxu0
    %v4340 = vpop.f32.mrf.mxu0
    %v4341 = vadd.f32 0.0, %v4340
    %v4342 = vpop.f32.mrf.mxu0
    %4343 = vmatprep.mubr.bf16.mxu0 0
    %4344 = vmatmul.mubr.bf16.gmra.mxu0 %v4111
    %v4345 = vpop.f32.mrf.mxu0
    %v4346 = vadd.f32 0.0, %v4345
    %v4347 = vpop.f32.mrf.mxu0
    %v4348 = vpop.f32.mrf.mxu0
    %v4349 = vadd.f32 0.0, %v4348
    %v4350 = vpop.f32.mrf.mxu0
    %4351 = vmatprep.mubr.bf16.mxu0 0
    %4352 = vmatmul.mubr.bf16.gmra.mxu0 %v4114
    %v4353 = vpop.f32.mrf.mxu0
    %v4354 = vadd.f32 0.0, %v4353
    %v4355 = vpop.f32.mrf.mxu0
    %v4356 = vpop.f32.mrf.mxu0
    %v4357 = vadd.f32 0.0, %v4356
    %v4358 = vpop.f32.mrf.mxu0
    %4359 = vmatprep.mubr.bf16.mxu0 0
    %4360 = vmatmul.mubr.bf16.gmra.mxu0 %v4117
    %v4361 = vpop.f32.mrf.mxu0
    %v4362 = vadd.f32 0.0, %v4361
    %v4363 = vpop.f32.mrf.mxu0
    %v4364 = vpop.f32.mrf.mxu0
    %v4365 = vadd.f32 0.0, %v4364
    %v4366 = vpop.f32.mrf.mxu0
    %4367 = vmatprep.mubr.bf16.mxu0 0
    %4368 = vmatmul.mubr.bf16.gmra.mxu0 %v4120
    %v4369 = vpop.f32.mrf.mxu0
    %v4370 = vadd.f32 0.0, %v4369
    %v4371 = vpop.f32.mrf.mxu0
    %v4372 = vpop.f32.mrf.mxu0
    %v4373 = vadd.f32 0.0, %v4372
    %v4374 = vpop.f32.mrf.mxu0
    %4375 = vmatprep.mubr.bf16.mxu0 0
    %4376 = vmatmul.mubr.bf16.gmra.mxu0 %v4123
    %v4377 = vpop.f32.mrf.mxu0
    %v4378 = vadd.f32 0.0, %v4377
    %v4379 = vpop.f32.mrf.mxu0
    %v4380 = vpop.f32.mrf.mxu0
    %v4381 = vadd.f32 0.0, %v4380
    %v4382 = vpop.f32.mrf.mxu0
    %4383 = vmatprep.mubr.bf16.mxu0 0
    %4384 = vmatmul.mubr.bf16.gmra.mxu0 %v4126
    %v4385 = vpop.f32.mrf.mxu0
    %v4386 = vadd.f32 0.0, %v4385
    %v4387 = vpop.f32.mrf.mxu0
    %v4388 = vpop.f32.mrf.mxu0
    %v4389 = vadd.f32 0.0, %v4388
    %v4390 = vpop.f32.mrf.mxu0
    %4391 = vmatprep.mubr.bf16.mxu0 0
    %4392 = vmatmul.mubr.bf16.gmra.mxu0 %v4129
    %v4393 = vpop.f32.mrf.mxu0
    %v4394 = vadd.f32 0.0, %v4393
    %v4395 = vpop.f32.mrf.mxu0
    %v4396 = vpop.f32.mrf.mxu0
    %v4397 = vadd.f32 0.0, %v4396
    %v4398 = vpop.f32.mrf.mxu0
    %4399 = vmatprep.mubr.bf16.mxu0 0
    %4400 = vmatmul.mubr.bf16.gmra.mxu0 %v4132
    %v4401 = vpop.f32.mrf.mxu0
    %v4402 = vadd.f32 0.0, %v4401
    %v4403 = vpop.f32.mrf.mxu0
    %v4404 = vpop.f32.mrf.mxu0
    %v4405 = vadd.f32 0.0, %v4404
    %v4406 = vpop.f32.mrf.mxu0
    %4407 = vmatprep.mubr.bf16.mxu0 0
    %4408 = vmatmul.mubr.bf16.gmra.mxu0 %v4135
    %v4409 = vpop.f32.mrf.mxu0
    %v4410 = vadd.f32 0.0, %v4409
    %v4411 = vpop.f32.mrf.mxu0
    %v4412 = vpop.f32.mrf.mxu0
    %v4413 = vadd.f32 0.0, %v4412
    %v4414 = vpop.f32.mrf.mxu0
    %4415 = vmatprep.mubr.bf16.mxu0 0
    %4416 = vmatmul.mubr.bf16.gmra.mxu0 %v4138
    %v4417 = vpop.f32.mrf.mxu0
    %v4418 = vadd.f32 0.0, %v4417
    %v4419 = vpop.f32.mrf.mxu0
    %v4420 = vpop.f32.mrf.mxu0
    %v4421 = vadd.f32 0.0, %v4420
    %v4422 = vpop.f32.mrf.mxu0
    %4423 = vmatprep.mubr.bf16.mxu0 0
    %4424 = vmatmul.mubr.bf16.gmra.mxu0 %v4141
    %v4425 = vpop.f32.mrf.mxu0
    %v4426 = vadd.f32 0.0, %v4425
    %v4427 = vpop.f32.mrf.mxu0
    %v4428 = vpop.f32.mrf.mxu0
    %v4429 = vadd.f32 0.0, %v4428
    %v4430 = vpop.f32.mrf.mxu0
    %4431 = vdwg.mxu0
    %v4432 = vadd.f32 %v3553, %v4178
    %v4433 = vadd.f32 %v3556, %v4181
    %v4434 = vadd.f32 %v3561, %v4186
    %v4435 = vadd.f32 %v3564, %v4189
    %v4436 = vadd.f32 %v3569, %v4194
    %v4437 = vadd.f32 %v3572, %v4197
    %v4438 = vadd.f32 %v3577, %v4202
    %v4439 = vadd.f32 %v3580, %v4205
    %v4440 = vadd.f32 %v3585, %v4210
    %v4441 = vadd.f32 %v3588, %v4213
    %v4442 = vadd.f32 %v3593, %v4218
    %v4443 = vadd.f32 %v3596, %v4221
    %v4444 = vadd.f32 %v3601, %v4226
    %v4445 = vadd.f32 %v3604, %v4229
    %v4446 = vadd.f32 %v3609, %v4234
    %v4447 = vadd.f32 %v3612, %v4237
    %v4448 = vadd.f32 %v3617, %v4242
    %v4449 = vadd.f32 %v3620, %v4245
    %v4450 = vadd.f32 %v3625, %v4250
    %v4451 = vadd.f32 %v3628, %v4253
    %v4452 = vadd.f32 %v3633, %v4258
    %v4453 = vadd.f32 %v3636, %v4261
    %v4454 = vadd.f32 %v3641, %v4266
    %v4455 = vadd.f32 %v3644, %v4269
    %v4456 = vadd.f32 %v3649, %v4274
    %v4457 = vadd.f32 %v3652, %v4277
    %v4458 = vadd.f32 %v3657, %v4282
    %v4459 = vadd.f32 %v3660, %v4285
    %v4460 = vadd.f32 %v3665, %v4290
    %v4461 = vadd.f32 %v3668, %v4293
    %v4462 = vadd.f32 %v3673, %v4298
    %v4463 = vadd.f32 %v3676, %v4301
    %v4464 = vadd.f32 %v3681, %v4306
    %v4465 = vadd.f32 %v3684, %v4309
    %v4466 = vadd.f32 %v3689, %v4314
    %v4467 = vadd.f32 %v3692, %v4317
    %v4468 = vadd.f32 %v3697, %v4322
    %v4469 = vadd.f32 %v3700, %v4325
    %v4470 = vadd.f32 %v3705, %v4330
    %v4471 = vadd.f32 %v3708, %v4333
    %v4472 = vadd.f32 %v3713, %v4338
    %v4473 = vadd.f32 %v3716, %v4341
    %v4474 = vadd.f32 %v3721, %v4346
    %v4475 = vadd.f32 %v3724, %v4349
    %v4476 = vadd.f32 %v3729, %v4354
    %v4477 = vadd.f32 %v3732, %v4357
    %v4478 = vadd.f32 %v3737, %v4362
    %v4479 = vadd.f32 %v3740, %v4365
    %v4480 = vadd.f32 %v3745, %v4370
    %v4481 = vadd.f32 %v3748, %v4373
    %v4482 = vadd.f32 %v3753, %v4378
    %v4483 = vadd.f32 %v3756, %v4381
    %v4484 = vadd.f32 %v3761, %v4386
    %v4485 = vadd.f32 %v3764, %v4389
    %v4486 = vadd.f32 %v3769, %v4394
    %v4487 = vadd.f32 %v3772, %v4397
    %v4488 = vadd.f32 %v3777, %v4402
    %v4489 = vadd.f32 %v3780, %v4405
    %v4490 = vadd.f32 %v3785, %v4410
    %v4491 = vadd.f32 %v3788, %v4413
    %v4492 = vadd.f32 %v3793, %v4418
    %v4493 = vadd.f32 %v3796, %v4421
    %v4494 = vadd.f32 %v3801, %v4426
    %v4495 = vadd.f32 %v3804, %v4429
    %v4496 = vrot.slane %v3301, 7
    %v4497 = vrot.slane %v3302, 7
    %v4498 = vrot.slane %v3303, 7
    %v4499 = vrot.slane %v3304, 7
    %v4500 = vrot.slane %v3305, 7
    %v4501 = vrot.slane %v3306, 7
    %v4502 = vrot.slane %v3307, 7
    %v4503 = vrot.slane %v3308, 7
    %v4504 = vrot.slane %v3309, 7
    %v4505 = vrot.slane %v3310, 7
    %v4506 = vrot.slane %v3311, 7
    %v4507 = vrot.slane %v3312, 7
    %v4508 = vrot.slane %v3313, 7
    %v4509 = vrot.slane %v3314, 7
    %v4510 = vrot.slane %v3315, 7
    %v4511 = vrot.slane %v3316, 7
    %v4512 = vrot.slane %v3317, 7
    %v4513 = vrot.slane %v3318, 7
    %v4514 = vrot.slane %v3319, 7
    %v4515 = vrot.slane %v3320, 7
    %v4516 = vrot.slane %v3321, 7
    %v4517 = vrot.slane %v3322, 7
    %v4518 = vrot.slane %v3323, 7
    %v4519 = vrot.slane %v3324, 7
    %v4520 = vrot.slane %v3325, 7
    %v4521 = vrot.slane %v3326, 7
    %v4522 = vrot.slane %v3327, 7
    %v4523 = vrot.slane %v3328, 7
    %v4524 = vrot.slane %v3329, 7
    %v4525 = vrot.slane %v3330, 7
    %v4526 = vrot.slane %v3331, 7
    %v4527 = vrot.slane %v3332, 7
    %v4528 = vrot.slane %v3333, 7
    %v4529 = vrot.slane %v3334, 7
    %v4530 = vrot.slane %v3335, 7
    %v4531 = vrot.slane %v3336, 7
    %v4532 = vrot.slane %v3337, 7
    %v4533 = vrot.slane %v3338, 7
    %v4534 = vrot.slane %v3339, 7
    %v4535 = vrot.slane %v3340, 7
    %v4536 = vrot.slane %v3341, 7
    %v4537 = vrot.slane %v3342, 7
    %v4538 = vrot.slane %v3343, 7
    %v4539 = vrot.slane %v3344, 7
    %v4540 = vrot.slane %v3345, 7
    %v4541 = vrot.slane %v3346, 7
    %v4542 = vrot.slane %v3347, 7
    %v4543 = vrot.slane %v3348, 7
    %v4544 = vrot.slane %v3349, 7
    %v4545 = vrot.slane %v3350, 7
    %v4546 = vrot.slane %v3351, 7
    %v4547 = vrot.slane %v3352, 7
    %v4548 = vrot.slane %v3353, 7
    %v4549 = vrot.slane %v3354, 7
    %v4550 = vrot.slane %v3355, 7
    %v4551 = vrot.slane %v3356, 7
    %v4552 = vrot.slane %v3357, 7
    %v4553 = vrot.slane %v3358, 7
    %v4554 = vrot.slane %v3359, 7
    %v4555 = vrot.slane %v3360, 7
    %v4556 = vrot.slane %v3361, 7
    %v4557 = vrot.slane %v3362, 7
    %v4558 = vrot.slane %v3363, 7
    %v4559 = vrot.slane %v3364, 7
    %v4560 = vsel %vm2686, %v4558, %v4559
    %v4561 = vsel %vm2686, %v4557, %v4558
    %v4562 = vsel %vm2686, %v4556, %v4557
    %v4563 = vsel %vm2686, %v4555, %v4556
    %v4564 = vsel %vm2686, %v4554, %v4555
    %v4565 = vsel %vm2686, %v4553, %v4554
    %v4566 = vsel %vm2686, %v4552, %v4553
    %v4567 = vsel %vm2686, %v4551, %v4552
    %v4568 = vsel %vm2686, %v4550, %v4551
    %v4569 = vsel %vm2686, %v4549, %v4550
    %v4570 = vsel %vm2686, %v4548, %v4549
    %v4571 = vsel %vm2686, %v4547, %v4548
    %v4572 = vsel %vm2686, %v4546, %v4547
    %v4573 = vsel %vm2686, %v4545, %v4546
    %v4574 = vsel %vm2686, %v4544, %v4545
    %v4575 = vsel %vm2686, %v4543, %v4544
    %v4576 = vsel %vm2686, %v4542, %v4543
    %v4577 = vsel %vm2686, %v4541, %v4542
    %v4578 = vsel %vm2686, %v4540, %v4541
    %v4579 = vsel %vm2686, %v4539, %v4540
    %v4580 = vsel %vm2686, %v4538, %v4539
    %v4581 = vsel %vm2686, %v4537, %v4538
    %v4582 = vsel %vm2686, %v4536, %v4537
    %v4583 = vsel %vm2686, %v4535, %v4536
    %v4584 = vsel %vm2686, %v4534, %v4535
    %v4585 = vsel %vm2686, %v4533, %v4534
    %v4586 = vsel %vm2686, %v4532, %v4533
    %v4587 = vsel %vm2686, %v4531, %v4532
    %v4588 = vsel %vm2686, %v4530, %v4531
    %v4589 = vsel %vm2686, %v4529, %v4530
    %v4590 = vsel %vm2686, %v4528, %v4529
    %v4591 = vsel %vm2686, %v4527, %v4528
    %v4592 = vsel %vm2686, %v4526, %v4527
    %v4593 = vsel %vm2686, %v4525, %v4526
    %v4594 = vsel %vm2686, %v4524, %v4525
    %v4595 = vsel %vm2686, %v4523, %v4524
    %v4596 = vsel %vm2686, %v4522, %v4523
    %v4597 = vsel %vm2686, %v4521, %v4522
    %v4598 = vsel %vm2686, %v4520, %v4521
    %v4599 = vsel %vm2686, %v4519, %v4520
    %v4600 = vsel %vm2686, %v4518, %v4519
    %v4601 = vsel %vm2686, %v4517, %v4518
    %v4602 = vsel %vm2686, %v4516, %v4517
    %v4603 = vsel %vm2686, %v4515, %v4516
    %v4604 = vsel %vm2686, %v4514, %v4515
    %v4605 = vsel %vm2686, %v4513, %v4514
    %v4606 = vsel %vm2686, %v4512, %v4513
    %v4607 = vsel %vm2686, %v4511, %v4512
    %v4608 = vsel %vm2686, %v4510, %v4511
    %v4609 = vsel %vm2686, %v4509, %v4510
    %v4610 = vsel %vm2686, %v4508, %v4509
    %v4611 = vsel %vm2686, %v4507, %v4508
    %v4612 = vsel %vm2686, %v4506, %v4507
    %v4613 = vsel %vm2686, %v4505, %v4506
    %v4614 = vsel %vm2686, %v4504, %v4505
    %v4615 = vsel %vm2686, %v4503, %v4504
    %v4616 = vsel %vm2686, %v4502, %v4503
    %v4617 = vsel %vm2686, %v4501, %v4502
    %v4618 = vsel %vm2686, %v4500, %v4501
    %v4619 = vsel %vm2686, %v4499, %v4500
    %v4620 = vsel %vm2686, %v4498, %v4499
    %v4621 = vsel %vm2686, %v4497, %v4498
    %v4622 = vsel %vm2686, %v4496, %v4497
    %v4623 = vsel %vm2686, %v4559, %v4496
    %v4624 = vmul.f32 %v4623, %v1001
    %v4625 = vmul.f32 %v4622, %v1002
    %v4626 = vmul.f32 %v4621, %v1003
    %v4627 = vmul.f32 %v4620, %v1004
    %v4628 = vmul.f32 %v4619, %v1005
    %v4629 = vmul.f32 %v4618, %v1006
    %v4630 = vmul.f32 %v4617, %v1007
    %v4631 = vmul.f32 %v4616, %v1008
    %v4632 = vmul.f32 %v4615, %v1009
    %v4633 = vmul.f32 %v4614, %v1010
    %v4634 = vmul.f32 %v4613, %v1011
    %v4635 = vmul.f32 %v4612, %v1012
    %v4636 = vmul.f32 %v4611, %v1013
    %v4637 = vmul.f32 %v4610, %v1014
    %v4638 = vmul.f32 %v4609, %v1015
    %v4639 = vmul.f32 %v4608, %v1016
    %v4640 = vmul.f32 %v4607, %v1017
    %v4641 = vmul.f32 %v4606, %v1018
    %v4642 = vmul.f32 %v4605, %v1019
    %v4643 = vmul.f32 %v4604, %v1020
    %v4644 = vmul.f32 %v4603, %v1021
    %v4645 = vmul.f32 %v4602, %v1022
    %v4646 = vmul.f32 %v4601, %v1023
    %v4647 = vmul.f32 %v4600, %v1024
    %v4648 = vmul.f32 %v4599, %v1025
    %v4649 = vmul.f32 %v4598, %v1026
    %v4650 = vmul.f32 %v4597, %v1027
    %v4651 = vmul.f32 %v4596, %v1028
    %v4652 = vmul.f32 %v4595, %v1029
    %v4653 = vmul.f32 %v4594, %v1030
    %v4654 = vmul.f32 %v4593, %v1031
    %v4655 = vmul.f32 %v4592, %v1032
    %v4656 = vmul.f32 %v4591, %v1033
    %v4657 = vmul.f32 %v4590, %v1034
    %v4658 = vmul.f32 %v4589, %v1035
    %v4659 = vmul.f32 %v4588, %v1036
    %v4660 = vmul.f32 %v4587, %v1037
    %v4661 = vmul.f32 %v4586, %v1038
    %v4662 = vmul.f32 %v4585, %v1039
    %v4663 = vmul.f32 %v4584, %v1040
    %v4664 = vmul.f32 %v4583, %v1041
    %v4665 = vmul.f32 %v4582, %v1042
    %v4666 = vmul.f32 %v4581, %v1043
    %v4667 = vmul.f32 %v4580, %v1044
    %v4668 = vmul.f32 %v4579, %v1045
    %v4669 = vmul.f32 %v4578, %v1046
    %v4670 = vmul.f32 %v4577, %v1047
    %v4671 = vmul.f32 %v4576, %v1048
    %v4672 = vmul.f32 %v4575, %v1049
    %v4673 = vmul.f32 %v4574, %v1050
    %v4674 = vmul.f32 %v4573, %v1051
    %v4675 = vmul.f32 %v4572, %v1052
    %v4676 = vmul.f32 %v4571, %v1053
    %v4677 = vmul.f32 %v4570, %v1054
    %v4678 = vmul.f32 %v4569, %v1055
    %v4679 = vmul.f32 %v4568, %v1056
    %v4680 = vmul.f32 %v4567, %v1057
    %v4681 = vmul.f32 %v4566, %v1058
    %v4682 = vmul.f32 %v4565, %v1059
    %v4683 = vmul.f32 %v4564, %v1060
    %v4684 = vmul.f32 %v4563, %v1061
    %v4685 = vmul.f32 %v4562, %v1062
    %v4686 = vmul.f32 %v4561, %v1063
    %v4687 = vmul.f32 %v4560, %v1064
    %s4688 = scalar_lea.vmem %s3, 16
    %v4689 = vld [vmem:[%s4688] sm:$0xf]
    %v4690 = vld [vmem:[%s4688 + $0x4] sm:$0xf]
    %v4691 = vld [vmem:[%s4688 + $0x8] sm:$0xf]
    %v4692 = vld [vmem:[%s4688 + $0xc] sm:$0xf]
    %v4693 = vpack.c.bf16 %v4625, %v4624
    %v4694 = vpack.c.bf16 %v4627, %v4626
    %v4695 = vpack.c.bf16 %v4629, %v4628
    %v4696 = vpack.c.bf16 %v4631, %v4630
    %v4697 = vpack.c.bf16 %v4633, %v4632
    %v4698 = vpack.c.bf16 %v4635, %v4634
    %v4699 = vpack.c.bf16 %v4637, %v4636
    %v4700 = vpack.c.bf16 %v4639, %v4638
    %v4701 = vpack.c.bf16 %v4641, %v4640
    %v4702 = vpack.c.bf16 %v4643, %v4642
    %v4703 = vpack.c.bf16 %v4645, %v4644
    %v4704 = vpack.c.bf16 %v4647, %v4646
    %v4705 = vpack.c.bf16 %v4649, %v4648
    %v4706 = vpack.c.bf16 %v4651, %v4650
    %v4707 = vpack.c.bf16 %v4653, %v4652
    %v4708 = vpack.c.bf16 %v4655, %v4654
    %v4709 = vpack.c.bf16 %v4657, %v4656
    %v4710 = vpack.c.bf16 %v4659, %v4658
    %v4711 = vpack.c.bf16 %v4661, %v4660
    %v4712 = vpack.c.bf16 %v4663, %v4662
    %v4713 = vpack.c.bf16 %v4665, %v4664
    %v4714 = vpack.c.bf16 %v4667, %v4666
    %v4715 = vpack.c.bf16 %v4669, %v4668
    %v4716 = vpack.c.bf16 %v4671, %v4670
    %v4717 = vpack.c.bf16 %v4673, %v4672
    %v4718 = vpack.c.bf16 %v4675, %v4674
    %v4719 = vpack.c.bf16 %v4677, %v4676
    %v4720 = vpack.c.bf16 %v4679, %v4678
    %v4721 = vpack.c.bf16 %v4681, %v4680
    %v4722 = vpack.c.bf16 %v4683, %v4682
    %v4723 = vpack.c.bf16 %v4685, %v4684
    %v4724 = vpack.c.bf16 %v4687, %v4686
    %v4729 = vunpack.c.l.b16 %v4689
    %v4730 = vunpack.c.l.b16 %v4690
    %v4731 = vunpack.c.l.b16 %v4691
    %v4732 = vunpack.c.l.b16 %v4692
    %v4733 = vpack.c.b16 %v4730, %v4729
    %v4734 = vpack.c.b16 %v4732, %v4731
    %v4738 = vsel %vm3421, %v4693, 0
    %v4741 = vsel %vm3421, %v4694, 0
    %v4744 = vsel %vm3421, %v4695, 0
    %v4747 = vsel %vm3421, %v4696, 0
    %v4750 = vsel %vm3421, %v4697, 0
    %v4753 = vsel %vm3421, %v4698, 0
    %v4756 = vsel %vm3421, %v4699, 0
    %v4759 = vsel %vm3421, %v4700, 0
    %v4762 = vsel %vm3421, %v4701, 0
    %v4765 = vsel %vm3421, %v4702, 0
    %v4768 = vsel %vm3421, %v4703, 0
    %v4771 = vsel %vm3421, %v4704, 0
    %v4774 = vsel %vm3421, %v4705, 0
    %v4777 = vsel %vm3421, %v4706, 0
    %v4780 = vsel %vm3421, %v4707, 0
    %v4783 = vsel %vm3421, %v4708, 0
    %v4786 = vsel %vm3421, %v4709, 0
    %v4789 = vsel %vm3421, %v4710, 0
    %v4792 = vsel %vm3421, %v4711, 0
    %v4795 = vsel %vm3421, %v4712, 0
    %v4798 = vsel %vm3421, %v4713, 0
    %v4801 = vsel %vm3421, %v4714, 0
    %v4804 = vsel %vm3421, %v4715, 0
    %v4807 = vsel %vm3421, %v4716, 0
    %v4810 = vsel %vm3421, %v4717, 0
    %v4813 = vsel %vm3421, %v4718, 0
    %v4816 = vsel %vm3421, %v4719, 0
    %v4819 = vsel %vm3421, %v4720, 0
    %v4822 = vsel %vm3421, %v4721, 0
    %v4825 = vsel %vm3421, %v4722, 0
    %v4828 = vsel %vm3421, %v4723, 0
    %v4831 = vsel %vm3421, %v4724, 0
    %4833 = vmatprep.subr.bf16.mxu0 0
    %4834 = vmatpush1.bf16.msra.mxu0 0
    %4835 = vmatprep.subr.bf16.mxu0 0
    %4836 = vmatpush1.bf16.msra.mxu0 0
    %4837 = vmatprep.subr.bf16.mxu0 0
    %4838 = vmatpush1.bf16.msra.mxu0 0
    %4839 = vmatprep.subr.bf16.mxu0 0
    %4840 = vmatpush1.bf16.msra.mxu0 0
    %4841 = vmatprep.subr.bf16.mxu0 0
    %4842 = vmatpush1.bf16.msra.mxu0 0
    %4843 = vmatprep.subr.bf16.mxu0 0
    %4844 = vmatpush1.bf16.msra.mxu0 0
    %4845 = vmatprep.subr.bf16.mxu0 0
    %4846 = vmatpush1.bf16.msra.mxu0 %v4734
    %4847 = vmatprep.subr.bf16.mxu0 0
    %4848 = vmatpush1.bf16.msra.mxu0 %v4733
    %4849 = vmatprep.subr.bf16.mxu0 0
    %4850 = vmatpush2.bf16.msra.mxu0 0
    %4851 = vmatprep.subr.bf16.mxu0 0
    %4852 = vmatpush2.bf16.msra.mxu0 0
    %4853 = vmatprep.subr.bf16.mxu0 0
    %4854 = vmatpush2.bf16.msra.mxu0 0
    %4855 = vmatprep.subr.bf16.mxu0 0
    %4856 = vmatpush2.bf16.msra.mxu0 0
    %4857 = vmatprep.subr.bf16.mxu0 0
    %4858 = vmatpush2.bf16.msra.mxu0 0
    %4859 = vmatprep.subr.bf16.mxu0 0
    %4860 = vmatpush2.bf16.msra.mxu0 0
    %4861 = vmatprep.subr.bf16.mxu0 0
    %4862 = vmatpush2.bf16.msra.mxu0 0
    %4863 = vmatprep.subr.bf16.mxu0 0
    %4864 = vmatpush2.bf16.msra.mxu0 0
    %4865 = vmatprep.mubr.bf16.mxu0 0
    %4866 = vmatmul.mubr.bf16.gmra.mxu0 %v4738
    %v4867 = vpop.f32.mrf.mxu0
    %v4868 = vadd.f32 0.0, %v4867
    %v4869 = vpop.f32.mrf.mxu0
    %v4870 = vpop.f32.mrf.mxu0
    %v4871 = vadd.f32 0.0, %v4870
    %v4872 = vpop.f32.mrf.mxu0
    %4873 = vmatprep.mubr.bf16.mxu0 0
    %4874 = vmatmul.mubr.bf16.gmra.mxu0 %v4741
    %v4875 = vpop.f32.mrf.mxu0
    %v4876 = vadd.f32 0.0, %v4875
    %v4877 = vpop.f32.mrf.mxu0
    %v4878 = vpop.f32.mrf.mxu0
    %v4879 = vadd.f32 0.0, %v4878
    %v4880 = vpop.f32.mrf.mxu0
    %4881 = vmatprep.mubr.bf16.mxu0 0
    %4882 = vmatmul.mubr.bf16.gmra.mxu0 %v4744
    %v4883 = vpop.f32.mrf.mxu0
    %v4884 = vadd.f32 0.0, %v4883
    %v4885 = vpop.f32.mrf.mxu0
    %v4886 = vpop.f32.mrf.mxu0
    %v4887 = vadd.f32 0.0, %v4886
    %v4888 = vpop.f32.mrf.mxu0
    %4889 = vmatprep.mubr.bf16.mxu0 0
    %4890 = vmatmul.mubr.bf16.gmra.mxu0 %v4747
    %v4891 = vpop.f32.mrf.mxu0
    %v4892 = vadd.f32 0.0, %v4891
    %v4893 = vpop.f32.mrf.mxu0
    %v4894 = vpop.f32.mrf.mxu0
    %v4895 = vadd.f32 0.0, %v4894
    %v4896 = vpop.f32.mrf.mxu0
    %4897 = vmatprep.mubr.bf16.mxu0 0
    %4898 = vmatmul.mubr.bf16.gmra.mxu0 %v4750
    %v4899 = vpop.f32.mrf.mxu0
    %v4900 = vadd.f32 0.0, %v4899
    %v4901 = vpop.f32.mrf.mxu0
    %v4902 = vpop.f32.mrf.mxu0
    %v4903 = vadd.f32 0.0, %v4902
    %v4904 = vpop.f32.mrf.mxu0
    %4905 = vmatprep.mubr.bf16.mxu0 0
    %4906 = vmatmul.mubr.bf16.gmra.mxu0 %v4753
    %v4907 = vpop.f32.mrf.mxu0
    %v4908 = vadd.f32 0.0, %v4907
    %v4909 = vpop.f32.mrf.mxu0
    %v4910 = vpop.f32.mrf.mxu0
    %v4911 = vadd.f32 0.0, %v4910
    %v4912 = vpop.f32.mrf.mxu0
    %4913 = vmatprep.mubr.bf16.mxu0 0
    %4914 = vmatmul.mubr.bf16.gmra.mxu0 %v4756
    %v4915 = vpop.f32.mrf.mxu0
    %v4916 = vadd.f32 0.0, %v4915
    %v4917 = vpop.f32.mrf.mxu0
    %v4918 = vpop.f32.mrf.mxu0
    %v4919 = vadd.f32 0.0, %v4918
    %v4920 = vpop.f32.mrf.mxu0
    %4921 = vmatprep.mubr.bf16.mxu0 0
    %4922 = vmatmul.mubr.bf16.gmra.mxu0 %v4759
    %v4923 = vpop.f32.mrf.mxu0
    %v4924 = vadd.f32 0.0, %v4923
    %v4925 = vpop.f32.mrf.mxu0
    %v4926 = vpop.f32.mrf.mxu0
    %v4927 = vadd.f32 0.0, %v4926
    %v4928 = vpop.f32.mrf.mxu0
    %4929 = vmatprep.mubr.bf16.mxu0 0
    %4930 = vmatmul.mubr.bf16.gmra.mxu0 %v4762
    %v4931 = vpop.f32.mrf.mxu0
    %v4932 = vadd.f32 0.0, %v4931
    %v4933 = vpop.f32.mrf.mxu0
    %v4934 = vpop.f32.mrf.mxu0
    %v4935 = vadd.f32 0.0, %v4934
    %v4936 = vpop.f32.mrf.mxu0
    %4937 = vmatprep.mubr.bf16.mxu0 0
    %4938 = vmatmul.mubr.bf16.gmra.mxu0 %v4765
    %v4939 = vpop.f32.mrf.mxu0
    %v4940 = vadd.f32 0.0, %v4939
    %v4941 = vpop.f32.mrf.mxu0
    %v4942 = vpop.f32.mrf.mxu0
    %v4943 = vadd.f32 0.0, %v4942
    %v4944 = vpop.f32.mrf.mxu0
    %4945 = vmatprep.mubr.bf16.mxu0 0
    %4946 = vmatmul.mubr.bf16.gmra.mxu0 %v4768
    %v4947 = vpop.f32.mrf.mxu0
    %v4948 = vadd.f32 0.0, %v4947
    %v4949 = vpop.f32.mrf.mxu0
    %v4950 = vpop.f32.mrf.mxu0
    %v4951 = vadd.f32 0.0, %v4950
    %v4952 = vpop.f32.mrf.mxu0
    %4953 = vmatprep.mubr.bf16.mxu0 0
    %4954 = vmatmul.mubr.bf16.gmra.mxu0 %v4771
    %v4955 = vpop.f32.mrf.mxu0
    %v4956 = vadd.f32 0.0, %v4955
    %v4957 = vpop.f32.mrf.mxu0
    %v4958 = vpop.f32.mrf.mxu0
    %v4959 = vadd.f32 0.0, %v4958
    %v4960 = vpop.f32.mrf.mxu0
    %4961 = vmatprep.mubr.bf16.mxu0 0
    %4962 = vmatmul.mubr.bf16.gmra.mxu0 %v4774
    %v4963 = vpop.f32.mrf.mxu0
    %v4964 = vadd.f32 0.0, %v4963
    %v4965 = vpop.f32.mrf.mxu0
    %v4966 = vpop.f32.mrf.mxu0
    %v4967 = vadd.f32 0.0, %v4966
    %v4968 = vpop.f32.mrf.mxu0
    %4969 = vmatprep.mubr.bf16.mxu0 0
    %4970 = vmatmul.mubr.bf16.gmra.mxu0 %v4777
    %v4971 = vpop.f32.mrf.mxu0
    %v4972 = vadd.f32 0.0, %v4971
    %v4973 = vpop.f32.mrf.mxu0
    %v4974 = vpop.f32.mrf.mxu0
    %v4975 = vadd.f32 0.0, %v4974
    %v4976 = vpop.f32.mrf.mxu0
    %4977 = vmatprep.mubr.bf16.mxu0 0
    %4978 = vmatmul.mubr.bf16.gmra.mxu0 %v4780
    %v4979 = vpop.f32.mrf.mxu0
    %v4980 = vadd.f32 0.0, %v4979
    %v4981 = vpop.f32.mrf.mxu0
    %v4982 = vpop.f32.mrf.mxu0
    %v4983 = vadd.f32 0.0, %v4982
    %v4984 = vpop.f32.mrf.mxu0
    %4985 = vmatprep.mubr.bf16.mxu0 0
    %4986 = vmatmul.mubr.bf16.gmra.mxu0 %v4783
    %v4987 = vpop.f32.mrf.mxu0
    %v4988 = vadd.f32 0.0, %v4987
    %v4989 = vpop.f32.mrf.mxu0
    %v4990 = vpop.f32.mrf.mxu0
    %v4991 = vadd.f32 0.0, %v4990
    %v4992 = vpop.f32.mrf.mxu0
    %4993 = vmatprep.mubr.bf16.mxu0 0
    %4994 = vmatmul.mubr.bf16.gmra.mxu0 %v4786
    %v4995 = vpop.f32.mrf.mxu0
    %v4996 = vadd.f32 0.0, %v4995
    %v4997 = vpop.f32.mrf.mxu0
    %v4998 = vpop.f32.mrf.mxu0
    %v4999 = vadd.f32 0.0, %v4998
    %v5000 = vpop.f32.mrf.mxu0
    %5001 = vmatprep.mubr.bf16.mxu0 0
    %5002 = vmatmul.mubr.bf16.gmra.mxu0 %v4789
    %v5003 = vpop.f32.mrf.mxu0
    %v5004 = vadd.f32 0.0, %v5003
    %v5005 = vpop.f32.mrf.mxu0
    %v5006 = vpop.f32.mrf.mxu0
    %v5007 = vadd.f32 0.0, %v5006
    %v5008 = vpop.f32.mrf.mxu0
    %5009 = vmatprep.mubr.bf16.mxu0 0
    %5010 = vmatmul.mubr.bf16.gmra.mxu0 %v4792
    %v5011 = vpop.f32.mrf.mxu0
    %v5012 = vadd.f32 0.0, %v5011
    %v5013 = vpop.f32.mrf.mxu0
    %v5014 = vpop.f32.mrf.mxu0
    %v5015 = vadd.f32 0.0, %v5014
    %v5016 = vpop.f32.mrf.mxu0
    %5017 = vmatprep.mubr.bf16.mxu0 0
    %5018 = vmatmul.mubr.bf16.gmra.mxu0 %v4795
    %v5019 = vpop.f32.mrf.mxu0
    %v5020 = vadd.f32 0.0, %v5019
    %v5021 = vpop.f32.mrf.mxu0
    %v5022 = vpop.f32.mrf.mxu0
    %v5023 = vadd.f32 0.0, %v5022
    %v5024 = vpop.f32.mrf.mxu0
    %5025 = vmatprep.mubr.bf16.mxu0 0
    %5026 = vmatmul.mubr.bf16.gmra.mxu0 %v4798
    %v5027 = vpop.f32.mrf.mxu0
    %v5028 = vadd.f32 0.0, %v5027
    %v5029 = vpop.f32.mrf.mxu0
    %v5030 = vpop.f32.mrf.mxu0
    %v5031 = vadd.f32 0.0, %v5030
    %v5032 = vpop.f32.mrf.mxu0
    %5033 = vmatprep.mubr.bf16.mxu0 0
    %5034 = vmatmul.mubr.bf16.gmra.mxu0 %v4801
    %v5035 = vpop.f32.mrf.mxu0
    %v5036 = vadd.f32 0.0, %v5035
    %v5037 = vpop.f32.mrf.mxu0
    %v5038 = vpop.f32.mrf.mxu0
    %v5039 = vadd.f32 0.0, %v5038
    %v5040 = vpop.f32.mrf.mxu0
    %5041 = vmatprep.mubr.bf16.mxu0 0
    %5042 = vmatmul.mubr.bf16.gmra.mxu0 %v4804
    %v5043 = vpop.f32.mrf.mxu0
    %v5044 = vadd.f32 0.0, %v5043
    %v5045 = vpop.f32.mrf.mxu0
    %v5046 = vpop.f32.mrf.mxu0
    %v5047 = vadd.f32 0.0, %v5046
    %v5048 = vpop.f32.mrf.mxu0
    %5049 = vmatprep.mubr.bf16.mxu0 0
    %5050 = vmatmul.mubr.bf16.gmra.mxu0 %v4807
    %v5051 = vpop.f32.mrf.mxu0
    %v5052 = vadd.f32 0.0, %v5051
    %v5053 = vpop.f32.mrf.mxu0
    %v5054 = vpop.f32.mrf.mxu0
    %v5055 = vadd.f32 0.0, %v5054
    %v5056 = vpop.f32.mrf.mxu0
    %5057 = vmatprep.mubr.bf16.mxu0 0
    %5058 = vmatmul.mubr.bf16.gmra.mxu0 %v4810
    %v5059 = vpop.f32.mrf.mxu0
    %v5060 = vadd.f32 0.0, %v5059
    %v5061 = vpop.f32.mrf.mxu0
    %v5062 = vpop.f32.mrf.mxu0
    %v5063 = vadd.f32 0.0, %v5062
    %v5064 = vpop.f32.mrf.mxu0
    %5065 = vmatprep.mubr.bf16.mxu0 0
    %5066 = vmatmul.mubr.bf16.gmra.mxu0 %v4813
    %v5067 = vpop.f32.mrf.mxu0
    %v5068 = vadd.f32 0.0, %v5067
    %v5069 = vpop.f32.mrf.mxu0
    %v5070 = vpop.f32.mrf.mxu0
    %v5071 = vadd.f32 0.0, %v5070
    %v5072 = vpop.f32.mrf.mxu0
    %5073 = vmatprep.mubr.bf16.mxu0 0
    %5074 = vmatmul.mubr.bf16.gmra.mxu0 %v4816
    %v5075 = vpop.f32.mrf.mxu0
    %v5076 = vadd.f32 0.0, %v5075
    %v5077 = vpop.f32.mrf.mxu0
    %v5078 = vpop.f32.mrf.mxu0
    %v5079 = vadd.f32 0.0, %v5078
    %v5080 = vpop.f32.mrf.mxu0
    %5081 = vmatprep.mubr.bf16.mxu0 0
    %5082 = vmatmul.mubr.bf16.gmra.mxu0 %v4819
    %v5083 = vpop.f32.mrf.mxu0
    %v5084 = vadd.f32 0.0, %v5083
    %v5085 = vpop.f32.mrf.mxu0
    %v5086 = vpop.f32.mrf.mxu0
    %v5087 = vadd.f32 0.0, %v5086
    %v5088 = vpop.f32.mrf.mxu0
    %5089 = vmatprep.mubr.bf16.mxu0 0
    %5090 = vmatmul.mubr.bf16.gmra.mxu0 %v4822
    %v5091 = vpop.f32.mrf.mxu0
    %v5092 = vadd.f32 0.0, %v5091
    %v5093 = vpop.f32.mrf.mxu0
    %v5094 = vpop.f32.mrf.mxu0
    %v5095 = vadd.f32 0.0, %v5094
    %v5096 = vpop.f32.mrf.mxu0
    %5097 = vmatprep.mubr.bf16.mxu0 0
    %5098 = vmatmul.mubr.bf16.gmra.mxu0 %v4825
    %v5099 = vpop.f32.mrf.mxu0
    %v5100 = vadd.f32 0.0, %v5099
    %v5101 = vpop.f32.mrf.mxu0
    %v5102 = vpop.f32.mrf.mxu0
    %v5103 = vadd.f32 0.0, %v5102
    %v5104 = vpop.f32.mrf.mxu0
    %5105 = vmatprep.mubr.bf16.mxu0 0
    %5106 = vmatmul.mubr.bf16.gmra.mxu0 %v4828
    %v5107 = vpop.f32.mrf.mxu0
    %v5108 = vadd.f32 0.0, %v5107
    %v5109 = vpop.f32.mrf.mxu0
    %v5110 = vpop.f32.mrf.mxu0
    %v5111 = vadd.f32 0.0, %v5110
    %v5112 = vpop.f32.mrf.mxu0
    %5113 = vmatprep.mubr.bf16.mxu0 0
    %5114 = vmatmul.mubr.bf16.gmra.mxu0 %v4831
    %v5115 = vpop.f32.mrf.mxu0
    %v5116 = vadd.f32 0.0, %v5115
    %v5117 = vpop.f32.mrf.mxu0
    %v5118 = vpop.f32.mrf.mxu0
    %v5119 = vadd.f32 0.0, %v5118
    %v5120 = vpop.f32.mrf.mxu0
    %5121 = vdwg.mxu0
    %v5122 = vadd.f32 %v4432, %v4868
    %v5123 = vadd.f32 %v4433, %v4871
    %v5124 = vadd.f32 %v4434, %v4876
    %v5125 = vadd.f32 %v4435, %v4879
    %v5126 = vadd.f32 %v4436, %v4884
    %v5127 = vadd.f32 %v4437, %v4887
    %v5128 = vadd.f32 %v4438, %v4892
    %v5129 = vadd.f32 %v4439, %v4895
    %v5130 = vadd.f32 %v4440, %v4900
    %v5131 = vadd.f32 %v4441, %v4903
    %v5132 = vadd.f32 %v4442, %v4908
    %v5133 = vadd.f32 %v4443, %v4911
    %v5134 = vadd.f32 %v4444, %v4916
    %v5135 = vadd.f32 %v4445, %v4919
    %v5136 = vadd.f32 %v4446, %v4924
    %v5137 = vadd.f32 %v4447, %v4927
    %v5138 = vadd.f32 %v4448, %v4932
    %v5139 = vadd.f32 %v4449, %v4935
    %v5140 = vadd.f32 %v4450, %v4940
    %v5141 = vadd.f32 %v4451, %v4943
    %v5142 = vadd.f32 %v4452, %v4948
    %v5143 = vadd.f32 %v4453, %v4951
    %v5144 = vadd.f32 %v4454, %v4956
    %v5145 = vadd.f32 %v4455, %v4959
    %v5146 = vadd.f32 %v4456, %v4964
    %v5147 = vadd.f32 %v4457, %v4967
    %v5148 = vadd.f32 %v4458, %v4972
    %v5149 = vadd.f32 %v4459, %v4975
    %v5150 = vadd.f32 %v4460, %v4980
    %v5151 = vadd.f32 %v4461, %v4983
    %v5152 = vadd.f32 %v4462, %v4988
    %v5153 = vadd.f32 %v4463, %v4991
    %v5154 = vadd.f32 %v4464, %v4996
    %v5155 = vadd.f32 %v4465, %v4999
    %v5156 = vadd.f32 %v4466, %v5004
    %v5157 = vadd.f32 %v4467, %v5007
    %v5158 = vadd.f32 %v4468, %v5012
    %v5159 = vadd.f32 %v4469, %v5015
    %v5160 = vadd.f32 %v4470, %v5020
    %v5161 = vadd.f32 %v4471, %v5023
    %v5162 = vadd.f32 %v4472, %v5028
    %v5163 = vadd.f32 %v4473, %v5031
    %v5164 = vadd.f32 %v4474, %v5036
    %v5165 = vadd.f32 %v4475, %v5039
    %v5166 = vadd.f32 %v4476, %v5044
    %v5167 = vadd.f32 %v4477, %v5047
    %v5168 = vadd.f32 %v4478, %v5052
    %v5169 = vadd.f32 %v4479, %v5055
    %v5170 = vadd.f32 %v4480, %v5060
    %v5171 = vadd.f32 %v4481, %v5063
    %v5172 = vadd.f32 %v4482, %v5068
    %v5173 = vadd.f32 %v4483, %v5071
    %v5174 = vadd.f32 %v4484, %v5076
    %v5175 = vadd.f32 %v4485, %v5079
    %v5176 = vadd.f32 %v4486, %v5084
    %v5177 = vadd.f32 %v4487, %v5087
    %v5178 = vadd.f32 %v4488, %v5092
    %v5179 = vadd.f32 %v4489, %v5095
    %v5180 = vadd.f32 %v4490, %v5100
    %v5181 = vadd.f32 %v4491, %v5103
    %v5182 = vadd.f32 %v4492, %v5108
    %v5183 = vadd.f32 %v4493, %v5111
    %v5184 = vadd.f32 %v4494, %v5116
    %v5185 = vadd.f32 %v4495, %v5119
    %v5186 = vmax.f32 %v5122, 0.0
    %v5187 = vmax.f32 %v5123, 0.0
    %v5188 = vmax.f32 %v5124, 0.0
    %v5189 = vmax.f32 %v5125, 0.0
    %v5190 = vmax.f32 %v5126, 0.0
    %v5191 = vmax.f32 %v5127, 0.0
    %v5192 = vmax.f32 %v5128, 0.0
    %v5193 = vmax.f32 %v5129, 0.0
    %v5194 = vmax.f32 %v5130, 0.0
    %v5195 = vmax.f32 %v5131, 0.0
    %v5196 = vmax.f32 %v5132, 0.0
    %v5197 = vmax.f32 %v5133, 0.0
    %v5198 = vmax.f32 %v5134, 0.0
    %v5199 = vmax.f32 %v5135, 0.0
    %v5200 = vmax.f32 %v5136, 0.0
    %v5201 = vmax.f32 %v5137, 0.0
    %v5202 = vmax.f32 %v5138, 0.0
    %v5203 = vmax.f32 %v5139, 0.0
    %v5204 = vmax.f32 %v5140, 0.0
    %v5205 = vmax.f32 %v5141, 0.0
    %v5206 = vmax.f32 %v5142, 0.0
    %v5207 = vmax.f32 %v5143, 0.0
    %v5208 = vmax.f32 %v5144, 0.0
    %v5209 = vmax.f32 %v5145, 0.0
    %v5210 = vmax.f32 %v5146, 0.0
    %v5211 = vmax.f32 %v5147, 0.0
    %v5212 = vmax.f32 %v5148, 0.0
    %v5213 = vmax.f32 %v5149, 0.0
    %v5214 = vmax.f32 %v5150, 0.0
    %v5215 = vmax.f32 %v5151, 0.0
    %v5216 = vmax.f32 %v5152, 0.0
    %v5217 = vmax.f32 %v5153, 0.0
    %v5218 = vmax.f32 %v5154, 0.0
    %v5219 = vmax.f32 %v5155, 0.0
    %v5220 = vmax.f32 %v5156, 0.0
    %v5221 = vmax.f32 %v5157, 0.0
    %v5222 = vmax.f32 %v5158, 0.0
    %v5223 = vmax.f32 %v5159, 0.0
    %v5224 = vmax.f32 %v5160, 0.0
    %v5225 = vmax.f32 %v5161, 0.0
    %v5226 = vmax.f32 %v5162, 0.0
    %v5227 = vmax.f32 %v5163, 0.0
    %v5228 = vmax.f32 %v5164, 0.0
    %v5229 = vmax.f32 %v5165, 0.0
    %v5230 = vmax.f32 %v5166, 0.0
    %v5231 = vmax.f32 %v5167, 0.0
    %v5232 = vmax.f32 %v5168, 0.0
    %v5233 = vmax.f32 %v5169, 0.0
    %v5234 = vmax.f32 %v5170, 0.0
    %v5235 = vmax.f32 %v5171, 0.0
    %v5236 = vmax.f32 %v5172, 0.0
    %v5237 = vmax.f32 %v5173, 0.0
    %v5238 = vmax.f32 %v5174, 0.0
    %v5239 = vmax.f32 %v5175, 0.0
    %v5240 = vmax.f32 %v5176, 0.0
    %v5241 = vmax.f32 %v5177, 0.0
    %v5242 = vmax.f32 %v5178, 0.0
    %v5243 = vmax.f32 %v5179, 0.0
    %v5244 = vmax.f32 %v5180, 0.0
    %v5245 = vmax.f32 %v5181, 0.0
    %v5246 = vmax.f32 %v5182, 0.0
    %v5247 = vmax.f32 %v5183, 0.0
    %v5248 = vmax.f32 %v5184, 0.0
    %v5249 = vmax.f32 %v5185, 0.0
    %5314 = vrot.lane.b32.xlu0 %v3237, 96
    %v5315 = vpop.permute.xlu0 %5314
    %5316 = vrot.lane.b32.xlu0 %v3238, 96
    %v5317 = vpop.permute.xlu0 %5316
    %5318 = vrot.lane.b32.xlu0 %v3239, 96
    %v5319 = vpop.permute.xlu0 %5318
    %5320 = vrot.lane.b32.xlu0 %v3240, 96
    %v5321 = vpop.permute.xlu0 %5320
    %5322 = vrot.lane.b32.xlu0 %v3241, 96
    %v5323 = vpop.permute.xlu0 %5322
    %5324 = vrot.lane.b32.xlu0 %v3242, 96
    %v5325 = vpop.permute.xlu0 %5324
    %5326 = vrot.lane.b32.xlu0 %v3243, 96
    %v5327 = vpop.permute.xlu0 %5326
    %5328 = vrot.lane.b32.xlu0 %v3244, 96
    %v5329 = vpop.permute.xlu0 %5328
    %5330 = vrot.lane.b32.xlu0 %v3245, 96
    %v5331 = vpop.permute.xlu0 %5330
    %5332 = vrot.lane.b32.xlu0 %v3246, 96
    %v5333 = vpop.permute.xlu0 %5332
    %5334 = vrot.lane.b32.xlu0 %v3247, 96
    %v5335 = vpop.permute.xlu0 %5334
    %5336 = vrot.lane.b32.xlu0 %v3248, 96
    %v5337 = vpop.permute.xlu0 %5336
    %5338 = vrot.lane.b32.xlu0 %v3249, 96
    %v5339 = vpop.permute.xlu0 %5338
    %5340 = vrot.lane.b32.xlu0 %v3250, 96
    %v5341 = vpop.permute.xlu0 %5340
    %5342 = vrot.lane.b32.xlu0 %v3251, 96
    %v5343 = vpop.permute.xlu0 %5342
    %5344 = vrot.lane.b32.xlu0 %v3252, 96
    %v5345 = vpop.permute.xlu0 %5344
    %5346 = vrot.lane.b32.xlu0 %v3253, 96
    %v5347 = vpop.permute.xlu0 %5346
    %5348 = vrot.lane.b32.xlu0 %v3254, 96
    %v5349 = vpop.permute.xlu0 %5348
    %5350 = vrot.lane.b32.xlu0 %v3255, 96
    %v5351 = vpop.permute.xlu0 %5350
    %5352 = vrot.lane.b32.xlu0 %v3256, 96
    %v5353 = vpop.permute.xlu0 %5352
    %5354 = vrot.lane.b32.xlu0 %v3257, 96
    %v5355 = vpop.permute.xlu0 %5354
    %5356 = vrot.lane.b32.xlu0 %v3258, 96
    %v5357 = vpop.permute.xlu0 %5356
    %5358 = vrot.lane.b32.xlu0 %v3259, 96
    %v5359 = vpop.permute.xlu0 %5358
    %5360 = vrot.lane.b32.xlu0 %v3260, 96
    %v5361 = vpop.permute.xlu0 %5360
    %5362 = vrot.lane.b32.xlu0 %v3261, 96
    %v5363 = vpop.permute.xlu0 %5362
    %5364 = vrot.lane.b32.xlu0 %v3262, 96
    %v5365 = vpop.permute.xlu0 %5364
    %5366 = vrot.lane.b32.xlu0 %v3263, 96
    %v5367 = vpop.permute.xlu0 %5366
    %5368 = vrot.lane.b32.xlu0 %v3264, 96
    %v5369 = vpop.permute.xlu0 %5368
    %5370 = vrot.lane.b32.xlu0 %v3265, 96
    %v5371 = vpop.permute.xlu0 %5370
    %5372 = vrot.lane.b32.xlu0 %v3266, 96
    %v5373 = vpop.permute.xlu0 %5372
    %5374 = vrot.lane.b32.xlu0 %v3267, 96
    %v5375 = vpop.permute.xlu0 %5374
    %5376 = vrot.lane.b32.xlu0 %v3268, 96
    %v5377 = vpop.permute.xlu0 %5376
    %5378 = vrot.lane.b32.xlu0 %v3269, 96
    %v5379 = vpop.permute.xlu0 %5378
    %5380 = vrot.lane.b32.xlu0 %v3270, 96
    %v5381 = vpop.permute.xlu0 %5380
    %5382 = vrot.lane.b32.xlu0 %v3271, 96
    %v5383 = vpop.permute.xlu0 %5382
    %5384 = vrot.lane.b32.xlu0 %v3272, 96
    %v5385 = vpop.permute.xlu0 %5384
    %5386 = vrot.lane.b32.xlu0 %v3273, 96
    %v5387 = vpop.permute.xlu0 %5386
    %5388 = vrot.lane.b32.xlu0 %v3274, 96
    %v5389 = vpop.permute.xlu0 %5388
    %5390 = vrot.lane.b32.xlu0 %v3275, 96
    %v5391 = vpop.permute.xlu0 %5390
    %5392 = vrot.lane.b32.xlu0 %v3276, 96
    %v5393 = vpop.permute.xlu0 %5392
    %5394 = vrot.lane.b32.xlu0 %v3277, 96
    %v5395 = vpop.permute.xlu0 %5394
    %5396 = vrot.lane.b32.xlu0 %v3278, 96
    %v5397 = vpop.permute.xlu0 %5396
    %5398 = vrot.lane.b32.xlu0 %v3279, 96
    %v5399 = vpop.permute.xlu0 %5398
    %5400 = vrot.lane.b32.xlu0 %v3280, 96
    %v5401 = vpop.permute.xlu0 %5400
    %5402 = vrot.lane.b32.xlu0 %v3281, 96
    %v5403 = vpop.permute.xlu0 %5402
    %5404 = vrot.lane.b32.xlu0 %v3282, 96
    %v5405 = vpop.permute.xlu0 %5404
    %5406 = vrot.lane.b32.xlu0 %v3283, 96
    %v5407 = vpop.permute.xlu0 %5406
    %5408 = vrot.lane.b32.xlu0 %v3284, 96
    %v5409 = vpop.permute.xlu0 %5408
    %5410 = vrot.lane.b32.xlu0 %v3285, 96
    %v5411 = vpop.permute.xlu0 %5410
    %5412 = vrot.lane.b32.xlu0 %v3286, 96
    %v5413 = vpop.permute.xlu0 %5412
    %5414 = vrot.lane.b32.xlu0 %v3287, 96
    %v5415 = vpop.permute.xlu0 %5414
    %5416 = vrot.lane.b32.xlu0 %v3288, 96
    %v5417 = vpop.permute.xlu0 %5416
    %5418 = vrot.lane.b32.xlu0 %v3289, 96
    %v5419 = vpop.permute.xlu0 %5418
    %5420 = vrot.lane.b32.xlu0 %v3290, 96
    %v5421 = vpop.permute.xlu0 %5420
    %5422 = vrot.lane.b32.xlu0 %v3291, 96
    %v5423 = vpop.permute.xlu0 %5422
    %5424 = vrot.lane.b32.xlu0 %v3292, 96
    %v5425 = vpop.permute.xlu0 %5424
    %5426 = vrot.lane.b32.xlu0 %v3293, 96
    %v5427 = vpop.permute.xlu0 %5426
    %5428 = vrot.lane.b32.xlu0 %v3294, 96
    %v5429 = vpop.permute.xlu0 %5428
    %5430 = vrot.lane.b32.xlu0 %v3295, 96
    %v5431 = vpop.permute.xlu0 %5430
    %5432 = vrot.lane.b32.xlu0 %v3296, 96
    %v5433 = vpop.permute.xlu0 %5432
    %5434 = vrot.lane.b32.xlu0 %v3297, 96
    %v5435 = vpop.permute.xlu0 %5434
    %5436 = vrot.lane.b32.xlu0 %v3298, 96
    %v5437 = vpop.permute.xlu0 %5436
    %5438 = vrot.lane.b32.xlu0 %v3299, 96
    %v5439 = vpop.permute.xlu0 %5438
    %5440 = vrot.lane.b32.xlu0 %v3300, 96
    %v5441 = vpop.permute.xlu0 %5440
    %v5506 = vadd.f32 %v5186, %v5315
    %v5507 = vadd.f32 %v5187, %v5317
    %v5508 = vadd.f32 %v5188, %v5319
    %v5509 = vadd.f32 %v5189, %v5321
    %v5510 = vadd.f32 %v5190, %v5323
    %v5511 = vadd.f32 %v5191, %v5325
    %v5512 = vadd.f32 %v5192, %v5327
    %v5513 = vadd.f32 %v5193, %v5329
    %v5514 = vadd.f32 %v5194, %v5331
    %v5515 = vadd.f32 %v5195, %v5333
    %v5516 = vadd.f32 %v5196, %v5335
    %v5517 = vadd.f32 %v5197, %v5337
    %v5518 = vadd.f32 %v5198, %v5339
    %v5519 = vadd.f32 %v5199, %v5341
    %v5520 = vadd.f32 %v5200, %v5343
    %v5521 = vadd.f32 %v5201, %v5345
    %v5522 = vadd.f32 %v5202, %v5347
    %v5523 = vadd.f32 %v5203, %v5349
    %v5524 = vadd.f32 %v5204, %v5351
    %v5525 = vadd.f32 %v5205, %v5353
    %v5526 = vadd.f32 %v5206, %v5355
    %v5527 = vadd.f32 %v5207, %v5357
    %v5528 = vadd.f32 %v5208, %v5359
    %v5529 = vadd.f32 %v5209, %v5361
    %v5530 = vadd.f32 %v5210, %v5363
    %v5531 = vadd.f32 %v5211, %v5365
    %v5532 = vadd.f32 %v5212, %v5367
    %v5533 = vadd.f32 %v5213, %v5369
    %v5534 = vadd.f32 %v5214, %v5371
    %v5535 = vadd.f32 %v5215, %v5373
    %v5536 = vadd.f32 %v5216, %v5375
    %v5537 = vadd.f32 %v5217, %v5377
    %v5538 = vadd.f32 %v5218, %v5379
    %v5539 = vadd.f32 %v5219, %v5381
    %v5540 = vadd.f32 %v5220, %v5383
    %v5541 = vadd.f32 %v5221, %v5385
    %v5542 = vadd.f32 %v5222, %v5387
    %v5543 = vadd.f32 %v5223, %v5389
    %v5544 = vadd.f32 %v5224, %v5391
    %v5545 = vadd.f32 %v5225, %v5393
    %v5546 = vadd.f32 %v5226, %v5395
    %v5547 = vadd.f32 %v5227, %v5397
    %v5548 = vadd.f32 %v5228, %v5399
    %v5549 = vadd.f32 %v5229, %v5401
    %v5550 = vadd.f32 %v5230, %v5403
    %v5551 = vadd.f32 %v5231, %v5405
    %v5552 = vadd.f32 %v5232, %v5407
    %v5553 = vadd.f32 %v5233, %v5409
    %v5554 = vadd.f32 %v5234, %v5411
    %v5555 = vadd.f32 %v5235, %v5413
    %v5556 = vadd.f32 %v5236, %v5415
    %v5557 = vadd.f32 %v5237, %v5417
    %v5558 = vadd.f32 %v5238, %v5419
    %v5559 = vadd.f32 %v5239, %v5421
    %v5560 = vadd.f32 %v5240, %v5423
    %v5561 = vadd.f32 %v5241, %v5425
    %v5562 = vadd.f32 %v5242, %v5427
    %v5563 = vadd.f32 %v5243, %v5429
    %v5564 = vadd.f32 %v5244, %v5431
    %v5565 = vadd.f32 %v5245, %v5433
    %v5566 = vadd.f32 %v5246, %v5435
    %v5567 = vadd.f32 %v5247, %v5437
    %v5568 = vadd.f32 %v5248, %v5439
    %v5569 = vadd.f32 %v5249, %v5441
    %v5570 = vmax.f32 %v5506, 0.0
    %v5571 = vmax.f32 %v5507, 0.0
    %v5572 = vmax.f32 %v5508, 0.0
    %v5573 = vmax.f32 %v5509, 0.0
    %v5574 = vmax.f32 %v5510, 0.0
    %v5575 = vmax.f32 %v5511, 0.0
    %v5576 = vmax.f32 %v5512, 0.0
    %v5577 = vmax.f32 %v5513, 0.0
    %v5578 = vmax.f32 %v5514, 0.0
    %v5579 = vmax.f32 %v5515, 0.0
    %v5580 = vmax.f32 %v5516, 0.0
    %v5581 = vmax.f32 %v5517, 0.0
    %v5582 = vmax.f32 %v5518, 0.0
    %v5583 = vmax.f32 %v5519, 0.0
    %v5584 = vmax.f32 %v5520, 0.0
    %v5585 = vmax.f32 %v5521, 0.0
    %v5586 = vmax.f32 %v5522, 0.0
    %v5587 = vmax.f32 %v5523, 0.0
    %v5588 = vmax.f32 %v5524, 0.0
    %v5589 = vmax.f32 %v5525, 0.0
    %v5590 = vmax.f32 %v5526, 0.0
    %v5591 = vmax.f32 %v5527, 0.0
    %v5592 = vmax.f32 %v5528, 0.0
    %v5593 = vmax.f32 %v5529, 0.0
    %v5594 = vmax.f32 %v5530, 0.0
    %v5595 = vmax.f32 %v5531, 0.0
    %v5596 = vmax.f32 %v5532, 0.0
    %v5597 = vmax.f32 %v5533, 0.0
    %v5598 = vmax.f32 %v5534, 0.0
    %v5599 = vmax.f32 %v5535, 0.0
    %v5600 = vmax.f32 %v5536, 0.0
    %v5601 = vmax.f32 %v5537, 0.0
    %v5602 = vmax.f32 %v5538, 0.0
    %v5603 = vmax.f32 %v5539, 0.0
    %v5604 = vmax.f32 %v5540, 0.0
    %v5605 = vmax.f32 %v5541, 0.0
    %v5606 = vmax.f32 %v5542, 0.0
    %v5607 = vmax.f32 %v5543, 0.0
    %v5608 = vmax.f32 %v5544, 0.0
    %v5609 = vmax.f32 %v5545, 0.0
    %v5610 = vmax.f32 %v5546, 0.0
    %v5611 = vmax.f32 %v5547, 0.0
    %v5612 = vmax.f32 %v5548, 0.0
    %v5613 = vmax.f32 %v5549, 0.0
    %v5614 = vmax.f32 %v5550, 0.0
    %v5615 = vmax.f32 %v5551, 0.0
    %v5616 = vmax.f32 %v5552, 0.0
    %v5617 = vmax.f32 %v5553, 0.0
    %v5618 = vmax.f32 %v5554, 0.0
    %v5619 = vmax.f32 %v5555, 0.0
    %v5620 = vmax.f32 %v5556, 0.0
    %v5621 = vmax.f32 %v5557, 0.0
    %v5622 = vmax.f32 %v5558, 0.0
    %v5623 = vmax.f32 %v5559, 0.0
    %v5624 = vmax.f32 %v5560, 0.0
    %v5625 = vmax.f32 %v5561, 0.0
    %v5626 = vmax.f32 %v5562, 0.0
    %v5627 = vmax.f32 %v5563, 0.0
    %v5628 = vmax.f32 %v5564, 0.0
    %v5629 = vmax.f32 %v5565, 0.0
    %v5630 = vmax.f32 %v5566, 0.0
    %v5631 = vmax.f32 %v5567, 0.0
    %v5632 = vmax.f32 %v5568, 0.0
    %v5633 = vmax.f32 %v5569, 0.0
    %s5634 = scalar_lea.vmem %s5, 32
    %v5635 = vld [vmem:[%s5634] sm:$0xf]
    %v5636 = vld [vmem:[%s5634 + $0x4] sm:$0xf]
    %v5637 = vld [vmem:[%s5634 + $0x8] sm:$0xf]
    %v5638 = vld [vmem:[%s5634 + $0xc] sm:$0xf]
    %v5639 = vpack.c.bf16 %v5571, %v5570
    %v5640 = vpack.c.bf16 %v5573, %v5572
    %v5641 = vpack.c.bf16 %v5575, %v5574
    %v5642 = vpack.c.bf16 %v5577, %v5576
    %v5643 = vpack.c.bf16 %v5579, %v5578
    %v5644 = vpack.c.bf16 %v5581, %v5580
    %v5645 = vpack.c.bf16 %v5583, %v5582
    %v5646 = vpack.c.bf16 %v5585, %v5584
    %v5647 = vpack.c.bf16 %v5587, %v5586
    %v5648 = vpack.c.bf16 %v5589, %v5588
    %v5649 = vpack.c.bf16 %v5591, %v5590
    %v5650 = vpack.c.bf16 %v5593, %v5592
    %v5651 = vpack.c.bf16 %v5595, %v5594
    %v5652 = vpack.c.bf16 %v5597, %v5596
    %v5653 = vpack.c.bf16 %v5599, %v5598
    %v5654 = vpack.c.bf16 %v5601, %v5600
    %v5655 = vpack.c.bf16 %v5603, %v5602
    %v5656 = vpack.c.bf16 %v5605, %v5604
    %v5657 = vpack.c.bf16 %v5607, %v5606
    %v5658 = vpack.c.bf16 %v5609, %v5608
    %v5659 = vpack.c.bf16 %v5611, %v5610
    %v5660 = vpack.c.bf16 %v5613, %v5612
    %v5661 = vpack.c.bf16 %v5615, %v5614
    %v5662 = vpack.c.bf16 %v5617, %v5616
    %v5663 = vpack.c.bf16 %v5619, %v5618
    %v5664 = vpack.c.bf16 %v5621, %v5620
    %v5665 = vpack.c.bf16 %v5623, %v5622
    %v5666 = vpack.c.bf16 %v5625, %v5624
    %v5667 = vpack.c.bf16 %v5627, %v5626
    %v5668 = vpack.c.bf16 %v5629, %v5628
    %v5669 = vpack.c.bf16 %v5631, %v5630
    %v5670 = vpack.c.bf16 %v5633, %v5632
    %v5671 = vld [vmem:[%s6] sm:$0x1]
    %v5673 = vlaneseq
    %v5674 = vshrl.u32 %v5673, 7
    %v5675 = vsub.s32 0, %v5674
    %v5676 = vrot.slane %v5671, %v5675
    %v5682 = vunpack.c.l.b16 %v5635
    %v5683 = vunpack.c.l.b16 %v5636
    %v5684 = vunpack.c.l.b16 %v5637
    %v5685 = vunpack.c.l.b16 %v5638
    %v5686 = vpack.c.b16 %v5683, %v5682
    %v5687 = vpack.c.b16 %v5685, %v5684
    %v5691 = vsel %vm3421, %v5639, 0
    %v5694 = vsel %vm3421, %v5640, 0
    %v5697 = vsel %vm3421, %v5641, 0
    %v5700 = vsel %vm3421, %v5642, 0
    %v5703 = vsel %vm3421, %v5643, 0
    %v5706 = vsel %vm3421, %v5644, 0
    %v5709 = vsel %vm3421, %v5645, 0
    %v5712 = vsel %vm3421, %v5646, 0
    %v5715 = vsel %vm3421, %v5647, 0
    %v5718 = vsel %vm3421, %v5648, 0
    %v5721 = vsel %vm3421, %v5649, 0
    %v5724 = vsel %vm3421, %v5650, 0
    %v5727 = vsel %vm3421, %v5651, 0
    %v5730 = vsel %vm3421, %v5652, 0
    %v5733 = vsel %vm3421, %v5653, 0
    %v5736 = vsel %vm3421, %v5654, 0
    %v5739 = vsel %vm3421, %v5655, 0
    %v5742 = vsel %vm3421, %v5656, 0
    %v5745 = vsel %vm3421, %v5657, 0
    %v5748 = vsel %vm3421, %v5658, 0
    %v5751 = vsel %vm3421, %v5659, 0
    %v5754 = vsel %vm3421, %v5660, 0
    %v5757 = vsel %vm3421, %v5661, 0
    %v5760 = vsel %vm3421, %v5662, 0
    %v5763 = vsel %vm3421, %v5663, 0
    %v5766 = vsel %vm3421, %v5664, 0
    %v5769 = vsel %vm3421, %v5665, 0
    %v5772 = vsel %vm3421, %v5666, 0
    %v5775 = vsel %vm3421, %v5667, 0
    %v5778 = vsel %vm3421, %v5668, 0
    %v5781 = vsel %vm3421, %v5669, 0
    %v5784 = vsel %vm3421, %v5670, 0
    %5786 = vmatprep.subr.bf16.mxu0 0
    %5787 = vmatpush1.bf16.msra.mxu0 0
    %5788 = vmatprep.subr.bf16.mxu0 0
    %5789 = vmatpush1.bf16.msra.mxu0 0
    %5790 = vmatprep.subr.bf16.mxu0 0
    %5791 = vmatpush1.bf16.msra.mxu0 0
    %5792 = vmatprep.subr.bf16.mxu0 0
    %5793 = vmatpush1.bf16.msra.mxu0 0
    %5794 = vmatprep.subr.bf16.mxu0 0
    %5795 = vmatpush1.bf16.msra.mxu0 0
    %5796 = vmatprep.subr.bf16.mxu0 0
    %5797 = vmatpush1.bf16.msra.mxu0 0
    %5798 = vmatprep.subr.bf16.mxu0 0
    %5799 = vmatpush1.bf16.msra.mxu0 %v5687
    %5800 = vmatprep.subr.bf16.mxu0 0
    %5801 = vmatpush1.bf16.msra.mxu0 %v5686
    %5802 = vmatprep.subr.bf16.mxu0 0
    %5803 = vmatpush2.bf16.msra.mxu0 0
    %5804 = vmatprep.subr.bf16.mxu0 0
    %5805 = vmatpush2.bf16.msra.mxu0 0
    %5806 = vmatprep.subr.bf16.mxu0 0
    %5807 = vmatpush2.bf16.msra.mxu0 0
    %5808 = vmatprep.subr.bf16.mxu0 0
    %5809 = vmatpush2.bf16.msra.mxu0 0
    %5810 = vmatprep.subr.bf16.mxu0 0
    %5811 = vmatpush2.bf16.msra.mxu0 0
    %5812 = vmatprep.subr.bf16.mxu0 0
    %5813 = vmatpush2.bf16.msra.mxu0 0
    %5814 = vmatprep.subr.bf16.mxu0 0
    %5815 = vmatpush2.bf16.msra.mxu0 0
    %5816 = vmatprep.subr.bf16.mxu0 0
    %5817 = vmatpush2.bf16.msra.mxu0 0
    %5818 = vmatprep.mubr.bf16.mxu0 0
    %5819 = vmatmul.mubr.bf16.gmra.mxu0 %v5691
    %v5820 = vpop.f32.mrf.mxu0
    %v5821 = vadd.f32 %v5676, %v5820
    %v5822 = vpop.f32.mrf.mxu0
    %v5823 = vpop.f32.mrf.mxu0
    %v5824 = vadd.f32 %v5676, %v5823
    %v5825 = vpop.f32.mrf.mxu0
    %5826 = vmatprep.mubr.bf16.mxu0 0
    %5827 = vmatmul.mubr.bf16.gmra.mxu0 %v5694
    %v5828 = vpop.f32.mrf.mxu0
    %v5829 = vadd.f32 %v5676, %v5828
    %v5830 = vpop.f32.mrf.mxu0
    %v5831 = vpop.f32.mrf.mxu0
    %v5832 = vadd.f32 %v5676, %v5831
    %v5833 = vpop.f32.mrf.mxu0
    %5834 = vmatprep.mubr.bf16.mxu0 0
    %5835 = vmatmul.mubr.bf16.gmra.mxu0 %v5697
    %v5836 = vpop.f32.mrf.mxu0
    %v5837 = vadd.f32 %v5676, %v5836
    %v5838 = vpop.f32.mrf.mxu0
    %v5839 = vpop.f32.mrf.mxu0
    %v5840 = vadd.f32 %v5676, %v5839
    %v5841 = vpop.f32.mrf.mxu0
    %5842 = vmatprep.mubr.bf16.mxu0 0
    %5843 = vmatmul.mubr.bf16.gmra.mxu0 %v5700
    %v5844 = vpop.f32.mrf.mxu0
    %v5845 = vadd.f32 %v5676, %v5844
    %v5846 = vpop.f32.mrf.mxu0
    %v5847 = vpop.f32.mrf.mxu0
    %v5848 = vadd.f32 %v5676, %v5847
    %v5849 = vpop.f32.mrf.mxu0
    %5850 = vmatprep.mubr.bf16.mxu0 0
    %5851 = vmatmul.mubr.bf16.gmra.mxu0 %v5703
    %v5852 = vpop.f32.mrf.mxu0
    %v5853 = vadd.f32 %v5676, %v5852
    %v5854 = vpop.f32.mrf.mxu0
    %v5855 = vpop.f32.mrf.mxu0
    %v5856 = vadd.f32 %v5676, %v5855
    %v5857 = vpop.f32.mrf.mxu0
    %5858 = vmatprep.mubr.bf16.mxu0 0
    %5859 = vmatmul.mubr.bf16.gmra.mxu0 %v5706
    %v5860 = vpop.f32.mrf.mxu0
    %v5861 = vadd.f32 %v5676, %v5860
    %v5862 = vpop.f32.mrf.mxu0
    %v5863 = vpop.f32.mrf.mxu0
    %v5864 = vadd.f32 %v5676, %v5863
    %v5865 = vpop.f32.mrf.mxu0
    %5866 = vmatprep.mubr.bf16.mxu0 0
    %5867 = vmatmul.mubr.bf16.gmra.mxu0 %v5709
    %v5868 = vpop.f32.mrf.mxu0
    %v5869 = vadd.f32 %v5676, %v5868
    %v5870 = vpop.f32.mrf.mxu0
    %v5871 = vpop.f32.mrf.mxu0
    %v5872 = vadd.f32 %v5676, %v5871
    %v5873 = vpop.f32.mrf.mxu0
    %5874 = vmatprep.mubr.bf16.mxu0 0
    %5875 = vmatmul.mubr.bf16.gmra.mxu0 %v5712
    %v5876 = vpop.f32.mrf.mxu0
    %v5877 = vadd.f32 %v5676, %v5876
    %v5878 = vpop.f32.mrf.mxu0
    %v5879 = vpop.f32.mrf.mxu0
    %v5880 = vadd.f32 %v5676, %v5879
    %v5881 = vpop.f32.mrf.mxu0
    %5882 = vmatprep.mubr.bf16.mxu0 0
    %5883 = vmatmul.mubr.bf16.gmra.mxu0 %v5715
    %v5884 = vpop.f32.mrf.mxu0
    %v5885 = vadd.f32 %v5676, %v5884
    %v5886 = vpop.f32.mrf.mxu0
    %v5887 = vpop.f32.mrf.mxu0
    %v5888 = vadd.f32 %v5676, %v5887
    %v5889 = vpop.f32.mrf.mxu0
    %5890 = vmatprep.mubr.bf16.mxu0 0
    %5891 = vmatmul.mubr.bf16.gmra.mxu0 %v5718
    %v5892 = vpop.f32.mrf.mxu0
    %v5893 = vadd.f32 %v5676, %v5892
    %v5894 = vpop.f32.mrf.mxu0
    %v5895 = vpop.f32.mrf.mxu0
    %v5896 = vadd.f32 %v5676, %v5895
    %v5897 = vpop.f32.mrf.mxu0
    %5898 = vmatprep.mubr.bf16.mxu0 0
    %5899 = vmatmul.mubr.bf16.gmra.mxu0 %v5721
    %v5900 = vpop.f32.mrf.mxu0
    %v5901 = vadd.f32 %v5676, %v5900
    %v5902 = vpop.f32.mrf.mxu0
    %v5903 = vpop.f32.mrf.mxu0
    %v5904 = vadd.f32 %v5676, %v5903
    %v5905 = vpop.f32.mrf.mxu0
    %5906 = vmatprep.mubr.bf16.mxu0 0
    %5907 = vmatmul.mubr.bf16.gmra.mxu0 %v5724
    %v5908 = vpop.f32.mrf.mxu0
    %v5909 = vadd.f32 %v5676, %v5908
    %v5910 = vpop.f32.mrf.mxu0
    %v5911 = vpop.f32.mrf.mxu0
    %v5912 = vadd.f32 %v5676, %v5911
    %v5913 = vpop.f32.mrf.mxu0
    %5914 = vmatprep.mubr.bf16.mxu0 0
    %5915 = vmatmul.mubr.bf16.gmra.mxu0 %v5727
    %v5916 = vpop.f32.mrf.mxu0
    %v5917 = vadd.f32 %v5676, %v5916
    %v5918 = vpop.f32.mrf.mxu0
    %v5919 = vpop.f32.mrf.mxu0
    %v5920 = vadd.f32 %v5676, %v5919
    %v5921 = vpop.f32.mrf.mxu0
    %5922 = vmatprep.mubr.bf16.mxu0 0
    %5923 = vmatmul.mubr.bf16.gmra.mxu0 %v5730
    %v5924 = vpop.f32.mrf.mxu0
    %v5925 = vadd.f32 %v5676, %v5924
    %v5926 = vpop.f32.mrf.mxu0
    %v5927 = vpop.f32.mrf.mxu0
    %v5928 = vadd.f32 %v5676, %v5927
    %v5929 = vpop.f32.mrf.mxu0
    %5930 = vmatprep.mubr.bf16.mxu0 0
    %5931 = vmatmul.mubr.bf16.gmra.mxu0 %v5733
    %v5932 = vpop.f32.mrf.mxu0
    %v5933 = vadd.f32 %v5676, %v5932
    %v5934 = vpop.f32.mrf.mxu0
    %v5935 = vpop.f32.mrf.mxu0
    %v5936 = vadd.f32 %v5676, %v5935
    %v5937 = vpop.f32.mrf.mxu0
    %5938 = vmatprep.mubr.bf16.mxu0 0
    %5939 = vmatmul.mubr.bf16.gmra.mxu0 %v5736
    %v5940 = vpop.f32.mrf.mxu0
    %v5941 = vadd.f32 %v5676, %v5940
    %v5942 = vpop.f32.mrf.mxu0
    %v5943 = vpop.f32.mrf.mxu0
    %v5944 = vadd.f32 %v5676, %v5943
    %v5945 = vpop.f32.mrf.mxu0
    %5946 = vmatprep.mubr.bf16.mxu0 0
    %5947 = vmatmul.mubr.bf16.gmra.mxu0 %v5739
    %v5948 = vpop.f32.mrf.mxu0
    %v5949 = vadd.f32 %v5676, %v5948
    %v5950 = vpop.f32.mrf.mxu0
    %v5951 = vpop.f32.mrf.mxu0
    %v5952 = vadd.f32 %v5676, %v5951
    %v5953 = vpop.f32.mrf.mxu0
    %5954 = vmatprep.mubr.bf16.mxu0 0
    %5955 = vmatmul.mubr.bf16.gmra.mxu0 %v5742
    %v5956 = vpop.f32.mrf.mxu0
    %v5957 = vadd.f32 %v5676, %v5956
    %v5958 = vpop.f32.mrf.mxu0
    %v5959 = vpop.f32.mrf.mxu0
    %v5960 = vadd.f32 %v5676, %v5959
    %v5961 = vpop.f32.mrf.mxu0
    %5962 = vmatprep.mubr.bf16.mxu0 0
    %5963 = vmatmul.mubr.bf16.gmra.mxu0 %v5745
    %v5964 = vpop.f32.mrf.mxu0
    %v5965 = vadd.f32 %v5676, %v5964
    %v5966 = vpop.f32.mrf.mxu0
    %v5967 = vpop.f32.mrf.mxu0
    %v5968 = vadd.f32 %v5676, %v5967
    %v5969 = vpop.f32.mrf.mxu0
    %5970 = vmatprep.mubr.bf16.mxu0 0
    %5971 = vmatmul.mubr.bf16.gmra.mxu0 %v5748
    %v5972 = vpop.f32.mrf.mxu0
    %v5973 = vadd.f32 %v5676, %v5972
    %v5974 = vpop.f32.mrf.mxu0
    %v5975 = vpop.f32.mrf.mxu0
    %v5976 = vadd.f32 %v5676, %v5975
    %v5977 = vpop.f32.mrf.mxu0
    %5978 = vmatprep.mubr.bf16.mxu0 0
    %5979 = vmatmul.mubr.bf16.gmra.mxu0 %v5751
    %v5980 = vpop.f32.mrf.mxu0
    %v5981 = vadd.f32 %v5676, %v5980
    %v5982 = vpop.f32.mrf.mxu0
    %v5983 = vpop.f32.mrf.mxu0
    %v5984 = vadd.f32 %v5676, %v5983
    %v5985 = vpop.f32.mrf.mxu0
    %5986 = vmatprep.mubr.bf16.mxu0 0
    %5987 = vmatmul.mubr.bf16.gmra.mxu0 %v5754
    %v5988 = vpop.f32.mrf.mxu0
    %v5989 = vadd.f32 %v5676, %v5988
    %v5990 = vpop.f32.mrf.mxu0
    %v5991 = vpop.f32.mrf.mxu0
    %v5992 = vadd.f32 %v5676, %v5991
    %v5993 = vpop.f32.mrf.mxu0
    %5994 = vmatprep.mubr.bf16.mxu0 0
    %5995 = vmatmul.mubr.bf16.gmra.mxu0 %v5757
    %v5996 = vpop.f32.mrf.mxu0
    %v5997 = vadd.f32 %v5676, %v5996
    %v5998 = vpop.f32.mrf.mxu0
    %v5999 = vpop.f32.mrf.mxu0
    %v6000 = vadd.f32 %v5676, %v5999
    %v6001 = vpop.f32.mrf.mxu0
    %6002 = vmatprep.mubr.bf16.mxu0 0
    %6003 = vmatmul.mubr.bf16.gmra.mxu0 %v5760
    %v6004 = vpop.f32.mrf.mxu0
    %v6005 = vadd.f32 %v5676, %v6004
    %v6006 = vpop.f32.mrf.mxu0
    %v6007 = vpop.f32.mrf.mxu0
    %v6008 = vadd.f32 %v5676, %v6007
    %v6009 = vpop.f32.mrf.mxu0
    %6010 = vmatprep.mubr.bf16.mxu0 0
    %6011 = vmatmul.mubr.bf16.gmra.mxu0 %v5763
    %v6012 = vpop.f32.mrf.mxu0
    %v6013 = vadd.f32 %v5676, %v6012
    %v6014 = vpop.f32.mrf.mxu0
    %v6015 = vpop.f32.mrf.mxu0
    %v6016 = vadd.f32 %v5676, %v6015
    %v6017 = vpop.f32.mrf.mxu0
    %6018 = vmatprep.mubr.bf16.mxu0 0
    %6019 = vmatmul.mubr.bf16.gmra.mxu0 %v5766
    %v6020 = vpop.f32.mrf.mxu0
    %v6021 = vadd.f32 %v5676, %v6020
    %v6022 = vpop.f32.mrf.mxu0
    %v6023 = vpop.f32.mrf.mxu0
    %v6024 = vadd.f32 %v5676, %v6023
    %v6025 = vpop.f32.mrf.mxu0
    %6026 = vmatprep.mubr.bf16.mxu0 0
    %6027 = vmatmul.mubr.bf16.gmra.mxu0 %v5769
    %v6028 = vpop.f32.mrf.mxu0
    %v6029 = vadd.f32 %v5676, %v6028
    %v6030 = vpop.f32.mrf.mxu0
    %v6031 = vpop.f32.mrf.mxu0
    %v6032 = vadd.f32 %v5676, %v6031
    %v6033 = vpop.f32.mrf.mxu0
    %6034 = vmatprep.mubr.bf16.mxu0 0
    %6035 = vmatmul.mubr.bf16.gmra.mxu0 %v5772
    %v6036 = vpop.f32.mrf.mxu0
    %v6037 = vadd.f32 %v5676, %v6036
    %v6038 = vpop.f32.mrf.mxu0
    %v6039 = vpop.f32.mrf.mxu0
    %v6040 = vadd.f32 %v5676, %v6039
    %v6041 = vpop.f32.mrf.mxu0
    %6042 = vmatprep.mubr.bf16.mxu0 0
    %6043 = vmatmul.mubr.bf16.gmra.mxu0 %v5775
    %v6044 = vpop.f32.mrf.mxu0
    %v6045 = vadd.f32 %v5676, %v6044
    %v6046 = vpop.f32.mrf.mxu0
    %v6047 = vpop.f32.mrf.mxu0
    %v6048 = vadd.f32 %v5676, %v6047
    %v6049 = vpop.f32.mrf.mxu0
    %6050 = vmatprep.mubr.bf16.mxu0 0
    %6051 = vmatmul.mubr.bf16.gmra.mxu0 %v5778
    %v6052 = vpop.f32.mrf.mxu0
    %v6053 = vadd.f32 %v5676, %v6052
    %v6054 = vpop.f32.mrf.mxu0
    %v6055 = vpop.f32.mrf.mxu0
    %v6056 = vadd.f32 %v5676, %v6055
    %v6057 = vpop.f32.mrf.mxu0
    %6058 = vmatprep.mubr.bf16.mxu0 0
    %6059 = vmatmul.mubr.bf16.gmra.mxu0 %v5781
    %v6060 = vpop.f32.mrf.mxu0
    %v6061 = vadd.f32 %v5676, %v6060
    %v6062 = vpop.f32.mrf.mxu0
    %v6063 = vpop.f32.mrf.mxu0
    %v6064 = vadd.f32 %v5676, %v6063
    %v6065 = vpop.f32.mrf.mxu0
    %6066 = vmatprep.mubr.bf16.mxu0 0
    %6067 = vmatmul.mubr.bf16.gmra.mxu0 %v5784
    %v6068 = vpop.f32.mrf.mxu0
    %v6069 = vadd.f32 %v5676, %v6068
    %v6070 = vpop.f32.mrf.mxu0
    %v6071 = vpop.f32.mrf.mxu0
    %v6072 = vadd.f32 %v5676, %v6071
    %v6073 = vpop.f32.mrf.mxu0
    %6074 = vdwg.mxu0
    %v6075 = vrot.slane %v5570, 4
    %v6076 = vrot.slane %v5571, 4
    %v6077 = vrot.slane %v5572, 4
    %v6078 = vrot.slane %v5573, 4
    %v6079 = vrot.slane %v5574, 4
    %v6080 = vrot.slane %v5575, 4
    %v6081 = vrot.slane %v5576, 4
    %v6082 = vrot.slane %v5577, 4
    %v6083 = vrot.slane %v5578, 4
    %v6084 = vrot.slane %v5579, 4
    %v6085 = vrot.slane %v5580, 4
    %v6086 = vrot.slane %v5581, 4
    %v6087 = vrot.slane %v5582, 4
    %v6088 = vrot.slane %v5583, 4
    %v6089 = vrot.slane %v5584, 4
    %v6090 = vrot.slane %v5585, 4
    %v6091 = vrot.slane %v5586, 4
    %v6092 = vrot.slane %v5587, 4
    %v6093 = vrot.slane %v5588, 4
    %v6094 = vrot.slane %v5589, 4
    %v6095 = vrot.slane %v5590, 4
    %v6096 = vrot.slane %v5591, 4
    %v6097 = vrot.slane %v5592, 4
    %v6098 = vrot.slane %v5593, 4
    %v6099 = vrot.slane %v5594, 4
    %v6100 = vrot.slane %v5595, 4
    %v6101 = vrot.slane %v5596, 4
    %v6102 = vrot.slane %v5597, 4
    %v6103 = vrot.slane %v5598, 4
    %v6104 = vrot.slane %v5599, 4
    %v6105 = vrot.slane %v5600, 4
    %v6106 = vrot.slane %v5601, 4
    %v6107 = vrot.slane %v5602, 4
    %v6108 = vrot.slane %v5603, 4
    %v6109 = vrot.slane %v5604, 4
    %v6110 = vrot.slane %v5605, 4
    %v6111 = vrot.slane %v5606, 4
    %v6112 = vrot.slane %v5607, 4
    %v6113 = vrot.slane %v5608, 4
    %v6114 = vrot.slane %v5609, 4
    %v6115 = vrot.slane %v5610, 4
    %v6116 = vrot.slane %v5611, 4
    %v6117 = vrot.slane %v5612, 4
    %v6118 = vrot.slane %v5613, 4
    %v6119 = vrot.slane %v5614, 4
    %v6120 = vrot.slane %v5615, 4
    %v6121 = vrot.slane %v5616, 4
    %v6122 = vrot.slane %v5617, 4
    %v6123 = vrot.slane %v5618, 4
    %v6124 = vrot.slane %v5619, 4
    %v6125 = vrot.slane %v5620, 4
    %v6126 = vrot.slane %v5621, 4
    %v6127 = vrot.slane %v5622, 4
    %v6128 = vrot.slane %v5623, 4
    %v6129 = vrot.slane %v5624, 4
    %v6130 = vrot.slane %v5625, 4
    %v6131 = vrot.slane %v5626, 4
    %v6132 = vrot.slane %v5627, 4
    %v6133 = vrot.slane %v5628, 4
    %v6134 = vrot.slane %v5629, 4
    %v6135 = vrot.slane %v5630, 4
    %v6136 = vrot.slane %v5631, 4
    %v6137 = vrot.slane %v5632, 4
    %v6138 = vrot.slane %v5633, 4
    %vm6139 = vcmp.lt.s32.totalorder %v41, 4
    %v6140 = vsel %vm6139, %v6137, %v6138
    %v6141 = vsel %vm6139, %v6136, %v6137
    %v6142 = vsel %vm6139, %v6135, %v6136
    %v6143 = vsel %vm6139, %v6134, %v6135
    %v6144 = vsel %vm6139, %v6133, %v6134
    %v6145 = vsel %vm6139, %v6132, %v6133
    %v6146 = vsel %vm6139, %v6131, %v6132
    %v6147 = vsel %vm6139, %v6130, %v6131
    %v6148 = vsel %vm6139, %v6129, %v6130
    %v6149 = vsel %vm6139, %v6128, %v6129
    %v6150 = vsel %vm6139, %v6127, %v6128
    %v6151 = vsel %vm6139, %v6126, %v6127
    %v6152 = vsel %vm6139, %v6125, %v6126
    %v6153 = vsel %vm6139, %v6124, %v6125
    %v6154 = vsel %vm6139, %v6123, %v6124
    %v6155 = vsel %vm6139, %v6122, %v6123
    %v6156 = vsel %vm6139, %v6121, %v6122
    %v6157 = vsel %vm6139, %v6120, %v6121
    %v6158 = vsel %vm6139, %v6119, %v6120
    %v6159 = vsel %vm6139, %v6118, %v6119
    %v6160 = vsel %vm6139, %v6117, %v6118
    %v6161 = vsel %vm6139, %v6116, %v6117
    %v6162 = vsel %vm6139, %v6115, %v6116
    %v6163 = vsel %vm6139, %v6114, %v6115
    %v6164 = vsel %vm6139, %v6113, %v6114
    %v6165 = vsel %vm6139, %v6112, %v6113
    %v6166 = vsel %vm6139, %v6111, %v6112
    %v6167 = vsel %vm6139, %v6110, %v6111
    %v6168 = vsel %vm6139, %v6109, %v6110
    %v6169 = vsel %vm6139, %v6108, %v6109
    %v6170 = vsel %vm6139, %v6107, %v6108
    %v6171 = vsel %vm6139, %v6106, %v6107
    %v6172 = vsel %vm6139, %v6105, %v6106
    %v6173 = vsel %vm6139, %v6104, %v6105
    %v6174 = vsel %vm6139, %v6103, %v6104
    %v6175 = vsel %vm6139, %v6102, %v6103
    %v6176 = vsel %vm6139, %v6101, %v6102
    %v6177 = vsel %vm6139, %v6100, %v6101
    %v6178 = vsel %vm6139, %v6099, %v6100
    %v6179 = vsel %vm6139, %v6098, %v6099
    %v6180 = vsel %vm6139, %v6097, %v6098
    %v6181 = vsel %vm6139, %v6096, %v6097
    %v6182 = vsel %vm6139, %v6095, %v6096
    %v6183 = vsel %vm6139, %v6094, %v6095
    %v6184 = vsel %vm6139, %v6093, %v6094
    %v6185 = vsel %vm6139, %v6092, %v6093
    %v6186 = vsel %vm6139, %v6091, %v6092
    %v6187 = vsel %vm6139, %v6090, %v6091
    %v6188 = vsel %vm6139, %v6089, %v6090
    %v6189 = vsel %vm6139, %v6088, %v6089
    %v6190 = vsel %vm6139, %v6087, %v6088
    %v6191 = vsel %vm6139, %v6086, %v6087
    %v6192 = vsel %vm6139, %v6085, %v6086
    %v6193 = vsel %vm6139, %v6084, %v6085
    %v6194 = vsel %vm6139, %v6083, %v6084
    %v6195 = vsel %vm6139, %v6082, %v6083
    %v6196 = vsel %vm6139, %v6081, %v6082
    %v6197 = vsel %vm6139, %v6080, %v6081
    %v6198 = vsel %vm6139, %v6079, %v6080
    %v6199 = vsel %vm6139, %v6078, %v6079
    %v6200 = vsel %vm6139, %v6077, %v6078
    %v6201 = vsel %vm6139, %v6076, %v6077
    %v6202 = vsel %vm6139, %v6075, %v6076
    %v6203 = vsel %vm6139, %v6138, %v6075
    %v6204 = vmul.f32 %v6203, %v1385
    %v6205 = vmul.f32 %v6202, %v1386
    %v6206 = vmul.f32 %v6201, %v1387
    %v6207 = vmul.f32 %v6200, %v1388
    %v6208 = vmul.f32 %v6199, %v1389
    %v6209 = vmul.f32 %v6198, %v1390
    %v6210 = vmul.f32 %v6197, %v1391
    %v6211 = vmul.f32 %v6196, %v1392
    %v6212 = vmul.f32 %v6195, %v1393
    %v6213 = vmul.f32 %v6194, %v1394
    %v6214 = vmul.f32 %v6193, %v1395
    %v6215 = vmul.f32 %v6192, %v1396
    %v6216 = vmul.f32 %v6191, %v1397
    %v6217 = vmul.f32 %v6190, %v1398
    %v6218 = vmul.f32 %v6189, %v1399
    %v6219 = vmul.f32 %v6188, %v1400
    %v6220 = vmul.f32 %v6187, %v1401
    %v6221 = vmul.f32 %v6186, %v1402
    %v6222 = vmul.f32 %v6185, %v1403
    %v6223 = vmul.f32 %v6184, %v1404
    %v6224 = vmul.f32 %v6183, %v1405
    %v6225 = vmul.f32 %v6182, %v1406
    %v6226 = vmul.f32 %v6181, %v1407
    %v6227 = vmul.f32 %v6180, %v1408
    %v6228 = vmul.f32 %v6179, %v1409
    %v6229 = vmul.f32 %v6178, %v1410
    %v6230 = vmul.f32 %v6177, %v1411
    %v6231 = vmul.f32 %v6176, %v1412
    %v6232 = vmul.f32 %v6175, %v1413
    %v6233 = vmul.f32 %v6174, %v1414
    %v6234 = vmul.f32 %v6173, %v1415
    %v6235 = vmul.f32 %v6172, %v1416
    %v6236 = vmul.f32 %v6171, %v1417
    %v6237 = vmul.f32 %v6170, %v1418
    %v6238 = vmul.f32 %v6169, %v1419
    %v6239 = vmul.f32 %v6168, %v1420
    %v6240 = vmul.f32 %v6167, %v1421
    %v6241 = vmul.f32 %v6166, %v1422
    %v6242 = vmul.f32 %v6165, %v1423
    %v6243 = vmul.f32 %v6164, %v1424
    %v6244 = vmul.f32 %v6163, %v1425
    %v6245 = vmul.f32 %v6162, %v1426
    %v6246 = vmul.f32 %v6161, %v1427
    %v6247 = vmul.f32 %v6160, %v1428
    %v6248 = vmul.f32 %v6159, %v1429
    %v6249 = vmul.f32 %v6158, %v1430
    %v6250 = vmul.f32 %v6157, %v1431
    %v6251 = vmul.f32 %v6156, %v1432
    %v6252 = vmul.f32 %v6155, %v1433
    %v6253 = vmul.f32 %v6154, %v1434
    %v6254 = vmul.f32 %v6153, %v1435
    %v6255 = vmul.f32 %v6152, %v1436
    %v6256 = vmul.f32 %v6151, %v1437
    %v6257 = vmul.f32 %v6150, %v1438
    %v6258 = vmul.f32 %v6149, %v1439
    %v6259 = vmul.f32 %v6148, %v1440
    %v6260 = vmul.f32 %v6147, %v1441
    %v6261 = vmul.f32 %v6146, %v1442
    %v6262 = vmul.f32 %v6145, %v1443
    %v6263 = vmul.f32 %v6144, %v1444
    %v6264 = vmul.f32 %v6143, %v1445
    %v6265 = vmul.f32 %v6142, %v1446
    %v6266 = vmul.f32 %v6141, %v1447
    %v6267 = vmul.f32 %v6140, %v1448
    %v6268 = vld [vmem:[%s5] sm:$0xf]
    %v6269 = vld [vmem:[%s5 + $0x4] sm:$0xf]
    %v6270 = vld [vmem:[%s5 + $0x8] sm:$0xf]
    %v6271 = vld [vmem:[%s5 + $0xc] sm:$0xf]
    %v6272 = vpack.c.bf16 %v6205, %v6204
    %v6273 = vpack.c.bf16 %v6207, %v6206
    %v6274 = vpack.c.bf16 %v6209, %v6208
    %v6275 = vpack.c.bf16 %v6211, %v6210
    %v6276 = vpack.c.bf16 %v6213, %v6212
    %v6277 = vpack.c.bf16 %v6215, %v6214
    %v6278 = vpack.c.bf16 %v6217, %v6216
    %v6279 = vpack.c.bf16 %v6219, %v6218
    %v6280 = vpack.c.bf16 %v6221, %v6220
    %v6281 = vpack.c.bf16 %v6223, %v6222
    %v6282 = vpack.c.bf16 %v6225, %v6224
    %v6283 = vpack.c.bf16 %v6227, %v6226
    %v6284 = vpack.c.bf16 %v6229, %v6228
    %v6285 = vpack.c.bf16 %v6231, %v6230
    %v6286 = vpack.c.bf16 %v6233, %v6232
    %v6287 = vpack.c.bf16 %v6235, %v6234
    %v6288 = vpack.c.bf16 %v6237, %v6236
    %v6289 = vpack.c.bf16 %v6239, %v6238
    %v6290 = vpack.c.bf16 %v6241, %v6240
    %v6291 = vpack.c.bf16 %v6243, %v6242
    %v6292 = vpack.c.bf16 %v6245, %v6244
    %v6293 = vpack.c.bf16 %v6247, %v6246
    %v6294 = vpack.c.bf16 %v6249, %v6248
    %v6295 = vpack.c.bf16 %v6251, %v6250
    %v6296 = vpack.c.bf16 %v6253, %v6252
    %v6297 = vpack.c.bf16 %v6255, %v6254
    %v6298 = vpack.c.bf16 %v6257, %v6256
    %v6299 = vpack.c.bf16 %v6259, %v6258
    %v6300 = vpack.c.bf16 %v6261, %v6260
    %v6301 = vpack.c.bf16 %v6263, %v6262
    %v6302 = vpack.c.bf16 %v6265, %v6264
    %v6303 = vpack.c.bf16 %v6267, %v6266
    %v6308 = vunpack.c.l.b16 %v6268
    %v6309 = vunpack.c.l.b16 %v6269
    %v6310 = vunpack.c.l.b16 %v6270
    %v6311 = vunpack.c.l.b16 %v6271
    %v6312 = vpack.c.b16 %v6309, %v6308
    %v6313 = vpack.c.b16 %v6311, %v6310
    %v6317 = vsel %vm3421, %v6272, 0
    %v6320 = vsel %vm3421, %v6273, 0
    %v6323 = vsel %vm3421, %v6274, 0
    %v6326 = vsel %vm3421, %v6275, 0
    %v6329 = vsel %vm3421, %v6276, 0
    %v6332 = vsel %vm3421, %v6277, 0
    %v6335 = vsel %vm3421, %v6278, 0
    %v6338 = vsel %vm3421, %v6279, 0
    %v6341 = vsel %vm3421, %v6280, 0
    %v6344 = vsel %vm3421, %v6281, 0
    %v6347 = vsel %vm3421, %v6282, 0
    %v6350 = vsel %vm3421, %v6283, 0
    %v6353 = vsel %vm3421, %v6284, 0
    %v6356 = vsel %vm3421, %v6285, 0
    %v6359 = vsel %vm3421, %v6286, 0
    %v6362 = vsel %vm3421, %v6287, 0
    %v6365 = vsel %vm3421, %v6288, 0
    %v6368 = vsel %vm3421, %v6289, 0
    %v6371 = vsel %vm3421, %v6290, 0
    %v6374 = vsel %vm3421, %v6291, 0
    %v6377 = vsel %vm3421, %v6292, 0
    %v6380 = vsel %vm3421, %v6293, 0
    %v6383 = vsel %vm3421, %v6294, 0
    %v6386 = vsel %vm3421, %v6295, 0
    %v6389 = vsel %vm3421, %v6296, 0
    %v6392 = vsel %vm3421, %v6297, 0
    %v6395 = vsel %vm3421, %v6298, 0
    %v6398 = vsel %vm3421, %v6299, 0
    %v6401 = vsel %vm3421, %v6300, 0
    %v6404 = vsel %vm3421, %v6301, 0
    %v6407 = vsel %vm3421, %v6302, 0
    %v6410 = vsel %vm3421, %v6303, 0
    %6412 = vmatprep.subr.bf16.mxu0 0
    %6413 = vmatpush1.bf16.msra.mxu0 0
    %6414 = vmatprep.subr.bf16.mxu0 0
    %6415 = vmatpush1.bf16.msra.mxu0 0
    %6416 = vmatprep.subr.bf16.mxu0 0
    %6417 = vmatpush1.bf16.msra.mxu0 0
    %6418 = vmatprep.subr.bf16.mxu0 0
    %6419 = vmatpush1.bf16.msra.mxu0 0
    %6420 = vmatprep.subr.bf16.mxu0 0
    %6421 = vmatpush1.bf16.msra.mxu0 0
    %6422 = vmatprep.subr.bf16.mxu0 0
    %6423 = vmatpush1.bf16.msra.mxu0 0
    %6424 = vmatprep.subr.bf16.mxu0 0
    %6425 = vmatpush1.bf16.msra.mxu0 %v6313
    %6426 = vmatprep.subr.bf16.mxu0 0
    %6427 = vmatpush1.bf16.msra.mxu0 %v6312
    %6428 = vmatprep.subr.bf16.mxu0 0
    %6429 = vmatpush2.bf16.msra.mxu0 0
    %6430 = vmatprep.subr.bf16.mxu0 0
    %6431 = vmatpush2.bf16.msra.mxu0 0
    %6432 = vmatprep.subr.bf16.mxu0 0
    %6433 = vmatpush2.bf16.msra.mxu0 0
    %6434 = vmatprep.subr.bf16.mxu0 0
    %6435 = vmatpush2.bf16.msra.mxu0 0
    %6436 = vmatprep.subr.bf16.mxu0 0
    %6437 = vmatpush2.bf16.msra.mxu0 0
    %6438 = vmatprep.subr.bf16.mxu0 0
    %6439 = vmatpush2.bf16.msra.mxu0 0
    %6440 = vmatprep.subr.bf16.mxu0 0
    %6441 = vmatpush2.bf16.msra.mxu0 0
    %6442 = vmatprep.subr.bf16.mxu0 0
    %6443 = vmatpush2.bf16.msra.mxu0 0
    %6444 = vmatprep.mubr.bf16.mxu0 0
    %6445 = vmatmul.mubr.bf16.gmra.mxu0 %v6317
    %v6446 = vpop.f32.mrf.mxu0
    %v6447 = vadd.f32 0.0, %v6446
    %v6448 = vpop.f32.mrf.mxu0
    %v6449 = vpop.f32.mrf.mxu0
    %v6450 = vadd.f32 0.0, %v6449
    %v6451 = vpop.f32.mrf.mxu0
    %6452 = vmatprep.mubr.bf16.mxu0 0
    %6453 = vmatmul.mubr.bf16.gmra.mxu0 %v6320
    %v6454 = vpop.f32.mrf.mxu0
    %v6455 = vadd.f32 0.0, %v6454
    %v6456 = vpop.f32.mrf.mxu0
    %v6457 = vpop.f32.mrf.mxu0
    %v6458 = vadd.f32 0.0, %v6457
    %v6459 = vpop.f32.mrf.mxu0
    %6460 = vmatprep.mubr.bf16.mxu0 0
    %6461 = vmatmul.mubr.bf16.gmra.mxu0 %v6323
    %v6462 = vpop.f32.mrf.mxu0
    %v6463 = vadd.f32 0.0, %v6462
    %v6464 = vpop.f32.mrf.mxu0
    %v6465 = vpop.f32.mrf.mxu0
    %v6466 = vadd.f32 0.0, %v6465
    %v6467 = vpop.f32.mrf.mxu0
    %6468 = vmatprep.mubr.bf16.mxu0 0
    %6469 = vmatmul.mubr.bf16.gmra.mxu0 %v6326
    %v6470 = vpop.f32.mrf.mxu0
    %v6471 = vadd.f32 0.0, %v6470
    %v6472 = vpop.f32.mrf.mxu0
    %v6473 = vpop.f32.mrf.mxu0
    %v6474 = vadd.f32 0.0, %v6473
    %v6475 = vpop.f32.mrf.mxu0
    %6476 = vmatprep.mubr.bf16.mxu0 0
    %6477 = vmatmul.mubr.bf16.gmra.mxu0 %v6329
    %v6478 = vpop.f32.mrf.mxu0
    %v6479 = vadd.f32 0.0, %v6478
    %v6480 = vpop.f32.mrf.mxu0
    %v6481 = vpop.f32.mrf.mxu0
    %v6482 = vadd.f32 0.0, %v6481
    %v6483 = vpop.f32.mrf.mxu0
    %6484 = vmatprep.mubr.bf16.mxu0 0
    %6485 = vmatmul.mubr.bf16.gmra.mxu0 %v6332
    %v6486 = vpop.f32.mrf.mxu0
    %v6487 = vadd.f32 0.0, %v6486
    %v6488 = vpop.f32.mrf.mxu0
    %v6489 = vpop.f32.mrf.mxu0
    %v6490 = vadd.f32 0.0, %v6489
    %v6491 = vpop.f32.mrf.mxu0
    %6492 = vmatprep.mubr.bf16.mxu0 0
    %6493 = vmatmul.mubr.bf16.gmra.mxu0 %v6335
    %v6494 = vpop.f32.mrf.mxu0
    %v6495 = vadd.f32 0.0, %v6494
    %v6496 = vpop.f32.mrf.mxu0
    %v6497 = vpop.f32.mrf.mxu0
    %v6498 = vadd.f32 0.0, %v6497
    %v6499 = vpop.f32.mrf.mxu0
    %6500 = vmatprep.mubr.bf16.mxu0 0
    %6501 = vmatmul.mubr.bf16.gmra.mxu0 %v6338
    %v6502 = vpop.f32.mrf.mxu0
    %v6503 = vadd.f32 0.0, %v6502
    %v6504 = vpop.f32.mrf.mxu0
    %v6505 = vpop.f32.mrf.mxu0
    %v6506 = vadd.f32 0.0, %v6505
    %v6507 = vpop.f32.mrf.mxu0
    %6508 = vmatprep.mubr.bf16.mxu0 0
    %6509 = vmatmul.mubr.bf16.gmra.mxu0 %v6341
    %v6510 = vpop.f32.mrf.mxu0
    %v6511 = vadd.f32 0.0, %v6510
    %v6512 = vpop.f32.mrf.mxu0
    %v6513 = vpop.f32.mrf.mxu0
    %v6514 = vadd.f32 0.0, %v6513
    %v6515 = vpop.f32.mrf.mxu0
    %6516 = vmatprep.mubr.bf16.mxu0 0
    %6517 = vmatmul.mubr.bf16.gmra.mxu0 %v6344
    %v6518 = vpop.f32.mrf.mxu0
    %v6519 = vadd.f32 0.0, %v6518
    %v6520 = vpop.f32.mrf.mxu0
    %v6521 = vpop.f32.mrf.mxu0
    %v6522 = vadd.f32 0.0, %v6521
    %v6523 = vpop.f32.mrf.mxu0
    %6524 = vmatprep.mubr.bf16.mxu0 0
    %6525 = vmatmul.mubr.bf16.gmra.mxu0 %v6347
    %v6526 = vpop.f32.mrf.mxu0
    %v6527 = vadd.f32 0.0, %v6526
    %v6528 = vpop.f32.mrf.mxu0
    %v6529 = vpop.f32.mrf.mxu0
    %v6530 = vadd.f32 0.0, %v6529
    %v6531 = vpop.f32.mrf.mxu0
    %6532 = vmatprep.mubr.bf16.mxu0 0
    %6533 = vmatmul.mubr.bf16.gmra.mxu0 %v6350
    %v6534 = vpop.f32.mrf.mxu0
    %v6535 = vadd.f32 0.0, %v6534
    %v6536 = vpop.f32.mrf.mxu0
    %v6537 = vpop.f32.mrf.mxu0
    %v6538 = vadd.f32 0.0, %v6537
    %v6539 = vpop.f32.mrf.mxu0
    %6540 = vmatprep.mubr.bf16.mxu0 0
    %6541 = vmatmul.mubr.bf16.gmra.mxu0 %v6353
    %v6542 = vpop.f32.mrf.mxu0
    %v6543 = vadd.f32 0.0, %v6542
    %v6544 = vpop.f32.mrf.mxu0
    %v6545 = vpop.f32.mrf.mxu0
    %v6546 = vadd.f32 0.0, %v6545
    %v6547 = vpop.f32.mrf.mxu0
    %6548 = vmatprep.mubr.bf16.mxu0 0
    %6549 = vmatmul.mubr.bf16.gmra.mxu0 %v6356
    %v6550 = vpop.f32.mrf.mxu0
    %v6551 = vadd.f32 0.0, %v6550
    %v6552 = vpop.f32.mrf.mxu0
    %v6553 = vpop.f32.mrf.mxu0
    %v6554 = vadd.f32 0.0, %v6553
    %v6555 = vpop.f32.mrf.mxu0
    %6556 = vmatprep.mubr.bf16.mxu0 0
    %6557 = vmatmul.mubr.bf16.gmra.mxu0 %v6359
    %v6558 = vpop.f32.mrf.mxu0
    %v6559 = vadd.f32 0.0, %v6558
    %v6560 = vpop.f32.mrf.mxu0
    %v6561 = vpop.f32.mrf.mxu0
    %v6562 = vadd.f32 0.0, %v6561
    %v6563 = vpop.f32.mrf.mxu0
    %6564 = vmatprep.mubr.bf16.mxu0 0
    %6565 = vmatmul.mubr.bf16.gmra.mxu0 %v6362
    %v6566 = vpop.f32.mrf.mxu0
    %v6567 = vadd.f32 0.0, %v6566
    %v6568 = vpop.f32.mrf.mxu0
    %v6569 = vpop.f32.mrf.mxu0
    %v6570 = vadd.f32 0.0, %v6569
    %v6571 = vpop.f32.mrf.mxu0
    %6572 = vmatprep.mubr.bf16.mxu0 0
    %6573 = vmatmul.mubr.bf16.gmra.mxu0 %v6365
    %v6574 = vpop.f32.mrf.mxu0
    %v6575 = vadd.f32 0.0, %v6574
    %v6576 = vpop.f32.mrf.mxu0
    %v6577 = vpop.f32.mrf.mxu0
    %v6578 = vadd.f32 0.0, %v6577
    %v6579 = vpop.f32.mrf.mxu0
    %6580 = vmatprep.mubr.bf16.mxu0 0
    %6581 = vmatmul.mubr.bf16.gmra.mxu0 %v6368
    %v6582 = vpop.f32.mrf.mxu0
    %v6583 = vadd.f32 0.0, %v6582
    %v6584 = vpop.f32.mrf.mxu0
    %v6585 = vpop.f32.mrf.mxu0
    %v6586 = vadd.f32 0.0, %v6585
    %v6587 = vpop.f32.mrf.mxu0
    %6588 = vmatprep.mubr.bf16.mxu0 0
    %6589 = vmatmul.mubr.bf16.gmra.mxu0 %v6371
    %v6590 = vpop.f32.mrf.mxu0
    %v6591 = vadd.f32 0.0, %v6590
    %v6592 = vpop.f32.mrf.mxu0
    %v6593 = vpop.f32.mrf.mxu0
    %v6594 = vadd.f32 0.0, %v6593
    %v6595 = vpop.f32.mrf.mxu0
    %6596 = vmatprep.mubr.bf16.mxu0 0
    %6597 = vmatmul.mubr.bf16.gmra.mxu0 %v6374
    %v6598 = vpop.f32.mrf.mxu0
    %v6599 = vadd.f32 0.0, %v6598
    %v6600 = vpop.f32.mrf.mxu0
    %v6601 = vpop.f32.mrf.mxu0
    %v6602 = vadd.f32 0.0, %v6601
    %v6603 = vpop.f32.mrf.mxu0
    %6604 = vmatprep.mubr.bf16.mxu0 0
    %6605 = vmatmul.mubr.bf16.gmra.mxu0 %v6377
    %v6606 = vpop.f32.mrf.mxu0
    %v6607 = vadd.f32 0.0, %v6606
    %v6608 = vpop.f32.mrf.mxu0
    %v6609 = vpop.f32.mrf.mxu0
    %v6610 = vadd.f32 0.0, %v6609
    %v6611 = vpop.f32.mrf.mxu0
    %6612 = vmatprep.mubr.bf16.mxu0 0
    %6613 = vmatmul.mubr.bf16.gmra.mxu0 %v6380
    %v6614 = vpop.f32.mrf.mxu0
    %v6615 = vadd.f32 0.0, %v6614
    %v6616 = vpop.f32.mrf.mxu0
    %v6617 = vpop.f32.mrf.mxu0
    %v6618 = vadd.f32 0.0, %v6617
    %v6619 = vpop.f32.mrf.mxu0
    %6620 = vmatprep.mubr.bf16.mxu0 0
    %6621 = vmatmul.mubr.bf16.gmra.mxu0 %v6383
    %v6622 = vpop.f32.mrf.mxu0
    %v6623 = vadd.f32 0.0, %v6622
    %v6624 = vpop.f32.mrf.mxu0
    %v6625 = vpop.f32.mrf.mxu0
    %v6626 = vadd.f32 0.0, %v6625
    %v6627 = vpop.f32.mrf.mxu0
    %6628 = vmatprep.mubr.bf16.mxu0 0
    %6629 = vmatmul.mubr.bf16.gmra.mxu0 %v6386
    %v6630 = vpop.f32.mrf.mxu0
    %v6631 = vadd.f32 0.0, %v6630
    %v6632 = vpop.f32.mrf.mxu0
    %v6633 = vpop.f32.mrf.mxu0
    %v6634 = vadd.f32 0.0, %v6633
    %v6635 = vpop.f32.mrf.mxu0
    %6636 = vmatprep.mubr.bf16.mxu0 0
    %6637 = vmatmul.mubr.bf16.gmra.mxu0 %v6389
    %v6638 = vpop.f32.mrf.mxu0
    %v6639 = vadd.f32 0.0, %v6638
    %v6640 = vpop.f32.mrf.mxu0
    %v6641 = vpop.f32.mrf.mxu0
    %v6642 = vadd.f32 0.0, %v6641
    %v6643 = vpop.f32.mrf.mxu0
    %6644 = vmatprep.mubr.bf16.mxu0 0
    %6645 = vmatmul.mubr.bf16.gmra.mxu0 %v6392
    %v6646 = vpop.f32.mrf.mxu0
    %v6647 = vadd.f32 0.0, %v6646
    %v6648 = vpop.f32.mrf.mxu0
    %v6649 = vpop.f32.mrf.mxu0
    %v6650 = vadd.f32 0.0, %v6649
    %v6651 = vpop.f32.mrf.mxu0
    %6652 = vmatprep.mubr.bf16.mxu0 0
    %6653 = vmatmul.mubr.bf16.gmra.mxu0 %v6395
    %v6654 = vpop.f32.mrf.mxu0
    %v6655 = vadd.f32 0.0, %v6654
    %v6656 = vpop.f32.mrf.mxu0
    %v6657 = vpop.f32.mrf.mxu0
    %v6658 = vadd.f32 0.0, %v6657
    %v6659 = vpop.f32.mrf.mxu0
    %6660 = vmatprep.mubr.bf16.mxu0 0
    %6661 = vmatmul.mubr.bf16.gmra.mxu0 %v6398
    %v6662 = vpop.f32.mrf.mxu0
    %v6663 = vadd.f32 0.0, %v6662
    %v6664 = vpop.f32.mrf.mxu0
    %v6665 = vpop.f32.mrf.mxu0
    %v6666 = vadd.f32 0.0, %v6665
    %v6667 = vpop.f32.mrf.mxu0
    %6668 = vmatprep.mubr.bf16.mxu0 0
    %6669 = vmatmul.mubr.bf16.gmra.mxu0 %v6401
    %v6670 = vpop.f32.mrf.mxu0
    %v6671 = vadd.f32 0.0, %v6670
    %v6672 = vpop.f32.mrf.mxu0
    %v6673 = vpop.f32.mrf.mxu0
    %v6674 = vadd.f32 0.0, %v6673
    %v6675 = vpop.f32.mrf.mxu0
    %6676 = vmatprep.mubr.bf16.mxu0 0
    %6677 = vmatmul.mubr.bf16.gmra.mxu0 %v6404
    %v6678 = vpop.f32.mrf.mxu0
    %v6679 = vadd.f32 0.0, %v6678
    %v6680 = vpop.f32.mrf.mxu0
    %v6681 = vpop.f32.mrf.mxu0
    %v6682 = vadd.f32 0.0, %v6681
    %v6683 = vpop.f32.mrf.mxu0
    %6684 = vmatprep.mubr.bf16.mxu0 0
    %6685 = vmatmul.mubr.bf16.gmra.mxu0 %v6407
    %v6686 = vpop.f32.mrf.mxu0
    %v6687 = vadd.f32 0.0, %v6686
    %v6688 = vpop.f32.mrf.mxu0
    %v6689 = vpop.f32.mrf.mxu0
    %v6690 = vadd.f32 0.0, %v6689
    %v6691 = vpop.f32.mrf.mxu0
    %6692 = vmatprep.mubr.bf16.mxu0 0
    %6693 = vmatmul.mubr.bf16.gmra.mxu0 %v6410
    %v6694 = vpop.f32.mrf.mxu0
    %v6695 = vadd.f32 0.0, %v6694
    %v6696 = vpop.f32.mrf.mxu0
    %v6697 = vpop.f32.mrf.mxu0
    %v6698 = vadd.f32 0.0, %v6697
    %v6699 = vpop.f32.mrf.mxu0
    %6700 = vdwg.mxu0
    %v6701 = vadd.f32 %v5821, %v6447
    %v6702 = vadd.f32 %v5824, %v6450
    %v6703 = vadd.f32 %v5829, %v6455
    %v6704 = vadd.f32 %v5832, %v6458
    %v6705 = vadd.f32 %v5837, %v6463
    %v6706 = vadd.f32 %v5840, %v6466
    %v6707 = vadd.f32 %v5845, %v6471
    %v6708 = vadd.f32 %v5848, %v6474
    %v6709 = vadd.f32 %v5853, %v6479
    %v6710 = vadd.f32 %v5856, %v6482
    %v6711 = vadd.f32 %v5861, %v6487
    %v6712 = vadd.f32 %v5864, %v6490
    %v6713 = vadd.f32 %v5869, %v6495
    %v6714 = vadd.f32 %v5872, %v6498
    %v6715 = vadd.f32 %v5877, %v6503
    %v6716 = vadd.f32 %v5880, %v6506
    %v6717 = vadd.f32 %v5885, %v6511
    %v6718 = vadd.f32 %v5888, %v6514
    %v6719 = vadd.f32 %v5893, %v6519
    %v6720 = vadd.f32 %v5896, %v6522
    %v6721 = vadd.f32 %v5901, %v6527
    %v6722 = vadd.f32 %v5904, %v6530
    %v6723 = vadd.f32 %v5909, %v6535
    %v6724 = vadd.f32 %v5912, %v6538
    %v6725 = vadd.f32 %v5917, %v6543
    %v6726 = vadd.f32 %v5920, %v6546
    %v6727 = vadd.f32 %v5925, %v6551
    %v6728 = vadd.f32 %v5928, %v6554
    %v6729 = vadd.f32 %v5933, %v6559
    %v6730 = vadd.f32 %v5936, %v6562
    %v6731 = vadd.f32 %v5941, %v6567
    %v6732 = vadd.f32 %v5944, %v6570
    %v6733 = vadd.f32 %v5949, %v6575
    %v6734 = vadd.f32 %v5952, %v6578
    %v6735 = vadd.f32 %v5957, %v6583
    %v6736 = vadd.f32 %v5960, %v6586
    %v6737 = vadd.f32 %v5965, %v6591
    %v6738 = vadd.f32 %v5968, %v6594
    %v6739 = vadd.f32 %v5973, %v6599
    %v6740 = vadd.f32 %v5976, %v6602
    %v6741 = vadd.f32 %v5981, %v6607
    %v6742 = vadd.f32 %v5984, %v6610
    %v6743 = vadd.f32 %v5989, %v6615
    %v6744 = vadd.f32 %v5992, %v6618
    %v6745 = vadd.f32 %v5997, %v6623
    %v6746 = vadd.f32 %v6000, %v6626
    %v6747 = vadd.f32 %v6005, %v6631
    %v6748 = vadd.f32 %v6008, %v6634
    %v6749 = vadd.f32 %v6013, %v6639
    %v6750 = vadd.f32 %v6016, %v6642
    %v6751 = vadd.f32 %v6021, %v6647
    %v6752 = vadd.f32 %v6024, %v6650
    %v6753 = vadd.f32 %v6029, %v6655
    %v6754 = vadd.f32 %v6032, %v6658
    %v6755 = vadd.f32 %v6037, %v6663
    %v6756 = vadd.f32 %v6040, %v6666
    %v6757 = vadd.f32 %v6045, %v6671
    %v6758 = vadd.f32 %v6048, %v6674
    %v6759 = vadd.f32 %v6053, %v6679
    %v6760 = vadd.f32 %v6056, %v6682
    %v6761 = vadd.f32 %v6061, %v6687
    %v6762 = vadd.f32 %v6064, %v6690
    %v6763 = vadd.f32 %v6069, %v6695
    %v6764 = vadd.f32 %v6072, %v6698
    %v6765 = vrot.slane %v5570, 6
    %v6766 = vrot.slane %v5571, 6
    %v6767 = vrot.slane %v5572, 6
    %v6768 = vrot.slane %v5573, 6
    %v6769 = vrot.slane %v5574, 6
    %v6770 = vrot.slane %v5575, 6
    %v6771 = vrot.slane %v5576, 6
    %v6772 = vrot.slane %v5577, 6
    %v6773 = vrot.slane %v5578, 6
    %v6774 = vrot.slane %v5579, 6
    %v6775 = vrot.slane %v5580, 6
    %v6776 = vrot.slane %v5581, 6
    %v6777 = vrot.slane %v5582, 6
    %v6778 = vrot.slane %v5583, 6
    %v6779 = vrot.slane %v5584, 6
    %v6780 = vrot.slane %v5585, 6
    %v6781 = vrot.slane %v5586, 6
    %v6782 = vrot.slane %v5587, 6
    %v6783 = vrot.slane %v5588, 6
    %v6784 = vrot.slane %v5589, 6
    %v6785 = vrot.slane %v5590, 6
    %v6786 = vrot.slane %v5591, 6
    %v6787 = vrot.slane %v5592, 6
    %v6788 = vrot.slane %v5593, 6
    %v6789 = vrot.slane %v5594, 6
    %v6790 = vrot.slane %v5595, 6
    %v6791 = vrot.slane %v5596, 6
    %v6792 = vrot.slane %v5597, 6
    %v6793 = vrot.slane %v5598, 6
    %v6794 = vrot.slane %v5599, 6
    %v6795 = vrot.slane %v5600, 6
    %v6796 = vrot.slane %v5601, 6
    %v6797 = vrot.slane %v5602, 6
    %v6798 = vrot.slane %v5603, 6
    %v6799 = vrot.slane %v5604, 6
    %v6800 = vrot.slane %v5605, 6
    %v6801 = vrot.slane %v5606, 6
    %v6802 = vrot.slane %v5607, 6
    %v6803 = vrot.slane %v5608, 6
    %v6804 = vrot.slane %v5609, 6
    %v6805 = vrot.slane %v5610, 6
    %v6806 = vrot.slane %v5611, 6
    %v6807 = vrot.slane %v5612, 6
    %v6808 = vrot.slane %v5613, 6
    %v6809 = vrot.slane %v5614, 6
    %v6810 = vrot.slane %v5615, 6
    %v6811 = vrot.slane %v5616, 6
    %v6812 = vrot.slane %v5617, 6
    %v6813 = vrot.slane %v5618, 6
    %v6814 = vrot.slane %v5619, 6
    %v6815 = vrot.slane %v5620, 6
    %v6816 = vrot.slane %v5621, 6
    %v6817 = vrot.slane %v5622, 6
    %v6818 = vrot.slane %v5623, 6
    %v6819 = vrot.slane %v5624, 6
    %v6820 = vrot.slane %v5625, 6
    %v6821 = vrot.slane %v5626, 6
    %v6822 = vrot.slane %v5627, 6
    %v6823 = vrot.slane %v5628, 6
    %v6824 = vrot.slane %v5629, 6
    %v6825 = vrot.slane %v5630, 6
    %v6826 = vrot.slane %v5631, 6
    %v6827 = vrot.slane %v5632, 6
    %v6828 = vrot.slane %v5633, 6
    %v6829 = vsel %vm2008, %v6827, %v6828
    %v6830 = vsel %vm2008, %v6826, %v6827
    %v6831 = vsel %vm2008, %v6825, %v6826
    %v6832 = vsel %vm2008, %v6824, %v6825
    %v6833 = vsel %vm2008, %v6823, %v6824
    %v6834 = vsel %vm2008, %v6822, %v6823
    %v6835 = vsel %vm2008, %v6821, %v6822
    %v6836 = vsel %vm2008, %v6820, %v6821
    %v6837 = vsel %vm2008, %v6819, %v6820
    %v6838 = vsel %vm2008, %v6818, %v6819
    %v6839 = vsel %vm2008, %v6817, %v6818
    %v6840 = vsel %vm2008, %v6816, %v6817
    %v6841 = vsel %vm2008, %v6815, %v6816
    %v6842 = vsel %vm2008, %v6814, %v6815
    %v6843 = vsel %vm2008, %v6813, %v6814
    %v6844 = vsel %vm2008, %v6812, %v6813
    %v6845 = vsel %vm2008, %v6811, %v6812
    %v6846 = vsel %vm2008, %v6810, %v6811
    %v6847 = vsel %vm2008, %v6809, %v6810
    %v6848 = vsel %vm2008, %v6808, %v6809
    %v6849 = vsel %vm2008, %v6807, %v6808
    %v6850 = vsel %vm2008, %v6806, %v6807
    %v6851 = vsel %vm2008, %v6805, %v6806
    %v6852 = vsel %vm2008, %v6804, %v6805
    %v6853 = vsel %vm2008, %v6803, %v6804
    %v6854 = vsel %vm2008, %v6802, %v6803
    %v6855 = vsel %vm2008, %v6801, %v6802
    %v6856 = vsel %vm2008, %v6800, %v6801
    %v6857 = vsel %vm2008, %v6799, %v6800
    %v6858 = vsel %vm2008, %v6798, %v6799
    %v6859 = vsel %vm2008, %v6797, %v6798
    %v6860 = vsel %vm2008, %v6796, %v6797
    %v6861 = vsel %vm2008, %v6795, %v6796
    %v6862 = vsel %vm2008, %v6794, %v6795
    %v6863 = vsel %vm2008, %v6793, %v6794
    %v6864 = vsel %vm2008, %v6792, %v6793
    %v6865 = vsel %vm2008, %v6791, %v6792
    %v6866 = vsel %vm2008, %v6790, %v6791
    %v6867 = vsel %vm2008, %v6789, %v6790
    %v6868 = vsel %vm2008, %v6788, %v6789
    %v6869 = vsel %vm2008, %v6787, %v6788
    %v6870 = vsel %vm2008, %v6786, %v6787
    %v6871 = vsel %vm2008, %v6785, %v6786
    %v6872 = vsel %vm2008, %v6784, %v6785
    %v6873 = vsel %vm2008, %v6783, %v6784
    %v6874 = vsel %vm2008, %v6782, %v6783
    %v6875 = vsel %vm2008, %v6781, %v6782
    %v6876 = vsel %vm2008, %v6780, %v6781
    %v6877 = vsel %vm2008, %v6779, %v6780
    %v6878 = vsel %vm2008, %v6778, %v6779
    %v6879 = vsel %vm2008, %v6777, %v6778
    %v6880 = vsel %vm2008, %v6776, %v6777
    %v6881 = vsel %vm2008, %v6775, %v6776
    %v6882 = vsel %vm2008, %v6774, %v6775
    %v6883 = vsel %vm2008, %v6773, %v6774
    %v6884 = vsel %vm2008, %v6772, %v6773
    %v6885 = vsel %vm2008, %v6771, %v6772
    %v6886 = vsel %vm2008, %v6770, %v6771
    %v6887 = vsel %vm2008, %v6769, %v6770
    %v6888 = vsel %vm2008, %v6768, %v6769
    %v6889 = vsel %vm2008, %v6767, %v6768
    %v6890 = vsel %vm2008, %v6766, %v6767
    %v6891 = vsel %vm2008, %v6765, %v6766
    %v6892 = vsel %vm2008, %v6828, %v6765
    %v6893 = vmul.f32 %v6892, %v1193
    %v6894 = vmul.f32 %v6891, %v1194
    %v6895 = vmul.f32 %v6890, %v1195
    %v6896 = vmul.f32 %v6889, %v1196
    %v6897 = vmul.f32 %v6888, %v1197
    %v6898 = vmul.f32 %v6887, %v1198
    %v6899 = vmul.f32 %v6886, %v1199
    %v6900 = vmul.f32 %v6885, %v1200
    %v6901 = vmul.f32 %v6884, %v1201
    %v6902 = vmul.f32 %v6883, %v1202
    %v6903 = vmul.f32 %v6882, %v1203
    %v6904 = vmul.f32 %v6881, %v1204
    %v6905 = vmul.f32 %v6880, %v1205
    %v6906 = vmul.f32 %v6879, %v1206
    %v6907 = vmul.f32 %v6878, %v1207
    %v6908 = vmul.f32 %v6877, %v1208
    %v6909 = vmul.f32 %v6876, %v1209
    %v6910 = vmul.f32 %v6875, %v1210
    %v6911 = vmul.f32 %v6874, %v1211
    %v6912 = vmul.f32 %v6873, %v1212
    %v6913 = vmul.f32 %v6872, %v1213
    %v6914 = vmul.f32 %v6871, %v1214
    %v6915 = vmul.f32 %v6870, %v1215
    %v6916 = vmul.f32 %v6869, %v1216
    %v6917 = vmul.f32 %v6868, %v1217
    %v6918 = vmul.f32 %v6867, %v1218
    %v6919 = vmul.f32 %v6866, %v1219
    %v6920 = vmul.f32 %v6865, %v1220
    %v6921 = vmul.f32 %v6864, %v1221
    %v6922 = vmul.f32 %v6863, %v1222
    %v6923 = vmul.f32 %v6862, %v1223
    %v6924 = vmul.f32 %v6861, %v1224
    %v6925 = vmul.f32 %v6860, %v1225
    %v6926 = vmul.f32 %v6859, %v1226
    %v6927 = vmul.f32 %v6858, %v1227
    %v6928 = vmul.f32 %v6857, %v1228
    %v6929 = vmul.f32 %v6856, %v1229
    %v6930 = vmul.f32 %v6855, %v1230
    %v6931 = vmul.f32 %v6854, %v1231
    %v6932 = vmul.f32 %v6853, %v1232
    %v6933 = vmul.f32 %v6852, %v1233
    %v6934 = vmul.f32 %v6851, %v1234
    %v6935 = vmul.f32 %v6850, %v1235
    %v6936 = vmul.f32 %v6849, %v1236
    %v6937 = vmul.f32 %v6848, %v1237
    %v6938 = vmul.f32 %v6847, %v1238
    %v6939 = vmul.f32 %v6846, %v1239
    %v6940 = vmul.f32 %v6845, %v1240
    %v6941 = vmul.f32 %v6844, %v1241
    %v6942 = vmul.f32 %v6843, %v1242
    %v6943 = vmul.f32 %v6842, %v1243
    %v6944 = vmul.f32 %v6841, %v1244
    %v6945 = vmul.f32 %v6840, %v1245
    %v6946 = vmul.f32 %v6839, %v1246
    %v6947 = vmul.f32 %v6838, %v1247
    %v6948 = vmul.f32 %v6837, %v1248
    %v6949 = vmul.f32 %v6836, %v1249
    %v6950 = vmul.f32 %v6835, %v1250
    %v6951 = vmul.f32 %v6834, %v1251
    %v6952 = vmul.f32 %v6833, %v1252
    %v6953 = vmul.f32 %v6832, %v1253
    %v6954 = vmul.f32 %v6831, %v1254
    %v6955 = vmul.f32 %v6830, %v1255
    %v6956 = vmul.f32 %v6829, %v1256
    %s6957 = scalar_lea.vmem %s5, 16
    %v6958 = vld [vmem:[%s6957] sm:$0xf]
    %v6959 = vld [vmem:[%s6957 + $0x4] sm:$0xf]
    %v6960 = vld [vmem:[%s6957 + $0x8] sm:$0xf]
    %v6961 = vld [vmem:[%s6957 + $0xc] sm:$0xf]
    %v6962 = vpack.c.bf16 %v6894, %v6893
    %v6963 = vpack.c.bf16 %v6896, %v6895
    %v6964 = vpack.c.bf16 %v6898, %v6897
    %v6965 = vpack.c.bf16 %v6900, %v6899
    %v6966 = vpack.c.bf16 %v6902, %v6901
    %v6967 = vpack.c.bf16 %v6904, %v6903
    %v6968 = vpack.c.bf16 %v6906, %v6905
    %v6969 = vpack.c.bf16 %v6908, %v6907
    %v6970 = vpack.c.bf16 %v6910, %v6909
    %v6971 = vpack.c.bf16 %v6912, %v6911
    %v6972 = vpack.c.bf16 %v6914, %v6913
    %v6973 = vpack.c.bf16 %v6916, %v6915
    %v6974 = vpack.c.bf16 %v6918, %v6917
    %v6975 = vpack.c.bf16 %v6920, %v6919
    %v6976 = vpack.c.bf16 %v6922, %v6921
    %v6977 = vpack.c.bf16 %v6924, %v6923
    %v6978 = vpack.c.bf16 %v6926, %v6925
    %v6979 = vpack.c.bf16 %v6928, %v6927
    %v6980 = vpack.c.bf16 %v6930, %v6929
    %v6981 = vpack.c.bf16 %v6932, %v6931
    %v6982 = vpack.c.bf16 %v6934, %v6933
    %v6983 = vpack.c.bf16 %v6936, %v6935
    %v6984 = vpack.c.bf16 %v6938, %v6937
    %v6985 = vpack.c.bf16 %v6940, %v6939
    %v6986 = vpack.c.bf16 %v6942, %v6941
    %v6987 = vpack.c.bf16 %v6944, %v6943
    %v6988 = vpack.c.bf16 %v6946, %v6945
    %v6989 = vpack.c.bf16 %v6948, %v6947
    %v6990 = vpack.c.bf16 %v6950, %v6949
    %v6991 = vpack.c.bf16 %v6952, %v6951
    %v6992 = vpack.c.bf16 %v6954, %v6953
    %v6993 = vpack.c.bf16 %v6956, %v6955
    %v6998 = vunpack.c.l.b16 %v6958
    %v6999 = vunpack.c.l.b16 %v6959
    %v7000 = vunpack.c.l.b16 %v6960
    %v7001 = vunpack.c.l.b16 %v6961
    %v7002 = vpack.c.b16 %v6999, %v6998
    %v7003 = vpack.c.b16 %v7001, %v7000
    %v7007 = vsel %vm3421, %v6962, 0
    %v7010 = vsel %vm3421, %v6963, 0
    %v7013 = vsel %vm3421, %v6964, 0
    %v7016 = vsel %vm3421, %v6965, 0
    %v7019 = vsel %vm3421, %v6966, 0
    %v7022 = vsel %vm3421, %v6967, 0
    %v7025 = vsel %vm3421, %v6968, 0
    %v7028 = vsel %vm3421, %v6969, 0
    %v7031 = vsel %vm3421, %v6970, 0
    %v7034 = vsel %vm3421, %v6971, 0
    %v7037 = vsel %vm3421, %v6972, 0
    %v7040 = vsel %vm3421, %v6973, 0
    %v7043 = vsel %vm3421, %v6974, 0
    %v7046 = vsel %vm3421, %v6975, 0
    %v7049 = vsel %vm3421, %v6976, 0
    %v7052 = vsel %vm3421, %v6977, 0
    %v7055 = vsel %vm3421, %v6978, 0
    %v7058 = vsel %vm3421, %v6979, 0
    %v7061 = vsel %vm3421, %v6980, 0
    %v7064 = vsel %vm3421, %v6981, 0
    %v7067 = vsel %vm3421, %v6982, 0
    %v7070 = vsel %vm3421, %v6983, 0
    %v7073 = vsel %vm3421, %v6984, 0
    %v7076 = vsel %vm3421, %v6985, 0
    %v7079 = vsel %vm3421, %v6986, 0
    %v7082 = vsel %vm3421, %v6987, 0
    %v7085 = vsel %vm3421, %v6988, 0
    %v7088 = vsel %vm3421, %v6989, 0
    %v7091 = vsel %vm3421, %v6990, 0
    %v7094 = vsel %vm3421, %v6991, 0
    %v7097 = vsel %vm3421, %v6992, 0
    %v7100 = vsel %vm3421, %v6993, 0
    %7102 = vmatprep.subr.bf16.mxu0 0
    %7103 = vmatpush1.bf16.msra.mxu0 0
    %7104 = vmatprep.subr.bf16.mxu0 0
    %7105 = vmatpush1.bf16.msra.mxu0 0
    %7106 = vmatprep.subr.bf16.mxu0 0
    %7107 = vmatpush1.bf16.msra.mxu0 0
    %7108 = vmatprep.subr.bf16.mxu0 0
    %7109 = vmatpush1.bf16.msra.mxu0 0
    %7110 = vmatprep.subr.bf16.mxu0 0
    %7111 = vmatpush1.bf16.msra.mxu0 0
    %7112 = vmatprep.subr.bf16.mxu0 0
    %7113 = vmatpush1.bf16.msra.mxu0 0
    %7114 = vmatprep.subr.bf16.mxu0 0
    %7115 = vmatpush1.bf16.msra.mxu0 %v7003
    %7116 = vmatprep.subr.bf16.mxu0 0
    %7117 = vmatpush1.bf16.msra.mxu0 %v7002
    %7118 = vmatprep.subr.bf16.mxu0 0
    %7119 = vmatpush2.bf16.msra.mxu0 0
    %7120 = vmatprep.subr.bf16.mxu0 0
    %7121 = vmatpush2.bf16.msra.mxu0 0
    %7122 = vmatprep.subr.bf16.mxu0 0
    %7123 = vmatpush2.bf16.msra.mxu0 0
    %7124 = vmatprep.subr.bf16.mxu0 0
    %7125 = vmatpush2.bf16.msra.mxu0 0
    %7126 = vmatprep.subr.bf16.mxu0 0
    %7127 = vmatpush2.bf16.msra.mxu0 0
    %7128 = vmatprep.subr.bf16.mxu0 0
    %7129 = vmatpush2.bf16.msra.mxu0 0
    %7130 = vmatprep.subr.bf16.mxu0 0
    %7131 = vmatpush2.bf16.msra.mxu0 0
    %7132 = vmatprep.subr.bf16.mxu0 0
    %7133 = vmatpush2.bf16.msra.mxu0 0
    %7134 = vmatprep.mubr.bf16.mxu0 0
    %7135 = vmatmul.mubr.bf16.gmra.mxu0 %v7007
    %v7136 = vpop.f32.mrf.mxu0
    %v7137 = vadd.f32 0.0, %v7136
    %v7138 = vpop.f32.mrf.mxu0
    %v7139 = vpop.f32.mrf.mxu0
    %v7140 = vadd.f32 0.0, %v7139
    %v7141 = vpop.f32.mrf.mxu0
    %7142 = vmatprep.mubr.bf16.mxu0 0
    %7143 = vmatmul.mubr.bf16.gmra.mxu0 %v7010
    %v7144 = vpop.f32.mrf.mxu0
    %v7145 = vadd.f32 0.0, %v7144
    %v7146 = vpop.f32.mrf.mxu0
    %v7147 = vpop.f32.mrf.mxu0
    %v7148 = vadd.f32 0.0, %v7147
    %v7149 = vpop.f32.mrf.mxu0
    %7150 = vmatprep.mubr.bf16.mxu0 0
    %7151 = vmatmul.mubr.bf16.gmra.mxu0 %v7013
    %v7152 = vpop.f32.mrf.mxu0
    %v7153 = vadd.f32 0.0, %v7152
    %v7154 = vpop.f32.mrf.mxu0
    %v7155 = vpop.f32.mrf.mxu0
    %v7156 = vadd.f32 0.0, %v7155
    %v7157 = vpop.f32.mrf.mxu0
    %7158 = vmatprep.mubr.bf16.mxu0 0
    %7159 = vmatmul.mubr.bf16.gmra.mxu0 %v7016
    %v7160 = vpop.f32.mrf.mxu0
    %v7161 = vadd.f32 0.0, %v7160
    %v7162 = vpop.f32.mrf.mxu0
    %v7163 = vpop.f32.mrf.mxu0
    %v7164 = vadd.f32 0.0, %v7163
    %v7165 = vpop.f32.mrf.mxu0
    %7166 = vmatprep.mubr.bf16.mxu0 0
    %7167 = vmatmul.mubr.bf16.gmra.mxu0 %v7019
    %v7168 = vpop.f32.mrf.mxu0
    %v7169 = vadd.f32 0.0, %v7168
    %v7170 = vpop.f32.mrf.mxu0
    %v7171 = vpop.f32.mrf.mxu0
    %v7172 = vadd.f32 0.0, %v7171
    %v7173 = vpop.f32.mrf.mxu0
    %7174 = vmatprep.mubr.bf16.mxu0 0
    %7175 = vmatmul.mubr.bf16.gmra.mxu0 %v7022
    %v7176 = vpop.f32.mrf.mxu0
    %v7177 = vadd.f32 0.0, %v7176
    %v7178 = vpop.f32.mrf.mxu0
    %v7179 = vpop.f32.mrf.mxu0
    %v7180 = vadd.f32 0.0, %v7179
    %v7181 = vpop.f32.mrf.mxu0
    %7182 = vmatprep.mubr.bf16.mxu0 0
    %7183 = vmatmul.mubr.bf16.gmra.mxu0 %v7025
    %v7184 = vpop.f32.mrf.mxu0
    %v7185 = vadd.f32 0.0, %v7184
    %v7186 = vpop.f32.mrf.mxu0
    %v7187 = vpop.f32.mrf.mxu0
    %v7188 = vadd.f32 0.0, %v7187
    %v7189 = vpop.f32.mrf.mxu0
    %7190 = vmatprep.mubr.bf16.mxu0 0
    %7191 = vmatmul.mubr.bf16.gmra.mxu0 %v7028
    %v7192 = vpop.f32.mrf.mxu0
    %v7193 = vadd.f32 0.0, %v7192
    %v7194 = vpop.f32.mrf.mxu0
    %v7195 = vpop.f32.mrf.mxu0
    %v7196 = vadd.f32 0.0, %v7195
    %v7197 = vpop.f32.mrf.mxu0
    %7198 = vmatprep.mubr.bf16.mxu0 0
    %7199 = vmatmul.mubr.bf16.gmra.mxu0 %v7031
    %v7200 = vpop.f32.mrf.mxu0
    %v7201 = vadd.f32 0.0, %v7200
    %v7202 = vpop.f32.mrf.mxu0
    %v7203 = vpop.f32.mrf.mxu0
    %v7204 = vadd.f32 0.0, %v7203
    %v7205 = vpop.f32.mrf.mxu0
    %7206 = vmatprep.mubr.bf16.mxu0 0
    %7207 = vmatmul.mubr.bf16.gmra.mxu0 %v7034
    %v7208 = vpop.f32.mrf.mxu0
    %v7209 = vadd.f32 0.0, %v7208
    %v7210 = vpop.f32.mrf.mxu0
    %v7211 = vpop.f32.mrf.mxu0
    %v7212 = vadd.f32 0.0, %v7211
    %v7213 = vpop.f32.mrf.mxu0
    %7214 = vmatprep.mubr.bf16.mxu0 0
    %7215 = vmatmul.mubr.bf16.gmra.mxu0 %v7037
    %v7216 = vpop.f32.mrf.mxu0
    %v7217 = vadd.f32 0.0, %v7216
    %v7218 = vpop.f32.mrf.mxu0
    %v7219 = vpop.f32.mrf.mxu0
    %v7220 = vadd.f32 0.0, %v7219
    %v7221 = vpop.f32.mrf.mxu0
    %7222 = vmatprep.mubr.bf16.mxu0 0
    %7223 = vmatmul.mubr.bf16.gmra.mxu0 %v7040
    %v7224 = vpop.f32.mrf.mxu0
    %v7225 = vadd.f32 0.0, %v7224
    %v7226 = vpop.f32.mrf.mxu0
    %v7227 = vpop.f32.mrf.mxu0
    %v7228 = vadd.f32 0.0, %v7227
    %v7229 = vpop.f32.mrf.mxu0
    %7230 = vmatprep.mubr.bf16.mxu0 0
    %7231 = vmatmul.mubr.bf16.gmra.mxu0 %v7043
    %v7232 = vpop.f32.mrf.mxu0
    %v7233 = vadd.f32 0.0, %v7232
    %v7234 = vpop.f32.mrf.mxu0
    %v7235 = vpop.f32.mrf.mxu0
    %v7236 = vadd.f32 0.0, %v7235
    %v7237 = vpop.f32.mrf.mxu0
    %7238 = vmatprep.mubr.bf16.mxu0 0
    %7239 = vmatmul.mubr.bf16.gmra.mxu0 %v7046
    %v7240 = vpop.f32.mrf.mxu0
    %v7241 = vadd.f32 0.0, %v7240
    %v7242 = vpop.f32.mrf.mxu0
    %v7243 = vpop.f32.mrf.mxu0
    %v7244 = vadd.f32 0.0, %v7243
    %v7245 = vpop.f32.mrf.mxu0
    %7246 = vmatprep.mubr.bf16.mxu0 0
    %7247 = vmatmul.mubr.bf16.gmra.mxu0 %v7049
    %v7248 = vpop.f32.mrf.mxu0
    %v7249 = vadd.f32 0.0, %v7248
    %v7250 = vpop.f32.mrf.mxu0
    %v7251 = vpop.f32.mrf.mxu0
    %v7252 = vadd.f32 0.0, %v7251
    %v7253 = vpop.f32.mrf.mxu0
    %7254 = vmatprep.mubr.bf16.mxu0 0
    %7255 = vmatmul.mubr.bf16.gmra.mxu0 %v7052
    %v7256 = vpop.f32.mrf.mxu0
    %v7257 = vadd.f32 0.0, %v7256
    %v7258 = vpop.f32.mrf.mxu0
    %v7259 = vpop.f32.mrf.mxu0
    %v7260 = vadd.f32 0.0, %v7259
    %v7261 = vpop.f32.mrf.mxu0
    %7262 = vmatprep.mubr.bf16.mxu0 0
    %7263 = vmatmul.mubr.bf16.gmra.mxu0 %v7055
    %v7264 = vpop.f32.mrf.mxu0
    %v7265 = vadd.f32 0.0, %v7264
    %v7266 = vpop.f32.mrf.mxu0
    %v7267 = vpop.f32.mrf.mxu0
    %v7268 = vadd.f32 0.0, %v7267
    %v7269 = vpop.f32.mrf.mxu0
    %7270 = vmatprep.mubr.bf16.mxu0 0
    %7271 = vmatmul.mubr.bf16.gmra.mxu0 %v7058
    %v7272 = vpop.f32.mrf.mxu0
    %v7273 = vadd.f32 0.0, %v7272
    %v7274 = vpop.f32.mrf.mxu0
    %v7275 = vpop.f32.mrf.mxu0
    %v7276 = vadd.f32 0.0, %v7275
    %v7277 = vpop.f32.mrf.mxu0
    %7278 = vmatprep.mubr.bf16.mxu0 0
    %7279 = vmatmul.mubr.bf16.gmra.mxu0 %v7061
    %v7280 = vpop.f32.mrf.mxu0
    %v7281 = vadd.f32 0.0, %v7280
    %v7282 = vpop.f32.mrf.mxu0
    %v7283 = vpop.f32.mrf.mxu0
    %v7284 = vadd.f32 0.0, %v7283
    %v7285 = vpop.f32.mrf.mxu0
    %7286 = vmatprep.mubr.bf16.mxu0 0
    %7287 = vmatmul.mubr.bf16.gmra.mxu0 %v7064
    %v7288 = vpop.f32.mrf.mxu0
    %v7289 = vadd.f32 0.0, %v7288
    %v7290 = vpop.f32.mrf.mxu0
    %v7291 = vpop.f32.mrf.mxu0
    %v7292 = vadd.f32 0.0, %v7291
    %v7293 = vpop.f32.mrf.mxu0
    %7294 = vmatprep.mubr.bf16.mxu0 0
    %7295 = vmatmul.mubr.bf16.gmra.mxu0 %v7067
    %v7296 = vpop.f32.mrf.mxu0
    %v7297 = vadd.f32 0.0, %v7296
    %v7298 = vpop.f32.mrf.mxu0
    %v7299 = vpop.f32.mrf.mxu0
    %v7300 = vadd.f32 0.0, %v7299
    %v7301 = vpop.f32.mrf.mxu0
    %7302 = vmatprep.mubr.bf16.mxu0 0
    %7303 = vmatmul.mubr.bf16.gmra.mxu0 %v7070
    %v7304 = vpop.f32.mrf.mxu0
    %v7305 = vadd.f32 0.0, %v7304
    %v7306 = vpop.f32.mrf.mxu0
    %v7307 = vpop.f32.mrf.mxu0
    %v7308 = vadd.f32 0.0, %v7307
    %v7309 = vpop.f32.mrf.mxu0
    %7310 = vmatprep.mubr.bf16.mxu0 0
    %7311 = vmatmul.mubr.bf16.gmra.mxu0 %v7073
    %v7312 = vpop.f32.mrf.mxu0
    %v7313 = vadd.f32 0.0, %v7312
    %v7314 = vpop.f32.mrf.mxu0
    %v7315 = vpop.f32.mrf.mxu0
    %v7316 = vadd.f32 0.0, %v7315
    %v7317 = vpop.f32.mrf.mxu0
    %7318 = vmatprep.mubr.bf16.mxu0 0
    %7319 = vmatmul.mubr.bf16.gmra.mxu0 %v7076
    %v7320 = vpop.f32.mrf.mxu0
    %v7321 = vadd.f32 0.0, %v7320
    %v7322 = vpop.f32.mrf.mxu0
    %v7323 = vpop.f32.mrf.mxu0
    %v7324 = vadd.f32 0.0, %v7323
    %v7325 = vpop.f32.mrf.mxu0
    %7326 = vmatprep.mubr.bf16.mxu0 0
    %7327 = vmatmul.mubr.bf16.gmra.mxu0 %v7079
    %v7328 = vpop.f32.mrf.mxu0
    %v7329 = vadd.f32 0.0, %v7328
    %v7330 = vpop.f32.mrf.mxu0
    %v7331 = vpop.f32.mrf.mxu0
    %v7332 = vadd.f32 0.0, %v7331
    %v7333 = vpop.f32.mrf.mxu0
    %7334 = vmatprep.mubr.bf16.mxu0 0
    %7335 = vmatmul.mubr.bf16.gmra.mxu0 %v7082
    %v7336 = vpop.f32.mrf.mxu0
    %v7337 = vadd.f32 0.0, %v7336
    %v7338 = vpop.f32.mrf.mxu0
    %v7339 = vpop.f32.mrf.mxu0
    %v7340 = vadd.f32 0.0, %v7339
    %v7341 = vpop.f32.mrf.mxu0
    %7342 = vmatprep.mubr.bf16.mxu0 0
    %7343 = vmatmul.mubr.bf16.gmra.mxu0 %v7085
    %v7344 = vpop.f32.mrf.mxu0
    %v7345 = vadd.f32 0.0, %v7344
    %v7346 = vpop.f32.mrf.mxu0
    %v7347 = vpop.f32.mrf.mxu0
    %v7348 = vadd.f32 0.0, %v7347
    %v7349 = vpop.f32.mrf.mxu0
    %7350 = vmatprep.mubr.bf16.mxu0 0
    %7351 = vmatmul.mubr.bf16.gmra.mxu0 %v7088
    %v7352 = vpop.f32.mrf.mxu0
    %v7353 = vadd.f32 0.0, %v7352
    %v7354 = vpop.f32.mrf.mxu0
    %v7355 = vpop.f32.mrf.mxu0
    %v7356 = vadd.f32 0.0, %v7355
    %v7357 = vpop.f32.mrf.mxu0
    %7358 = vmatprep.mubr.bf16.mxu0 0
    %7359 = vmatmul.mubr.bf16.gmra.mxu0 %v7091
    %v7360 = vpop.f32.mrf.mxu0
    %v7361 = vadd.f32 0.0, %v7360
    %v7362 = vpop.f32.mrf.mxu0
    %v7363 = vpop.f32.mrf.mxu0
    %v7364 = vadd.f32 0.0, %v7363
    %v7365 = vpop.f32.mrf.mxu0
    %7366 = vmatprep.mubr.bf16.mxu0 0
    %7367 = vmatmul.mubr.bf16.gmra.mxu0 %v7094
    %v7368 = vpop.f32.mrf.mxu0
    %v7369 = vadd.f32 0.0, %v7368
    %v7370 = vpop.f32.mrf.mxu0
    %v7371 = vpop.f32.mrf.mxu0
    %v7372 = vadd.f32 0.0, %v7371
    %v7373 = vpop.f32.mrf.mxu0
    %7374 = vmatprep.mubr.bf16.mxu0 0
    %7375 = vmatmul.mubr.bf16.gmra.mxu0 %v7097
    %v7376 = vpop.f32.mrf.mxu0
    %v7377 = vadd.f32 0.0, %v7376
    %v7378 = vpop.f32.mrf.mxu0
    %v7379 = vpop.f32.mrf.mxu0
    %v7380 = vadd.f32 0.0, %v7379
    %v7381 = vpop.f32.mrf.mxu0
    %7382 = vmatprep.mubr.bf16.mxu0 0
    %7383 = vmatmul.mubr.bf16.gmra.mxu0 %v7100
    %v7384 = vpop.f32.mrf.mxu0
    %v7385 = vadd.f32 0.0, %v7384
    %v7386 = vpop.f32.mrf.mxu0
    %v7387 = vpop.f32.mrf.mxu0
    %v7388 = vadd.f32 0.0, %v7387
    %v7389 = vpop.f32.mrf.mxu0
    %7390 = vdwg.mxu0
    %v7391 = vadd.f32 %v6701, %v7137
    %v7392 = vadd.f32 %v6702, %v7140
    %v7393 = vadd.f32 %v6703, %v7145
    %v7394 = vadd.f32 %v6704, %v7148
    %v7395 = vadd.f32 %v6705, %v7153
    %v7396 = vadd.f32 %v6706, %v7156
    %v7397 = vadd.f32 %v6707, %v7161
    %v7398 = vadd.f32 %v6708, %v7164
    %v7399 = vadd.f32 %v6709, %v7169
    %v7400 = vadd.f32 %v6710, %v7172
    %v7401 = vadd.f32 %v6711, %v7177
    %v7402 = vadd.f32 %v6712, %v7180
    %v7403 = vadd.f32 %v6713, %v7185
    %v7404 = vadd.f32 %v6714, %v7188
    %v7405 = vadd.f32 %v6715, %v7193
    %v7406 = vadd.f32 %v6716, %v7196
    %v7407 = vadd.f32 %v6717, %v7201
    %v7408 = vadd.f32 %v6718, %v7204
    %v7409 = vadd.f32 %v6719, %v7209
    %v7410 = vadd.f32 %v6720, %v7212
    %v7411 = vadd.f32 %v6721, %v7217
    %v7412 = vadd.f32 %v6722, %v7220
    %v7413 = vadd.f32 %v6723, %v7225
    %v7414 = vadd.f32 %v6724, %v7228
    %v7415 = vadd.f32 %v6725, %v7233
    %v7416 = vadd.f32 %v6726, %v7236
    %v7417 = vadd.f32 %v6727, %v7241
    %v7418 = vadd.f32 %v6728, %v7244
    %v7419 = vadd.f32 %v6729, %v7249
    %v7420 = vadd.f32 %v6730, %v7252
    %v7421 = vadd.f32 %v6731, %v7257
    %v7422 = vadd.f32 %v6732, %v7260
    %v7423 = vadd.f32 %v6733, %v7265
    %v7424 = vadd.f32 %v6734, %v7268
    %v7425 = vadd.f32 %v6735, %v7273
    %v7426 = vadd.f32 %v6736, %v7276
    %v7427 = vadd.f32 %v6737, %v7281
    %v7428 = vadd.f32 %v6738, %v7284
    %v7429 = vadd.f32 %v6739, %v7289
    %v7430 = vadd.f32 %v6740, %v7292
    %v7431 = vadd.f32 %v6741, %v7297
    %v7432 = vadd.f32 %v6742, %v7300
    %v7433 = vadd.f32 %v6743, %v7305
    %v7434 = vadd.f32 %v6744, %v7308
    %v7435 = vadd.f32 %v6745, %v7313
    %v7436 = vadd.f32 %v6746, %v7316
    %v7437 = vadd.f32 %v6747, %v7321
    %v7438 = vadd.f32 %v6748, %v7324
    %v7439 = vadd.f32 %v6749, %v7329
    %v7440 = vadd.f32 %v6750, %v7332
    %v7441 = vadd.f32 %v6751, %v7337
    %v7442 = vadd.f32 %v6752, %v7340
    %v7443 = vadd.f32 %v6753, %v7345
    %v7444 = vadd.f32 %v6754, %v7348
    %v7445 = vadd.f32 %v6755, %v7353
    %v7446 = vadd.f32 %v6756, %v7356
    %v7447 = vadd.f32 %v6757, %v7361
    %v7448 = vadd.f32 %v6758, %v7364
    %v7449 = vadd.f32 %v6759, %v7369
    %v7450 = vadd.f32 %v6760, %v7372
    %v7451 = vadd.f32 %v6761, %v7377
    %v7452 = vadd.f32 %v6762, %v7380
    %v7453 = vadd.f32 %v6763, %v7385
    %v7454 = vadd.f32 %v6764, %v7388
    %v7455 = vmax.f32 %v7391, 0.0
    %v7456 = vmax.f32 %v7392, 0.0
    %v7457 = vmax.f32 %v7393, 0.0
    %v7458 = vmax.f32 %v7394, 0.0
    %v7459 = vmax.f32 %v7395, 0.0
    %v7460 = vmax.f32 %v7396, 0.0
    %v7461 = vmax.f32 %v7397, 0.0
    %v7462 = vmax.f32 %v7398, 0.0
    %v7463 = vmax.f32 %v7399, 0.0
    %v7464 = vmax.f32 %v7400, 0.0
    %v7465 = vmax.f32 %v7401, 0.0
    %v7466 = vmax.f32 %v7402, 0.0
    %v7467 = vmax.f32 %v7403, 0.0
    %v7468 = vmax.f32 %v7404, 0.0
    %v7469 = vmax.f32 %v7405, 0.0
    %v7470 = vmax.f32 %v7406, 0.0
    %v7471 = vmax.f32 %v7407, 0.0
    %v7472 = vmax.f32 %v7408, 0.0
    %v7473 = vmax.f32 %v7409, 0.0
    %v7474 = vmax.f32 %v7410, 0.0
    %v7475 = vmax.f32 %v7411, 0.0
    %v7476 = vmax.f32 %v7412, 0.0
    %v7477 = vmax.f32 %v7413, 0.0
    %v7478 = vmax.f32 %v7414, 0.0
    %v7479 = vmax.f32 %v7415, 0.0
    %v7480 = vmax.f32 %v7416, 0.0
    %v7481 = vmax.f32 %v7417, 0.0
    %v7482 = vmax.f32 %v7418, 0.0
    %v7483 = vmax.f32 %v7419, 0.0
    %v7484 = vmax.f32 %v7420, 0.0
    %v7485 = vmax.f32 %v7421, 0.0
    %v7486 = vmax.f32 %v7422, 0.0
    %v7487 = vmax.f32 %v7423, 0.0
    %v7488 = vmax.f32 %v7424, 0.0
    %v7489 = vmax.f32 %v7425, 0.0
    %v7490 = vmax.f32 %v7426, 0.0
    %v7491 = vmax.f32 %v7427, 0.0
    %v7492 = vmax.f32 %v7428, 0.0
    %v7493 = vmax.f32 %v7429, 0.0
    %v7494 = vmax.f32 %v7430, 0.0
    %v7495 = vmax.f32 %v7431, 0.0
    %v7496 = vmax.f32 %v7432, 0.0
    %v7497 = vmax.f32 %v7433, 0.0
    %v7498 = vmax.f32 %v7434, 0.0
    %v7499 = vmax.f32 %v7435, 0.0
    %v7500 = vmax.f32 %v7436, 0.0
    %v7501 = vmax.f32 %v7437, 0.0
    %v7502 = vmax.f32 %v7438, 0.0
    %v7503 = vmax.f32 %v7439, 0.0
    %v7504 = vmax.f32 %v7440, 0.0
    %v7505 = vmax.f32 %v7441, 0.0
    %v7506 = vmax.f32 %v7442, 0.0
    %v7507 = vmax.f32 %v7443, 0.0
    %v7508 = vmax.f32 %v7444, 0.0
    %v7509 = vmax.f32 %v7445, 0.0
    %v7510 = vmax.f32 %v7446, 0.0
    %v7511 = vmax.f32 %v7447, 0.0
    %v7512 = vmax.f32 %v7448, 0.0
    %v7513 = vmax.f32 %v7449, 0.0
    %v7514 = vmax.f32 %v7450, 0.0
    %v7515 = vmax.f32 %v7451, 0.0
    %v7516 = vmax.f32 %v7452, 0.0
    %v7517 = vmax.f32 %v7453, 0.0
    %v7518 = vmax.f32 %v7454, 0.0
    %s7519 = scalar_lea.vmem %s7, 32
    %v7520 = vld [vmem:[%s7519] sm:$0xf]
    %v7521 = vld [vmem:[%s7519 + $0x4] sm:$0xf]
    %v7522 = vld [vmem:[%s7519 + $0x8] sm:$0xf]
    %v7523 = vld [vmem:[%s7519 + $0xc] sm:$0xf]
    %v7524 = vpack.c.bf16 %v7456, %v7455
    %v7525 = vpack.c.bf16 %v7458, %v7457
    %v7526 = vpack.c.bf16 %v7460, %v7459
    %v7527 = vpack.c.bf16 %v7462, %v7461
    %v7528 = vpack.c.bf16 %v7464, %v7463
    %v7529 = vpack.c.bf16 %v7466, %v7465
    %v7530 = vpack.c.bf16 %v7468, %v7467
    %v7531 = vpack.c.bf16 %v7470, %v7469
    %v7532 = vpack.c.bf16 %v7472, %v7471
    %v7533 = vpack.c.bf16 %v7474, %v7473
    %v7534 = vpack.c.bf16 %v7476, %v7475
    %v7535 = vpack.c.bf16 %v7478, %v7477
    %v7536 = vpack.c.bf16 %v7480, %v7479
    %v7537 = vpack.c.bf16 %v7482, %v7481
    %v7538 = vpack.c.bf16 %v7484, %v7483
    %v7539 = vpack.c.bf16 %v7486, %v7485
    %v7540 = vpack.c.bf16 %v7488, %v7487
    %v7541 = vpack.c.bf16 %v7490, %v7489
    %v7542 = vpack.c.bf16 %v7492, %v7491
    %v7543 = vpack.c.bf16 %v7494, %v7493
    %v7544 = vpack.c.bf16 %v7496, %v7495
    %v7545 = vpack.c.bf16 %v7498, %v7497
    %v7546 = vpack.c.bf16 %v7500, %v7499
    %v7547 = vpack.c.bf16 %v7502, %v7501
    %v7548 = vpack.c.bf16 %v7504, %v7503
    %v7549 = vpack.c.bf16 %v7506, %v7505
    %v7550 = vpack.c.bf16 %v7508, %v7507
    %v7551 = vpack.c.bf16 %v7510, %v7509
    %v7552 = vpack.c.bf16 %v7512, %v7511
    %v7553 = vpack.c.bf16 %v7514, %v7513
    %v7554 = vpack.c.bf16 %v7516, %v7515
    %v7555 = vpack.c.bf16 %v7518, %v7517
    %v7556 = vld [vmem:[%s8] sm:$0x1]
    %v7558 = vlaneseq
    %v7559 = vshrl.u32 %v7558, 7
    %v7560 = vsub.s32 0, %v7559
    %v7561 = vrot.slane %v7556, %v7560
    %v7567 = vunpack.c.l.b16 %v7520
    %v7568 = vunpack.c.l.b16 %v7521
    %v7569 = vunpack.c.l.b16 %v7522
    %v7570 = vunpack.c.l.b16 %v7523
    %v7571 = vpack.c.b16 %v7568, %v7567
    %v7572 = vpack.c.b16 %v7570, %v7569
    %v7576 = vsel %vm3421, %v7524, 0
    %v7579 = vsel %vm3421, %v7525, 0
    %v7582 = vsel %vm3421, %v7526, 0
    %v7585 = vsel %vm3421, %v7527, 0
    %v7588 = vsel %vm3421, %v7528, 0
    %v7591 = vsel %vm3421, %v7529, 0
    %v7594 = vsel %vm3421, %v7530, 0
    %v7597 = vsel %vm3421, %v7531, 0
    %v7600 = vsel %vm3421, %v7532, 0
    %v7603 = vsel %vm3421, %v7533, 0
    %v7606 = vsel %vm3421, %v7534, 0
    %v7609 = vsel %vm3421, %v7535, 0
    %v7612 = vsel %vm3421, %v7536, 0
    %v7615 = vsel %vm3421, %v7537, 0
    %v7618 = vsel %vm3421, %v7538, 0
    %v7621 = vsel %vm3421, %v7539, 0
    %v7624 = vsel %vm3421, %v7540, 0
    %v7627 = vsel %vm3421, %v7541, 0
    %v7630 = vsel %vm3421, %v7542, 0
    %v7633 = vsel %vm3421, %v7543, 0
    %v7636 = vsel %vm3421, %v7544, 0
    %v7639 = vsel %vm3421, %v7545, 0
    %v7642 = vsel %vm3421, %v7546, 0
    %v7645 = vsel %vm3421, %v7547, 0
    %v7648 = vsel %vm3421, %v7548, 0
    %v7651 = vsel %vm3421, %v7549, 0
    %v7654 = vsel %vm3421, %v7550, 0
    %v7657 = vsel %vm3421, %v7551, 0
    %v7660 = vsel %vm3421, %v7552, 0
    %v7663 = vsel %vm3421, %v7553, 0
    %v7666 = vsel %vm3421, %v7554, 0
    %v7669 = vsel %vm3421, %v7555, 0
    %7671 = vmatprep.subr.bf16.mxu0 0
    %7672 = vmatpush1.bf16.msra.mxu0 0
    %7673 = vmatprep.subr.bf16.mxu0 0
    %7674 = vmatpush1.bf16.msra.mxu0 0
    %7675 = vmatprep.subr.bf16.mxu0 0
    %7676 = vmatpush1.bf16.msra.mxu0 0
    %7677 = vmatprep.subr.bf16.mxu0 0
    %7678 = vmatpush1.bf16.msra.mxu0 0
    %7679 = vmatprep.subr.bf16.mxu0 0
    %7680 = vmatpush1.bf16.msra.mxu0 0
    %7681 = vmatprep.subr.bf16.mxu0 0
    %7682 = vmatpush1.bf16.msra.mxu0 0
    %7683 = vmatprep.subr.bf16.mxu0 0
    %7684 = vmatpush1.bf16.msra.mxu0 %v7572
    %7685 = vmatprep.subr.bf16.mxu0 0
    %7686 = vmatpush1.bf16.msra.mxu0 %v7571
    %7687 = vmatprep.subr.bf16.mxu0 0
    %7688 = vmatpush2.bf16.msra.mxu0 0
    %7689 = vmatprep.subr.bf16.mxu0 0
    %7690 = vmatpush2.bf16.msra.mxu0 0
    %7691 = vmatprep.subr.bf16.mxu0 0
    %7692 = vmatpush2.bf16.msra.mxu0 0
    %7693 = vmatprep.subr.bf16.mxu0 0
    %7694 = vmatpush2.bf16.msra.mxu0 0
    %7695 = vmatprep.subr.bf16.mxu0 0
    %7696 = vmatpush2.bf16.msra.mxu0 0
    %7697 = vmatprep.subr.bf16.mxu0 0
    %7698 = vmatpush2.bf16.msra.mxu0 0
    %7699 = vmatprep.subr.bf16.mxu0 0
    %7700 = vmatpush2.bf16.msra.mxu0 0
    %7701 = vmatprep.subr.bf16.mxu0 0
    %7702 = vmatpush2.bf16.msra.mxu0 0
    %7703 = vmatprep.mubr.bf16.mxu0 0
    %7704 = vmatmul.mubr.bf16.gmra.mxu0 %v7576
    %v7705 = vpop.f32.mrf.mxu0
    %v7706 = vadd.f32 %v7561, %v7705
    %v7707 = vpop.f32.mrf.mxu0
    %v7708 = vpop.f32.mrf.mxu0
    %v7709 = vadd.f32 %v7561, %v7708
    %v7710 = vpop.f32.mrf.mxu0
    %7711 = vmatprep.mubr.bf16.mxu0 0
    %7712 = vmatmul.mubr.bf16.gmra.mxu0 %v7579
    %v7713 = vpop.f32.mrf.mxu0
    %v7714 = vadd.f32 %v7561, %v7713
    %v7715 = vpop.f32.mrf.mxu0
    %v7716 = vpop.f32.mrf.mxu0
    %v7717 = vadd.f32 %v7561, %v7716
    %v7718 = vpop.f32.mrf.mxu0
    %7719 = vmatprep.mubr.bf16.mxu0 0
    %7720 = vmatmul.mubr.bf16.gmra.mxu0 %v7582
    %v7721 = vpop.f32.mrf.mxu0
    %v7722 = vadd.f32 %v7561, %v7721
    %v7723 = vpop.f32.mrf.mxu0
    %v7724 = vpop.f32.mrf.mxu0
    %v7725 = vadd.f32 %v7561, %v7724
    %v7726 = vpop.f32.mrf.mxu0
    %7727 = vmatprep.mubr.bf16.mxu0 0
    %7728 = vmatmul.mubr.bf16.gmra.mxu0 %v7585
    %v7729 = vpop.f32.mrf.mxu0
    %v7730 = vadd.f32 %v7561, %v7729
    %v7731 = vpop.f32.mrf.mxu0
    %v7732 = vpop.f32.mrf.mxu0
    %v7733 = vadd.f32 %v7561, %v7732
    %v7734 = vpop.f32.mrf.mxu0
    %7735 = vmatprep.mubr.bf16.mxu0 0
    %7736 = vmatmul.mubr.bf16.gmra.mxu0 %v7588
    %v7737 = vpop.f32.mrf.mxu0
    %v7738 = vadd.f32 %v7561, %v7737
    %v7739 = vpop.f32.mrf.mxu0
    %v7740 = vpop.f32.mrf.mxu0
    %v7741 = vadd.f32 %v7561, %v7740
    %v7742 = vpop.f32.mrf.mxu0
    %7743 = vmatprep.mubr.bf16.mxu0 0
    %7744 = vmatmul.mubr.bf16.gmra.mxu0 %v7591
    %v7745 = vpop.f32.mrf.mxu0
    %v7746 = vadd.f32 %v7561, %v7745
    %v7747 = vpop.f32.mrf.mxu0
    %v7748 = vpop.f32.mrf.mxu0
    %v7749 = vadd.f32 %v7561, %v7748
    %v7750 = vpop.f32.mrf.mxu0
    %7751 = vmatprep.mubr.bf16.mxu0 0
    %7752 = vmatmul.mubr.bf16.gmra.mxu0 %v7594
    %v7753 = vpop.f32.mrf.mxu0
    %v7754 = vadd.f32 %v7561, %v7753
    %v7755 = vpop.f32.mrf.mxu0
    %v7756 = vpop.f32.mrf.mxu0
    %v7757 = vadd.f32 %v7561, %v7756
    %v7758 = vpop.f32.mrf.mxu0
    %7759 = vmatprep.mubr.bf16.mxu0 0
    %7760 = vmatmul.mubr.bf16.gmra.mxu0 %v7597
    %v7761 = vpop.f32.mrf.mxu0
    %v7762 = vadd.f32 %v7561, %v7761
    %v7763 = vpop.f32.mrf.mxu0
    %v7764 = vpop.f32.mrf.mxu0
    %v7765 = vadd.f32 %v7561, %v7764
    %v7766 = vpop.f32.mrf.mxu0
    %7767 = vmatprep.mubr.bf16.mxu0 0
    %7768 = vmatmul.mubr.bf16.gmra.mxu0 %v7600
    %v7769 = vpop.f32.mrf.mxu0
    %v7770 = vadd.f32 %v7561, %v7769
    %v7771 = vpop.f32.mrf.mxu0
    %v7772 = vpop.f32.mrf.mxu0
    %v7773 = vadd.f32 %v7561, %v7772
    %v7774 = vpop.f32.mrf.mxu0
    %7775 = vmatprep.mubr.bf16.mxu0 0
    %7776 = vmatmul.mubr.bf16.gmra.mxu0 %v7603
    %v7777 = vpop.f32.mrf.mxu0
    %v7778 = vadd.f32 %v7561, %v7777
    %v7779 = vpop.f32.mrf.mxu0
    %v7780 = vpop.f32.mrf.mxu0
    %v7781 = vadd.f32 %v7561, %v7780
    %v7782 = vpop.f32.mrf.mxu0
    %7783 = vmatprep.mubr.bf16.mxu0 0
    %7784 = vmatmul.mubr.bf16.gmra.mxu0 %v7606
    %v7785 = vpop.f32.mrf.mxu0
    %v7786 = vadd.f32 %v7561, %v7785
    %v7787 = vpop.f32.mrf.mxu0
    %v7788 = vpop.f32.mrf.mxu0
    %v7789 = vadd.f32 %v7561, %v7788
    %v7790 = vpop.f32.mrf.mxu0
    %7791 = vmatprep.mubr.bf16.mxu0 0
    %7792 = vmatmul.mubr.bf16.gmra.mxu0 %v7609
    %v7793 = vpop.f32.mrf.mxu0
    %v7794 = vadd.f32 %v7561, %v7793
    %v7795 = vpop.f32.mrf.mxu0
    %v7796 = vpop.f32.mrf.mxu0
    %v7797 = vadd.f32 %v7561, %v7796
    %v7798 = vpop.f32.mrf.mxu0
    %7799 = vmatprep.mubr.bf16.mxu0 0
    %7800 = vmatmul.mubr.bf16.gmra.mxu0 %v7612
    %v7801 = vpop.f32.mrf.mxu0
    %v7802 = vadd.f32 %v7561, %v7801
    %v7803 = vpop.f32.mrf.mxu0
    %v7804 = vpop.f32.mrf.mxu0
    %v7805 = vadd.f32 %v7561, %v7804
    %v7806 = vpop.f32.mrf.mxu0
    %7807 = vmatprep.mubr.bf16.mxu0 0
    %7808 = vmatmul.mubr.bf16.gmra.mxu0 %v7615
    %v7809 = vpop.f32.mrf.mxu0
    %v7810 = vadd.f32 %v7561, %v7809
    %v7811 = vpop.f32.mrf.mxu0
    %v7812 = vpop.f32.mrf.mxu0
    %v7813 = vadd.f32 %v7561, %v7812
    %v7814 = vpop.f32.mrf.mxu0
    %7815 = vmatprep.mubr.bf16.mxu0 0
    %7816 = vmatmul.mubr.bf16.gmra.mxu0 %v7618
    %v7817 = vpop.f32.mrf.mxu0
    %v7818 = vadd.f32 %v7561, %v7817
    %v7819 = vpop.f32.mrf.mxu0
    %v7820 = vpop.f32.mrf.mxu0
    %v7821 = vadd.f32 %v7561, %v7820
    %v7822 = vpop.f32.mrf.mxu0
    %7823 = vmatprep.mubr.bf16.mxu0 0
    %7824 = vmatmul.mubr.bf16.gmra.mxu0 %v7621
    %v7825 = vpop.f32.mrf.mxu0
    %v7826 = vadd.f32 %v7561, %v7825
    %v7827 = vpop.f32.mrf.mxu0
    %v7828 = vpop.f32.mrf.mxu0
    %v7829 = vadd.f32 %v7561, %v7828
    %v7830 = vpop.f32.mrf.mxu0
    %7831 = vmatprep.mubr.bf16.mxu0 0
    %7832 = vmatmul.mubr.bf16.gmra.mxu0 %v7624
    %v7833 = vpop.f32.mrf.mxu0
    %v7834 = vadd.f32 %v7561, %v7833
    %v7835 = vpop.f32.mrf.mxu0
    %v7836 = vpop.f32.mrf.mxu0
    %v7837 = vadd.f32 %v7561, %v7836
    %v7838 = vpop.f32.mrf.mxu0
    %7839 = vmatprep.mubr.bf16.mxu0 0
    %7840 = vmatmul.mubr.bf16.gmra.mxu0 %v7627
    %v7841 = vpop.f32.mrf.mxu0
    %v7842 = vadd.f32 %v7561, %v7841
    %v7843 = vpop.f32.mrf.mxu0
    %v7844 = vpop.f32.mrf.mxu0
    %v7845 = vadd.f32 %v7561, %v7844
    %v7846 = vpop.f32.mrf.mxu0
    %7847 = vmatprep.mubr.bf16.mxu0 0
    %7848 = vmatmul.mubr.bf16.gmra.mxu0 %v7630
    %v7849 = vpop.f32.mrf.mxu0
    %v7850 = vadd.f32 %v7561, %v7849
    %v7851 = vpop.f32.mrf.mxu0
    %v7852 = vpop.f32.mrf.mxu0
    %v7853 = vadd.f32 %v7561, %v7852
    %v7854 = vpop.f32.mrf.mxu0
    %7855 = vmatprep.mubr.bf16.mxu0 0
    %7856 = vmatmul.mubr.bf16.gmra.mxu0 %v7633
    %v7857 = vpop.f32.mrf.mxu0
    %v7858 = vadd.f32 %v7561, %v7857
    %v7859 = vpop.f32.mrf.mxu0
    %v7860 = vpop.f32.mrf.mxu0
    %v7861 = vadd.f32 %v7561, %v7860
    %v7862 = vpop.f32.mrf.mxu0
    %7863 = vmatprep.mubr.bf16.mxu0 0
    %7864 = vmatmul.mubr.bf16.gmra.mxu0 %v7636
    %v7865 = vpop.f32.mrf.mxu0
    %v7866 = vadd.f32 %v7561, %v7865
    %v7867 = vpop.f32.mrf.mxu0
    %v7868 = vpop.f32.mrf.mxu0
    %v7869 = vadd.f32 %v7561, %v7868
    %v7870 = vpop.f32.mrf.mxu0
    %7871 = vmatprep.mubr.bf16.mxu0 0
    %7872 = vmatmul.mubr.bf16.gmra.mxu0 %v7639
    %v7873 = vpop.f32.mrf.mxu0
    %v7874 = vadd.f32 %v7561, %v7873
    %v7875 = vpop.f32.mrf.mxu0
    %v7876 = vpop.f32.mrf.mxu0
    %v7877 = vadd.f32 %v7561, %v7876
    %v7878 = vpop.f32.mrf.mxu0
    %7879 = vmatprep.mubr.bf16.mxu0 0
    %7880 = vmatmul.mubr.bf16.gmra.mxu0 %v7642
    %v7881 = vpop.f32.mrf.mxu0
    %v7882 = vadd.f32 %v7561, %v7881
    %v7883 = vpop.f32.mrf.mxu0
    %v7884 = vpop.f32.mrf.mxu0
    %v7885 = vadd.f32 %v7561, %v7884
    %v7886 = vpop.f32.mrf.mxu0
    %7887 = vmatprep.mubr.bf16.mxu0 0
    %7888 = vmatmul.mubr.bf16.gmra.mxu0 %v7645
    %v7889 = vpop.f32.mrf.mxu0
    %v7890 = vadd.f32 %v7561, %v7889
    %v7891 = vpop.f32.mrf.mxu0
    %v7892 = vpop.f32.mrf.mxu0
    %v7893 = vadd.f32 %v7561, %v7892
    %v7894 = vpop.f32.mrf.mxu0
    %7895 = vmatprep.mubr.bf16.mxu0 0
    %7896 = vmatmul.mubr.bf16.gmra.mxu0 %v7648
    %v7897 = vpop.f32.mrf.mxu0
    %v7898 = vadd.f32 %v7561, %v7897
    %v7899 = vpop.f32.mrf.mxu0
    %v7900 = vpop.f32.mrf.mxu0
    %v7901 = vadd.f32 %v7561, %v7900
    %v7902 = vpop.f32.mrf.mxu0
    %7903 = vmatprep.mubr.bf16.mxu0 0
    %7904 = vmatmul.mubr.bf16.gmra.mxu0 %v7651
    %v7905 = vpop.f32.mrf.mxu0
    %v7906 = vadd.f32 %v7561, %v7905
    %v7907 = vpop.f32.mrf.mxu0
    %v7908 = vpop.f32.mrf.mxu0
    %v7909 = vadd.f32 %v7561, %v7908
    %v7910 = vpop.f32.mrf.mxu0
    %7911 = vmatprep.mubr.bf16.mxu0 0
    %7912 = vmatmul.mubr.bf16.gmra.mxu0 %v7654
    %v7913 = vpop.f32.mrf.mxu0
    %v7914 = vadd.f32 %v7561, %v7913
    %v7915 = vpop.f32.mrf.mxu0
    %v7916 = vpop.f32.mrf.mxu0
    %v7917 = vadd.f32 %v7561, %v7916
    %v7918 = vpop.f32.mrf.mxu0
    %7919 = vmatprep.mubr.bf16.mxu0 0
    %7920 = vmatmul.mubr.bf16.gmra.mxu0 %v7657
    %v7921 = vpop.f32.mrf.mxu0
    %v7922 = vadd.f32 %v7561, %v7921
    %v7923 = vpop.f32.mrf.mxu0
    %v7924 = vpop.f32.mrf.mxu0
    %v7925 = vadd.f32 %v7561, %v7924
    %v7926 = vpop.f32.mrf.mxu0
    %7927 = vmatprep.mubr.bf16.mxu0 0
    %7928 = vmatmul.mubr.bf16.gmra.mxu0 %v7660
    %v7929 = vpop.f32.mrf.mxu0
    %v7930 = vadd.f32 %v7561, %v7929
    %v7931 = vpop.f32.mrf.mxu0
    %v7932 = vpop.f32.mrf.mxu0
    %v7933 = vadd.f32 %v7561, %v7932
    %v7934 = vpop.f32.mrf.mxu0
    %7935 = vmatprep.mubr.bf16.mxu0 0
    %7936 = vmatmul.mubr.bf16.gmra.mxu0 %v7663
    %v7937 = vpop.f32.mrf.mxu0
    %v7938 = vadd.f32 %v7561, %v7937
    %v7939 = vpop.f32.mrf.mxu0
    %v7940 = vpop.f32.mrf.mxu0
    %v7941 = vadd.f32 %v7561, %v7940
    %v7942 = vpop.f32.mrf.mxu0
    %7943 = vmatprep.mubr.bf16.mxu0 0
    %7944 = vmatmul.mubr.bf16.gmra.mxu0 %v7666
    %v7945 = vpop.f32.mrf.mxu0
    %v7946 = vadd.f32 %v7561, %v7945
    %v7947 = vpop.f32.mrf.mxu0
    %v7948 = vpop.f32.mrf.mxu0
    %v7949 = vadd.f32 %v7561, %v7948
    %v7950 = vpop.f32.mrf.mxu0
    %7951 = vmatprep.mubr.bf16.mxu0 0
    %7952 = vmatmul.mubr.bf16.gmra.mxu0 %v7669
    %v7953 = vpop.f32.mrf.mxu0
    %v7954 = vadd.f32 %v7561, %v7953
    %v7955 = vpop.f32.mrf.mxu0
    %v7956 = vpop.f32.mrf.mxu0
    %v7957 = vadd.f32 %v7561, %v7956
    %v7958 = vpop.f32.mrf.mxu0
    %7959 = vdwg.mxu0
    %v7960 = vrot.slane %v7455, 4
    %v7961 = vrot.slane %v7456, 4
    %v7962 = vrot.slane %v7457, 4
    %v7963 = vrot.slane %v7458, 4
    %v7964 = vrot.slane %v7459, 4
    %v7965 = vrot.slane %v7460, 4
    %v7966 = vrot.slane %v7461, 4
    %v7967 = vrot.slane %v7462, 4
    %v7968 = vrot.slane %v7463, 4
    %v7969 = vrot.slane %v7464, 4
    %v7970 = vrot.slane %v7465, 4
    %v7971 = vrot.slane %v7466, 4
    %v7972 = vrot.slane %v7467, 4
    %v7973 = vrot.slane %v7468, 4
    %v7974 = vrot.slane %v7469, 4
    %v7975 = vrot.slane %v7470, 4
    %v7976 = vrot.slane %v7471, 4
    %v7977 = vrot.slane %v7472, 4
    %v7978 = vrot.slane %v7473, 4
    %v7979 = vrot.slane %v7474, 4
    %v7980 = vrot.slane %v7475, 4
    %v7981 = vrot.slane %v7476, 4
    %v7982 = vrot.slane %v7477, 4
    %v7983 = vrot.slane %v7478, 4
    %v7984 = vrot.slane %v7479, 4
    %v7985 = vrot.slane %v7480, 4
    %v7986 = vrot.slane %v7481, 4
    %v7987 = vrot.slane %v7482, 4
    %v7988 = vrot.slane %v7483, 4
    %v7989 = vrot.slane %v7484, 4
    %v7990 = vrot.slane %v7485, 4
    %v7991 = vrot.slane %v7486, 4
    %v7992 = vrot.slane %v7487, 4
    %v7993 = vrot.slane %v7488, 4
    %v7994 = vrot.slane %v7489, 4
    %v7995 = vrot.slane %v7490, 4
    %v7996 = vrot.slane %v7491, 4
    %v7997 = vrot.slane %v7492, 4
    %v7998 = vrot.slane %v7493, 4
    %v7999 = vrot.slane %v7494, 4
    %v8000 = vrot.slane %v7495, 4
    %v8001 = vrot.slane %v7496, 4
    %v8002 = vrot.slane %v7497, 4
    %v8003 = vrot.slane %v7498, 4
    %v8004 = vrot.slane %v7499, 4
    %v8005 = vrot.slane %v7500, 4
    %v8006 = vrot.slane %v7501, 4
    %v8007 = vrot.slane %v7502, 4
    %v8008 = vrot.slane %v7503, 4
    %v8009 = vrot.slane %v7504, 4
    %v8010 = vrot.slane %v7505, 4
    %v8011 = vrot.slane %v7506, 4
    %v8012 = vrot.slane %v7507, 4
    %v8013 = vrot.slane %v7508, 4
    %v8014 = vrot.slane %v7509, 4
    %v8015 = vrot.slane %v7510, 4
    %v8016 = vrot.slane %v7511, 4
    %v8017 = vrot.slane %v7512, 4
    %v8018 = vrot.slane %v7513, 4
    %v8019 = vrot.slane %v7514, 4
    %v8020 = vrot.slane %v7515, 4
    %v8021 = vrot.slane %v7516, 4
    %v8022 = vrot.slane %v7517, 4
    %v8023 = vrot.slane %v7518, 4
    %v8024 = vsel %vm6139, %v8022, %v8023
    %v8025 = vsel %vm6139, %v8021, %v8022
    %v8026 = vsel %vm6139, %v8020, %v8021
    %v8027 = vsel %vm6139, %v8019, %v8020
    %v8028 = vsel %vm6139, %v8018, %v8019
    %v8029 = vsel %vm6139, %v8017, %v8018
    %v8030 = vsel %vm6139, %v8016, %v8017
    %v8031 = vsel %vm6139, %v8015, %v8016
    %v8032 = vsel %vm6139, %v8014, %v8015
    %v8033 = vsel %vm6139, %v8013, %v8014
    %v8034 = vsel %vm6139, %v8012, %v8013
    %v8035 = vsel %vm6139, %v8011, %v8012
    %v8036 = vsel %vm6139, %v8010, %v8011
    %v8037 = vsel %vm6139, %v8009, %v8010
    %v8038 = vsel %vm6139, %v8008, %v8009
    %v8039 = vsel %vm6139, %v8007, %v8008
    %v8040 = vsel %vm6139, %v8006, %v8007
    %v8041 = vsel %vm6139, %v8005, %v8006
    %v8042 = vsel %vm6139, %v8004, %v8005
    %v8043 = vsel %vm6139, %v8003, %v8004
    %v8044 = vsel %vm6139, %v8002, %v8003
    %v8045 = vsel %vm6139, %v8001, %v8002
    %v8046 = vsel %vm6139, %v8000, %v8001
    %v8047 = vsel %vm6139, %v7999, %v8000
    %v8048 = vsel %vm6139, %v7998, %v7999
    %v8049 = vsel %vm6139, %v7997, %v7998
    %v8050 = vsel %vm6139, %v7996, %v7997
    %v8051 = vsel %vm6139, %v7995, %v7996
    %v8052 = vsel %vm6139, %v7994, %v7995
    %v8053 = vsel %vm6139, %v7993, %v7994
    %v8054 = vsel %vm6139, %v7992, %v7993
    %v8055 = vsel %vm6139, %v7991, %v7992
    %v8056 = vsel %vm6139, %v7990, %v7991
    %v8057 = vsel %vm6139, %v7989, %v7990
    %v8058 = vsel %vm6139, %v7988, %v7989
    %v8059 = vsel %vm6139, %v7987, %v7988
    %v8060 = vsel %vm6139, %v7986, %v7987
    %v8061 = vsel %vm6139, %v7985, %v7986
    %v8062 = vsel %vm6139, %v7984, %v7985
    %v8063 = vsel %vm6139, %v7983, %v7984
    %v8064 = vsel %vm6139, %v7982, %v7983
    %v8065 = vsel %vm6139, %v7981, %v7982
    %v8066 = vsel %vm6139, %v7980, %v7981
    %v8067 = vsel %vm6139, %v7979, %v7980
    %v8068 = vsel %vm6139, %v7978, %v7979
    %v8069 = vsel %vm6139, %v7977, %v7978
    %v8070 = vsel %vm6139, %v7976, %v7977
    %v8071 = vsel %vm6139, %v7975, %v7976
    %v8072 = vsel %vm6139, %v7974, %v7975
    %v8073 = vsel %vm6139, %v7973, %v7974
    %v8074 = vsel %vm6139, %v7972, %v7973
    %v8075 = vsel %vm6139, %v7971, %v7972
    %v8076 = vsel %vm6139, %v7970, %v7971
    %v8077 = vsel %vm6139, %v7969, %v7970
    %v8078 = vsel %vm6139, %v7968, %v7969
    %v8079 = vsel %vm6139, %v7967, %v7968
    %v8080 = vsel %vm6139, %v7966, %v7967
    %v8081 = vsel %vm6139, %v7965, %v7966
    %v8082 = vsel %vm6139, %v7964, %v7965
    %v8083 = vsel %vm6139, %v7963, %v7964
    %v8084 = vsel %vm6139, %v7962, %v7963
    %v8085 = vsel %vm6139, %v7961, %v7962
    %v8086 = vsel %vm6139, %v7960, %v7961
    %v8087 = vsel %vm6139, %v8023, %v7960
    %v8088 = vmul.f32 %v8087, %v1385
    %v8089 = vmul.f32 %v8086, %v1386
    %v8090 = vmul.f32 %v8085, %v1387
    %v8091 = vmul.f32 %v8084, %v1388
    %v8092 = vmul.f32 %v8083, %v1389
    %v8093 = vmul.f32 %v8082, %v1390
    %v8094 = vmul.f32 %v8081, %v1391
    %v8095 = vmul.f32 %v8080, %v1392
    %v8096 = vmul.f32 %v8079, %v1393
    %v8097 = vmul.f32 %v8078, %v1394
    %v8098 = vmul.f32 %v8077, %v1395
    %v8099 = vmul.f32 %v8076, %v1396
    %v8100 = vmul.f32 %v8075, %v1397
    %v8101 = vmul.f32 %v8074, %v1398
    %v8102 = vmul.f32 %v8073, %v1399
    %v8103 = vmul.f32 %v8072, %v1400
    %v8104 = vmul.f32 %v8071, %v1401
    %v8105 = vmul.f32 %v8070, %v1402
    %v8106 = vmul.f32 %v8069, %v1403
    %v8107 = vmul.f32 %v8068, %v1404
    %v8108 = vmul.f32 %v8067, %v1405
    %v8109 = vmul.f32 %v8066, %v1406
    %v8110 = vmul.f32 %v8065, %v1407
    %v8111 = vmul.f32 %v8064, %v1408
    %v8112 = vmul.f32 %v8063, %v1409
    %v8113 = vmul.f32 %v8062, %v1410
    %v8114 = vmul.f32 %v8061, %v1411
    %v8115 = vmul.f32 %v8060, %v1412
    %v8116 = vmul.f32 %v8059, %v1413
    %v8117 = vmul.f32 %v8058, %v1414
    %v8118 = vmul.f32 %v8057, %v1415
    %v8119 = vmul.f32 %v8056, %v1416
    %v8120 = vmul.f32 %v8055, %v1417
    %v8121 = vmul.f32 %v8054, %v1418
    %v8122 = vmul.f32 %v8053, %v1419
    %v8123 = vmul.f32 %v8052, %v1420
    %v8124 = vmul.f32 %v8051, %v1421
    %v8125 = vmul.f32 %v8050, %v1422
    %v8126 = vmul.f32 %v8049, %v1423
    %v8127 = vmul.f32 %v8048, %v1424
    %v8128 = vmul.f32 %v8047, %v1425
    %v8129 = vmul.f32 %v8046, %v1426
    %v8130 = vmul.f32 %v8045, %v1427
    %v8131 = vmul.f32 %v8044, %v1428
    %v8132 = vmul.f32 %v8043, %v1429
    %v8133 = vmul.f32 %v8042, %v1430
    %v8134 = vmul.f32 %v8041, %v1431
    %v8135 = vmul.f32 %v8040, %v1432
    %v8136 = vmul.f32 %v8039, %v1433
    %v8137 = vmul.f32 %v8038, %v1434
    %v8138 = vmul.f32 %v8037, %v1435
    %v8139 = vmul.f32 %v8036, %v1436
    %v8140 = vmul.f32 %v8035, %v1437
    %v8141 = vmul.f32 %v8034, %v1438
    %v8142 = vmul.f32 %v8033, %v1439
    %v8143 = vmul.f32 %v8032, %v1440
    %v8144 = vmul.f32 %v8031, %v1441
    %v8145 = vmul.f32 %v8030, %v1442
    %v8146 = vmul.f32 %v8029, %v1443
    %v8147 = vmul.f32 %v8028, %v1444
    %v8148 = vmul.f32 %v8027, %v1445
    %v8149 = vmul.f32 %v8026, %v1446
    %v8150 = vmul.f32 %v8025, %v1447
    %v8151 = vmul.f32 %v8024, %v1448
    %v8152 = vld [vmem:[%s7] sm:$0xf]
    %v8153 = vld [vmem:[%s7 + $0x4] sm:$0xf]
    %v8154 = vld [vmem:[%s7 + $0x8] sm:$0xf]
    %v8155 = vld [vmem:[%s7 + $0xc] sm:$0xf]
    %v8156 = vpack.c.bf16 %v8089, %v8088
    %v8157 = vpack.c.bf16 %v8091, %v8090
    %v8158 = vpack.c.bf16 %v8093, %v8092
    %v8159 = vpack.c.bf16 %v8095, %v8094
    %v8160 = vpack.c.bf16 %v8097, %v8096
    %v8161 = vpack.c.bf16 %v8099, %v8098
    %v8162 = vpack.c.bf16 %v8101, %v8100
    %v8163 = vpack.c.bf16 %v8103, %v8102
    %v8164 = vpack.c.bf16 %v8105, %v8104
    %v8165 = vpack.c.bf16 %v8107, %v8106
    %v8166 = vpack.c.bf16 %v8109, %v8108
    %v8167 = vpack.c.bf16 %v8111, %v8110
    %v8168 = vpack.c.bf16 %v8113, %v8112
    %v8169 = vpack.c.bf16 %v8115, %v8114
    %v8170 = vpack.c.bf16 %v8117, %v8116
    %v8171 = vpack.c.bf16 %v8119, %v8118
    %v8172 = vpack.c.bf16 %v8121, %v8120
    %v8173 = vpack.c.bf16 %v8123, %v8122
    %v8174 = vpack.c.bf16 %v8125, %v8124
    %v8175 = vpack.c.bf16 %v8127, %v8126
    %v8176 = vpack.c.bf16 %v8129, %v8128
    %v8177 = vpack.c.bf16 %v8131, %v8130
    %v8178 = vpack.c.bf16 %v8133, %v8132
    %v8179 = vpack.c.bf16 %v8135, %v8134
    %v8180 = vpack.c.bf16 %v8137, %v8136
    %v8181 = vpack.c.bf16 %v8139, %v8138
    %v8182 = vpack.c.bf16 %v8141, %v8140
    %v8183 = vpack.c.bf16 %v8143, %v8142
    %v8184 = vpack.c.bf16 %v8145, %v8144
    %v8185 = vpack.c.bf16 %v8147, %v8146
    %v8186 = vpack.c.bf16 %v8149, %v8148
    %v8187 = vpack.c.bf16 %v8151, %v8150
    %v8192 = vunpack.c.l.b16 %v8152
    %v8193 = vunpack.c.l.b16 %v8153
    %v8194 = vunpack.c.l.b16 %v8154
    %v8195 = vunpack.c.l.b16 %v8155
    %v8196 = vpack.c.b16 %v8193, %v8192
    %v8197 = vpack.c.b16 %v8195, %v8194
    %v8201 = vsel %vm3421, %v8156, 0
    %v8204 = vsel %vm3421, %v8157, 0
    %v8207 = vsel %vm3421, %v8158, 0
    %v8210 = vsel %vm3421, %v8159, 0
    %v8213 = vsel %vm3421, %v8160, 0
    %v8216 = vsel %vm3421, %v8161, 0
    %v8219 = vsel %vm3421, %v8162, 0
    %v8222 = vsel %vm3421, %v8163, 0
    %v8225 = vsel %vm3421, %v8164, 0
    %v8228 = vsel %vm3421, %v8165, 0
    %v8231 = vsel %vm3421, %v8166, 0
    %v8234 = vsel %vm3421, %v8167, 0
    %v8237 = vsel %vm3421, %v8168, 0
    %v8240 = vsel %vm3421, %v8169, 0
    %v8243 = vsel %vm3421, %v8170, 0
    %v8246 = vsel %vm3421, %v8171, 0
    %v8249 = vsel %vm3421, %v8172, 0
    %v8252 = vsel %vm3421, %v8173, 0
    %v8255 = vsel %vm3421, %v8174, 0
    %v8258 = vsel %vm3421, %v8175, 0
    %v8261 = vsel %vm3421, %v8176, 0
    %v8264 = vsel %vm3421, %v8177, 0
    %v8267 = vsel %vm3421, %v8178, 0
    %v8270 = vsel %vm3421, %v8179, 0
    %v8273 = vsel %vm3421, %v8180, 0
    %v8276 = vsel %vm3421, %v8181, 0
    %v8279 = vsel %vm3421, %v8182, 0
    %v8282 = vsel %vm3421, %v8183, 0
    %v8285 = vsel %vm3421, %v8184, 0
    %v8288 = vsel %vm3421, %v8185, 0
    %v8291 = vsel %vm3421, %v8186, 0
    %v8294 = vsel %vm3421, %v8187, 0
    %8296 = vmatprep.subr.bf16.mxu0 0
    %8297 = vmatpush1.bf16.msra.mxu0 0
    %8298 = vmatprep.subr.bf16.mxu0 0
    %8299 = vmatpush1.bf16.msra.mxu0 0
    %8300 = vmatprep.subr.bf16.mxu0 0
    %8301 = vmatpush1.bf16.msra.mxu0 0
    %8302 = vmatprep.subr.bf16.mxu0 0
    %8303 = vmatpush1.bf16.msra.mxu0 0
    %8304 = vmatprep.subr.bf16.mxu0 0
    %8305 = vmatpush1.bf16.msra.mxu0 0
    %8306 = vmatprep.subr.bf16.mxu0 0
    %8307 = vmatpush1.bf16.msra.mxu0 0
    %8308 = vmatprep.subr.bf16.mxu0 0
    %8309 = vmatpush1.bf16.msra.mxu0 %v8197
    %8310 = vmatprep.subr.bf16.mxu0 0
    %8311 = vmatpush1.bf16.msra.mxu0 %v8196
    %8312 = vmatprep.subr.bf16.mxu0 0
    %8313 = vmatpush2.bf16.msra.mxu0 0
    %8314 = vmatprep.subr.bf16.mxu0 0
    %8315 = vmatpush2.bf16.msra.mxu0 0
    %8316 = vmatprep.subr.bf16.mxu0 0
    %8317 = vmatpush2.bf16.msra.mxu0 0
    %8318 = vmatprep.subr.bf16.mxu0 0
    %8319 = vmatpush2.bf16.msra.mxu0 0
    %8320 = vmatprep.subr.bf16.mxu0 0
    %8321 = vmatpush2.bf16.msra.mxu0 0
    %8322 = vmatprep.subr.bf16.mxu0 0
    %8323 = vmatpush2.bf16.msra.mxu0 0
    %8324 = vmatprep.subr.bf16.mxu0 0
    %8325 = vmatpush2.bf16.msra.mxu0 0
    %8326 = vmatprep.subr.bf16.mxu0 0
    %8327 = vmatpush2.bf16.msra.mxu0 0
    %8328 = vmatprep.mubr.bf16.mxu0 0
    %8329 = vmatmul.mubr.bf16.gmra.mxu0 %v8201
    %v8330 = vpop.f32.mrf.mxu0
    %v8331 = vadd.f32 0.0, %v8330
    %v8332 = vpop.f32.mrf.mxu0
    %v8333 = vpop.f32.mrf.mxu0
    %v8334 = vadd.f32 0.0, %v8333
    %v8335 = vpop.f32.mrf.mxu0
    %8336 = vmatprep.mubr.bf16.mxu0 0
    %8337 = vmatmul.mubr.bf16.gmra.mxu0 %v8204
    %v8338 = vpop.f32.mrf.mxu0
    %v8339 = vadd.f32 0.0, %v8338
    %v8340 = vpop.f32.mrf.mxu0
    %v8341 = vpop.f32.mrf.mxu0
    %v8342 = vadd.f32 0.0, %v8341
    %v8343 = vpop.f32.mrf.mxu0
    %8344 = vmatprep.mubr.bf16.mxu0 0
    %8345 = vmatmul.mubr.bf16.gmra.mxu0 %v8207
    %v8346 = vpop.f32.mrf.mxu0
    %v8347 = vadd.f32 0.0, %v8346
    %v8348 = vpop.f32.mrf.mxu0
    %v8349 = vpop.f32.mrf.mxu0
    %v8350 = vadd.f32 0.0, %v8349
    %v8351 = vpop.f32.mrf.mxu0
    %8352 = vmatprep.mubr.bf16.mxu0 0
    %8353 = vmatmul.mubr.bf16.gmra.mxu0 %v8210
    %v8354 = vpop.f32.mrf.mxu0
    %v8355 = vadd.f32 0.0, %v8354
    %v8356 = vpop.f32.mrf.mxu0
    %v8357 = vpop.f32.mrf.mxu0
    %v8358 = vadd.f32 0.0, %v8357
    %v8359 = vpop.f32.mrf.mxu0
    %8360 = vmatprep.mubr.bf16.mxu0 0
    %8361 = vmatmul.mubr.bf16.gmra.mxu0 %v8213
    %v8362 = vpop.f32.mrf.mxu0
    %v8363 = vadd.f32 0.0, %v8362
    %v8364 = vpop.f32.mrf.mxu0
    %v8365 = vpop.f32.mrf.mxu0
    %v8366 = vadd.f32 0.0, %v8365
    %v8367 = vpop.f32.mrf.mxu0
    %8368 = vmatprep.mubr.bf16.mxu0 0
    %8369 = vmatmul.mubr.bf16.gmra.mxu0 %v8216
    %v8370 = vpop.f32.mrf.mxu0
    %v8371 = vadd.f32 0.0, %v8370
    %v8372 = vpop.f32.mrf.mxu0
    %v8373 = vpop.f32.mrf.mxu0
    %v8374 = vadd.f32 0.0, %v8373
    %v8375 = vpop.f32.mrf.mxu0
    %8376 = vmatprep.mubr.bf16.mxu0 0
    %8377 = vmatmul.mubr.bf16.gmra.mxu0 %v8219
    %v8378 = vpop.f32.mrf.mxu0
    %v8379 = vadd.f32 0.0, %v8378
    %v8380 = vpop.f32.mrf.mxu0
    %v8381 = vpop.f32.mrf.mxu0
    %v8382 = vadd.f32 0.0, %v8381
    %v8383 = vpop.f32.mrf.mxu0
    %8384 = vmatprep.mubr.bf16.mxu0 0
    %8385 = vmatmul.mubr.bf16.gmra.mxu0 %v8222
    %v8386 = vpop.f32.mrf.mxu0
    %v8387 = vadd.f32 0.0, %v8386
    %v8388 = vpop.f32.mrf.mxu0
    %v8389 = vpop.f32.mrf.mxu0
    %v8390 = vadd.f32 0.0, %v8389
    %v8391 = vpop.f32.mrf.mxu0
    %8392 = vmatprep.mubr.bf16.mxu0 0
    %8393 = vmatmul.mubr.bf16.gmra.mxu0 %v8225
    %v8394 = vpop.f32.mrf.mxu0
    %v8395 = vadd.f32 0.0, %v8394
    %v8396 = vpop.f32.mrf.mxu0
    %v8397 = vpop.f32.mrf.mxu0
    %v8398 = vadd.f32 0.0, %v8397
    %v8399 = vpop.f32.mrf.mxu0
    %8400 = vmatprep.mubr.bf16.mxu0 0
    %8401 = vmatmul.mubr.bf16.gmra.mxu0 %v8228
    %v8402 = vpop.f32.mrf.mxu0
    %v8403 = vadd.f32 0.0, %v8402
    %v8404 = vpop.f32.mrf.mxu0
    %v8405 = vpop.f32.mrf.mxu0
    %v8406 = vadd.f32 0.0, %v8405
    %v8407 = vpop.f32.mrf.mxu0
    %8408 = vmatprep.mubr.bf16.mxu0 0
    %8409 = vmatmul.mubr.bf16.gmra.mxu0 %v8231
    %v8410 = vpop.f32.mrf.mxu0
    %v8411 = vadd.f32 0.0, %v8410
    %v8412 = vpop.f32.mrf.mxu0
    %v8413 = vpop.f32.mrf.mxu0
    %v8414 = vadd.f32 0.0, %v8413
    %v8415 = vpop.f32.mrf.mxu0
    %8416 = vmatprep.mubr.bf16.mxu0 0
    %8417 = vmatmul.mubr.bf16.gmra.mxu0 %v8234
    %v8418 = vpop.f32.mrf.mxu0
    %v8419 = vadd.f32 0.0, %v8418
    %v8420 = vpop.f32.mrf.mxu0
    %v8421 = vpop.f32.mrf.mxu0
    %v8422 = vadd.f32 0.0, %v8421
    %v8423 = vpop.f32.mrf.mxu0
    %8424 = vmatprep.mubr.bf16.mxu0 0
    %8425 = vmatmul.mubr.bf16.gmra.mxu0 %v8237
    %v8426 = vpop.f32.mrf.mxu0
    %v8427 = vadd.f32 0.0, %v8426
    %v8428 = vpop.f32.mrf.mxu0
    %v8429 = vpop.f32.mrf.mxu0
    %v8430 = vadd.f32 0.0, %v8429
    %v8431 = vpop.f32.mrf.mxu0
    %8432 = vmatprep.mubr.bf16.mxu0 0
    %8433 = vmatmul.mubr.bf16.gmra.mxu0 %v8240
    %v8434 = vpop.f32.mrf.mxu0
    %v8435 = vadd.f32 0.0, %v8434
    %v8436 = vpop.f32.mrf.mxu0
    %v8437 = vpop.f32.mrf.mxu0
    %v8438 = vadd.f32 0.0, %v8437
    %v8439 = vpop.f32.mrf.mxu0
    %8440 = vmatprep.mubr.bf16.mxu0 0
    %8441 = vmatmul.mubr.bf16.gmra.mxu0 %v8243
    %v8442 = vpop.f32.mrf.mxu0
    %v8443 = vadd.f32 0.0, %v8442
    %v8444 = vpop.f32.mrf.mxu0
    %v8445 = vpop.f32.mrf.mxu0
    %v8446 = vadd.f32 0.0, %v8445
    %v8447 = vpop.f32.mrf.mxu0
    %8448 = vmatprep.mubr.bf16.mxu0 0
    %8449 = vmatmul.mubr.bf16.gmra.mxu0 %v8246
    %v8450 = vpop.f32.mrf.mxu0
    %v8451 = vadd.f32 0.0, %v8450
    %v8452 = vpop.f32.mrf.mxu0
    %v8453 = vpop.f32.mrf.mxu0
    %v8454 = vadd.f32 0.0, %v8453
    %v8455 = vpop.f32.mrf.mxu0
    %8456 = vmatprep.mubr.bf16.mxu0 0
    %8457 = vmatmul.mubr.bf16.gmra.mxu0 %v8249
    %v8458 = vpop.f32.mrf.mxu0
    %v8459 = vadd.f32 0.0, %v8458
    %v8460 = vpop.f32.mrf.mxu0
    %v8461 = vpop.f32.mrf.mxu0
    %v8462 = vadd.f32 0.0, %v8461
    %v8463 = vpop.f32.mrf.mxu0
    %8464 = vmatprep.mubr.bf16.mxu0 0
    %8465 = vmatmul.mubr.bf16.gmra.mxu0 %v8252
    %v8466 = vpop.f32.mrf.mxu0
    %v8467 = vadd.f32 0.0, %v8466
    %v8468 = vpop.f32.mrf.mxu0
    %v8469 = vpop.f32.mrf.mxu0
    %v8470 = vadd.f32 0.0, %v8469
    %v8471 = vpop.f32.mrf.mxu0
    %8472 = vmatprep.mubr.bf16.mxu0 0
    %8473 = vmatmul.mubr.bf16.gmra.mxu0 %v8255
    %v8474 = vpop.f32.mrf.mxu0
    %v8475 = vadd.f32 0.0, %v8474
    %v8476 = vpop.f32.mrf.mxu0
    %v8477 = vpop.f32.mrf.mxu0
    %v8478 = vadd.f32 0.0, %v8477
    %v8479 = vpop.f32.mrf.mxu0
    %8480 = vmatprep.mubr.bf16.mxu0 0
    %8481 = vmatmul.mubr.bf16.gmra.mxu0 %v8258
    %v8482 = vpop.f32.mrf.mxu0
    %v8483 = vadd.f32 0.0, %v8482
    %v8484 = vpop.f32.mrf.mxu0
    %v8485 = vpop.f32.mrf.mxu0
    %v8486 = vadd.f32 0.0, %v8485
    %v8487 = vpop.f32.mrf.mxu0
    %8488 = vmatprep.mubr.bf16.mxu0 0
    %8489 = vmatmul.mubr.bf16.gmra.mxu0 %v8261
    %v8490 = vpop.f32.mrf.mxu0
    %v8491 = vadd.f32 0.0, %v8490
    %v8492 = vpop.f32.mrf.mxu0
    %v8493 = vpop.f32.mrf.mxu0
    %v8494 = vadd.f32 0.0, %v8493
    %v8495 = vpop.f32.mrf.mxu0
    %8496 = vmatprep.mubr.bf16.mxu0 0
    %8497 = vmatmul.mubr.bf16.gmra.mxu0 %v8264
    %v8498 = vpop.f32.mrf.mxu0
    %v8499 = vadd.f32 0.0, %v8498
    %v8500 = vpop.f32.mrf.mxu0
    %v8501 = vpop.f32.mrf.mxu0
    %v8502 = vadd.f32 0.0, %v8501
    %v8503 = vpop.f32.mrf.mxu0
    %8504 = vmatprep.mubr.bf16.mxu0 0
    %8505 = vmatmul.mubr.bf16.gmra.mxu0 %v8267
    %v8506 = vpop.f32.mrf.mxu0
    %v8507 = vadd.f32 0.0, %v8506
    %v8508 = vpop.f32.mrf.mxu0
    %v8509 = vpop.f32.mrf.mxu0
    %v8510 = vadd.f32 0.0, %v8509
    %v8511 = vpop.f32.mrf.mxu0
    %8512 = vmatprep.mubr.bf16.mxu0 0
    %8513 = vmatmul.mubr.bf16.gmra.mxu0 %v8270
    %v8514 = vpop.f32.mrf.mxu0
    %v8515 = vadd.f32 0.0, %v8514
    %v8516 = vpop.f32.mrf.mxu0
    %v8517 = vpop.f32.mrf.mxu0
    %v8518 = vadd.f32 0.0, %v8517
    %v8519 = vpop.f32.mrf.mxu0
    %8520 = vmatprep.mubr.bf16.mxu0 0
    %8521 = vmatmul.mubr.bf16.gmra.mxu0 %v8273
    %v8522 = vpop.f32.mrf.mxu0
    %v8523 = vadd.f32 0.0, %v8522
    %v8524 = vpop.f32.mrf.mxu0
    %v8525 = vpop.f32.mrf.mxu0
    %v8526 = vadd.f32 0.0, %v8525
    %v8527 = vpop.f32.mrf.mxu0
    %8528 = vmatprep.mubr.bf16.mxu0 0
    %8529 = vmatmul.mubr.bf16.gmra.mxu0 %v8276
    %v8530 = vpop.f32.mrf.mxu0
    %v8531 = vadd.f32 0.0, %v8530
    %v8532 = vpop.f32.mrf.mxu0
    %v8533 = vpop.f32.mrf.mxu0
    %v8534 = vadd.f32 0.0, %v8533
    %v8535 = vpop.f32.mrf.mxu0
    %8536 = vmatprep.mubr.bf16.mxu0 0
    %8537 = vmatmul.mubr.bf16.gmra.mxu0 %v8279
    %v8538 = vpop.f32.mrf.mxu0
    %v8539 = vadd.f32 0.0, %v8538
    %v8540 = vpop.f32.mrf.mxu0
    %v8541 = vpop.f32.mrf.mxu0
    %v8542 = vadd.f32 0.0, %v8541
    %v8543 = vpop.f32.mrf.mxu0
    %8544 = vmatprep.mubr.bf16.mxu0 0
    %8545 = vmatmul.mubr.bf16.gmra.mxu0 %v8282
    %v8546 = vpop.f32.mrf.mxu0
    %v8547 = vadd.f32 0.0, %v8546
    %v8548 = vpop.f32.mrf.mxu0
    %v8549 = vpop.f32.mrf.mxu0
    %v8550 = vadd.f32 0.0, %v8549
    %v8551 = vpop.f32.mrf.mxu0
    %8552 = vmatprep.mubr.bf16.mxu0 0
    %8553 = vmatmul.mubr.bf16.gmra.mxu0 %v8285
    %v8554 = vpop.f32.mrf.mxu0
    %v8555 = vadd.f32 0.0, %v8554
    %v8556 = vpop.f32.mrf.mxu0
    %v8557 = vpop.f32.mrf.mxu0
    %v8558 = vadd.f32 0.0, %v8557
    %v8559 = vpop.f32.mrf.mxu0
    %8560 = vmatprep.mubr.bf16.mxu0 0
    %8561 = vmatmul.mubr.bf16.gmra.mxu0 %v8288
    %v8562 = vpop.f32.mrf.mxu0
    %v8563 = vadd.f32 0.0, %v8562
    %v8564 = vpop.f32.mrf.mxu0
    %v8565 = vpop.f32.mrf.mxu0
    %v8566 = vadd.f32 0.0, %v8565
    %v8567 = vpop.f32.mrf.mxu0
    %8568 = vmatprep.mubr.bf16.mxu0 0
    %8569 = vmatmul.mubr.bf16.gmra.mxu0 %v8291
    %v8570 = vpop.f32.mrf.mxu0
    %v8571 = vadd.f32 0.0, %v8570
    %v8572 = vpop.f32.mrf.mxu0
    %v8573 = vpop.f32.mrf.mxu0
    %v8574 = vadd.f32 0.0, %v8573
    %v8575 = vpop.f32.mrf.mxu0
    %8576 = vmatprep.mubr.bf16.mxu0 0
    %8577 = vmatmul.mubr.bf16.gmra.mxu0 %v8294
    %v8578 = vpop.f32.mrf.mxu0
    %v8579 = vadd.f32 0.0, %v8578
    %v8580 = vpop.f32.mrf.mxu0
    %v8581 = vpop.f32.mrf.mxu0
    %v8582 = vadd.f32 0.0, %v8581
    %v8583 = vpop.f32.mrf.mxu0
    %8584 = vdwg.mxu0
    %v8585 = vadd.f32 %v7706, %v8331
    %v8586 = vadd.f32 %v7709, %v8334
    %v8587 = vadd.f32 %v7714, %v8339
    %v8588 = vadd.f32 %v7717, %v8342
    %v8589 = vadd.f32 %v7722, %v8347
    %v8590 = vadd.f32 %v7725, %v8350
    %v8591 = vadd.f32 %v7730, %v8355
    %v8592 = vadd.f32 %v7733, %v8358
    %v8593 = vadd.f32 %v7738, %v8363
    %v8594 = vadd.f32 %v7741, %v8366
    %v8595 = vadd.f32 %v7746, %v8371
    %v8596 = vadd.f32 %v7749, %v8374
    %v8597 = vadd.f32 %v7754, %v8379
    %v8598 = vadd.f32 %v7757, %v8382
    %v8599 = vadd.f32 %v7762, %v8387
    %v8600 = vadd.f32 %v7765, %v8390
    %v8601 = vadd.f32 %v7770, %v8395
    %v8602 = vadd.f32 %v7773, %v8398
    %v8603 = vadd.f32 %v7778, %v8403
    %v8604 = vadd.f32 %v7781, %v8406
    %v8605 = vadd.f32 %v7786, %v8411
    %v8606 = vadd.f32 %v7789, %v8414
    %v8607 = vadd.f32 %v7794, %v8419
    %v8608 = vadd.f32 %v7797, %v8422
    %v8609 = vadd.f32 %v7802, %v8427
    %v8610 = vadd.f32 %v7805, %v8430
    %v8611 = vadd.f32 %v7810, %v8435
    %v8612 = vadd.f32 %v7813, %v8438
    %v8613 = vadd.f32 %v7818, %v8443
    %v8614 = vadd.f32 %v7821, %v8446
    %v8615 = vadd.f32 %v7826, %v8451
    %v8616 = vadd.f32 %v7829, %v8454
    %v8617 = vadd.f32 %v7834, %v8459
    %v8618 = vadd.f32 %v7837, %v8462
    %v8619 = vadd.f32 %v7842, %v8467
    %v8620 = vadd.f32 %v7845, %v8470
    %v8621 = vadd.f32 %v7850, %v8475
    %v8622 = vadd.f32 %v7853, %v8478
    %v8623 = vadd.f32 %v7858, %v8483
    %v8624 = vadd.f32 %v7861, %v8486
    %v8625 = vadd.f32 %v7866, %v8491
    %v8626 = vadd.f32 %v7869, %v8494
    %v8627 = vadd.f32 %v7874, %v8499
    %v8628 = vadd.f32 %v7877, %v8502
    %v8629 = vadd.f32 %v7882, %v8507
    %v8630 = vadd.f32 %v7885, %v8510
    %v8631 = vadd.f32 %v7890, %v8515
    %v8632 = vadd.f32 %v7893, %v8518
    %v8633 = vadd.f32 %v7898, %v8523
    %v8634 = vadd.f32 %v7901, %v8526
    %v8635 = vadd.f32 %v7906, %v8531
    %v8636 = vadd.f32 %v7909, %v8534
    %v8637 = vadd.f32 %v7914, %v8539
    %v8638 = vadd.f32 %v7917, %v8542
    %v8639 = vadd.f32 %v7922, %v8547
    %v8640 = vadd.f32 %v7925, %v8550
    %v8641 = vadd.f32 %v7930, %v8555
    %v8642 = vadd.f32 %v7933, %v8558
    %v8643 = vadd.f32 %v7938, %v8563
    %v8644 = vadd.f32 %v7941, %v8566
    %v8645 = vadd.f32 %v7946, %v8571
    %v8646 = vadd.f32 %v7949, %v8574
    %v8647 = vadd.f32 %v7954, %v8579
    %v8648 = vadd.f32 %v7957, %v8582
    %v8649 = vrot.slane %v7455, 6
    %v8650 = vrot.slane %v7456, 6
    %v8651 = vrot.slane %v7457, 6
    %v8652 = vrot.slane %v7458, 6
    %v8653 = vrot.slane %v7459, 6
    %v8654 = vrot.slane %v7460, 6
    %v8655 = vrot.slane %v7461, 6
    %v8656 = vrot.slane %v7462, 6
    %v8657 = vrot.slane %v7463, 6
    %v8658 = vrot.slane %v7464, 6
    %v8659 = vrot.slane %v7465, 6
    %v8660 = vrot.slane %v7466, 6
    %v8661 = vrot.slane %v7467, 6
    %v8662 = vrot.slane %v7468, 6
    %v8663 = vrot.slane %v7469, 6
    %v8664 = vrot.slane %v7470, 6
    %v8665 = vrot.slane %v7471, 6
    %v8666 = vrot.slane %v7472, 6
    %v8667 = vrot.slane %v7473, 6
    %v8668 = vrot.slane %v7474, 6
    %v8669 = vrot.slane %v7475, 6
    %v8670 = vrot.slane %v7476, 6
    %v8671 = vrot.slane %v7477, 6
    %v8672 = vrot.slane %v7478, 6
    %v8673 = vrot.slane %v7479, 6
    %v8674 = vrot.slane %v7480, 6
    %v8675 = vrot.slane %v7481, 6
    %v8676 = vrot.slane %v7482, 6
    %v8677 = vrot.slane %v7483, 6
    %v8678 = vrot.slane %v7484, 6
    %v8679 = vrot.slane %v7485, 6
    %v8680 = vrot.slane %v7486, 6
    %v8681 = vrot.slane %v7487, 6
    %v8682 = vrot.slane %v7488, 6
    %v8683 = vrot.slane %v7489, 6
    %v8684 = vrot.slane %v7490, 6
    %v8685 = vrot.slane %v7491, 6
    %v8686 = vrot.slane %v7492, 6
    %v8687 = vrot.slane %v7493, 6
    %v8688 = vrot.slane %v7494, 6
    %v8689 = vrot.slane %v7495, 6
    %v8690 = vrot.slane %v7496, 6
    %v8691 = vrot.slane %v7497, 6
    %v8692 = vrot.slane %v7498, 6
    %v8693 = vrot.slane %v7499, 6
    %v8694 = vrot.slane %v7500, 6
    %v8695 = vrot.slane %v7501, 6
    %v8696 = vrot.slane %v7502, 6
    %v8697 = vrot.slane %v7503, 6
    %v8698 = vrot.slane %v7504, 6
    %v8699 = vrot.slane %v7505, 6
    %v8700 = vrot.slane %v7506, 6
    %v8701 = vrot.slane %v7507, 6
    %v8702 = vrot.slane %v7508, 6
    %v8703 = vrot.slane %v7509, 6
    %v8704 = vrot.slane %v7510, 6
    %v8705 = vrot.slane %v7511, 6
    %v8706 = vrot.slane %v7512, 6
    %v8707 = vrot.slane %v7513, 6
    %v8708 = vrot.slane %v7514, 6
    %v8709 = vrot.slane %v7515, 6
    %v8710 = vrot.slane %v7516, 6
    %v8711 = vrot.slane %v7517, 6
    %v8712 = vrot.slane %v7518, 6
    %v8713 = vsel %vm2008, %v8711, %v8712
    %v8714 = vsel %vm2008, %v8710, %v8711
    %v8715 = vsel %vm2008, %v8709, %v8710
    %v8716 = vsel %vm2008, %v8708, %v8709
    %v8717 = vsel %vm2008, %v8707, %v8708
    %v8718 = vsel %vm2008, %v8706, %v8707
    %v8719 = vsel %vm2008, %v8705, %v8706
    %v8720 = vsel %vm2008, %v8704, %v8705
    %v8721 = vsel %vm2008, %v8703, %v8704
    %v8722 = vsel %vm2008, %v8702, %v8703
    %v8723 = vsel %vm2008, %v8701, %v8702
    %v8724 = vsel %vm2008, %v8700, %v8701
    %v8725 = vsel %vm2008, %v8699, %v8700
    %v8726 = vsel %vm2008, %v8698, %v8699
    %v8727 = vsel %vm2008, %v8697, %v8698
    %v8728 = vsel %vm2008, %v8696, %v8697
    %v8729 = vsel %vm2008, %v8695, %v8696
    %v8730 = vsel %vm2008, %v8694, %v8695
    %v8731 = vsel %vm2008, %v8693, %v8694
    %v8732 = vsel %vm2008, %v8692, %v8693
    %v8733 = vsel %vm2008, %v8691, %v8692
    %v8734 = vsel %vm2008, %v8690, %v8691
    %v8735 = vsel %vm2008, %v8689, %v8690
    %v8736 = vsel %vm2008, %v8688, %v8689
    %v8737 = vsel %vm2008, %v8687, %v8688
    %v8738 = vsel %vm2008, %v8686, %v8687
    %v8739 = vsel %vm2008, %v8685, %v8686
    %v8740 = vsel %vm2008, %v8684, %v8685
    %v8741 = vsel %vm2008, %v8683, %v8684
    %v8742 = vsel %vm2008, %v8682, %v8683
    %v8743 = vsel %vm2008, %v8681, %v8682
    %v8744 = vsel %vm2008, %v8680, %v8681
    %v8745 = vsel %vm2008, %v8679, %v8680
    %v8746 = vsel %vm2008, %v8678, %v8679
    %v8747 = vsel %vm2008, %v8677, %v8678
    %v8748 = vsel %vm2008, %v8676, %v8677
    %v8749 = vsel %vm2008, %v8675, %v8676
    %v8750 = vsel %vm2008, %v8674, %v8675
    %v8751 = vsel %vm2008, %v8673, %v8674
    %v8752 = vsel %vm2008, %v8672, %v8673
    %v8753 = vsel %vm2008, %v8671, %v8672
    %v8754 = vsel %vm2008, %v8670, %v8671
    %v8755 = vsel %vm2008, %v8669, %v8670
    %v8756 = vsel %vm2008, %v8668, %v8669
    %v8757 = vsel %vm2008, %v8667, %v8668
    %v8758 = vsel %vm2008, %v8666, %v8667
    %v8759 = vsel %vm2008, %v8665, %v8666
    %v8760 = vsel %vm2008, %v8664, %v8665
    %v8761 = vsel %vm2008, %v8663, %v8664
    %v8762 = vsel %vm2008, %v8662, %v8663
    %v8763 = vsel %vm2008, %v8661, %v8662
    %v8764 = vsel %vm2008, %v8660, %v8661
    %v8765 = vsel %vm2008, %v8659, %v8660
    %v8766 = vsel %vm2008, %v8658, %v8659
    %v8767 = vsel %vm2008, %v8657, %v8658
    %v8768 = vsel %vm2008, %v8656, %v8657
    %v8769 = vsel %vm2008, %v8655, %v8656
    %v8770 = vsel %vm2008, %v8654, %v8655
    %v8771 = vsel %vm2008, %v8653, %v8654
    %v8772 = vsel %vm2008, %v8652, %v8653
    %v8773 = vsel %vm2008, %v8651, %v8652
    %v8774 = vsel %vm2008, %v8650, %v8651
    %v8775 = vsel %vm2008, %v8649, %v8650
    %v8776 = vsel %vm2008, %v8712, %v8649
    %v8777 = vmul.f32 %v8776, %v1193
    %v8778 = vmul.f32 %v8775, %v1194
    %v8779 = vmul.f32 %v8774, %v1195
    %v8780 = vmul.f32 %v8773, %v1196
    %v8781 = vmul.f32 %v8772, %v1197
    %v8782 = vmul.f32 %v8771, %v1198
    %v8783 = vmul.f32 %v8770, %v1199
    %v8784 = vmul.f32 %v8769, %v1200
    %v8785 = vmul.f32 %v8768, %v1201
    %v8786 = vmul.f32 %v8767, %v1202
    %v8787 = vmul.f32 %v8766, %v1203
    %v8788 = vmul.f32 %v8765, %v1204
    %v8789 = vmul.f32 %v8764, %v1205
    %v8790 = vmul.f32 %v8763, %v1206
    %v8791 = vmul.f32 %v8762, %v1207
    %v8792 = vmul.f32 %v8761, %v1208
    %v8793 = vmul.f32 %v8760, %v1209
    %v8794 = vmul.f32 %v8759, %v1210
    %v8795 = vmul.f32 %v8758, %v1211
    %v8796 = vmul.f32 %v8757, %v1212
    %v8797 = vmul.f32 %v8756, %v1213
    %v8798 = vmul.f32 %v8755, %v1214
    %v8799 = vmul.f32 %v8754, %v1215
    %v8800 = vmul.f32 %v8753, %v1216
    %v8801 = vmul.f32 %v8752, %v1217
    %v8802 = vmul.f32 %v8751, %v1218
    %v8803 = vmul.f32 %v8750, %v1219
    %v8804 = vmul.f32 %v8749, %v1220
    %v8805 = vmul.f32 %v8748, %v1221
    %v8806 = vmul.f32 %v8747, %v1222
    %v8807 = vmul.f32 %v8746, %v1223
    %v8808 = vmul.f32 %v8745, %v1224
    %v8809 = vmul.f32 %v8744, %v1225
    %v8810 = vmul.f32 %v8743, %v1226
    %v8811 = vmul.f32 %v8742, %v1227
    %v8812 = vmul.f32 %v8741, %v1228
    %v8813 = vmul.f32 %v8740, %v1229
    %v8814 = vmul.f32 %v8739, %v1230
    %v8815 = vmul.f32 %v8738, %v1231
    %v8816 = vmul.f32 %v8737, %v1232
    %v8817 = vmul.f32 %v8736, %v1233
    %v8818 = vmul.f32 %v8735, %v1234
    %v8819 = vmul.f32 %v8734, %v1235
    %v8820 = vmul.f32 %v8733, %v1236
    %v8821 = vmul.f32 %v8732, %v1237
    %v8822 = vmul.f32 %v8731, %v1238
    %v8823 = vmul.f32 %v8730, %v1239
    %v8824 = vmul.f32 %v8729, %v1240
    %v8825 = vmul.f32 %v8728, %v1241
    %v8826 = vmul.f32 %v8727, %v1242
    %v8827 = vmul.f32 %v8726, %v1243
    %v8828 = vmul.f32 %v8725, %v1244
    %v8829 = vmul.f32 %v8724, %v1245
    %v8830 = vmul.f32 %v8723, %v1246
    %v8831 = vmul.f32 %v8722, %v1247
    %v8832 = vmul.f32 %v8721, %v1248
    %v8833 = vmul.f32 %v8720, %v1249
    %v8834 = vmul.f32 %v8719, %v1250
    %v8835 = vmul.f32 %v8718, %v1251
    %v8836 = vmul.f32 %v8717, %v1252
    %v8837 = vmul.f32 %v8716, %v1253
    %v8838 = vmul.f32 %v8715, %v1254
    %v8839 = vmul.f32 %v8714, %v1255
    %v8840 = vmul.f32 %v8713, %v1256
    %s8841 = scalar_lea.vmem %s7, 16
    %v8842 = vld [vmem:[%s8841] sm:$0xf]
    %v8843 = vld [vmem:[%s8841 + $0x4] sm:$0xf]
    %v8844 = vld [vmem:[%s8841 + $0x8] sm:$0xf]
    %v8845 = vld [vmem:[%s8841 + $0xc] sm:$0xf]
    %v8846 = vpack.c.bf16 %v8778, %v8777
    %v8847 = vpack.c.bf16 %v8780, %v8779
    %v8848 = vpack.c.bf16 %v8782, %v8781
    %v8849 = vpack.c.bf16 %v8784, %v8783
    %v8850 = vpack.c.bf16 %v8786, %v8785
    %v8851 = vpack.c.bf16 %v8788, %v8787
    %v8852 = vpack.c.bf16 %v8790, %v8789
    %v8853 = vpack.c.bf16 %v8792, %v8791
    %v8854 = vpack.c.bf16 %v8794, %v8793
    %v8855 = vpack.c.bf16 %v8796, %v8795
    %v8856 = vpack.c.bf16 %v8798, %v8797
    %v8857 = vpack.c.bf16 %v8800, %v8799
    %v8858 = vpack.c.bf16 %v8802, %v8801
    %v8859 = vpack.c.bf16 %v8804, %v8803
    %v8860 = vpack.c.bf16 %v8806, %v8805
    %v8861 = vpack.c.bf16 %v8808, %v8807
    %v8862 = vpack.c.bf16 %v8810, %v8809
    %v8863 = vpack.c.bf16 %v8812, %v8811
    %v8864 = vpack.c.bf16 %v8814, %v8813
    %v8865 = vpack.c.bf16 %v8816, %v8815
    %v8866 = vpack.c.bf16 %v8818, %v8817
    %v8867 = vpack.c.bf16 %v8820, %v8819
    %v8868 = vpack.c.bf16 %v8822, %v8821
    %v8869 = vpack.c.bf16 %v8824, %v8823
    %v8870 = vpack.c.bf16 %v8826, %v8825
    %v8871 = vpack.c.bf16 %v8828, %v8827
    %v8872 = vpack.c.bf16 %v8830, %v8829
    %v8873 = vpack.c.bf16 %v8832, %v8831
    %v8874 = vpack.c.bf16 %v8834, %v8833
    %v8875 = vpack.c.bf16 %v8836, %v8835
    %v8876 = vpack.c.bf16 %v8838, %v8837
    %v8877 = vpack.c.bf16 %v8840, %v8839
    %v8882 = vunpack.c.l.b16 %v8842
    %v8883 = vunpack.c.l.b16 %v8843
    %v8884 = vunpack.c.l.b16 %v8844
    %v8885 = vunpack.c.l.b16 %v8845
    %v8886 = vpack.c.b16 %v8883, %v8882
    %v8887 = vpack.c.b16 %v8885, %v8884
    %v8891 = vsel %vm3421, %v8846, 0
    %v8894 = vsel %vm3421, %v8847, 0
    %v8897 = vsel %vm3421, %v8848, 0
    %v8900 = vsel %vm3421, %v8849, 0
    %v8903 = vsel %vm3421, %v8850, 0
    %v8906 = vsel %vm3421, %v8851, 0
    %v8909 = vsel %vm3421, %v8852, 0
    %v8912 = vsel %vm3421, %v8853, 0
    %v8915 = vsel %vm3421, %v8854, 0
    %v8918 = vsel %vm3421, %v8855, 0
    %v8921 = vsel %vm3421, %v8856, 0
    %v8924 = vsel %vm3421, %v8857, 0
    %v8927 = vsel %vm3421, %v8858, 0
    %v8930 = vsel %vm3421, %v8859, 0
    %v8933 = vsel %vm3421, %v8860, 0
    %v8936 = vsel %vm3421, %v8861, 0
    %v8939 = vsel %vm3421, %v8862, 0
    %v8942 = vsel %vm3421, %v8863, 0
    %v8945 = vsel %vm3421, %v8864, 0
    %v8948 = vsel %vm3421, %v8865, 0
    %v8951 = vsel %vm3421, %v8866, 0
    %v8954 = vsel %vm3421, %v8867, 0
    %v8957 = vsel %vm3421, %v8868, 0
    %v8960 = vsel %vm3421, %v8869, 0
    %v8963 = vsel %vm3421, %v8870, 0
    %v8966 = vsel %vm3421, %v8871, 0
    %v8969 = vsel %vm3421, %v8872, 0
    %v8972 = vsel %vm3421, %v8873, 0
    %v8975 = vsel %vm3421, %v8874, 0
    %v8978 = vsel %vm3421, %v8875, 0
    %v8981 = vsel %vm3421, %v8876, 0
    %v8984 = vsel %vm3421, %v8877, 0
    %8986 = vmatprep.subr.bf16.mxu0 0
    %8987 = vmatpush1.bf16.msra.mxu0 0
    %8988 = vmatprep.subr.bf16.mxu0 0
    %8989 = vmatpush1.bf16.msra.mxu0 0
    %8990 = vmatprep.subr.bf16.mxu0 0
    %8991 = vmatpush1.bf16.msra.mxu0 0
    %8992 = vmatprep.subr.bf16.mxu0 0
    %8993 = vmatpush1.bf16.msra.mxu0 0
    %8994 = vmatprep.subr.bf16.mxu0 0
    %8995 = vmatpush1.bf16.msra.mxu0 0
    %8996 = vmatprep.subr.bf16.mxu0 0
    %8997 = vmatpush1.bf16.msra.mxu0 0
    %8998 = vmatprep.subr.bf16.mxu0 0
    %8999 = vmatpush1.bf16.msra.mxu0 %v8887
    %9000 = vmatprep.subr.bf16.mxu0 0
    %9001 = vmatpush1.bf16.msra.mxu0 %v8886
    %9002 = vmatprep.subr.bf16.mxu0 0
    %9003 = vmatpush2.bf16.msra.mxu0 0
    %9004 = vmatprep.subr.bf16.mxu0 0
    %9005 = vmatpush2.bf16.msra.mxu0 0
    %9006 = vmatprep.subr.bf16.mxu0 0
    %9007 = vmatpush2.bf16.msra.mxu0 0
    %9008 = vmatprep.subr.bf16.mxu0 0
    %9009 = vmatpush2.bf16.msra.mxu0 0
    %9010 = vmatprep.subr.bf16.mxu0 0
    %9011 = vmatpush2.bf16.msra.mxu0 0
    %9012 = vmatprep.subr.bf16.mxu0 0
    %9013 = vmatpush2.bf16.msra.mxu0 0
    %9014 = vmatprep.subr.bf16.mxu0 0
    %9015 = vmatpush2.bf16.msra.mxu0 0
    %9016 = vmatprep.subr.bf16.mxu0 0
    %9017 = vmatpush2.bf16.msra.mxu0 0
    %9018 = vmatprep.mubr.bf16.mxu0 0
    %9019 = vmatmul.mubr.bf16.gmra.mxu0 %v8891
    %v9020 = vpop.f32.mrf.mxu0
    %v9021 = vadd.f32 0.0, %v9020
    %v9022 = vpop.f32.mrf.mxu0
    %v9023 = vpop.f32.mrf.mxu0
    %v9024 = vadd.f32 0.0, %v9023
    %v9025 = vpop.f32.mrf.mxu0
    %9026 = vmatprep.mubr.bf16.mxu0 0
    %9027 = vmatmul.mubr.bf16.gmra.mxu0 %v8894
    %v9028 = vpop.f32.mrf.mxu0
    %v9029 = vadd.f32 0.0, %v9028
    %v9030 = vpop.f32.mrf.mxu0
    %v9031 = vpop.f32.mrf.mxu0
    %v9032 = vadd.f32 0.0, %v9031
    %v9033 = vpop.f32.mrf.mxu0
    %9034 = vmatprep.mubr.bf16.mxu0 0
    %9035 = vmatmul.mubr.bf16.gmra.mxu0 %v8897
    %v9036 = vpop.f32.mrf.mxu0
    %v9037 = vadd.f32 0.0, %v9036
    %v9038 = vpop.f32.mrf.mxu0
    %v9039 = vpop.f32.mrf.mxu0
    %v9040 = vadd.f32 0.0, %v9039
    %v9041 = vpop.f32.mrf.mxu0
    %9042 = vmatprep.mubr.bf16.mxu0 0
    %9043 = vmatmul.mubr.bf16.gmra.mxu0 %v8900
    %v9044 = vpop.f32.mrf.mxu0
    %v9045 = vadd.f32 0.0, %v9044
    %v9046 = vpop.f32.mrf.mxu0
    %v9047 = vpop.f32.mrf.mxu0
    %v9048 = vadd.f32 0.0, %v9047
    %v9049 = vpop.f32.mrf.mxu0
    %9050 = vmatprep.mubr.bf16.mxu0 0
    %9051 = vmatmul.mubr.bf16.gmra.mxu0 %v8903
    %v9052 = vpop.f32.mrf.mxu0
    %v9053 = vadd.f32 0.0, %v9052
    %v9054 = vpop.f32.mrf.mxu0
    %v9055 = vpop.f32.mrf.mxu0
    %v9056 = vadd.f32 0.0, %v9055
    %v9057 = vpop.f32.mrf.mxu0
    %9058 = vmatprep.mubr.bf16.mxu0 0
    %9059 = vmatmul.mubr.bf16.gmra.mxu0 %v8906
    %v9060 = vpop.f32.mrf.mxu0
    %v9061 = vadd.f32 0.0, %v9060
    %v9062 = vpop.f32.mrf.mxu0
    %v9063 = vpop.f32.mrf.mxu0
    %v9064 = vadd.f32 0.0, %v9063
    %v9065 = vpop.f32.mrf.mxu0
    %9066 = vmatprep.mubr.bf16.mxu0 0
    %9067 = vmatmul.mubr.bf16.gmra.mxu0 %v8909
    %v9068 = vpop.f32.mrf.mxu0
    %v9069 = vadd.f32 0.0, %v9068
    %v9070 = vpop.f32.mrf.mxu0
    %v9071 = vpop.f32.mrf.mxu0
    %v9072 = vadd.f32 0.0, %v9071
    %v9073 = vpop.f32.mrf.mxu0
    %9074 = vmatprep.mubr.bf16.mxu0 0
    %9075 = vmatmul.mubr.bf16.gmra.mxu0 %v8912
    %v9076 = vpop.f32.mrf.mxu0
    %v9077 = vadd.f32 0.0, %v9076
    %v9078 = vpop.f32.mrf.mxu0
    %v9079 = vpop.f32.mrf.mxu0
    %v9080 = vadd.f32 0.0, %v9079
    %v9081 = vpop.f32.mrf.mxu0
    %9082 = vmatprep.mubr.bf16.mxu0 0
    %9083 = vmatmul.mubr.bf16.gmra.mxu0 %v8915
    %v9084 = vpop.f32.mrf.mxu0
    %v9085 = vadd.f32 0.0, %v9084
    %v9086 = vpop.f32.mrf.mxu0
    %v9087 = vpop.f32.mrf.mxu0
    %v9088 = vadd.f32 0.0, %v9087
    %v9089 = vpop.f32.mrf.mxu0
    %9090 = vmatprep.mubr.bf16.mxu0 0
    %9091 = vmatmul.mubr.bf16.gmra.mxu0 %v8918
    %v9092 = vpop.f32.mrf.mxu0
    %v9093 = vadd.f32 0.0, %v9092
    %v9094 = vpop.f32.mrf.mxu0
    %v9095 = vpop.f32.mrf.mxu0
    %v9096 = vadd.f32 0.0, %v9095
    %v9097 = vpop.f32.mrf.mxu0
    %9098 = vmatprep.mubr.bf16.mxu0 0
    %9099 = vmatmul.mubr.bf16.gmra.mxu0 %v8921
    %v9100 = vpop.f32.mrf.mxu0
    %v9101 = vadd.f32 0.0, %v9100
    %v9102 = vpop.f32.mrf.mxu0
    %v9103 = vpop.f32.mrf.mxu0
    %v9104 = vadd.f32 0.0, %v9103
    %v9105 = vpop.f32.mrf.mxu0
    %9106 = vmatprep.mubr.bf16.mxu0 0
    %9107 = vmatmul.mubr.bf16.gmra.mxu0 %v8924
    %v9108 = vpop.f32.mrf.mxu0
    %v9109 = vadd.f32 0.0, %v9108
    %v9110 = vpop.f32.mrf.mxu0
    %v9111 = vpop.f32.mrf.mxu0
    %v9112 = vadd.f32 0.0, %v9111
    %v9113 = vpop.f32.mrf.mxu0
    %9114 = vmatprep.mubr.bf16.mxu0 0
    %9115 = vmatmul.mubr.bf16.gmra.mxu0 %v8927
    %v9116 = vpop.f32.mrf.mxu0
    %v9117 = vadd.f32 0.0, %v9116
    %v9118 = vpop.f32.mrf.mxu0
    %v9119 = vpop.f32.mrf.mxu0
    %v9120 = vadd.f32 0.0, %v9119
    %v9121 = vpop.f32.mrf.mxu0
    %9122 = vmatprep.mubr.bf16.mxu0 0
    %9123 = vmatmul.mubr.bf16.gmra.mxu0 %v8930
    %v9124 = vpop.f32.mrf.mxu0
    %v9125 = vadd.f32 0.0, %v9124
    %v9126 = vpop.f32.mrf.mxu0
    %v9127 = vpop.f32.mrf.mxu0
    %v9128 = vadd.f32 0.0, %v9127
    %v9129 = vpop.f32.mrf.mxu0
    %9130 = vmatprep.mubr.bf16.mxu0 0
    %9131 = vmatmul.mubr.bf16.gmra.mxu0 %v8933
    %v9132 = vpop.f32.mrf.mxu0
    %v9133 = vadd.f32 0.0, %v9132
    %v9134 = vpop.f32.mrf.mxu0
    %v9135 = vpop.f32.mrf.mxu0
    %v9136 = vadd.f32 0.0, %v9135
    %v9137 = vpop.f32.mrf.mxu0
    %9138 = vmatprep.mubr.bf16.mxu0 0
    %9139 = vmatmul.mubr.bf16.gmra.mxu0 %v8936
    %v9140 = vpop.f32.mrf.mxu0
    %v9141 = vadd.f32 0.0, %v9140
    %v9142 = vpop.f32.mrf.mxu0
    %v9143 = vpop.f32.mrf.mxu0
    %v9144 = vadd.f32 0.0, %v9143
    %v9145 = vpop.f32.mrf.mxu0
    %9146 = vmatprep.mubr.bf16.mxu0 0
    %9147 = vmatmul.mubr.bf16.gmra.mxu0 %v8939
    %v9148 = vpop.f32.mrf.mxu0
    %v9149 = vadd.f32 0.0, %v9148
    %v9150 = vpop.f32.mrf.mxu0
    %v9151 = vpop.f32.mrf.mxu0
    %v9152 = vadd.f32 0.0, %v9151
    %v9153 = vpop.f32.mrf.mxu0
    %9154 = vmatprep.mubr.bf16.mxu0 0
    %9155 = vmatmul.mubr.bf16.gmra.mxu0 %v8942
    %v9156 = vpop.f32.mrf.mxu0
    %v9157 = vadd.f32 0.0, %v9156
    %v9158 = vpop.f32.mrf.mxu0
    %v9159 = vpop.f32.mrf.mxu0
    %v9160 = vadd.f32 0.0, %v9159
    %v9161 = vpop.f32.mrf.mxu0
    %9162 = vmatprep.mubr.bf16.mxu0 0
    %9163 = vmatmul.mubr.bf16.gmra.mxu0 %v8945
    %v9164 = vpop.f32.mrf.mxu0
    %v9165 = vadd.f32 0.0, %v9164
    %v9166 = vpop.f32.mrf.mxu0
    %v9167 = vpop.f32.mrf.mxu0
    %v9168 = vadd.f32 0.0, %v9167
    %v9169 = vpop.f32.mrf.mxu0
    %9170 = vmatprep.mubr.bf16.mxu0 0
    %9171 = vmatmul.mubr.bf16.gmra.mxu0 %v8948
    %v9172 = vpop.f32.mrf.mxu0
    %v9173 = vadd.f32 0.0, %v9172
    %v9174 = vpop.f32.mrf.mxu0
    %v9175 = vpop.f32.mrf.mxu0
    %v9176 = vadd.f32 0.0, %v9175
    %v9177 = vpop.f32.mrf.mxu0
    %9178 = vmatprep.mubr.bf16.mxu0 0
    %9179 = vmatmul.mubr.bf16.gmra.mxu0 %v8951
    %v9180 = vpop.f32.mrf.mxu0
    %v9181 = vadd.f32 0.0, %v9180
    %v9182 = vpop.f32.mrf.mxu0
    %v9183 = vpop.f32.mrf.mxu0
    %v9184 = vadd.f32 0.0, %v9183
    %v9185 = vpop.f32.mrf.mxu0
    %9186 = vmatprep.mubr.bf16.mxu0 0
    %9187 = vmatmul.mubr.bf16.gmra.mxu0 %v8954
    %v9188 = vpop.f32.mrf.mxu0
    %v9189 = vadd.f32 0.0, %v9188
    %v9190 = vpop.f32.mrf.mxu0
    %v9191 = vpop.f32.mrf.mxu0
    %v9192 = vadd.f32 0.0, %v9191
    %v9193 = vpop.f32.mrf.mxu0
    %9194 = vmatprep.mubr.bf16.mxu0 0
    %9195 = vmatmul.mubr.bf16.gmra.mxu0 %v8957
    %v9196 = vpop.f32.mrf.mxu0
    %v9197 = vadd.f32 0.0, %v9196
    %v9198 = vpop.f32.mrf.mxu0
    %v9199 = vpop.f32.mrf.mxu0
    %v9200 = vadd.f32 0.0, %v9199
    %v9201 = vpop.f32.mrf.mxu0
    %9202 = vmatprep.mubr.bf16.mxu0 0
    %9203 = vmatmul.mubr.bf16.gmra.mxu0 %v8960
    %v9204 = vpop.f32.mrf.mxu0
    %v9205 = vadd.f32 0.0, %v9204
    %v9206 = vpop.f32.mrf.mxu0
    %v9207 = vpop.f32.mrf.mxu0
    %v9208 = vadd.f32 0.0, %v9207
    %v9209 = vpop.f32.mrf.mxu0
    %9210 = vmatprep.mubr.bf16.mxu0 0
    %9211 = vmatmul.mubr.bf16.gmra.mxu0 %v8963
    %v9212 = vpop.f32.mrf.mxu0
    %v9213 = vadd.f32 0.0, %v9212
    %v9214 = vpop.f32.mrf.mxu0
    %v9215 = vpop.f32.mrf.mxu0
    %v9216 = vadd.f32 0.0, %v9215
    %v9217 = vpop.f32.mrf.mxu0
    %9218 = vmatprep.mubr.bf16.mxu0 0
    %9219 = vmatmul.mubr.bf16.gmra.mxu0 %v8966
    %v9220 = vpop.f32.mrf.mxu0
    %v9221 = vadd.f32 0.0, %v9220
    %v9222 = vpop.f32.mrf.mxu0
    %v9223 = vpop.f32.mrf.mxu0
    %v9224 = vadd.f32 0.0, %v9223
    %v9225 = vpop.f32.mrf.mxu0
    %9226 = vmatprep.mubr.bf16.mxu0 0
    %9227 = vmatmul.mubr.bf16.gmra.mxu0 %v8969
    %v9228 = vpop.f32.mrf.mxu0
    %v9229 = vadd.f32 0.0, %v9228
    %v9230 = vpop.f32.mrf.mxu0
    %v9231 = vpop.f32.mrf.mxu0
    %v9232 = vadd.f32 0.0, %v9231
    %v9233 = vpop.f32.mrf.mxu0
    %9234 = vmatprep.mubr.bf16.mxu0 0
    %9235 = vmatmul.mubr.bf16.gmra.mxu0 %v8972
    %v9236 = vpop.f32.mrf.mxu0
    %v9237 = vadd.f32 0.0, %v9236
    %v9238 = vpop.f32.mrf.mxu0
    %v9239 = vpop.f32.mrf.mxu0
    %v9240 = vadd.f32 0.0, %v9239
    %v9241 = vpop.f32.mrf.mxu0
    %9242 = vmatprep.mubr.bf16.mxu0 0
    %9243 = vmatmul.mubr.bf16.gmra.mxu0 %v8975
    %v9244 = vpop.f32.mrf.mxu0
    %v9245 = vadd.f32 0.0, %v9244
    %v9246 = vpop.f32.mrf.mxu0
    %v9247 = vpop.f32.mrf.mxu0
    %v9248 = vadd.f32 0.0, %v9247
    %v9249 = vpop.f32.mrf.mxu0
    %9250 = vmatprep.mubr.bf16.mxu0 0
    %9251 = vmatmul.mubr.bf16.gmra.mxu0 %v8978
    %v9252 = vpop.f32.mrf.mxu0
    %v9253 = vadd.f32 0.0, %v9252
    %v9254 = vpop.f32.mrf.mxu0
    %v9255 = vpop.f32.mrf.mxu0
    %v9256 = vadd.f32 0.0, %v9255
    %v9257 = vpop.f32.mrf.mxu0
    %9258 = vmatprep.mubr.bf16.mxu0 0
    %9259 = vmatmul.mubr.bf16.gmra.mxu0 %v8981
    %v9260 = vpop.f32.mrf.mxu0
    %v9261 = vadd.f32 0.0, %v9260
    %v9262 = vpop.f32.mrf.mxu0
    %v9263 = vpop.f32.mrf.mxu0
    %v9264 = vadd.f32 0.0, %v9263
    %v9265 = vpop.f32.mrf.mxu0
    %9266 = vmatprep.mubr.bf16.mxu0 0
    %9267 = vmatmul.mubr.bf16.gmra.mxu0 %v8984
    %v9268 = vpop.f32.mrf.mxu0
    %v9269 = vadd.f32 0.0, %v9268
    %v9270 = vpop.f32.mrf.mxu0
    %v9271 = vpop.f32.mrf.mxu0
    %v9272 = vadd.f32 0.0, %v9271
    %v9273 = vpop.f32.mrf.mxu0
    %9274 = vdwg.mxu0
    %v9275 = vadd.f32 %v8585, %v9021
    %v9276 = vadd.f32 %v8586, %v9024
    %v9277 = vadd.f32 %v8587, %v9029
    %v9278 = vadd.f32 %v8588, %v9032
    %v9279 = vadd.f32 %v8589, %v9037
    %v9280 = vadd.f32 %v8590, %v9040
    %v9281 = vadd.f32 %v8591, %v9045
    %v9282 = vadd.f32 %v8592, %v9048
    %v9283 = vadd.f32 %v8593, %v9053
    %v9284 = vadd.f32 %v8594, %v9056
    %v9285 = vadd.f32 %v8595, %v9061
    %v9286 = vadd.f32 %v8596, %v9064
    %v9287 = vadd.f32 %v8597, %v9069
    %v9288 = vadd.f32 %v8598, %v9072
    %v9289 = vadd.f32 %v8599, %v9077
    %v9290 = vadd.f32 %v8600, %v9080
    %v9291 = vadd.f32 %v8601, %v9085
    %v9292 = vadd.f32 %v8602, %v9088
    %v9293 = vadd.f32 %v8603, %v9093
    %v9294 = vadd.f32 %v8604, %v9096
    %v9295 = vadd.f32 %v8605, %v9101
    %v9296 = vadd.f32 %v8606, %v9104
    %v9297 = vadd.f32 %v8607, %v9109
    %v9298 = vadd.f32 %v8608, %v9112
    %v9299 = vadd.f32 %v8609, %v9117
    %v9300 = vadd.f32 %v8610, %v9120
    %v9301 = vadd.f32 %v8611, %v9125
    %v9302 = vadd.f32 %v8612, %v9128
    %v9303 = vadd.f32 %v8613, %v9133
    %v9304 = vadd.f32 %v8614, %v9136
    %v9305 = vadd.f32 %v8615, %v9141
    %v9306 = vadd.f32 %v8616, %v9144
    %v9307 = vadd.f32 %v8617, %v9149
    %v9308 = vadd.f32 %v8618, %v9152
    %v9309 = vadd.f32 %v8619, %v9157
    %v9310 = vadd.f32 %v8620, %v9160
    %v9311 = vadd.f32 %v8621, %v9165
    %v9312 = vadd.f32 %v8622, %v9168
    %v9313 = vadd.f32 %v8623, %v9173
    %v9314 = vadd.f32 %v8624, %v9176
    %v9315 = vadd.f32 %v8625, %v9181
    %v9316 = vadd.f32 %v8626, %v9184
    %v9317 = vadd.f32 %v8627, %v9189
    %v9318 = vadd.f32 %v8628, %v9192
    %v9319 = vadd.f32 %v8629, %v9197
    %v9320 = vadd.f32 %v8630, %v9200
    %v9321 = vadd.f32 %v8631, %v9205
    %v9322 = vadd.f32 %v8632, %v9208
    %v9323 = vadd.f32 %v8633, %v9213
    %v9324 = vadd.f32 %v8634, %v9216
    %v9325 = vadd.f32 %v8635, %v9221
    %v9326 = vadd.f32 %v8636, %v9224
    %v9327 = vadd.f32 %v8637, %v9229
    %v9328 = vadd.f32 %v8638, %v9232
    %v9329 = vadd.f32 %v8639, %v9237
    %v9330 = vadd.f32 %v8640, %v9240
    %v9331 = vadd.f32 %v8641, %v9245
    %v9332 = vadd.f32 %v8642, %v9248
    %v9333 = vadd.f32 %v8643, %v9253
    %v9334 = vadd.f32 %v8644, %v9256
    %v9335 = vadd.f32 %v8645, %v9261
    %v9336 = vadd.f32 %v8646, %v9264
    %v9337 = vadd.f32 %v8647, %v9269
    %v9338 = vadd.f32 %v8648, %v9272
    %v9339 = vmax.f32 %v9275, 0.0
    %v9340 = vmax.f32 %v9276, 0.0
    %v9341 = vmax.f32 %v9277, 0.0
    %v9342 = vmax.f32 %v9278, 0.0
    %v9343 = vmax.f32 %v9279, 0.0
    %v9344 = vmax.f32 %v9280, 0.0
    %v9345 = vmax.f32 %v9281, 0.0
    %v9346 = vmax.f32 %v9282, 0.0
    %v9347 = vmax.f32 %v9283, 0.0
    %v9348 = vmax.f32 %v9284, 0.0
    %v9349 = vmax.f32 %v9285, 0.0
    %v9350 = vmax.f32 %v9286, 0.0
    %v9351 = vmax.f32 %v9287, 0.0
    %v9352 = vmax.f32 %v9288, 0.0
    %v9353 = vmax.f32 %v9289, 0.0
    %v9354 = vmax.f32 %v9290, 0.0
    %v9355 = vmax.f32 %v9291, 0.0
    %v9356 = vmax.f32 %v9292, 0.0
    %v9357 = vmax.f32 %v9293, 0.0
    %v9358 = vmax.f32 %v9294, 0.0
    %v9359 = vmax.f32 %v9295, 0.0
    %v9360 = vmax.f32 %v9296, 0.0
    %v9361 = vmax.f32 %v9297, 0.0
    %v9362 = vmax.f32 %v9298, 0.0
    %v9363 = vmax.f32 %v9299, 0.0
    %v9364 = vmax.f32 %v9300, 0.0
    %v9365 = vmax.f32 %v9301, 0.0
    %v9366 = vmax.f32 %v9302, 0.0
    %v9367 = vmax.f32 %v9303, 0.0
    %v9368 = vmax.f32 %v9304, 0.0
    %v9369 = vmax.f32 %v9305, 0.0
    %v9370 = vmax.f32 %v9306, 0.0
    %v9371 = vmax.f32 %v9307, 0.0
    %v9372 = vmax.f32 %v9308, 0.0
    %v9373 = vmax.f32 %v9309, 0.0
    %v9374 = vmax.f32 %v9310, 0.0
    %v9375 = vmax.f32 %v9311, 0.0
    %v9376 = vmax.f32 %v9312, 0.0
    %v9377 = vmax.f32 %v9313, 0.0
    %v9378 = vmax.f32 %v9314, 0.0
    %v9379 = vmax.f32 %v9315, 0.0
    %v9380 = vmax.f32 %v9316, 0.0
    %v9381 = vmax.f32 %v9317, 0.0
    %v9382 = vmax.f32 %v9318, 0.0
    %v9383 = vmax.f32 %v9319, 0.0
    %v9384 = vmax.f32 %v9320, 0.0
    %v9385 = vmax.f32 %v9321, 0.0
    %v9386 = vmax.f32 %v9322, 0.0
    %v9387 = vmax.f32 %v9323, 0.0
    %v9388 = vmax.f32 %v9324, 0.0
    %v9389 = vmax.f32 %v9325, 0.0
    %v9390 = vmax.f32 %v9326, 0.0
    %v9391 = vmax.f32 %v9327, 0.0
    %v9392 = vmax.f32 %v9328, 0.0
    %v9393 = vmax.f32 %v9329, 0.0
    %v9394 = vmax.f32 %v9330, 0.0
    %v9395 = vmax.f32 %v9331, 0.0
    %v9396 = vmax.f32 %v9332, 0.0
    %v9397 = vmax.f32 %v9333, 0.0
    %v9398 = vmax.f32 %v9334, 0.0
    %v9399 = vmax.f32 %v9335, 0.0
    %v9400 = vmax.f32 %v9336, 0.0
    %v9401 = vmax.f32 %v9337, 0.0
    %v9402 = vmax.f32 %v9338, 0.0
    %v9403 = vadd.f32 %v9339, %v5570
    %v9404 = vadd.f32 %v9340, %v5571
    %v9405 = vadd.f32 %v9341, %v5572
    %v9406 = vadd.f32 %v9342, %v5573
    %v9407 = vadd.f32 %v9343, %v5574
    %v9408 = vadd.f32 %v9344, %v5575
    %v9409 = vadd.f32 %v9345, %v5576
    %v9410 = vadd.f32 %v9346, %v5577
    %v9411 = vadd.f32 %v9347, %v5578
    %v9412 = vadd.f32 %v9348, %v5579
    %v9413 = vadd.f32 %v9349, %v5580
    %v9414 = vadd.f32 %v9350, %v5581
    %v9415 = vadd.f32 %v9351, %v5582
    %v9416 = vadd.f32 %v9352, %v5583
    %v9417 = vadd.f32 %v9353, %v5584
    %v9418 = vadd.f32 %v9354, %v5585
    %v9419 = vadd.f32 %v9355, %v5586
    %v9420 = vadd.f32 %v9356, %v5587
    %v9421 = vadd.f32 %v9357, %v5588
    %v9422 = vadd.f32 %v9358, %v5589
    %v9423 = vadd.f32 %v9359, %v5590
    %v9424 = vadd.f32 %v9360, %v5591
    %v9425 = vadd.f32 %v9361, %v5592
    %v9426 = vadd.f32 %v9362, %v5593
    %v9427 = vadd.f32 %v9363, %v5594
    %v9428 = vadd.f32 %v9364, %v5595
    %v9429 = vadd.f32 %v9365, %v5596
    %v9430 = vadd.f32 %v9366, %v5597
    %v9431 = vadd.f32 %v9367, %v5598
    %v9432 = vadd.f32 %v9368, %v5599
    %v9433 = vadd.f32 %v9369, %v5600
    %v9434 = vadd.f32 %v9370, %v5601
    %v9435 = vadd.f32 %v9371, %v5602
    %v9436 = vadd.f32 %v9372, %v5603
    %v9437 = vadd.f32 %v9373, %v5604
    %v9438 = vadd.f32 %v9374, %v5605
    %v9439 = vadd.f32 %v9375, %v5606
    %v9440 = vadd.f32 %v9376, %v5607
    %v9441 = vadd.f32 %v9377, %v5608
    %v9442 = vadd.f32 %v9378, %v5609
    %v9443 = vadd.f32 %v9379, %v5610
    %v9444 = vadd.f32 %v9380, %v5611
    %v9445 = vadd.f32 %v9381, %v5612
    %v9446 = vadd.f32 %v9382, %v5613
    %v9447 = vadd.f32 %v9383, %v5614
    %v9448 = vadd.f32 %v9384, %v5615
    %v9449 = vadd.f32 %v9385, %v5616
    %v9450 = vadd.f32 %v9386, %v5617
    %v9451 = vadd.f32 %v9387, %v5618
    %v9452 = vadd.f32 %v9388, %v5619
    %v9453 = vadd.f32 %v9389, %v5620
    %v9454 = vadd.f32 %v9390, %v5621
    %v9455 = vadd.f32 %v9391, %v5622
    %v9456 = vadd.f32 %v9392, %v5623
    %v9457 = vadd.f32 %v9393, %v5624
    %v9458 = vadd.f32 %v9394, %v5625
    %v9459 = vadd.f32 %v9395, %v5626
    %v9460 = vadd.f32 %v9396, %v5627
    %v9461 = vadd.f32 %v9397, %v5628
    %v9462 = vadd.f32 %v9398, %v5629
    %v9463 = vadd.f32 %v9399, %v5630
    %v9464 = vadd.f32 %v9400, %v5631
    %v9465 = vadd.f32 %v9401, %v5632
    %v9466 = vadd.f32 %v9402, %v5633
    %v9467 = vmax.f32 %v9403, 0.0
    %v9468 = vmax.f32 %v9404, 0.0
    %v9469 = vmax.f32 %v9405, 0.0
    %v9470 = vmax.f32 %v9406, 0.0
    %v9471 = vmax.f32 %v9407, 0.0
    %v9472 = vmax.f32 %v9408, 0.0
    %v9473 = vmax.f32 %v9409, 0.0
    %v9474 = vmax.f32 %v9410, 0.0
    %v9475 = vmax.f32 %v9411, 0.0
    %v9476 = vmax.f32 %v9412, 0.0
    %v9477 = vmax.f32 %v9413, 0.0
    %v9478 = vmax.f32 %v9414, 0.0
    %v9479 = vmax.f32 %v9415, 0.0
    %v9480 = vmax.f32 %v9416, 0.0
    %v9481 = vmax.f32 %v9417, 0.0
    %v9482 = vmax.f32 %v9418, 0.0
    %v9483 = vmax.f32 %v9419, 0.0
    %v9484 = vmax.f32 %v9420, 0.0
    %v9485 = vmax.f32 %v9421, 0.0
    %v9486 = vmax.f32 %v9422, 0.0
    %v9487 = vmax.f32 %v9423, 0.0
    %v9488 = vmax.f32 %v9424, 0.0
    %v9489 = vmax.f32 %v9425, 0.0
    %v9490 = vmax.f32 %v9426, 0.0
    %v9491 = vmax.f32 %v9427, 0.0
    %v9492 = vmax.f32 %v9428, 0.0
    %v9493 = vmax.f32 %v9429, 0.0
    %v9494 = vmax.f32 %v9430, 0.0
    %v9495 = vmax.f32 %v9431, 0.0
    %v9496 = vmax.f32 %v9432, 0.0
    %v9497 = vmax.f32 %v9433, 0.0
    %v9498 = vmax.f32 %v9434, 0.0
    %v9499 = vmax.f32 %v9435, 0.0
    %v9500 = vmax.f32 %v9436, 0.0
    %v9501 = vmax.f32 %v9437, 0.0
    %v9502 = vmax.f32 %v9438, 0.0
    %v9503 = vmax.f32 %v9439, 0.0
    %v9504 = vmax.f32 %v9440, 0.0
    %v9505 = vmax.f32 %v9441, 0.0
    %v9506 = vmax.f32 %v9442, 0.0
    %v9507 = vmax.f32 %v9443, 0.0
    %v9508 = vmax.f32 %v9444, 0.0
    %v9509 = vmax.f32 %v9445, 0.0
    %v9510 = vmax.f32 %v9446, 0.0
    %v9511 = vmax.f32 %v9447, 0.0
    %v9512 = vmax.f32 %v9448, 0.0
    %v9513 = vmax.f32 %v9449, 0.0
    %v9514 = vmax.f32 %v9450, 0.0
    %v9515 = vmax.f32 %v9451, 0.0
    %v9516 = vmax.f32 %v9452, 0.0
    %v9517 = vmax.f32 %v9453, 0.0
    %v9518 = vmax.f32 %v9454, 0.0
    %v9519 = vmax.f32 %v9455, 0.0
    %v9520 = vmax.f32 %v9456, 0.0
    %v9521 = vmax.f32 %v9457, 0.0
    %v9522 = vmax.f32 %v9458, 0.0
    %v9523 = vmax.f32 %v9459, 0.0
    %v9524 = vmax.f32 %v9460, 0.0
    %v9525 = vmax.f32 %v9461, 0.0
    %v9526 = vmax.f32 %v9462, 0.0
    %v9527 = vmax.f32 %v9463, 0.0
    %v9528 = vmax.f32 %v9464, 0.0
    %v9529 = vmax.f32 %v9465, 0.0
    %v9530 = vmax.f32 %v9466, 0.0
    %v9531 = vld [vmem:[%s9] sm:$0xf]
    %v9532 = vld [vmem:[%s9 + $0x4] sm:$0xf]
    %v9533 = vld [vmem:[%s9 + $0x8] sm:$0xf]
    %v9534 = vld [vmem:[%s9 + $0xc] sm:$0xf]
    %v9535 = vpack.c.bf16 %v9468, %v9467
    %v9536 = vpack.c.bf16 %v9470, %v9469
    %v9537 = vpack.c.bf16 %v9472, %v9471
    %v9538 = vpack.c.bf16 %v9474, %v9473
    %v9539 = vpack.c.bf16 %v9476, %v9475
    %v9540 = vpack.c.bf16 %v9478, %v9477
    %v9541 = vpack.c.bf16 %v9480, %v9479
    %v9542 = vpack.c.bf16 %v9482, %v9481
    %v9543 = vpack.c.bf16 %v9484, %v9483
    %v9544 = vpack.c.bf16 %v9486, %v9485
    %v9545 = vpack.c.bf16 %v9488, %v9487
    %v9546 = vpack.c.bf16 %v9490, %v9489
    %v9547 = vpack.c.bf16 %v9492, %v9491
    %v9548 = vpack.c.bf16 %v9494, %v9493
    %v9549 = vpack.c.bf16 %v9496, %v9495
    %v9550 = vpack.c.bf16 %v9498, %v9497
    %v9551 = vpack.c.bf16 %v9500, %v9499
    %v9552 = vpack.c.bf16 %v9502, %v9501
    %v9553 = vpack.c.bf16 %v9504, %v9503
    %v9554 = vpack.c.bf16 %v9506, %v9505
    %v9555 = vpack.c.bf16 %v9508, %v9507
    %v9556 = vpack.c.bf16 %v9510, %v9509
    %v9557 = vpack.c.bf16 %v9512, %v9511
    %v9558 = vpack.c.bf16 %v9514, %v9513
    %v9559 = vpack.c.bf16 %v9516, %v9515
    %v9560 = vpack.c.bf16 %v9518, %v9517
    %v9561 = vpack.c.bf16 %v9520, %v9519
    %v9562 = vpack.c.bf16 %v9522, %v9521
    %v9563 = vpack.c.bf16 %v9524, %v9523
    %v9564 = vpack.c.bf16 %v9526, %v9525
    %v9565 = vpack.c.bf16 %v9528, %v9527
    %v9566 = vpack.c.bf16 %v9530, %v9529
    %v9567 = vld [vmem:[%s10] sm:$0x1]
    %v9569 = vlaneseq
    %v9570 = vshrl.u32 %v9569, 7
    %v9571 = vsub.s32 0, %v9570
    %v9572 = vrot.slane %v9567, %v9571
    %v9578 = vunpack.c.l.b16 %v9531
    %v9579 = vunpack.c.l.b16 %v9532
    %v9580 = vunpack.c.l.b16 %v9533
    %v9581 = vunpack.c.l.b16 %v9534
    %v9582 = vpack.c.b16 %v9579, %v9578
    %v9583 = vpack.c.b16 %v9581, %v9580
    %v9587 = vsel %vm3421, %v9535, 0
    %v9590 = vsel %vm3421, %v9536, 0
    %v9593 = vsel %vm3421, %v9537, 0
    %v9596 = vsel %vm3421, %v9538, 0
    %v9599 = vsel %vm3421, %v9539, 0
    %v9602 = vsel %vm3421, %v9540, 0
    %v9605 = vsel %vm3421, %v9541, 0
    %v9608 = vsel %vm3421, %v9542, 0
    %v9611 = vsel %vm3421, %v9543, 0
    %v9614 = vsel %vm3421, %v9544, 0
    %v9617 = vsel %vm3421, %v9545, 0
    %v9620 = vsel %vm3421, %v9546, 0
    %v9623 = vsel %vm3421, %v9547, 0
    %v9626 = vsel %vm3421, %v9548, 0
    %v9629 = vsel %vm3421, %v9549, 0
    %v9632 = vsel %vm3421, %v9550, 0
    %v9635 = vsel %vm3421, %v9551, 0
    %v9638 = vsel %vm3421, %v9552, 0
    %v9641 = vsel %vm3421, %v9553, 0
    %v9644 = vsel %vm3421, %v9554, 0
    %v9647 = vsel %vm3421, %v9555, 0
    %v9650 = vsel %vm3421, %v9556, 0
    %v9653 = vsel %vm3421, %v9557, 0
    %v9656 = vsel %vm3421, %v9558, 0
    %v9659 = vsel %vm3421, %v9559, 0
    %v9662 = vsel %vm3421, %v9560, 0
    %v9665 = vsel %vm3421, %v9561, 0
    %v9668 = vsel %vm3421, %v9562, 0
    %v9671 = vsel %vm3421, %v9563, 0
    %v9674 = vsel %vm3421, %v9564, 0
    %v9677 = vsel %vm3421, %v9565, 0
    %v9680 = vsel %vm3421, %v9566, 0
    %9682 = vmatprep.subr.bf16.mxu0 0
    %9683 = vmatpush1.bf16.msra.mxu0 0
    %9684 = vmatprep.subr.bf16.mxu0 0
    %9685 = vmatpush1.bf16.msra.mxu0 0
    %9686 = vmatprep.subr.bf16.mxu0 0
    %9687 = vmatpush1.bf16.msra.mxu0 0
    %9688 = vmatprep.subr.bf16.mxu0 0
    %9689 = vmatpush1.bf16.msra.mxu0 0
    %9690 = vmatprep.subr.bf16.mxu0 0
    %9691 = vmatpush1.bf16.msra.mxu0 0
    %9692 = vmatprep.subr.bf16.mxu0 0
    %9693 = vmatpush1.bf16.msra.mxu0 0
    %9694 = vmatprep.subr.bf16.mxu0 0
    %9695 = vmatpush1.bf16.msra.mxu0 %v9583
    %9696 = vmatprep.subr.bf16.mxu0 0
    %9697 = vmatpush1.bf16.msra.mxu0 %v9582
    %9698 = vmatprep.subr.bf16.mxu0 0
    %9699 = vmatpush2.bf16.msra.mxu0 0
    %9700 = vmatprep.subr.bf16.mxu0 0
    %9701 = vmatpush2.bf16.msra.mxu0 0
    %9702 = vmatprep.subr.bf16.mxu0 0
    %9703 = vmatpush2.bf16.msra.mxu0 0
    %9704 = vmatprep.subr.bf16.mxu0 0
    %9705 = vmatpush2.bf16.msra.mxu0 0
    %9706 = vmatprep.subr.bf16.mxu0 0
    %9707 = vmatpush2.bf16.msra.mxu0 0
    %9708 = vmatprep.subr.bf16.mxu0 0
    %9709 = vmatpush2.bf16.msra.mxu0 0
    %9710 = vmatprep.subr.bf16.mxu0 0
    %9711 = vmatpush2.bf16.msra.mxu0 0
    %9712 = vmatprep.subr.bf16.mxu0 0
    %9713 = vmatpush2.bf16.msra.mxu0 0
    %9714 = vmatprep.mubr.bf16.mxu0 0
    %9715 = vmatmul.mubr.bf16.gmra.mxu0 %v9587
    %v9716 = vpop.f32.mrf.mxu0
    %v9717 = vadd.f32 %v9572, %v9716
    %v9718 = vpop.f32.mrf.mxu0
    %v9719 = vpop.f32.mrf.mxu0
    %v9720 = vadd.f32 %v9572, %v9719
    %v9721 = vpop.f32.mrf.mxu0
    %9722 = vmatprep.mubr.bf16.mxu0 0
    %9723 = vmatmul.mubr.bf16.gmra.mxu0 %v9590
    %v9724 = vpop.f32.mrf.mxu0
    %v9725 = vadd.f32 %v9572, %v9724
    %v9726 = vpop.f32.mrf.mxu0
    %v9727 = vpop.f32.mrf.mxu0
    %v9728 = vadd.f32 %v9572, %v9727
    %v9729 = vpop.f32.mrf.mxu0
    %9730 = vmatprep.mubr.bf16.mxu0 0
    %9731 = vmatmul.mubr.bf16.gmra.mxu0 %v9593
    %v9732 = vpop.f32.mrf.mxu0
    %v9733 = vadd.f32 %v9572, %v9732
    %v9734 = vpop.f32.mrf.mxu0
    %v9735 = vpop.f32.mrf.mxu0
    %v9736 = vadd.f32 %v9572, %v9735
    %v9737 = vpop.f32.mrf.mxu0
    %9738 = vmatprep.mubr.bf16.mxu0 0
    %9739 = vmatmul.mubr.bf16.gmra.mxu0 %v9596
    %v9740 = vpop.f32.mrf.mxu0
    %v9741 = vadd.f32 %v9572, %v9740
    %v9742 = vpop.f32.mrf.mxu0
    %v9743 = vpop.f32.mrf.mxu0
    %v9744 = vadd.f32 %v9572, %v9743
    %v9745 = vpop.f32.mrf.mxu0
    %9746 = vmatprep.mubr.bf16.mxu0 0
    %9747 = vmatmul.mubr.bf16.gmra.mxu0 %v9599
    %v9748 = vpop.f32.mrf.mxu0
    %v9749 = vadd.f32 %v9572, %v9748
    %v9750 = vpop.f32.mrf.mxu0
    %v9751 = vpop.f32.mrf.mxu0
    %v9752 = vadd.f32 %v9572, %v9751
    %v9753 = vpop.f32.mrf.mxu0
    %9754 = vmatprep.mubr.bf16.mxu0 0
    %9755 = vmatmul.mubr.bf16.gmra.mxu0 %v9602
    %v9756 = vpop.f32.mrf.mxu0
    %v9757 = vadd.f32 %v9572, %v9756
    %v9758 = vpop.f32.mrf.mxu0
    %v9759 = vpop.f32.mrf.mxu0
    %v9760 = vadd.f32 %v9572, %v9759
    %v9761 = vpop.f32.mrf.mxu0
    %9762 = vmatprep.mubr.bf16.mxu0 0
    %9763 = vmatmul.mubr.bf16.gmra.mxu0 %v9605
    %v9764 = vpop.f32.mrf.mxu0
    %v9765 = vadd.f32 %v9572, %v9764
    %v9766 = vpop.f32.mrf.mxu0
    %v9767 = vpop.f32.mrf.mxu0
    %v9768 = vadd.f32 %v9572, %v9767
    %v9769 = vpop.f32.mrf.mxu0
    %9770 = vmatprep.mubr.bf16.mxu0 0
    %9771 = vmatmul.mubr.bf16.gmra.mxu0 %v9608
    %v9772 = vpop.f32.mrf.mxu0
    %v9773 = vadd.f32 %v9572, %v9772
    %v9774 = vpop.f32.mrf.mxu0
    %v9775 = vpop.f32.mrf.mxu0
    %v9776 = vadd.f32 %v9572, %v9775
    %v9777 = vpop.f32.mrf.mxu0
    %9778 = vmatprep.mubr.bf16.mxu0 0
    %9779 = vmatmul.mubr.bf16.gmra.mxu0 %v9611
    %v9780 = vpop.f32.mrf.mxu0
    %v9781 = vadd.f32 %v9572, %v9780
    %v9782 = vpop.f32.mrf.mxu0
    %v9783 = vpop.f32.mrf.mxu0
    %v9784 = vadd.f32 %v9572, %v9783
    %v9785 = vpop.f32.mrf.mxu0
    %9786 = vmatprep.mubr.bf16.mxu0 0
    %9787 = vmatmul.mubr.bf16.gmra.mxu0 %v9614
    %v9788 = vpop.f32.mrf.mxu0
    %v9789 = vadd.f32 %v9572, %v9788
    %v9790 = vpop.f32.mrf.mxu0
    %v9791 = vpop.f32.mrf.mxu0
    %v9792 = vadd.f32 %v9572, %v9791
    %v9793 = vpop.f32.mrf.mxu0
    %9794 = vmatprep.mubr.bf16.mxu0 0
    %9795 = vmatmul.mubr.bf16.gmra.mxu0 %v9617
    %v9796 = vpop.f32.mrf.mxu0
    %v9797 = vadd.f32 %v9572, %v9796
    %v9798 = vpop.f32.mrf.mxu0
    %v9799 = vpop.f32.mrf.mxu0
    %v9800 = vadd.f32 %v9572, %v9799
    %v9801 = vpop.f32.mrf.mxu0
    %9802 = vmatprep.mubr.bf16.mxu0 0
    %9803 = vmatmul.mubr.bf16.gmra.mxu0 %v9620
    %v9804 = vpop.f32.mrf.mxu0
    %v9805 = vadd.f32 %v9572, %v9804
    %v9806 = vpop.f32.mrf.mxu0
    %v9807 = vpop.f32.mrf.mxu0
    %v9808 = vadd.f32 %v9572, %v9807
    %v9809 = vpop.f32.mrf.mxu0
    %9810 = vmatprep.mubr.bf16.mxu0 0
    %9811 = vmatmul.mubr.bf16.gmra.mxu0 %v9623
    %v9812 = vpop.f32.mrf.mxu0
    %v9813 = vadd.f32 %v9572, %v9812
    %v9814 = vpop.f32.mrf.mxu0
    %v9815 = vpop.f32.mrf.mxu0
    %v9816 = vadd.f32 %v9572, %v9815
    %v9817 = vpop.f32.mrf.mxu0
    %9818 = vmatprep.mubr.bf16.mxu0 0
    %9819 = vmatmul.mubr.bf16.gmra.mxu0 %v9626
    %v9820 = vpop.f32.mrf.mxu0
    %v9821 = vadd.f32 %v9572, %v9820
    %v9822 = vpop.f32.mrf.mxu0
    %v9823 = vpop.f32.mrf.mxu0
    %v9824 = vadd.f32 %v9572, %v9823
    %v9825 = vpop.f32.mrf.mxu0
    %9826 = vmatprep.mubr.bf16.mxu0 0
    %9827 = vmatmul.mubr.bf16.gmra.mxu0 %v9629
    %v9828 = vpop.f32.mrf.mxu0
    %v9829 = vadd.f32 %v9572, %v9828
    %v9830 = vpop.f32.mrf.mxu0
    %v9831 = vpop.f32.mrf.mxu0
    %v9832 = vadd.f32 %v9572, %v9831
    %v9833 = vpop.f32.mrf.mxu0
    %9834 = vmatprep.mubr.bf16.mxu0 0
    %9835 = vmatmul.mubr.bf16.gmra.mxu0 %v9632
    %v9836 = vpop.f32.mrf.mxu0
    %v9837 = vadd.f32 %v9572, %v9836
    %v9838 = vpop.f32.mrf.mxu0
    %v9839 = vpop.f32.mrf.mxu0
    %v9840 = vadd.f32 %v9572, %v9839
    %v9841 = vpop.f32.mrf.mxu0
    %9842 = vmatprep.mubr.bf16.mxu0 0
    %9843 = vmatmul.mubr.bf16.gmra.mxu0 %v9635
    %v9844 = vpop.f32.mrf.mxu0
    %v9845 = vadd.f32 %v9572, %v9844
    %v9846 = vpop.f32.mrf.mxu0
    %v9847 = vpop.f32.mrf.mxu0
    %v9848 = vadd.f32 %v9572, %v9847
    %v9849 = vpop.f32.mrf.mxu0
    %9850 = vmatprep.mubr.bf16.mxu0 0
    %9851 = vmatmul.mubr.bf16.gmra.mxu0 %v9638
    %v9852 = vpop.f32.mrf.mxu0
    %v9853 = vadd.f32 %v9572, %v9852
    %v9854 = vpop.f32.mrf.mxu0
    %v9855 = vpop.f32.mrf.mxu0
    %v9856 = vadd.f32 %v9572, %v9855
    %v9857 = vpop.f32.mrf.mxu0
    %9858 = vmatprep.mubr.bf16.mxu0 0
    %9859 = vmatmul.mubr.bf16.gmra.mxu0 %v9641
    %v9860 = vpop.f32.mrf.mxu0
    %v9861 = vadd.f32 %v9572, %v9860
    %v9862 = vpop.f32.mrf.mxu0
    %v9863 = vpop.f32.mrf.mxu0
    %v9864 = vadd.f32 %v9572, %v9863
    %v9865 = vpop.f32.mrf.mxu0
    %9866 = vmatprep.mubr.bf16.mxu0 0
    %9867 = vmatmul.mubr.bf16.gmra.mxu0 %v9644
    %v9868 = vpop.f32.mrf.mxu0
    %v9869 = vadd.f32 %v9572, %v9868
    %v9870 = vpop.f32.mrf.mxu0
    %v9871 = vpop.f32.mrf.mxu0
    %v9872 = vadd.f32 %v9572, %v9871
    %v9873 = vpop.f32.mrf.mxu0
    %9874 = vmatprep.mubr.bf16.mxu0 0
    %9875 = vmatmul.mubr.bf16.gmra.mxu0 %v9647
    %v9876 = vpop.f32.mrf.mxu0
    %v9877 = vadd.f32 %v9572, %v9876
    %v9878 = vpop.f32.mrf.mxu0
    %v9879 = vpop.f32.mrf.mxu0
    %v9880 = vadd.f32 %v9572, %v9879
    %v9881 = vpop.f32.mrf.mxu0
    %9882 = vmatprep.mubr.bf16.mxu0 0
    %9883 = vmatmul.mubr.bf16.gmra.mxu0 %v9650
    %v9884 = vpop.f32.mrf.mxu0
    %v9885 = vadd.f32 %v9572, %v9884
    %v9886 = vpop.f32.mrf.mxu0
    %v9887 = vpop.f32.mrf.mxu0
    %v9888 = vadd.f32 %v9572, %v9887
    %v9889 = vpop.f32.mrf.mxu0
    %9890 = vmatprep.mubr.bf16.mxu0 0
    %9891 = vmatmul.mubr.bf16.gmra.mxu0 %v9653
    %v9892 = vpop.f32.mrf.mxu0
    %v9893 = vadd.f32 %v9572, %v9892
    %v9894 = vpop.f32.mrf.mxu0
    %v9895 = vpop.f32.mrf.mxu0
    %v9896 = vadd.f32 %v9572, %v9895
    %v9897 = vpop.f32.mrf.mxu0
    %9898 = vmatprep.mubr.bf16.mxu0 0
    %9899 = vmatmul.mubr.bf16.gmra.mxu0 %v9656
    %v9900 = vpop.f32.mrf.mxu0
    %v9901 = vadd.f32 %v9572, %v9900
    %v9902 = vpop.f32.mrf.mxu0
    %v9903 = vpop.f32.mrf.mxu0
    %v9904 = vadd.f32 %v9572, %v9903
    %v9905 = vpop.f32.mrf.mxu0
    %9906 = vmatprep.mubr.bf16.mxu0 0
    %9907 = vmatmul.mubr.bf16.gmra.mxu0 %v9659
    %v9908 = vpop.f32.mrf.mxu0
    %v9909 = vadd.f32 %v9572, %v9908
    %v9910 = vpop.f32.mrf.mxu0
    %v9911 = vpop.f32.mrf.mxu0
    %v9912 = vadd.f32 %v9572, %v9911
    %v9913 = vpop.f32.mrf.mxu0
    %9914 = vmatprep.mubr.bf16.mxu0 0
    %9915 = vmatmul.mubr.bf16.gmra.mxu0 %v9662
    %v9916 = vpop.f32.mrf.mxu0
    %v9917 = vadd.f32 %v9572, %v9916
    %v9918 = vpop.f32.mrf.mxu0
    %v9919 = vpop.f32.mrf.mxu0
    %v9920 = vadd.f32 %v9572, %v9919
    %v9921 = vpop.f32.mrf.mxu0
    %9922 = vmatprep.mubr.bf16.mxu0 0
    %9923 = vmatmul.mubr.bf16.gmra.mxu0 %v9665
    %v9924 = vpop.f32.mrf.mxu0
    %v9925 = vadd.f32 %v9572, %v9924
    %v9926 = vpop.f32.mrf.mxu0
    %v9927 = vpop.f32.mrf.mxu0
    %v9928 = vadd.f32 %v9572, %v9927
    %v9929 = vpop.f32.mrf.mxu0
    %9930 = vmatprep.mubr.bf16.mxu0 0
    %9931 = vmatmul.mubr.bf16.gmra.mxu0 %v9668
    %v9932 = vpop.f32.mrf.mxu0
    %v9933 = vadd.f32 %v9572, %v9932
    %v9934 = vpop.f32.mrf.mxu0
    %v9935 = vpop.f32.mrf.mxu0
    %v9936 = vadd.f32 %v9572, %v9935
    %v9937 = vpop.f32.mrf.mxu0
    %9938 = vmatprep.mubr.bf16.mxu0 0
    %9939 = vmatmul.mubr.bf16.gmra.mxu0 %v9671
    %v9940 = vpop.f32.mrf.mxu0
    %v9941 = vadd.f32 %v9572, %v9940
    %v9942 = vpop.f32.mrf.mxu0
    %v9943 = vpop.f32.mrf.mxu0
    %v9944 = vadd.f32 %v9572, %v9943
    %v9945 = vpop.f32.mrf.mxu0
    %9946 = vmatprep.mubr.bf16.mxu0 0
    %9947 = vmatmul.mubr.bf16.gmra.mxu0 %v9674
    %v9948 = vpop.f32.mrf.mxu0
    %v9949 = vadd.f32 %v9572, %v9948
    %v9950 = vpop.f32.mrf.mxu0
    %v9951 = vpop.f32.mrf.mxu0
    %v9952 = vadd.f32 %v9572, %v9951
    %v9953 = vpop.f32.mrf.mxu0
    %9954 = vmatprep.mubr.bf16.mxu0 0
    %9955 = vmatmul.mubr.bf16.gmra.mxu0 %v9677
    %v9956 = vpop.f32.mrf.mxu0
    %v9957 = vadd.f32 %v9572, %v9956
    %v9958 = vpop.f32.mrf.mxu0
    %v9959 = vpop.f32.mrf.mxu0
    %v9960 = vadd.f32 %v9572, %v9959
    %v9961 = vpop.f32.mrf.mxu0
    %9962 = vmatprep.mubr.bf16.mxu0 0
    %9963 = vmatmul.mubr.bf16.gmra.mxu0 %v9680
    %v9964 = vpop.f32.mrf.mxu0
    %v9965 = vadd.f32 %v9572, %v9964
    %v9966 = vpop.f32.mrf.mxu0
    %v9967 = vpop.f32.mrf.mxu0
    %v9968 = vadd.f32 %v9572, %v9967
    %v9969 = vpop.f32.mrf.mxu0
    %9970 = vdwg.mxu0
    %9971 = vst [vmem:[#allocation2] sm:$0xff] %v9717
    %9972 = vst [vmem:[#allocation2 + $0x8] sm:$0xff] %v9720
    %9973 = vst [vmem:[#allocation2 + $0x10] sm:$0xff] %v9725
    %9974 = vst [vmem:[#allocation2 + $0x18] sm:$0xff] %v9728
    %9975 = vst [vmem:[#allocation2 + $0x20] sm:$0xff] %v9733
    %9976 = vst [vmem:[#allocation2 + $0x28] sm:$0xff] %v9736
    %9977 = vst [vmem:[#allocation2 + $0x30] sm:$0xff] %v9741
    %9978 = vst [vmem:[#allocation2 + $0x38] sm:$0xff] %v9744
    %9979 = vst [vmem:[#allocation2 + $0x40] sm:$0xff] %v9749
    %9980 = vst [vmem:[#allocation2 + $0x48] sm:$0xff] %v9752
    %9981 = vst [vmem:[#allocation2 + $0x50] sm:$0xff] %v9757
    %9982 = vst [vmem:[#allocation2 + $0x58] sm:$0xff] %v9760
    %9983 = vst [vmem:[#allocation2 + $0x60] sm:$0xff] %v9765
    %9984 = vst [vmem:[#allocation2 + $0x68] sm:$0xff] %v9768
    %9985 = vst [vmem:[#allocation2 + $0x70] sm:$0xff] %v9773
    %9986 = vst [vmem:[#allocation2 + $0x78] sm:$0xff] %v9776
    %9987 = vst [vmem:[#allocation2 + $0x80] sm:$0xff] %v9781
    %9988 = vst [vmem:[#allocation2 + $0x88] sm:$0xff] %v9784
    %9989 = vst [vmem:[#allocation2 + $0x90] sm:$0xff] %v9789
    %9990 = vst [vmem:[#allocation2 + $0x98] sm:$0xff] %v9792
    %9991 = vst [vmem:[#allocation2 + $0xa0] sm:$0xff] %v9797
    %9992 = vst [vmem:[#allocation2 + $0xa8] sm:$0xff] %v9800
    %9993 = vst [vmem:[#allocation2 + $0xb0] sm:$0xff] %v9805
    %9994 = vst [vmem:[#allocation2 + $0xb8] sm:$0xff] %v9808
    %9995 = vst [vmem:[#allocation2 + $0xc0] sm:$0xff] %v9813
    %9996 = vst [vmem:[#allocation2 + $0xc8] sm:$0xff] %v9816
    %9997 = vst [vmem:[#allocation2 + $0xd0] sm:$0xff] %v9821
    %9998 = vst [vmem:[#allocation2 + $0xd8] sm:$0xff] %v9824
    %9999 = vst [vmem:[#allocation2 + $0xe0] sm:$0xff] %v9829
    %10000 = vst [vmem:[#allocation2 + $0xe8] sm:$0xff] %v9832
    %10001 = vst [vmem:[#allocation2 + $0xf0] sm:$0xff] %v9837
    %10002 = vst [vmem:[#allocation2 + $0xf8] sm:$0xff] %v9840
    %10003 = vst [vmem:[#allocation2 + $0x100] sm:$0xff] %v9845
    %10004 = vst [vmem:[#allocation2 + $0x108] sm:$0xff] %v9848
    %10005 = vst [vmem:[#allocation2 + $0x110] sm:$0xff] %v9853
    %10006 = vst [vmem:[#allocation2 + $0x118] sm:$0xff] %v9856
    %10007 = vst [vmem:[#allocation2 + $0x120] sm:$0xff] %v9861
    %10008 = vst [vmem:[#allocation2 + $0x128] sm:$0xff] %v9864
    %10009 = vst [vmem:[#allocation2 + $0x130] sm:$0xff] %v9869
    %10010 = vst [vmem:[#allocation2 + $0x138] sm:$0xff] %v9872
    %10011 = vst [vmem:[#allocation2 + $0x140] sm:$0xff] %v9877
    %10012 = vst [vmem:[#allocation2 + $0x148] sm:$0xff] %v9880
    %10013 = vst [vmem:[#allocation2 + $0x150] sm:$0xff] %v9885
    %10014 = vst [vmem:[#allocation2 + $0x158] sm:$0xff] %v9888
    %10015 = vst [vmem:[#allocation2 + $0x160] sm:$0xff] %v9893
    %10016 = vst [vmem:[#allocation2 + $0x168] sm:$0xff] %v9896
    %10017 = vst [vmem:[#allocation2 + $0x170] sm:$0xff] %v9901
    %10018 = vst [vmem:[#allocation2 + $0x178] sm:$0xff] %v9904
    %10019 = vst [vmem:[#allocation2 + $0x180] sm:$0xff] %v9909
    %10020 = vst [vmem:[#allocation2 + $0x188] sm:$0xff] %v9912
    %10021 = vst [vmem:[#allocation2 + $0x190] sm:$0xff] %v9917
    %10022 = vst [vmem:[#allocation2 + $0x198] sm:$0xff] %v9920
    %10023 = vst [vmem:[#allocation2 + $0x1a0] sm:$0xff] %v9925
    %10024 = vst [vmem:[#allocation2 + $0x1a8] sm:$0xff] %v9928
    %10025 = vst [vmem:[#allocation2 + $0x1b0] sm:$0xff] %v9933
    %10026 = vst [vmem:[#allocation2 + $0x1b8] sm:$0xff] %v9936
    %10027 = vst [vmem:[#allocation2 + $0x1c0] sm:$0xff] %v9941
    %10028 = vst [vmem:[#allocation2 + $0x1c8] sm:$0xff] %v9944
    %10029 = vst [vmem:[#allocation2 + $0x1d0] sm:$0xff] %v9949
    %10030 = vst [vmem:[#allocation2 + $0x1d8] sm:$0xff] %v9952
    %10031 = vst [vmem:[#allocation2 + $0x1e0] sm:$0xff] %v9957
    %10032 = vst [vmem:[#allocation2 + $0x1e8] sm:$0xff] %v9960
    %10033 = vst [vmem:[#allocation2 + $0x1f0] sm:$0xff] %v9965
    %10034 = vst [vmem:[#allocation2 + $0x1f8] sm:$0xff] %v9968
    // Predicated region
    $region46: #{tpu_custom_call.1} parent=1 // pred_check
      _
    $region47: #{tpu_custom_call.1} parent=1 // pred_check_branch
      %10036 = sbr.rel (0) target = $region49
    $region48: #{tpu_custom_call.1} parent=1 // pred_region
      %s10038 = ssub.s32 8192, 8192
      %10039 = vsyncadd [#allocation3], %s10038
      %s10040 = sshll.u32 [#allocation2], 4
      %s10041 = int_to_ptr.vmem [resolvable:$true] %s10040
      %10046 = dma.vmem_to_hbm [thread:$0]  %s10041, 8192, %s11, [#allocation3], 128, 128, 8
    $region49: #{tpu_custom_call.1} parent=1 // pred_fallthru
      _
    // Predicated region
    $region50: #{tpu_custom_call.1} parent=1 // pred_check
      _
    $region51: #{tpu_custom_call.1} parent=1 // pred_check_branch
      %10048 = sbr.rel (0) target = $region53
    $region52: #{tpu_custom_call.1} parent=1 // pred_region
      %10049 = dma.done [#allocation3], 8192
    $region53: #{tpu_custom_call.1} parent=1 // pred_fallthru
      _
    %10050 = vsyncpa [#allocation3], 1

</llo_original>
